<compile_context>
chip_gen: v7x
topology: tpu7x:2x2x1
jax: 0.10.0
libtpu: 0.0.40
codegen_flags: <defaults>
</compile_context>

<pallas_src>
import jax
import jax.numpy as jnp
from jax.experimental import pallas as pl
from jax.experimental.pallas import tpu as pltpu

BN_EPS = 1e-5
HIDDEN_PAD = 512          # 500 -> 512 (clean 128-lane tiles)
OUT_PAD = 128             # 5   -> 128 (lane-dense final store, sliced outside)
N_CLASSES = 5
VMEM_LIMIT_BYTES = 48 * 1024 * 1024   # well under v7x's 64 MiB physical VMEM

_VMEM_SPEC = pl.BlockSpec(memory_space=pltpu.MemorySpace.VMEM)


# --------------------------------------------------------------------------
# Pallas kernels
# --------------------------------------------------------------------------
def _conv_bn_relu_kernel(p_ref, w_ref, b_ref, s_ref, t_ref, o_ref):
    """One sample: (Cout,9Cin)@(9Cin,HW) + bias -> ReLU -> folded-BN scale/shift."""
    # p_ref: (1, 9*Cin, HW) bf16; w_ref: (Cout, 9*Cin) bf16; vectors (Cout, 1) f32.
    y = jnp.dot(w_ref[...], p_ref[0], preferred_element_type=jnp.float32)  # (Cout, HW)
    y = jnp.maximum(y + b_ref[...], 0.0)            # Conv bias, then ReLU (module order)
    y = y * s_ref[...] + t_ref[...]                 # BatchNorm (eval), pre-folded
    o_ref[0] = y.astype(o_ref.dtype)


def _mlp_kernel(x_ref, w1_ref, b1_ref, w2_ref, b2_ref, w3_ref, b3_ref, o_ref):
    """Fused fc1->ReLU->fc2->ReLU->fc3 (Dropout = eval-mode identity)."""
    h = jnp.dot(x_ref[...], w1_ref[...], preferred_element_type=jnp.float32)
    h = jnp.maximum(h + b1_ref[...], 0.0)
    h = jnp.dot(h.astype(jnp.bfloat16), w2_ref[...], preferred_element_type=jnp.float32)
    h = jnp.maximum(h + b2_ref[...], 0.0)
    h = jnp.dot(h.astype(jnp.bfloat16), w3_ref[...], preferred_element_type=jnp.float32)
    o_ref[...] = (h + b3_ref[...]).astype(o_ref.dtype)


# --------------------------------------------------------------------------
# pallas_call wrappers
# --------------------------------------------------------------------------
def conv_bn_relu(patches, wT, b, scale, shift):
    """patches: (N, 9*Cin, HW) bf16; wT: (Cout, 9*Cin) bf16. Returns (N, Cout, HW) bf16."""
    n, kc, hw = patches.shape
    cout = wT.shape[0]
    flops = 2 * n * cout * kc * hw
    bytes_accessed = (patches.size * 2 + wT.size * 2
                      + (b.size + scale.size + shift.size) * 4
                      + n * cout * hw * 2)
    return pl.pallas_call(
        _conv_bn_relu_kernel,
        out_shape=jax.ShapeDtypeStruct((n, cout, hw), jnp.bfloat16),
        grid=(n,),
        in_specs=[
            pl.BlockSpec((1, kc, hw), lambda i: (i, 0, 0)),
            pl.BlockSpec((cout, kc), lambda i: (0, 0)),
            pl.BlockSpec((cout, 1), lambda i: (0, 0)),
            pl.BlockSpec((cout, 1), lambda i: (0, 0)),
            pl.BlockSpec((cout, 1), lambda i: (0, 0)),
        ],
        out_specs=pl.BlockSpec((1, cout, hw), lambda i: (i, 0, 0)),
        compiler_params=pltpu.CompilerParams(
            dimension_semantics=("parallel",),
            vmem_limit_bytes=VMEM_LIMIT_BYTES),
        cost_estimate=pl.CostEstimate(flops=flops, transcendentals=0,
                                      bytes_accessed=bytes_accessed),
    )(patches, wT, b, scale, shift)


def mlp_head(x_flat, fc):
    """x_flat: (N, 16*H*W). Returns (N, N_CLASSES) f32 logits."""
    n, kf = x_flat.shape
    flops = 2 * n * (kf * HIDDEN_PAD + HIDDEN_PAD * HIDDEN_PAD + HIDDEN_PAD * OUT_PAD)
    bytes_accessed = (n * kf * 2
                      + (fc["w1"].size + fc["w2"].size + fc["w3"].size) * 2
                      + (fc["b1"].size + fc["b2"].size + fc["b3"].size) * 4
                      + n * OUT_PAD * 4)
    out = pl.pallas_call(
        _mlp_kernel,
        out_shape=jax.ShapeDtypeStruct((n, OUT_PAD), jnp.float32),
        in_specs=[_VMEM_SPEC] * 7,
        out_specs=_VMEM_SPEC,
        compiler_params=pltpu.CompilerParams(vmem_limit_bytes=VMEM_LIMIT_BYTES),
        cost_estimate=pl.CostEstimate(flops=flops, transcendentals=0,
                                      bytes_accessed=bytes_accessed),
    )(x_flat.astype(jnp.bfloat16),
      fc["w1"], fc["b1"], fc["w2"], fc["b2"], fc["w3"], fc["b3"])
    return out[:, :N_CLASSES]


# --------------------------------------------------------------------------
# Glue (reflect pad / im2col) in plain JAX
# --------------------------------------------------------------------------
def _conv_block(x, prep):
    """ReflectionPad2d(1) + Conv2d(3x3, stride 1) + ReLU + BatchNorm2d (eval)."""
    n, cin, h, w = x.shape
    xp = jnp.pad(x, ((0, 0), (0, 0), (1, 1), (1, 1)), mode="reflect")
    cols = [xp[:, :, dy:dy + h, dx:dx + w] for dy in range(3) for dx in range(3)]
    # (N, Cin, 9, H, W) -> (N, Cin*9, H*W): row order (cin, ky, kx) matches the
    # (Cout, Cin, 3, 3) -> (Cout, Cin*9) weight reshape.
    patches = jnp.stack(cols, axis=2).reshape(n, cin * 9, h * w).astype(jnp.bfloat16)
    y = conv_bn_relu(patches, prep["wT"], prep["b"], prep["scale"], prep["shift"])
    cout = prep["wT"].shape[0]
    return y.reshape(n, cout, h, w)


def forward_batched(x_nchw, prep):
    x = x_nchw.astype(jnp.float32)
    x = _conv_block(x, prep["conv1"])
    x = _conv_block(x, prep["conv2"])
    x = _conv_block(x, prep["conv3"])
    n = x.shape[0]
    # Activations are already NCHW -> flatten is a pure reshape (PyTorch order).
    return mlp_head(x.reshape(n, -1), prep["fc"])


def siamese_forward(input1, input2, prep):
    n = input1.shape[0]
    out = forward_batched(jnp.concatenate([input1, input2], axis=0), prep)
    return out[:n], out[n:]


# --------------------------------------------------------------------------
# Parameters: deterministic construction + kernel-ready preparation
# --------------------------------------------------------------------------
def init_params(key, h, w):
    def conv_params(k, cin, cout):
        k1, k2, k3, k4, k5, k6 = jax.random.split(k, 6)
        return {
            "w": jax.random.normal(k1, (cout, cin, 3, 3), jnp.float32) * 0.1,  # OIHW
            "b": jax.random.normal(k2, (cout,), jnp.float32) * 0.05,
            "gamma": 1.0 + 0.1 * jax.random.normal(k3, (cout,), jnp.float32),
            "beta": 0.05 * jax.random.normal(k4, (cout,), jnp.float32),
            "mean": 0.05 * jax.random.normal(k5, (cout,), jnp.float32),
            "var": jax.random.uniform(k6, (cout,), jnp.float32, 0.5, 1.5),
        }

    ks = jax.random.split(key, 9)
    feat = 16 * h * w
    return {
        "conv1": conv_params(ks[0], 1, 8),
        "conv2": conv_params(ks[1], 8, 16),
        "conv3": conv_params(ks[2], 16, 16),
        "fc1_w": jax.random.normal(ks[3], (feat, 500), jnp.float32) * 0.02,
        "fc1_b": jax.random.normal(ks[4], (500,), jnp.float32) * 0.02,
        "fc2_w": jax.random.normal(ks[5], (500, 500), jnp.float32) * 0.04,
        "fc2_b": jax.random.normal(ks[6], (500,), jnp.float32) * 0.02,
        "fc3_w": jax.random.normal(ks[7], (500, 5), jnp.float32) * 0.04,
        "fc3_b": jax.random.normal(ks[8], (5,), jnp.float32) * 0.02,
    }


def prepare_params(p):
    """One-time fold/pad/cast into the kernel-facing layout."""
    prep = {}
    for name in ("conv1", "conv2", "conv3"):
        c = p[name]
        cout, cin = c["w"].shape[0], c["w"].shape[1]
        scale = c["gamma"] * jax.lax.rsqrt(c["var"] + BN_EPS)
        shift = c["beta"] - c["mean"] * scale
        prep[name] = {
            "wT": c["w"].reshape(cout, cin * 9).astype(jnp.bfloat16),
            "b": c["b"].reshape(cout, 1).astype(jnp.float32),
            "scale": scale.reshape(cout, 1).astype(jnp.float32),
            "shift": shift.reshape(cout, 1).astype(jnp.float32),
        }
    hp = HIDDEN_PAD - p["fc1_w"].shape[1]   # 12
    op = OUT_PAD - p["fc3_w"].shape[1]      # 123
    prep["fc"] = {
        "w1": jnp.pad(p["fc1_w"], ((0, 0), (0, hp))).astype(jnp.bfloat16),
        "b1": jnp.pad(p["fc1_b"], (0, hp)).reshape(1, HIDDEN_PAD).astype(jnp.float32),
        "w2": jnp.pad(p["fc2_w"], ((0, hp), (0, hp))).astype(jnp.bfloat16),
        "b2": jnp.pad(p["fc2_b"], (0, hp)).reshape(1, HIDDEN_PAD).astype(jnp.float32),
        "w3": jnp.pad(p["fc3_w"], ((0, hp), (0, op))).astype(jnp.bfloat16),
        "b3": jnp.pad(p["fc3_b"], (0, op)).reshape(1, OUT_PAD).astype(jnp.float32),
    }
    return prep


# --------------------------------------------------------------------------
# Pure-JAX f32 reference (independent path via lax.conv) for a sanity check
# --------------------------------------------------------------------------
def _ref_conv_block(x, c):
    xp = jnp.pad(x, ((0, 0), (0, 0), (1, 1), (1, 1)), mode="reflect")
    y = jax.lax.conv_general_dilated(
        xp, c["w"], window_strides=(1, 1), padding="VALID",
        dimension_numbers=("NCHW", "OIHW", "NCHW"),
        precision=jax.lax.Precision.HIGHEST)
    y = jnp.maximum(y + c["b"].reshape(1, -1, 1, 1), 0.0)
    scale = c["gamma"] * jax.lax.rsqrt(c["var"] + BN_EPS)
    shift = c["beta"] - c["mean"] * scale
    return y * scale.reshape(1, -1, 1, 1) + shift.reshape(1, -1, 1, 1)


def reference_forward(x, p):
    x = _ref_conv_block(x, p["conv1"])
    x = _ref_conv_block(x, p["conv2"])
    x = _ref_conv_block(x, p["conv3"])
    x = x.reshape(x.shape[0], -1)
    hi = jax.lax.Precision.HIGHEST
    x = jnp.maximum(jnp.dot(x, p["fc1_w"], precision=hi) + p["fc1_b"], 0.0)
    x = jnp.maximum(jnp.dot(x, p["fc2_w"], precision=hi) + p["fc2_b"], 0.0)
    return jnp.dot(x, p["fc3_w"], precision=hi) + p["fc3_b"]


# --------------------------------------------------------------------------
if __name__ == "__main__":
    N, C, H, W = 2, 1, 16, 16   # small shapes; module's original was 1x100x100
    key = jax.random.PRNGKey(0)
    kp, k1, k2 = jax.random.split(key, 3)

    params = init_params(kp, H, W)
    prep = prepare_params(params)
    input1 = jax.random.normal(k1, (N, C, H, W), jnp.float32)
    input2 = jax.random.normal(k2, (N, C, H, W), jnp.float32)

    fwd = jax.jit(siamese_forward)
    out1, out2 = fwd(input1, input2, prep)
    jax.block_until_ready((out1, out2))

    assert out1.shape == (N, N_CLASSES) and out2.shape == (N, N_CLASSES)
    assert bool(jnp.all(jnp.isfinite(out1))) and bool(jnp.all(jnp.isfinite(out2)))

    # Loose numerical check vs. f32 reference (kernel path uses bf16 MXU inputs).
    ref1 = reference_forward(input1, params)
    ref2 = reference_forward(input2, params)
    scale = float(jnp.max(jnp.abs(jnp.concatenate([ref1, ref2])))) + 1e-6
    err = float(jnp.max(jnp.abs(jnp.concatenate([out1 - ref1, out2 - ref2]))))
    assert err <= 0.1 * scale + 3e-2, f"numerics mismatch: err={err} scale={scale}"

    print("KERNEL_OK")
</pallas_src>

<mosaic_0001>
module attributes {stable_mosaic.version = 11 : i64} {
  func.func @_conv_bn_relu_kernel(%arg0: i32, %arg1: memref<1x9x256xbf16, #tpu.memory_space<vmem>>, %arg2: memref<8x9xbf16, #tpu.memory_space<vmem>>, %arg3: memref<8x1xf32, #tpu.memory_space<vmem>>, %arg4: memref<8x1xf32, #tpu.memory_space<vmem>>, %arg5: memref<8x1xf32, #tpu.memory_space<vmem>>, %arg6: memref<1x8x256xbf16, #tpu.memory_space<vmem>>) attributes {dimension_semantics = [#tpu.dimension_semantics<parallel>], iteration_bounds = array<i64: 4>, scalar_prefetch = 0 : i64, scratch_operands = 0 : i64, tpu.core_type = #tpu.core_type<tc>, window_params = [{transform_indices = @transform_0, window_bounds = array<i64: 1, 9, 256>}, {pipeline_mode = #tpu.pipeline_mode<synchronous>, transform_indices = @transform_1, window_bounds = array<i64: 8, 9>}, {pipeline_mode = #tpu.pipeline_mode<synchronous>, transform_indices = @transform_2, window_bounds = array<i64: 8, 1>}, {pipeline_mode = #tpu.pipeline_mode<synchronous>, transform_indices = @transform_3, window_bounds = array<i64: 8, 1>}, {pipeline_mode = #tpu.pipeline_mode<synchronous>, transform_indices = @transform_4, window_bounds = array<i64: 8, 1>}, {transform_indices = @transform_5, window_bounds = array<i64: 1, 8, 256>}]} {
    %c0 = arith.constant 0 : index
    %c0_0 = arith.constant 0 : index
    %0 = vector.load %arg2[%c0, %c0_0] : memref<8x9xbf16, #tpu.memory_space<vmem>>, vector<8x9xbf16>
    %c0_1 = arith.constant 0 : index
    %c0_2 = arith.constant 0 : index
    %c0_3 = arith.constant 0 : index
    %1 = vector.load %arg1[%c0_1, %c0_2, %c0_3] : memref<1x9x256xbf16, #tpu.memory_space<vmem>>, vector<1x9x256xbf16>
    %2 = vector.shape_cast %1 : vector<1x9x256xbf16> to vector<9x256xbf16>
    %cst = arith.constant dense<0.000000e+00> : vector<8x256xf32>
    %3 = tpu.matmul %0, %2, %cst {dimension_numbers = #tpu.dot_dimension_numbers<[1], [0], [0], [1], [0, 0, 1, 1], [], []>} : vector<8x9xbf16>, vector<9x256xbf16>, vector<8x256xf32> -> vector<8x256xf32>
    %c0_4 = arith.constant 0 : index
    %c0_5 = arith.constant 0 : index
    %4 = vector.load %arg3[%c0_4, %c0_5] : memref<8x1xf32, #tpu.memory_space<vmem>>, vector<8x1xf32>
    %5 = vector.broadcast %4 : vector<8x1xf32> to vector<8x256xf32>
    %6 = arith.addf %3, %5 : vector<8x256xf32>
    %cst_6 = arith.constant 0.000000e+00 : f32
    %7 = vector.broadcast %cst_6 : f32 to vector<8x256xf32>
    %8 = arith.maximumf %6, %7 : vector<8x256xf32>
    %c0_7 = arith.constant 0 : index
    %c0_8 = arith.constant 0 : index
    %9 = vector.load %arg4[%c0_7, %c0_8] : memref<8x1xf32, #tpu.memory_space<vmem>>, vector<8x1xf32>
    %10 = vector.broadcast %9 : vector<8x1xf32> to vector<8x256xf32>
    %11 = arith.mulf %8, %10 : vector<8x256xf32>
    %c0_9 = arith.constant 0 : index
    %c0_10 = arith.constant 0 : index
    %12 = vector.load %arg5[%c0_9, %c0_10] : memref<8x1xf32, #tpu.memory_space<vmem>>, vector<8x1xf32>
    %13 = vector.broadcast %12 : vector<8x1xf32> to vector<8x256xf32>
    %14 = arith.addf %11, %13 : vector<8x256xf32>
    %15 = arith.truncf %14 : vector<8x256xf32> to vector<8x256xbf16>
    %c0_11 = arith.constant 0 : index
    %c0_12 = arith.constant 0 : index
    %c0_13 = arith.constant 0 : index
    %16 = vector.load %arg6[%c0_11, %c0_12, %c0_13] : memref<1x8x256xbf16, #tpu.memory_space<vmem>>, vector<1x8x256xbf16>
    %17 = vector.shape_cast %16 : vector<1x8x256xbf16> to vector<8x256xbf16>
    %18 = vector.shape_cast %15 : vector<8x256xbf16> to vector<1x8x256xbf16>
    tpu.vector_store %arg6[%c0_11, %c0_12, %c0_13], %18 {strides = array<i32>} : memref<1x8x256xbf16, #tpu.memory_space<vmem>>, vector<1x8x256xbf16>,
    return
  }
  func.func @transform_0(%arg0: i32) -> (i32, i32, i32) {
    %c0_i32 = arith.constant 0 : i32
    %c0_i32_0 = arith.constant 0 : i32
    %c0_i32_1 = arith.constant 0 : i32
    return %arg0, %c0_i32, %c0_i32_0 : i32, i32, i32
  }
  func.func @transform_1(%arg0: i32) -> (i32, i32) {
    %c0_i32 = arith.constant 0 : i32
    %c0_i32_0 = arith.constant 0 : i32
    %c0_i32_1 = arith.constant 0 : i32
    return %c0_i32, %c0_i32_0 : i32, i32
  }
  func.func @transform_2(%arg0: i32) -> (i32, i32) {
    %c0_i32 = arith.constant 0 : i32
    %c0_i32_0 = arith.constant 0 : i32
    %c0_i32_1 = arith.constant 0 : i32
    return %c0_i32, %c0_i32_0 : i32, i32
  }
  func.func @transform_3(%arg0: i32) -> (i32, i32) {
    %c0_i32 = arith.constant 0 : i32
    %c0_i32_0 = arith.constant 0 : i32
    %c0_i32_1 = arith.constant 0 : i32
    return %c0_i32, %c0_i32_0 : i32, i32
  }
  func.func @transform_4(%arg0: i32) -> (i32, i32) {
    %c0_i32 = arith.constant 0 : i32
    %c0_i32_0 = arith.constant 0 : i32
    %c0_i32_1 = arith.constant 0 : i32
    return %c0_i32, %c0_i32_0 : i32, i32
  }
  func.func @transform_5(%arg0: i32) -> (i32, i32, i32) {
    %c0_i32 = arith.constant 0 : i32
    %c0_i32_0 = arith.constant 0 : i32
    %c0_i32_1 = arith.constant 0 : i32
    return %arg0, %c0_i32, %c0_i32_0 : i32, i32, i32
  }
}

module attributes {stable_mosaic.version = 11 : i64} {
  func.func @_conv_bn_relu_kernel(%arg0: i32, %arg1: memref<1x72x256xbf16, #tpu.memory_space<vmem>>, %arg2: memref<16x72xbf16, #tpu.memory_space<vmem>>, %arg3: memref<16x1xf32, #tpu.memory_space<vmem>>, %arg4: memref<16x1xf32, #tpu.memory_space<vmem>>, %arg5: memref<16x1xf32, #tpu.memory_space<vmem>>, %arg6: memref<1x16x256xbf16, #tpu.memory_space<vmem>>) attributes {dimension_semantics = [#tpu.dimension_semantics<parallel>], iteration_bounds = array<i64: 4>, scalar_prefetch = 0 : i64, scratch_operands = 0 : i64, tpu.core_type = #tpu.core_type<tc>, window_params = [{transform_indices = @transform_0, window_bounds = array<i64: 1, 72, 256>}, {pipeline_mode = #tpu.pipeline_mode<synchronous>, transform_indices = @transform_1, window_bounds = array<i64: 16, 72>}, {pipeline_mode = #tpu.pipeline_mode<synchronous>, transform_indices = @transform_2, window_bounds = array<i64: 16, 1>}, {pipeline_mode = #tpu.pipeline_mode<synchronous>, transform_indices = @transform_3, window_bounds = array<i64: 16, 1>}, {pipeline_mode = #tpu.pipeline_mode<synchronous>, transform_indices = @transform_4, window_bounds = array<i64: 16, 1>}, {transform_indices = @transform_5, window_bounds = array<i64: 1, 16, 256>}]} {
    %c0 = arith.constant 0 : index
    %c0_0 = arith.constant 0 : index
    %0 = vector.load %arg2[%c0, %c0_0] : memref<16x72xbf16, #tpu.memory_space<vmem>>, vector<16x72xbf16>
    %c0_1 = arith.constant 0 : index
    %c0_2 = arith.constant 0 : index
    %c0_3 = arith.constant 0 : index
    %1 = vector.load %arg1[%c0_1, %c0_2, %c0_3] : memref<1x72x256xbf16, #tpu.memory_space<vmem>>, vector<1x72x256xbf16>
    %2 = vector.shape_cast %1 : vector<1x72x256xbf16> to vector<72x256xbf16>
    %cst = arith.constant dense<0.000000e+00> : vector<16x256xf32>
    %3 = tpu.matmul %0, %2, %cst {dimension_numbers = #tpu.dot_dimension_numbers<[1], [0], [0], [1], [0, 0, 1, 1], [], []>} : vector<16x72xbf16>, vector<72x256xbf16>, vector<16x256xf32> -> vector<16x256xf32>
    %c0_4 = arith.constant 0 : index
    %c0_5 = arith.constant 0 : index
    %4 = vector.load %arg3[%c0_4, %c0_5] : memref<16x1xf32, #tpu.memory_space<vmem>>, vector<16x1xf32>
    %5 = vector.broadcast %4 : vector<16x1xf32> to vector<16x256xf32>
    %6 = arith.addf %3, %5 : vector<16x256xf32>
    %cst_6 = arith.constant 0.000000e+00 : f32
    %7 = vector.broadcast %cst_6 : f32 to vector<16x256xf32>
    %8 = arith.maximumf %6, %7 : vector<16x256xf32>
    %c0_7 = arith.constant 0 : index
    %c0_8 = arith.constant 0 : index
    %9 = vector.load %arg4[%c0_7, %c0_8] : memref<16x1xf32, #tpu.memory_space<vmem>>, vector<16x1xf32>
    %10 = vector.broadcast %9 : vector<16x1xf32> to vector<16x256xf32>
    %11 = arith.mulf %8, %10 : vector<16x256xf32>
    %c0_9 = arith.constant 0 : index
    %c0_10 = arith.constant 0 : index
    %12 = vector.load %arg5[%c0_9, %c0_10] : memref<16x1xf32, #tpu.memory_space<vmem>>, vector<16x1xf32>
    %13 = vector.broadcast %12 : vector<16x1xf32> to vector<16x256xf32>
    %14 = arith.addf %11, %13 : vector<16x256xf32>
    %15 = arith.truncf %14 : vector<16x256xf32> to vector<16x256xbf16>
    %c0_11 = arith.constant 0 : index
    %c0_12 = arith.constant 0 : index
    %c0_13 = arith.constant 0 : index
    %16 = vector.load %arg6[%c0_11, %c0_12, %c0_13] : memref<1x16x256xbf16, #tpu.memory_space<vmem>>, vector<1x16x256xbf16>
    %17 = vector.shape_cast %16 : vector<1x16x256xbf16> to vector<16x256xbf16>
    %18 = vector.shape_cast %15 : vector<16x256xbf16> to vector<1x16x256xbf16>
    tpu.vector_store %arg6[%c0_11, %c0_12, %c0_13], %18 {strides = array<i32>} : memref<1x16x256xbf16, #tpu.memory_space<vmem>>, vector<1x16x256xbf16>,
    return
  }
  func.func @transform_0(%arg0: i32) -> (i32, i32, i32) {
    %c0_i32 = arith.constant 0 : i32
    %c0_i32_0 = arith.constant 0 : i32
    %c0_i32_1 = arith.constant 0 : i32
    return %arg0, %c0_i32, %c0_i32_0 : i32, i32, i32
  }
  func.func @transform_1(%arg0: i32) -> (i32, i32) {
    %c0_i32 = arith.constant 0 : i32
    %c0_i32_0 = arith.constant 0 : i32
    %c0_i32_1 = arith.constant 0 : i32
    return %c0_i32, %c0_i32_0 : i32, i32
  }
  func.func @transform_2(%arg0: i32) -> (i32, i32) {
    %c0_i32 = arith.constant 0 : i32
    %c0_i32_0 = arith.constant 0 : i32
    %c0_i32_1 = arith.constant 0 : i32
    return %c0_i32, %c0_i32_0 : i32, i32
  }
  func.func @transform_3(%arg0: i32) -> (i32, i32) {
    %c0_i32 = arith.constant 0 : i32
    %c0_i32_0 = arith.constant 0 : i32
    %c0_i32_1 = arith.constant 0 : i32
    return %c0_i32, %c0_i32_0 : i32, i32
  }
  func.func @transform_4(%arg0: i32) -> (i32, i32) {
    %c0_i32 = arith.constant 0 : i32
    %c0_i32_0 = arith.constant 0 : i32
    %c0_i32_1 = arith.constant 0 : i32
    return %c0_i32, %c0_i32_0 : i32, i32
  }
  func.func @transform_5(%arg0: i32) -> (i32, i32, i32) {
    %c0_i32 = arith.constant 0 : i32
    %c0_i32_0 = arith.constant 0 : i32
    %c0_i32_1 = arith.constant 0 : i32
    return %arg0, %c0_i32, %c0_i32_0 : i32, i32, i32
  }
}

module attributes {stable_mosaic.version = 11 : i64} {
  func.func @_conv_bn_relu_kernel(%arg0: i32, %arg1: memref<1x144x256xbf16, #tpu.memory_space<vmem>>, %arg2: memref<16x144xbf16, #tpu.memory_space<vmem>>, %arg3: memref<16x1xf32, #tpu.memory_space<vmem>>, %arg4: memref<16x1xf32, #tpu.memory_space<vmem>>, %arg5: memref<16x1xf32, #tpu.memory_space<vmem>>, %arg6: memref<1x16x256xbf16, #tpu.memory_space<vmem>>) attributes {dimension_semantics = [#tpu.dimension_semantics<parallel>], iteration_bounds = array<i64: 4>, scalar_prefetch = 0 : i64, scratch_operands = 0 : i64, tpu.core_type = #tpu.core_type<tc>, window_params = [{transform_indices = @transform_0, window_bounds = array<i64: 1, 144, 256>}, {pipeline_mode = #tpu.pipeline_mode<synchronous>, transform_indices = @transform_1, window_bounds = array<i64: 16, 144>}, {pipeline_mode = #tpu.pipeline_mode<synchronous>, transform_indices = @transform_2, window_bounds = array<i64: 16, 1>}, {pipeline_mode = #tpu.pipeline_mode<synchronous>, transform_indices = @transform_3, window_bounds = array<i64: 16, 1>}, {pipeline_mode = #tpu.pipeline_mode<synchronous>, transform_indices = @transform_4, window_bounds = array<i64: 16, 1>}, {transform_indices = @transform_5, window_bounds = array<i64: 1, 16, 256>}]} {
    %c0 = arith.constant 0 : index
    %c0_0 = arith.constant 0 : index
    %0 = vector.load %arg2[%c0, %c0_0] : memref<16x144xbf16, #tpu.memory_space<vmem>>, vector<16x144xbf16>
    %c0_1 = arith.constant 0 : index
    %c0_2 = arith.constant 0 : index
    %c0_3 = arith.constant 0 : index
    %1 = vector.load %arg1[%c0_1, %c0_2, %c0_3] : memref<1x144x256xbf16, #tpu.memory_space<vmem>>, vector<1x144x256xbf16>
    %2 = vector.shape_cast %1 : vector<1x144x256xbf16> to vector<144x256xbf16>
    %cst = arith.constant dense<0.000000e+00> : vector<16x256xf32>
    %3 = tpu.matmul %0, %2, %cst {dimension_numbers = #tpu.dot_dimension_numbers<[1], [0], [0], [1], [0, 0, 1, 1], [], []>} : vector<16x144xbf16>, vector<144x256xbf16>, vector<16x256xf32> -> vector<16x256xf32>
    %c0_4 = arith.constant 0 : index
    %c0_5 = arith.constant 0 : index
    %4 = vector.load %arg3[%c0_4, %c0_5] : memref<16x1xf32, #tpu.memory_space<vmem>>, vector<16x1xf32>
    %5 = vector.broadcast %4 : vector<16x1xf32> to vector<16x256xf32>
    %6 = arith.addf %3, %5 : vector<16x256xf32>
    %cst_6 = arith.constant 0.000000e+00 : f32
    %7 = vector.broadcast %cst_6 : f32 to vector<16x256xf32>
    %8 = arith.maximumf %6, %7 : vector<16x256xf32>
    %c0_7 = arith.constant 0 : index
    %c0_8 = arith.constant 0 : index
    %9 = vector.load %arg4[%c0_7, %c0_8] : memref<16x1xf32, #tpu.memory_space<vmem>>, vector<16x1xf32>
    %10 = vector.broadcast %9 : vector<16x1xf32> to vector<16x256xf32>
    %11 = arith.mulf %8, %10 : vector<16x256xf32>
    %c0_9 = arith.constant 0 : index
    %c0_10 = arith.constant 0 : index
    %12 = vector.load %arg5[%c0_9, %c0_10] : memref<16x1xf32, #tpu.memory_space<vmem>>, vector<16x1xf32>
    %13 = vector.broadcast %12 : vector<16x1xf32> to vector<16x256xf32>
    %14 = arith.addf %11, %13 : vector<16x256xf32>
    %15 = arith.truncf %14 : vector<16x256xf32> to vector<16x256xbf16>
    %c0_11 = arith.constant 0 : index
    %c0_12 = arith.constant 0 : index
    %c0_13 = arith.constant 0 : index
    %16 = vector.load %arg6[%c0_11, %c0_12, %c0_13] : memref<1x16x256xbf16, #tpu.memory_space<vmem>>, vector<1x16x256xbf16>
    %17 = vector.shape_cast %16 : vector<1x16x256xbf16> to vector<16x256xbf16>
    %18 = vector.shape_cast %15 : vector<16x256xbf16> to vector<1x16x256xbf16>
    tpu.vector_store %arg6[%c0_11, %c0_12, %c0_13], %18 {strides = array<i32>} : memref<1x16x256xbf16, #tpu.memory_space<vmem>>, vector<1x16x256xbf16>,
    return
  }
  func.func @transform_0(%arg0: i32) -> (i32, i32, i32) {
    %c0_i32 = arith.constant 0 : i32
    %c0_i32_0 = arith.constant 0 : i32
    %c0_i32_1 = arith.constant 0 : i32
    return %arg0, %c0_i32, %c0_i32_0 : i32, i32, i32
  }
  func.func @transform_1(%arg0: i32) -> (i32, i32) {
    %c0_i32 = arith.constant 0 : i32
    %c0_i32_0 = arith.constant 0 : i32
    %c0_i32_1 = arith.constant 0 : i32
    return %c0_i32, %c0_i32_0 : i32, i32
  }
  func.func @transform_2(%arg0: i32) -> (i32, i32) {
    %c0_i32 = arith.constant 0 : i32
    %c0_i32_0 = arith.constant 0 : i32
    %c0_i32_1 = arith.constant 0 : i32
    return %c0_i32, %c0_i32_0 : i32, i32
  }
  func.func @transform_3(%arg0: i32) -> (i32, i32) {
    %c0_i32 = arith.constant 0 : i32
    %c0_i32_0 = arith.constant 0 : i32
    %c0_i32_1 = arith.constant 0 : i32
    return %c0_i32, %c0_i32_0 : i32, i32
  }
  func.func @transform_4(%arg0: i32) -> (i32, i32) {
    %c0_i32 = arith.constant 0 : i32
    %c0_i32_0 = arith.constant 0 : i32
    %c0_i32_1 = arith.constant 0 : i32
    return %c0_i32, %c0_i32_0 : i32, i32
  }
  func.func @transform_5(%arg0: i32) -> (i32, i32, i32) {
    %c0_i32 = arith.constant 0 : i32
    %c0_i32_0 = arith.constant 0 : i32
    %c0_i32_1 = arith.constant 0 : i32
    return %arg0, %c0_i32, %c0_i32_0 : i32, i32, i32
  }
}

module attributes {stable_mosaic.version = 11 : i64} {
  func.func @_mlp_kernel(%arg0: memref<4x4096xbf16, #tpu.memory_space<vmem>>, %arg1: memref<4096x512xbf16, #tpu.memory_space<vmem>>, %arg2: memref<1x512xf32, #tpu.memory_space<vmem>>, %arg3: memref<512x512xbf16, #tpu.memory_space<vmem>>, %arg4: memref<1x512xf32, #tpu.memory_space<vmem>>, %arg5: memref<512x128xbf16, #tpu.memory_space<vmem>>, %arg6: memref<1x128xf32, #tpu.memory_space<vmem>>, %arg7: memref<4x128xf32, #tpu.memory_space<vmem>>) attributes {dimension_semantics = [], scalar_prefetch = 0 : i64, scratch_operands = 0 : i64, tpu.core_type = #tpu.core_type<tc>} {
    %c0 = arith.constant 0 : index
    %c0_0 = arith.constant 0 : index
    %0 = vector.load %arg0[%c0, %c0_0] : memref<4x4096xbf16, #tpu.memory_space<vmem>>, vector<4x4096xbf16>
    %c0_1 = arith.constant 0 : index
    %c0_2 = arith.constant 0 : index
    %1 = vector.load %arg1[%c0_1, %c0_2] : memref<4096x512xbf16, #tpu.memory_space<vmem>>, vector<4096x512xbf16>
    %cst = arith.constant dense<0.000000e+00> : vector<4x512xf32>
    %2 = tpu.matmul %0, %1, %cst {dimension_numbers = #tpu.dot_dimension_numbers<[1], [0], [0], [1], [0, 0, 1, 1], [], []>} : vector<4x4096xbf16>, vector<4096x512xbf16>, vector<4x512xf32> -> vector<4x512xf32>
    %c0_3 = arith.constant 0 : index
    %c0_4 = arith.constant 0 : index
    %3 = vector.load %arg2[%c0_3, %c0_4] : memref<1x512xf32, #tpu.memory_space<vmem>>, vector<1x512xf32>
    %4 = vector.broadcast %3 : vector<1x512xf32> to vector<4x512xf32>
    %5 = arith.addf %2, %4 : vector<4x512xf32>
    %cst_5 = arith.constant 0.000000e+00 : f32
    %6 = vector.broadcast %cst_5 : f32 to vector<4x512xf32>
    %7 = arith.maximumf %5, %6 : vector<4x512xf32>
    %8 = arith.truncf %7 : vector<4x512xf32> to vector<4x512xbf16>
    %c0_6 = arith.constant 0 : index
    %c0_7 = arith.constant 0 : index
    %9 = vector.load %arg3[%c0_6, %c0_7] : memref<512x512xbf16, #tpu.memory_space<vmem>>, vector<512x512xbf16>
    %cst_8 = arith.constant dense<0.000000e+00> : vector<4x512xf32>
    %10 = tpu.matmul %8, %9, %cst_8 {dimension_numbers = #tpu.dot_dimension_numbers<[1], [0], [0], [1], [0, 0, 1, 1], [], []>} : vector<4x512xbf16>, vector<512x512xbf16>, vector<4x512xf32> -> vector<4x512xf32>
    %c0_9 = arith.constant 0 : index
    %c0_10 = arith.constant 0 : index
    %11 = vector.load %arg4[%c0_9, %c0_10] : memref<1x512xf32, #tpu.memory_space<vmem>>, vector<1x512xf32>
    %12 = vector.broadcast %11 : vector<1x512xf32> to vector<4x512xf32>
    %13 = arith.addf %10, %12 : vector<4x512xf32>
    %cst_11 = arith.constant 0.000000e+00 : f32
    %14 = vector.broadcast %cst_11 : f32 to vector<4x512xf32>
    %15 = arith.maximumf %13, %14 : vector<4x512xf32>
    %16 = arith.truncf %15 : vector<4x512xf32> to vector<4x512xbf16>
    %c0_12 = arith.constant 0 : index
    %c0_13 = arith.constant 0 : index
    %17 = vector.load %arg5[%c0_12, %c0_13] : memref<512x128xbf16, #tpu.memory_space<vmem>>, vector<512x128xbf16>
    %cst_14 = arith.constant dense<0.000000e+00> : vector<4x128xf32>
    %18 = tpu.matmul %16, %17, %cst_14 {dimension_numbers = #tpu.dot_dimension_numbers<[1], [0], [0], [1], [0, 0, 1, 1], [], []>} : vector<4x512xbf16>, vector<512x128xbf16>, vector<4x128xf32> -> vector<4x128xf32>
    %c0_15 = arith.constant 0 : index
    %c0_16 = arith.constant 0 : index
    %19 = vector.load %arg6[%c0_15, %c0_16] : memref<1x128xf32, #tpu.memory_space<vmem>>, vector<1x128xf32>
    %20 = vector.broadcast %19 : vector<1x128xf32> to vector<4x128xf32>
    %21 = arith.addf %18, %20 : vector<4x128xf32>
    %c0_17 = arith.constant 0 : index
    %c0_18 = arith.constant 0 : index
    %22 = vector.load %arg7[%c0_17, %c0_18] : memref<4x128xf32, #tpu.memory_space<vmem>>, vector<4x128xf32>
    tpu.vector_store %arg7[%c0_17, %c0_18], %21 {strides = array<i32>} : memref<4x128xf32, #tpu.memory_space<vmem>>, vector<4x128xf32>,
    return
  }
}

</mosaic_0001>

<llo_original>
// kernel: siamese_forward.4
$region0: #{siamese_forward.4}
  #allocation0 [shape = 'u32[]', space=smem, size = 0x4, offset = 0x4, fixed_abs, tag = 'smem constant byte address 0x4 - core index']
  #allocation1 [shape = 'u32[144,128]{1,0:T(1,128)}', space=vmem, size = 0x12000, scoped, tag = 'internal scratch']
  %s0 = inlined_call_operand.vmem [shape: bf16[4,9,256], index: 0, kind: input, shape index: {}]
  %s1 = inlined_call_operand.hbm [shape: bf16[8,9], index: 1, kind: input, shape index: {}]
  %s2 = inlined_call_operand.vmem [shape: f32[8,1], index: 2, kind: input, shape index: {}]
  %s3 = inlined_call_operand.vmem [shape: f32[8,1], index: 3, kind: input, shape index: {}]
  %s4 = inlined_call_operand.vmem [shape: f32[8,1], index: 4, kind: input, shape index: {}]
  %s5 = inlined_call_operand.vmem [shape: bf16[4,8,256], index: 5, kind: output, shape index: {}]
  %s6 = sld [smem:[#allocation0]]
  $region57: #{siamese_forward.4} parent=0
    _
  %s8 = ssub.s32 1, %s6
  %s9 = scalar_select 0, %s8, %s6
  $region1: #{siamese_forward.4} parent=0
    #allocation2 [shape = 'u8[2048]{0}', space=vmem, size = 0x800, scoped, tag = 'input window, operand 1, single buffered']
    #allocation3 [shape = 's32[2]{0}', space=sflag, size = 0x8, scoped, tag = 'scoped memory for siamese_forward.4']
    %10 = vsyncpa [#allocation3], 0
    loop: start=0, step=1, limit=6
    $region2: #{siamese_forward.4} parent=1 // loop_pre_header
      _
    $region3: #{siamese_forward.4} parent=1 // loop_header
      %s12 = sphi 0, %s16
      %p13 = scmp.ge.s32.totalorder %s12, 6
      %s22 = sphi 0, %s24
      %s25 = sphi 0, %s22
      %s26 = sphi 0, %s25
      %s42 = sphi 0, %s26
      %s46 = sphi 0, %s46
      %s48 = sphi 0, %s46
      %s49 = sphi 0, %s48
      %s63 = sphi 0, %s49
      %s67 = sphi 0, %s67
      %s69 = sphi 0, %s67
      %s70 = sphi 0, %s69
      %s84 = sphi 0, %s70
      %s88 = sphi 0, %s88
      %s90 = sphi 0, %s88
      %s91 = sphi 0, %s90
      %s105 = sphi 0, %s91
      %s109 = sphi 0, %s109
      %s111 = sphi 0, %s109
      %s112 = sphi 0, %s111
      %s126 = sphi 0, %s112
      %s132 = sphi 0, %s134
      %s135 = sphi 0, %s132
      %s136 = sphi 0, %s135
      %s152 = sphi 0, %s136
    $region4: #{siamese_forward.4} parent=1 // loop_header_branch
      %15 = sbr.rel (%p13) target = $region8
    $region5: #{siamese_forward.4} parent=1 // loop_body
      %s17 = ssub.s32 %s12, 1
      %s18 = ssub.s32 %s12, 2
      %s19 = sadd.s32 %s12, 1
      %s20 = ssub.s32 %s12, %s19
      %p21 = scmp.eq.s32.totalorder %s20, 0
      %s23 = sadd.s32 %s22, 1
      %s24 = scalar_select %p21, %s22, %s23
      %p27 = pneg %p21
      %p28 = scmp.eq.s32.totalorder %s12, 3
      %p29 = por %p27, %p28
      %p30 = scmp.ne.s32.totalorder %s22, %s25
      %p31 = scmp.eq.s32.totalorder %s12, 0
      %p32 = por %p30, %p31
      %p33 = scmp.ne.s32.totalorder %s22, %s25
      %p34 = scmp.eq.s32.totalorder %s17, 3
      %p35 = por %p33, %p34
      %p36 = scmp.ne.s32.totalorder %s25, %s26
      %p37 = scmp.eq.s32.totalorder %s17, 0
      %p38 = por %p36, %p37
      %p39 = scmp.ne.s32.totalorder %s25, %s26
      %p40 = scmp.eq.s32.totalorder %s18, 3
      %p41 = por %p39, %p40
      %p43 = scmp.ne.s32.totalorder %s26, %s42
      %p44 = scmp.eq.s32.totalorder %s18, 0
      %p45 = por %p43, %p44
      %s47 = sadd.s32 %s46, 1
      %p50 = scmp.eq.s32.totalorder %s12, 3
      %p51 = scmp.ne.s32.totalorder %s46, %s48
      %p52 = scmp.eq.s32.totalorder %s12, 0
      %p53 = por %p51, %p52
      %p54 = scmp.ne.s32.totalorder %s46, %s48
      %p55 = scmp.eq.s32.totalorder %s17, 3
      %p56 = por %p54, %p55
      %p57 = scmp.ne.s32.totalorder %s48, %s49
      %p58 = scmp.eq.s32.totalorder %s17, 0
      %p59 = por %p57, %p58
      %p60 = scmp.ne.s32.totalorder %s48, %s49
      %p61 = scmp.eq.s32.totalorder %s18, 3
      %p62 = por %p60, %p61
      %p64 = scmp.ne.s32.totalorder %s49, %s63
      %p65 = scmp.eq.s32.totalorder %s18, 0
      %p66 = por %p64, %p65
      %s68 = sadd.s32 %s67, 1
      %p71 = scmp.eq.s32.totalorder %s12, 3
      %p72 = scmp.ne.s32.totalorder %s67, %s69
      %p73 = scmp.eq.s32.totalorder %s12, 0
      %p74 = por %p72, %p73
      %p75 = scmp.ne.s32.totalorder %s67, %s69
      %p76 = scmp.eq.s32.totalorder %s17, 3
      %p77 = por %p75, %p76
      %p78 = scmp.ne.s32.totalorder %s69, %s70
      %p79 = scmp.eq.s32.totalorder %s17, 0
      %p80 = por %p78, %p79
      %p81 = scmp.ne.s32.totalorder %s69, %s70
      %p82 = scmp.eq.s32.totalorder %s18, 3
      %p83 = por %p81, %p82
      %p85 = scmp.ne.s32.totalorder %s70, %s84
      %p86 = scmp.eq.s32.totalorder %s18, 0
      %p87 = por %p85, %p86
      %s89 = sadd.s32 %s88, 1
      %p92 = scmp.eq.s32.totalorder %s12, 3
      %p93 = scmp.ne.s32.totalorder %s88, %s90
      %p94 = scmp.eq.s32.totalorder %s12, 0
      %p95 = por %p93, %p94
      %p96 = scmp.ne.s32.totalorder %s88, %s90
      %p97 = scmp.eq.s32.totalorder %s17, 3
      %p98 = por %p96, %p97
      %p99 = scmp.ne.s32.totalorder %s90, %s91
      %p100 = scmp.eq.s32.totalorder %s17, 0
      %p101 = por %p99, %p100
      %p102 = scmp.ne.s32.totalorder %s90, %s91
      %p103 = scmp.eq.s32.totalorder %s18, 3
      %p104 = por %p102, %p103
      %p106 = scmp.ne.s32.totalorder %s91, %s105
      %p107 = scmp.eq.s32.totalorder %s18, 0
      %p108 = por %p106, %p107
      %s110 = sadd.s32 %s109, 1
      %p113 = scmp.eq.s32.totalorder %s12, 3
      %p114 = scmp.ne.s32.totalorder %s109, %s111
      %p115 = scmp.eq.s32.totalorder %s12, 0
      %p116 = por %p114, %p115
      %p117 = scmp.ne.s32.totalorder %s109, %s111
      %p118 = scmp.eq.s32.totalorder %s17, 3
      %p119 = por %p117, %p118
      %p120 = scmp.ne.s32.totalorder %s111, %s112
      %p121 = scmp.eq.s32.totalorder %s17, 0
      %p122 = por %p120, %p121
      %p123 = scmp.ne.s32.totalorder %s111, %s112
      %p124 = scmp.eq.s32.totalorder %s18, 3
      %p125 = por %p123, %p124
      %p127 = scmp.ne.s32.totalorder %s112, %s126
      %p128 = scmp.eq.s32.totalorder %s18, 0
      %p129 = por %p127, %p128
      %s130 = ssub.s32 %s12, %s19
      %p131 = scmp.eq.s32.totalorder %s130, 0
      %s133 = sadd.s32 %s132, 1
      %s134 = scalar_select %p131, %s132, %s133
      %p137 = pneg %p131
      %p138 = scmp.eq.s32.totalorder %s12, 3
      %p139 = por %p137, %p138
      %p140 = scmp.ne.s32.totalorder %s132, %s135
      %p141 = scmp.eq.s32.totalorder %s12, 0
      %p142 = por %p140, %p141
      %p143 = scmp.ne.s32.totalorder %s132, %s135
      %p144 = scmp.eq.s32.totalorder %s17, 3
      %p145 = por %p143, %p144
      %p146 = scmp.ne.s32.totalorder %s135, %s136
      %p147 = scmp.eq.s32.totalorder %s17, 0
      %p148 = por %p146, %p147
      %p149 = scmp.ne.s32.totalorder %s135, %s136
      %p150 = scmp.eq.s32.totalorder %s18, 3
      %p151 = por %p149, %p150
      %p153 = scmp.ne.s32.totalorder %s136, %s152
      %p154 = scmp.eq.s32.totalorder %s18, 0
      %p155 = por %p153, %p154
      %p156 = scmp.le.s32.totalorder 1, %s12
      %p157 = scmp.lt.s32.totalorder %s12, 5
      %p158 = pnand %p156, %p157
      %p159 = pneg %p158
      // Predicated region
      $region9: #{siamese_forward.4} parent=5 // pred_check
        _
      $region10: #{siamese_forward.4} parent=5 // pred_check_branch
        %161 = sbr.rel (%p158) target = $region12
      $region11: #{siamese_forward.4} parent=5 // pred_region
        %s162 = ssub.s32 %s12, 1
        // Predicated region
        $region13: #{siamese_forward.4} parent=11 // pred_check
          %p163 = pneg %p59
        $region14: #{siamese_forward.4} parent=11 // pred_check_branch
          %165 = sbr.rel (%p163) target = $region16
        $region15: #{siamese_forward.4} parent=11 // pred_region
          %s167 = ssub.s32 64, 64
          %168 = vsyncadd [#allocation3], %s167
          %s170 = sshll.u32 [#allocation2], 4
          %s171 = int_to_ptr.vmem [resolvable:$true] %s170
          %173 = dma.hbm_to_vmem [thread:$0]  %s1, 64, %s171, [#allocation3]
        $region16: #{siamese_forward.4} parent=11 // pred_fallthru
          _
        // Predicated region
        $region17: #{siamese_forward.4} parent=11 // pred_check
          %p174 = pneg %p80
        $region18: #{siamese_forward.4} parent=11 // pred_check_branch
          %176 = sbr.rel (%p174) target = $region20
        $region19: #{siamese_forward.4} parent=11 // pred_region
          _
        $region20: #{siamese_forward.4} parent=11 // pred_fallthru
          _
        // Predicated region
        $region21: #{siamese_forward.4} parent=11 // pred_check
          %p177 = pneg %p101
        $region22: #{siamese_forward.4} parent=11 // pred_check_branch
          %179 = sbr.rel (%p177) target = $region24
        $region23: #{siamese_forward.4} parent=11 // pred_region
          _
        $region24: #{siamese_forward.4} parent=11 // pred_fallthru
          _
        // Predicated region
        $region25: #{siamese_forward.4} parent=11 // pred_check
          %p180 = pneg %p122
        $region26: #{siamese_forward.4} parent=11 // pred_check_branch
          %182 = sbr.rel (%p180) target = $region28
        $region27: #{siamese_forward.4} parent=11 // pred_region
          _
        $region28: #{siamese_forward.4} parent=11 // pred_fallthru
          _
      $region12: #{siamese_forward.4} parent=5 // pred_fallthru
        _
      %p183 = scmp.lt.s32.totalorder %s12, 4
      // Predicated region
      $region29: #{siamese_forward.4} parent=5 // pred_check
        %p184 = pneg %p183
      $region30: #{siamese_forward.4} parent=5 // pred_check_branch
        %186 = sbr.rel (%p184) target = $region32
      $region31: #{siamese_forward.4} parent=5 // pred_region
        // Predicated region
        $region33: #{siamese_forward.4} parent=31 // pred_check
          %p187 = pneg %p32
        $region34: #{siamese_forward.4} parent=31 // pred_check_branch
          %189 = sbr.rel (%p187) target = $region36
        $region35: #{siamese_forward.4} parent=31 // pred_region
          %p190 = scmp.lt.s32.totalorder %s12, 3
          %s191 = scalar_select %p190, %s12, 3
          %s192 = smul.addr %s191, 4
          %s193 = smul.addr %s192, 4
          %s194 = scalar_lea.vmem %s0, %s193
        $region36: #{siamese_forward.4} parent=31 // pred_fallthru
          _
      $region32: #{siamese_forward.4} parent=5 // pred_fallthru
        _
      %p195 = scmp.le.s32.totalorder 1, %s12
      %p196 = scmp.lt.s32.totalorder %s12, 5
      %p197 = pnand %p195, %p196
      %p198 = pneg %p197
      // Predicated region
      $region37: #{siamese_forward.4} parent=5 // pred_check
        _
      $region38: #{siamese_forward.4} parent=5 // pred_check_branch
        %200 = sbr.rel (%p197) target = $region40
      $region39: #{siamese_forward.4} parent=5 // pred_region
        %s201 = ssub.s32 %s12, 1
        // Predicated region
        $region41: #{siamese_forward.4} parent=39 // pred_check
          %p202 = pneg %p59
        $region42: #{siamese_forward.4} parent=39 // pred_check_branch
          %204 = sbr.rel (%p202) target = $region44
        $region43: #{siamese_forward.4} parent=39 // pred_region
          %205 = dma.done [#allocation3], 64
        $region44: #{siamese_forward.4} parent=39 // pred_fallthru
          _
        %p206 = scmp.lt.s32.totalorder %s17, 3
        %s207 = scalar_select %p206, %s17, 3
        %s208 = smul.addr %s207, 4
        %s209 = smul.addr %s208, 4
        %s210 = scalar_lea.vmem %s0, %s209
        %p211 = pneg %p38
        %p212 = pneg %p35
        %p213 = pneg %p59
        %p214 = pneg %p56
        %p215 = pneg %p80
        %p216 = pneg %p77
        %p217 = pneg %p101
        %p218 = pneg %p98
        %p219 = pneg %p122
        %p220 = pneg %p119
        %p221 = pneg %p148
        %p222 = pneg %p145
        %p223 = scmp.lt.s32.totalorder %s17, 3
        %s224 = scalar_select %p223, %s17, 3
        %s225 = smul.addr %s224, 2
        %s226 = smul.addr %s225, 4
        %s227 = scalar_lea.vmem %s5, %s226
        %p228 = scmp.lt.s32.totalorder %s17, 3
        %s229 = scalar_select %p228, %s17, 3
        %s230 = smul.addr %s229, 4
        %s231 = smul.addr %s230, 4
        %s232 = scalar_lea.vmem %s0, %s231
        %p233 = scmp.lt.s32.totalorder %s17, 3
        %s234 = scalar_select %p233, %s17, 3
        %s235 = smul.addr %s234, 2
        %s236 = smul.addr %s235, 4
        %s237 = scalar_lea.vmem %s5, %s236
        %v239 = vld [vmem:[#allocation2] sm:$0xf]
        %v240 = vld [vmem:[%s232] sm:$0xff]
        %v241 = vld [vmem:[%s232 + $0x8] sm:$0x11]
        %v242 = vld [vmem:[%s2] sm:$0xff]
        %244 = vset.pattern.permute.xlu0 0
        %245 = vperm.xlu0 %244, %v242
        %v246 = vpop.permute.xlu0 %245
        %v250 = vunpack.c.l.b16 %v240
        %v251 = vunpack.c.h.b16 %v240
        %v252 = vunpack.c.l.b16 %v241
        %v253 = vunpack.c.h.b16 %v241
        %v254 = vpack.c.b16 %v252, %v250
        %v255 = vpack.c.b16 %v253, %v251
        %vm256 = vcmask 72704
        %v258 = vsel %vm256, %v239, 0
        %vm260 = vcmask 1043456
        %vm261 = vcmask 1044480
        %v262 = vsel %vm260, 4294967295, 65535
        %v263 = vsel %vm261, %v262, 0
        %v265 = vand.u32 %v254, %v263
        %v268 = vand.u32 %v255, %v263
        %270 = vmatprep.subr.bf16.mxu0 %v268
        %271 = vmatpush1.bf16.msra.mxu0 %v265
        %272 = vmatprep.subr.bf16.mxu0 0
        %273 = vmatpush1.bf16.msra.mxu0 0
        %274 = vmatprep.subr.bf16.mxu0 0
        %275 = vmatpush1.bf16.msra.mxu0 0
        %276 = vmatprep.subr.bf16.mxu0 0
        %277 = vmatpush1.bf16.msra.mxu0 0
        %278 = vmatprep.subr.bf16.mxu0 0
        %279 = vmatpush1.bf16.msra.mxu0 0
        %280 = vmatprep.subr.bf16.mxu0 0
        %281 = vmatpush1.bf16.msra.mxu0 0
        %282 = vmatprep.subr.bf16.mxu0 0
        %283 = vmatpush1.bf16.msra.mxu0 0
        %284 = vmatprep.subr.bf16.mxu0 0
        %285 = vmatpush1.bf16.msra.mxu0 0
        %286 = vmatprep.subr.bf16.mxu0 0
        %287 = vmatpush1.bf16.msra.mxu0 0
        %288 = vmatprep.subr.bf16.mxu0 0
        %289 = vmatpush1.bf16.msra.mxu0 0
        %290 = vmatprep.subr.bf16.mxu0 0
        %291 = vmatpush1.bf16.msra.mxu0 0
        %292 = vmatprep.subr.bf16.mxu0 0
        %293 = vmatpush1.bf16.msra.mxu0 0
        %294 = vmatprep.subr.bf16.mxu0 0
        %295 = vmatpush1.bf16.msra.mxu0 0
        %296 = vmatprep.subr.bf16.mxu0 0
        %297 = vmatpush1.bf16.msra.mxu0 0
        %298 = vmatprep.subr.bf16.mxu0 0
        %299 = vmatpush1.bf16.msra.mxu0 0
        %300 = vmatprep.subr.bf16.mxu0 0
        %301 = vmatpush1.bf16.msra.mxu0 0
        %302 = vmatprep.mubr.bf16.mxu0 0
        %303 = vmatmul.mubr.bf16.gmra.mrb[0].mxu0 %v258
        %v304 = vpop.f32.mrb[0].mxu0
        %v305 = vadd.f32 %v246, %v304
        %v306 = vpop.f32.mrb[0].mxu0
        %v307 = vadd.f32 %v246, %v306
        %v308 = vpop.f32.mrb[0].mxu0
        %v309 = vpop.f32.mrb[0].mxu0
        %310 = vdwg.mxu0
        %v311 = vmax.f32 %v305, 0.0
        %v312 = vmax.f32 %v307, 0.0
        %v313 = vld [vmem:[%s3] sm:$0xff]
        %315 = vset.pattern.permute.xlu0 0
        %316 = vperm.xlu0 %315, %v313
        %v317 = vpop.permute.xlu0 %316
        %v319 = vmul.f32 %v311, %v317
        %v320 = vmul.f32 %v312, %v317
        %v321 = vld [vmem:[%s4] sm:$0xff]
        %323 = vset.pattern.permute.xlu0 0
        %324 = vperm.xlu0 %323, %v321
        %v325 = vpop.permute.xlu0 %324
        %v327 = vadd.f32 %v319, %v325
        %v328 = vadd.f32 %v320, %v325
        %v329 = vpack.c.bf16 %v327, %v327
        %v330 = vpack.c.bf16 %v328, %v328
        %v333 = vunpack.c.l.b16 %v329
        %v334 = vunpack.c.l.b16 %v330
        %v335 = vpack.c.b16 %v334, %v333
        %337 = vst [vmem:[%s237] sm:$0xff] %v335
        %p338 = scmp.lt.s32.totalorder %s17, 3
        %s339 = scalar_select %p338, %s17, 3
        %s340 = smul.addr %s339, 2
        %s341 = smul.addr %s340, 4
        %s342 = scalar_lea.vmem %s5, %s341
        // Predicated region
        $region45: #{siamese_forward.4} parent=39 // pred_check
          %p343 = pneg %p145
        $region46: #{siamese_forward.4} parent=39 // pred_check_branch
          %345 = sbr.rel (%p343) target = $region48
        $region47: #{siamese_forward.4} parent=39 // pred_region
          _
        $region48: #{siamese_forward.4} parent=39 // pred_fallthru
          _
      $region40: #{siamese_forward.4} parent=5 // pred_fallthru
        _
      %p346 = scmp.le.s32.totalorder 2, %s12
      // Predicated region
      $region49: #{siamese_forward.4} parent=5 // pred_check
        %p347 = pneg %p346
      $region50: #{siamese_forward.4} parent=5 // pred_check_branch
        %349 = sbr.rel (%p347) target = $region52
      $region51: #{siamese_forward.4} parent=5 // pred_region
        %s350 = ssub.s32 %s12, 2
        // Predicated region
        $region53: #{siamese_forward.4} parent=51 // pred_check
          %p351 = pneg %p151
        $region54: #{siamese_forward.4} parent=51 // pred_check_branch
          %353 = sbr.rel (%p351) target = $region56
        $region55: #{siamese_forward.4} parent=51 // pred_region
          %p354 = scmp.lt.s32.totalorder %s18, 3
          %s355 = scalar_select %p354, %s18, 3
          %s356 = smul.addr %s355, 2
          %s357 = smul.addr %s356, 4
          %s358 = scalar_lea.vmem %s5, %s357
        $region56: #{siamese_forward.4} parent=51 // pred_fallthru
          _
      $region52: #{siamese_forward.4} parent=5 // pred_fallthru
        _
    $region6: #{siamese_forward.4} parent=1 // loop_footer
      %s16 = sadd.s32 1, %s12
    $region7: #{siamese_forward.4} parent=1 // loop_footer_branch
      %11 = sbr.rel target = $region3
    $region8: #{siamese_forward.4} parent=1 // loop_exit
      _
    %359 = vsyncpa [#allocation3], 1
    %s360 = scalar_lea.sflag [#allocation3], 1
    %361 = vsyncpa %s360, 1

// kernel: siamese_forward.5
$region0: #{siamese_forward.5}
  #allocation0 [shape = 'u32[]', space=smem, size = 0x4, offset = 0x4, fixed_abs, tag = 'smem constant byte address 0x4 - core index']
  #allocation1 [shape = 'u32[144,128]{1,0:T(1,128)}', space=vmem, size = 0x12000, scoped, tag = 'internal scratch']
  %s0 = inlined_call_operand.vmem [shape: bf16[4,72,256], index: 0, kind: input, shape index: {}]
  %s1 = inlined_call_operand.vmem [shape: bf16[16,72], index: 1, kind: input, shape index: {}]
  %s2 = inlined_call_operand.vmem [shape: f32[16,1], index: 2, kind: input, shape index: {}]
  %s3 = inlined_call_operand.vmem [shape: f32[16,1], index: 3, kind: input, shape index: {}]
  %s4 = inlined_call_operand.vmem [shape: f32[16,1], index: 4, kind: input, shape index: {}]
  %s5 = inlined_call_operand.vmem [shape: bf16[4,16,256], index: 5, kind: output, shape index: {}]
  %s6 = sld [smem:[#allocation0]]
  $region53: #{siamese_forward.5} parent=0
    _
  %s8 = ssub.s32 1, %s6
  %s9 = scalar_select 0, %s8, %s6
  loop: start=0, step=1, limit=6
  $region2: #{siamese_forward.5} parent=0 // loop_pre_header
    _
  $region3: #{siamese_forward.5} parent=0 // loop_header
    %s11 = sphi 0, %s15
    %p12 = scmp.ge.s32.totalorder %s11, 6
    %s21 = sphi 0, %s23
    %s24 = sphi 0, %s21
    %s25 = sphi 0, %s24
    %s41 = sphi 0, %s25
    %s45 = sphi 0, %s45
    %s47 = sphi 0, %s45
    %s48 = sphi 0, %s47
    %s62 = sphi 0, %s48
    %s66 = sphi 0, %s66
    %s68 = sphi 0, %s66
    %s69 = sphi 0, %s68
    %s83 = sphi 0, %s69
    %s87 = sphi 0, %s87
    %s89 = sphi 0, %s87
    %s90 = sphi 0, %s89
    %s104 = sphi 0, %s90
    %s108 = sphi 0, %s108
    %s110 = sphi 0, %s108
    %s111 = sphi 0, %s110
    %s125 = sphi 0, %s111
    %s131 = sphi 0, %s133
    %s134 = sphi 0, %s131
    %s135 = sphi 0, %s134
    %s151 = sphi 0, %s135
  $region4: #{siamese_forward.5} parent=0 // loop_header_branch
    %14 = sbr.rel (%p12) target = $region8
  $region5: #{siamese_forward.5} parent=0 // loop_body
    %s16 = ssub.s32 %s11, 1
    %s17 = ssub.s32 %s11, 2
    %s18 = sadd.s32 %s11, 1
    %s19 = ssub.s32 %s11, %s18
    %p20 = scmp.eq.s32.totalorder %s19, 0
    %s22 = sadd.s32 %s21, 1
    %s23 = scalar_select %p20, %s21, %s22
    %p26 = pneg %p20
    %p27 = scmp.eq.s32.totalorder %s11, 3
    %p28 = por %p26, %p27
    %p29 = scmp.ne.s32.totalorder %s21, %s24
    %p30 = scmp.eq.s32.totalorder %s11, 0
    %p31 = por %p29, %p30
    %p32 = scmp.ne.s32.totalorder %s21, %s24
    %p33 = scmp.eq.s32.totalorder %s16, 3
    %p34 = por %p32, %p33
    %p35 = scmp.ne.s32.totalorder %s24, %s25
    %p36 = scmp.eq.s32.totalorder %s16, 0
    %p37 = por %p35, %p36
    %p38 = scmp.ne.s32.totalorder %s24, %s25
    %p39 = scmp.eq.s32.totalorder %s17, 3
    %p40 = por %p38, %p39
    %p42 = scmp.ne.s32.totalorder %s25, %s41
    %p43 = scmp.eq.s32.totalorder %s17, 0
    %p44 = por %p42, %p43
    %s46 = sadd.s32 %s45, 1
    %p49 = scmp.eq.s32.totalorder %s11, 3
    %p50 = scmp.ne.s32.totalorder %s45, %s47
    %p51 = scmp.eq.s32.totalorder %s11, 0
    %p52 = por %p50, %p51
    %p53 = scmp.ne.s32.totalorder %s45, %s47
    %p54 = scmp.eq.s32.totalorder %s16, 3
    %p55 = por %p53, %p54
    %p56 = scmp.ne.s32.totalorder %s47, %s48
    %p57 = scmp.eq.s32.totalorder %s16, 0
    %p58 = por %p56, %p57
    %p59 = scmp.ne.s32.totalorder %s47, %s48
    %p60 = scmp.eq.s32.totalorder %s17, 3
    %p61 = por %p59, %p60
    %p63 = scmp.ne.s32.totalorder %s48, %s62
    %p64 = scmp.eq.s32.totalorder %s17, 0
    %p65 = por %p63, %p64
    %s67 = sadd.s32 %s66, 1
    %p70 = scmp.eq.s32.totalorder %s11, 3
    %p71 = scmp.ne.s32.totalorder %s66, %s68
    %p72 = scmp.eq.s32.totalorder %s11, 0
    %p73 = por %p71, %p72
    %p74 = scmp.ne.s32.totalorder %s66, %s68
    %p75 = scmp.eq.s32.totalorder %s16, 3
    %p76 = por %p74, %p75
    %p77 = scmp.ne.s32.totalorder %s68, %s69
    %p78 = scmp.eq.s32.totalorder %s16, 0
    %p79 = por %p77, %p78
    %p80 = scmp.ne.s32.totalorder %s68, %s69
    %p81 = scmp.eq.s32.totalorder %s17, 3
    %p82 = por %p80, %p81
    %p84 = scmp.ne.s32.totalorder %s69, %s83
    %p85 = scmp.eq.s32.totalorder %s17, 0
    %p86 = por %p84, %p85
    %s88 = sadd.s32 %s87, 1
    %p91 = scmp.eq.s32.totalorder %s11, 3
    %p92 = scmp.ne.s32.totalorder %s87, %s89
    %p93 = scmp.eq.s32.totalorder %s11, 0
    %p94 = por %p92, %p93
    %p95 = scmp.ne.s32.totalorder %s87, %s89
    %p96 = scmp.eq.s32.totalorder %s16, 3
    %p97 = por %p95, %p96
    %p98 = scmp.ne.s32.totalorder %s89, %s90
    %p99 = scmp.eq.s32.totalorder %s16, 0
    %p100 = por %p98, %p99
    %p101 = scmp.ne.s32.totalorder %s89, %s90
    %p102 = scmp.eq.s32.totalorder %s17, 3
    %p103 = por %p101, %p102
    %p105 = scmp.ne.s32.totalorder %s90, %s104
    %p106 = scmp.eq.s32.totalorder %s17, 0
    %p107 = por %p105, %p106
    %s109 = sadd.s32 %s108, 1
    %p112 = scmp.eq.s32.totalorder %s11, 3
    %p113 = scmp.ne.s32.totalorder %s108, %s110
    %p114 = scmp.eq.s32.totalorder %s11, 0
    %p115 = por %p113, %p114
    %p116 = scmp.ne.s32.totalorder %s108, %s110
    %p117 = scmp.eq.s32.totalorder %s16, 3
    %p118 = por %p116, %p117
    %p119 = scmp.ne.s32.totalorder %s110, %s111
    %p120 = scmp.eq.s32.totalorder %s16, 0
    %p121 = por %p119, %p120
    %p122 = scmp.ne.s32.totalorder %s110, %s111
    %p123 = scmp.eq.s32.totalorder %s17, 3
    %p124 = por %p122, %p123
    %p126 = scmp.ne.s32.totalorder %s111, %s125
    %p127 = scmp.eq.s32.totalorder %s17, 0
    %p128 = por %p126, %p127
    %s129 = ssub.s32 %s11, %s18
    %p130 = scmp.eq.s32.totalorder %s129, 0
    %s132 = sadd.s32 %s131, 1
    %s133 = scalar_select %p130, %s131, %s132
    %p136 = pneg %p130
    %p137 = scmp.eq.s32.totalorder %s11, 3
    %p138 = por %p136, %p137
    %p139 = scmp.ne.s32.totalorder %s131, %s134
    %p140 = scmp.eq.s32.totalorder %s11, 0
    %p141 = por %p139, %p140
    %p142 = scmp.ne.s32.totalorder %s131, %s134
    %p143 = scmp.eq.s32.totalorder %s16, 3
    %p144 = por %p142, %p143
    %p145 = scmp.ne.s32.totalorder %s134, %s135
    %p146 = scmp.eq.s32.totalorder %s16, 0
    %p147 = por %p145, %p146
    %p148 = scmp.ne.s32.totalorder %s134, %s135
    %p149 = scmp.eq.s32.totalorder %s17, 3
    %p150 = por %p148, %p149
    %p152 = scmp.ne.s32.totalorder %s135, %s151
    %p153 = scmp.eq.s32.totalorder %s17, 0
    %p154 = por %p152, %p153
    %p155 = scmp.le.s32.totalorder 1, %s11
    %p156 = scmp.lt.s32.totalorder %s11, 5
    %p157 = pnand %p155, %p156
    %p158 = pneg %p157
    // Predicated region
    $region9: #{siamese_forward.5} parent=5 // pred_check
      _
    $region10: #{siamese_forward.5} parent=5 // pred_check_branch
      %160 = sbr.rel (%p157) target = $region12
    $region11: #{siamese_forward.5} parent=5 // pred_region
      %s161 = ssub.s32 %s11, 1
      // Predicated region
      $region13: #{siamese_forward.5} parent=11 // pred_check
        %p162 = pneg %p58
      $region14: #{siamese_forward.5} parent=11 // pred_check_branch
        %164 = sbr.rel (%p162) target = $region16
      $region15: #{siamese_forward.5} parent=11 // pred_region
        _
      $region16: #{siamese_forward.5} parent=11 // pred_fallthru
        _
      // Predicated region
      $region17: #{siamese_forward.5} parent=11 // pred_check
        %p165 = pneg %p79
      $region18: #{siamese_forward.5} parent=11 // pred_check_branch
        %167 = sbr.rel (%p165) target = $region20
      $region19: #{siamese_forward.5} parent=11 // pred_region
        _
      $region20: #{siamese_forward.5} parent=11 // pred_fallthru
        _
      // Predicated region
      $region21: #{siamese_forward.5} parent=11 // pred_check
        %p168 = pneg %p100
      $region22: #{siamese_forward.5} parent=11 // pred_check_branch
        %170 = sbr.rel (%p168) target = $region24
      $region23: #{siamese_forward.5} parent=11 // pred_region
        _
      $region24: #{siamese_forward.5} parent=11 // pred_fallthru
        _
      // Predicated region
      $region25: #{siamese_forward.5} parent=11 // pred_check
        %p171 = pneg %p121
      $region26: #{siamese_forward.5} parent=11 // pred_check_branch
        %173 = sbr.rel (%p171) target = $region28
      $region27: #{siamese_forward.5} parent=11 // pred_region
        _
      $region28: #{siamese_forward.5} parent=11 // pred_fallthru
        _
    $region12: #{siamese_forward.5} parent=5 // pred_fallthru
      _
    %p174 = scmp.lt.s32.totalorder %s11, 4
    // Predicated region
    $region29: #{siamese_forward.5} parent=5 // pred_check
      %p175 = pneg %p174
    $region30: #{siamese_forward.5} parent=5 // pred_check_branch
      %177 = sbr.rel (%p175) target = $region32
    $region31: #{siamese_forward.5} parent=5 // pred_region
      // Predicated region
      $region33: #{siamese_forward.5} parent=31 // pred_check
        %p178 = pneg %p31
      $region34: #{siamese_forward.5} parent=31 // pred_check_branch
        %180 = sbr.rel (%p178) target = $region36
      $region35: #{siamese_forward.5} parent=31 // pred_region
        %p181 = scmp.lt.s32.totalorder %s11, 3
        %s182 = scalar_select %p181, %s11, 3
        %s183 = smul.addr %s182, 18
        %s184 = smul.addr %s183, 4
        %s185 = scalar_lea.vmem %s0, %s184
      $region36: #{siamese_forward.5} parent=31 // pred_fallthru
        _
    $region32: #{siamese_forward.5} parent=5 // pred_fallthru
      _
    %p186 = scmp.le.s32.totalorder 1, %s11
    %p187 = scmp.lt.s32.totalorder %s11, 5
    %p188 = pnand %p186, %p187
    %p189 = pneg %p188
    // Predicated region
    $region37: #{siamese_forward.5} parent=5 // pred_check
      _
    $region38: #{siamese_forward.5} parent=5 // pred_check_branch
      %191 = sbr.rel (%p188) target = $region40
    $region39: #{siamese_forward.5} parent=5 // pred_region
      %s192 = ssub.s32 %s11, 1
      %p193 = scmp.lt.s32.totalorder %s16, 3
      %s194 = scalar_select %p193, %s16, 3
      %s195 = smul.addr %s194, 18
      %s196 = smul.addr %s195, 4
      %s197 = scalar_lea.vmem %s0, %s196
      %p198 = pneg %p37
      %p199 = pneg %p34
      %p200 = pneg %p58
      %p201 = pneg %p55
      %p202 = pneg %p79
      %p203 = pneg %p76
      %p204 = pneg %p100
      %p205 = pneg %p97
      %p206 = pneg %p121
      %p207 = pneg %p118
      %p208 = pneg %p147
      %p209 = pneg %p144
      %p210 = scmp.lt.s32.totalorder %s16, 3
      %s211 = scalar_select %p210, %s16, 3
      %s212 = smul.addr %s211, 4
      %s213 = smul.addr %s212, 4
      %s214 = scalar_lea.vmem %s5, %s213
      %p215 = scmp.lt.s32.totalorder %s16, 3
      %s216 = scalar_select %p215, %s16, 3
      %s217 = smul.addr %s216, 18
      %s218 = smul.addr %s217, 4
      %s219 = scalar_lea.vmem %s0, %s218
      %p220 = scmp.lt.s32.totalorder %s16, 3
      %s221 = scalar_select %p220, %s16, 3
      %s222 = smul.addr %s221, 4
      %s223 = smul.addr %s222, 4
      %s224 = scalar_lea.vmem %s5, %s223
      %v226 = vld [vmem:[%s1] sm:$0xf]
      %v227 = vld [vmem:[%s1 + $0x4] sm:$0xf]
      %v228 = vld [vmem:[%s219] sm:$0xff]
      %v229 = vld [vmem:[%s219 + $0x8] sm:$0xff]
      %v230 = vld [vmem:[%s219 + $0x10] sm:$0xff]
      %v231 = vld [vmem:[%s219 + $0x18] sm:$0xff]
      %v232 = vld [vmem:[%s219 + $0x20] sm:$0xff]
      %v233 = vld [vmem:[%s219 + $0x28] sm:$0xff]
      %v234 = vld [vmem:[%s219 + $0x30] sm:$0xff]
      %v235 = vld [vmem:[%s219 + $0x38] sm:$0xff]
      %v236 = vld [vmem:[%s219 + $0x40] sm:$0xff]
      %v237 = vld [vmem:[%s2] sm:$0xff]
      %v238 = vld [vmem:[%s2 + $0x8] sm:$0xff]
      %240 = vset.pattern.permute.xlu0 0
      %241 = vperm.xlu0 %240, %v237
      %v242 = vpop.permute.xlu0 %241
      %245 = vset.pattern.permute.xlu0 0
      %246 = vperm.xlu0 %245, %v238
      %v247 = vpop.permute.xlu0 %246
      %v251 = vunpack.c.l.b16 %v226
      %v252 = vunpack.c.l.b16 %v227
      %v253 = vpack.c.b16 %v252, %v251
      %v263 = vunpack.c.l.b16 %v228
      %v264 = vunpack.c.h.b16 %v228
      %v265 = vunpack.c.l.b16 %v229
      %v266 = vunpack.c.h.b16 %v229
      %v267 = vunpack.c.l.b16 %v230
      %v268 = vunpack.c.h.b16 %v230
      %v269 = vunpack.c.l.b16 %v231
      %v270 = vunpack.c.h.b16 %v231
      %v271 = vunpack.c.l.b16 %v232
      %v272 = vunpack.c.h.b16 %v232
      %v273 = vunpack.c.l.b16 %v233
      %v274 = vunpack.c.h.b16 %v233
      %v275 = vunpack.c.l.b16 %v234
      %v276 = vunpack.c.h.b16 %v234
      %v277 = vunpack.c.l.b16 %v235
      %v278 = vunpack.c.h.b16 %v235
      %v279 = vunpack.c.l.b16 %v236
      %v280 = vunpack.c.h.b16 %v236
      %v281 = vpack.c.b16 %v265, %v263
      %v282 = vpack.c.b16 %v266, %v264
      %v283 = vpack.c.b16 %v269, %v267
      %v284 = vpack.c.b16 %v270, %v268
      %v285 = vpack.c.b16 %v273, %v271
      %v286 = vpack.c.b16 %v274, %v272
      %v287 = vpack.c.b16 %v277, %v275
      %v288 = vpack.c.b16 %v278, %v276
      %v289 = vpack.c.b16 %v279, %v279
      %v290 = vpack.c.b16 %v280, %v280
      %vm299 = vcmask 588800
      %v301 = vsel %vm299, %v253, 0
      %vm303 = vcmask 1043456
      %v305 = vsel %vm303, %v289, 0
      %v308 = vsel %vm303, %v290, 0
      %310 = vmatprep.subr.bf16.mxu0 %v282
      %311 = vmatpush1.bf16.msra.mxu0 %v281
      %312 = vmatprep.subr.bf16.mxu0 %v284
      %313 = vmatpush1.bf16.msra.mxu0 %v283
      %314 = vmatprep.subr.bf16.mxu0 %v286
      %315 = vmatpush1.bf16.msra.mxu0 %v285
      %316 = vmatprep.subr.bf16.mxu0 %v288
      %317 = vmatpush1.bf16.msra.mxu0 %v287
      %318 = vmatprep.subr.bf16.mxu0 %v308
      %319 = vmatpush1.bf16.msra.mxu0 %v305
      %320 = vmatprep.subr.bf16.mxu0 0
      %321 = vmatpush1.bf16.msra.mxu0 0
      %322 = vmatprep.subr.bf16.mxu0 0
      %323 = vmatpush1.bf16.msra.mxu0 0
      %324 = vmatprep.subr.bf16.mxu0 0
      %325 = vmatpush1.bf16.msra.mxu0 0
      %326 = vmatprep.subr.bf16.mxu0 0
      %327 = vmatpush1.bf16.msra.mxu0 0
      %328 = vmatprep.subr.bf16.mxu0 0
      %329 = vmatpush1.bf16.msra.mxu0 0
      %330 = vmatprep.subr.bf16.mxu0 0
      %331 = vmatpush1.bf16.msra.mxu0 0
      %332 = vmatprep.subr.bf16.mxu0 0
      %333 = vmatpush1.bf16.msra.mxu0 0
      %334 = vmatprep.subr.bf16.mxu0 0
      %335 = vmatpush1.bf16.msra.mxu0 0
      %336 = vmatprep.subr.bf16.mxu0 0
      %337 = vmatpush1.bf16.msra.mxu0 0
      %338 = vmatprep.subr.bf16.mxu0 0
      %339 = vmatpush1.bf16.msra.mxu0 0
      %340 = vmatprep.subr.bf16.mxu0 0
      %341 = vmatpush1.bf16.msra.mxu0 0
      %342 = vmatprep.mubr.bf16.mxu0 0
      %343 = vmatmul.mubr.bf16.gmra.mrb[0].mxu0 %v301
      %v344 = vpop.f32.mrb[0].mxu0
      %v345 = vadd.f32 %v242, %v344
      %v346 = vpop.f32.mrb[0].mxu0
      %v347 = vadd.f32 %v242, %v346
      %v348 = vpop.f32.mrb[0].mxu0
      %v349 = vadd.f32 %v247, %v348
      %v350 = vpop.f32.mrb[0].mxu0
      %v351 = vadd.f32 %v247, %v350
      %352 = vdwg.mxu0
      %v353 = vmax.f32 %v345, 0.0
      %v354 = vmax.f32 %v347, 0.0
      %v355 = vmax.f32 %v349, 0.0
      %v356 = vmax.f32 %v351, 0.0
      %v357 = vld [vmem:[%s3] sm:$0xff]
      %v358 = vld [vmem:[%s3 + $0x8] sm:$0xff]
      %360 = vset.pattern.permute.xlu0 0
      %361 = vperm.xlu0 %360, %v357
      %v362 = vpop.permute.xlu0 %361
      %365 = vset.pattern.permute.xlu0 0
      %366 = vperm.xlu0 %365, %v358
      %v367 = vpop.permute.xlu0 %366
      %v369 = vmul.f32 %v353, %v362
      %v370 = vmul.f32 %v354, %v362
      %v371 = vmul.f32 %v355, %v367
      %v372 = vmul.f32 %v356, %v367
      %v373 = vld [vmem:[%s4] sm:$0xff]
      %v374 = vld [vmem:[%s4 + $0x8] sm:$0xff]
      %376 = vset.pattern.permute.xlu0 0
      %377 = vperm.xlu0 %376, %v373
      %v378 = vpop.permute.xlu0 %377
      %381 = vset.pattern.permute.xlu0 0
      %382 = vperm.xlu0 %381, %v374
      %v383 = vpop.permute.xlu0 %382
      %v385 = vadd.f32 %v369, %v378
      %v386 = vadd.f32 %v370, %v378
      %v387 = vadd.f32 %v371, %v383
      %v388 = vadd.f32 %v372, %v383
      %v389 = vpack.c.bf16 %v387, %v385
      %v390 = vpack.c.bf16 %v388, %v386
      %v393 = vunpack.c.l.b16 %v389
      %v394 = vunpack.c.l.b16 %v390
      %v395 = vunpack.c.h.b16 %v389
      %v396 = vunpack.c.h.b16 %v390
      %v397 = vpack.c.b16 %v394, %v393
      %v398 = vpack.c.b16 %v396, %v395
      %401 = vst [vmem:[%s224] sm:$0xff] %v397
      %402 = vst [vmem:[%s224 + $0x8] sm:$0xff] %v398
      %p403 = scmp.lt.s32.totalorder %s16, 3
      %s404 = scalar_select %p403, %s16, 3
      %s405 = smul.addr %s404, 4
      %s406 = smul.addr %s405, 4
      %s407 = scalar_lea.vmem %s5, %s406
      // Predicated region
      $region41: #{siamese_forward.5} parent=39 // pred_check
        %p408 = pneg %p144
      $region42: #{siamese_forward.5} parent=39 // pred_check_branch
        %410 = sbr.rel (%p408) target = $region44
      $region43: #{siamese_forward.5} parent=39 // pred_region
        _
      $region44: #{siamese_forward.5} parent=39 // pred_fallthru
        _
    $region40: #{siamese_forward.5} parent=5 // pred_fallthru
      _
    %p411 = scmp.le.s32.totalorder 2, %s11
    // Predicated region
    $region45: #{siamese_forward.5} parent=5 // pred_check
      %p412 = pneg %p411
    $region46: #{siamese_forward.5} parent=5 // pred_check_branch
      %414 = sbr.rel (%p412) target = $region48
    $region47: #{siamese_forward.5} parent=5 // pred_region
      %s415 = ssub.s32 %s11, 2
      // Predicated region
      $region49: #{siamese_forward.5} parent=47 // pred_check
        %p416 = pneg %p150
      $region50: #{siamese_forward.5} parent=47 // pred_check_branch
        %418 = sbr.rel (%p416) target = $region52
      $region51: #{siamese_forward.5} parent=47 // pred_region
        %p419 = scmp.lt.s32.totalorder %s17, 3
        %s420 = scalar_select %p419, %s17, 3
        %s421 = smul.addr %s420, 4
        %s422 = smul.addr %s421, 4
        %s423 = scalar_lea.vmem %s5, %s422
      $region52: #{siamese_forward.5} parent=47 // pred_fallthru
        _
    $region48: #{siamese_forward.5} parent=5 // pred_fallthru
      _
  $region6: #{siamese_forward.5} parent=0 // loop_footer
    %s15 = sadd.s32 1, %s11
  $region7: #{siamese_forward.5} parent=0 // loop_footer_branch
    %10 = sbr.rel target = $region3
  $region8: #{siamese_forward.5} parent=0 // loop_exit
    _

// kernel: siamese_forward.6
$region0: #{siamese_forward.6}
  #allocation0 [shape = 'u32[]', space=smem, size = 0x4, offset = 0x4, fixed_abs, tag = 'smem constant byte address 0x4 - core index']
  #allocation1 [shape = 'u32[144,128]{1,0:T(1,128)}', space=vmem, size = 0x12000, scoped, tag = 'internal scratch']
  %s0 = inlined_call_operand.vmem [shape: bf16[4,144,256], index: 0, kind: input, shape index: {}]
  %s1 = inlined_call_operand.vmem [shape: bf16[16,144], index: 1, kind: input, shape index: {}]
  %s2 = inlined_call_operand.vmem [shape: f32[16,1], index: 2, kind: input, shape index: {}]
  %s3 = inlined_call_operand.vmem [shape: f32[16,1], index: 3, kind: input, shape index: {}]
  %s4 = inlined_call_operand.vmem [shape: f32[16,1], index: 4, kind: input, shape index: {}]
  %s5 = inlined_call_operand.vmem [shape: bf16[4,16,256], index: 5, kind: output, shape index: {}]
  %s6 = sld [smem:[#allocation0]]
  $region53: #{siamese_forward.6} parent=0
    _
  %s8 = ssub.s32 1, %s6
  %s9 = scalar_select 0, %s8, %s6
  loop: start=0, step=1, limit=6
  $region2: #{siamese_forward.6} parent=0 // loop_pre_header
    _
  $region3: #{siamese_forward.6} parent=0 // loop_header
    %s11 = sphi 0, %s15
    %p12 = scmp.ge.s32.totalorder %s11, 6
    %s21 = sphi 0, %s23
    %s24 = sphi 0, %s21
    %s25 = sphi 0, %s24
    %s41 = sphi 0, %s25
    %s45 = sphi 0, %s45
    %s47 = sphi 0, %s45
    %s48 = sphi 0, %s47
    %s62 = sphi 0, %s48
    %s66 = sphi 0, %s66
    %s68 = sphi 0, %s66
    %s69 = sphi 0, %s68
    %s83 = sphi 0, %s69
    %s87 = sphi 0, %s87
    %s89 = sphi 0, %s87
    %s90 = sphi 0, %s89
    %s104 = sphi 0, %s90
    %s108 = sphi 0, %s108
    %s110 = sphi 0, %s108
    %s111 = sphi 0, %s110
    %s125 = sphi 0, %s111
    %s131 = sphi 0, %s133
    %s134 = sphi 0, %s131
    %s135 = sphi 0, %s134
    %s151 = sphi 0, %s135
  $region4: #{siamese_forward.6} parent=0 // loop_header_branch
    %14 = sbr.rel (%p12) target = $region8
  $region5: #{siamese_forward.6} parent=0 // loop_body
    %s16 = ssub.s32 %s11, 1
    %s17 = ssub.s32 %s11, 2
    %s18 = sadd.s32 %s11, 1
    %s19 = ssub.s32 %s11, %s18
    %p20 = scmp.eq.s32.totalorder %s19, 0
    %s22 = sadd.s32 %s21, 1
    %s23 = scalar_select %p20, %s21, %s22
    %p26 = pneg %p20
    %p27 = scmp.eq.s32.totalorder %s11, 3
    %p28 = por %p26, %p27
    %p29 = scmp.ne.s32.totalorder %s21, %s24
    %p30 = scmp.eq.s32.totalorder %s11, 0
    %p31 = por %p29, %p30
    %p32 = scmp.ne.s32.totalorder %s21, %s24
    %p33 = scmp.eq.s32.totalorder %s16, 3
    %p34 = por %p32, %p33
    %p35 = scmp.ne.s32.totalorder %s24, %s25
    %p36 = scmp.eq.s32.totalorder %s16, 0
    %p37 = por %p35, %p36
    %p38 = scmp.ne.s32.totalorder %s24, %s25
    %p39 = scmp.eq.s32.totalorder %s17, 3
    %p40 = por %p38, %p39
    %p42 = scmp.ne.s32.totalorder %s25, %s41
    %p43 = scmp.eq.s32.totalorder %s17, 0
    %p44 = por %p42, %p43
    %s46 = sadd.s32 %s45, 1
    %p49 = scmp.eq.s32.totalorder %s11, 3
    %p50 = scmp.ne.s32.totalorder %s45, %s47
    %p51 = scmp.eq.s32.totalorder %s11, 0
    %p52 = por %p50, %p51
    %p53 = scmp.ne.s32.totalorder %s45, %s47
    %p54 = scmp.eq.s32.totalorder %s16, 3
    %p55 = por %p53, %p54
    %p56 = scmp.ne.s32.totalorder %s47, %s48
    %p57 = scmp.eq.s32.totalorder %s16, 0
    %p58 = por %p56, %p57
    %p59 = scmp.ne.s32.totalorder %s47, %s48
    %p60 = scmp.eq.s32.totalorder %s17, 3
    %p61 = por %p59, %p60
    %p63 = scmp.ne.s32.totalorder %s48, %s62
    %p64 = scmp.eq.s32.totalorder %s17, 0
    %p65 = por %p63, %p64
    %s67 = sadd.s32 %s66, 1
    %p70 = scmp.eq.s32.totalorder %s11, 3
    %p71 = scmp.ne.s32.totalorder %s66, %s68
    %p72 = scmp.eq.s32.totalorder %s11, 0
    %p73 = por %p71, %p72
    %p74 = scmp.ne.s32.totalorder %s66, %s68
    %p75 = scmp.eq.s32.totalorder %s16, 3
    %p76 = por %p74, %p75
    %p77 = scmp.ne.s32.totalorder %s68, %s69
    %p78 = scmp.eq.s32.totalorder %s16, 0
    %p79 = por %p77, %p78
    %p80 = scmp.ne.s32.totalorder %s68, %s69
    %p81 = scmp.eq.s32.totalorder %s17, 3
    %p82 = por %p80, %p81
    %p84 = scmp.ne.s32.totalorder %s69, %s83
    %p85 = scmp.eq.s32.totalorder %s17, 0
    %p86 = por %p84, %p85
    %s88 = sadd.s32 %s87, 1
    %p91 = scmp.eq.s32.totalorder %s11, 3
    %p92 = scmp.ne.s32.totalorder %s87, %s89
    %p93 = scmp.eq.s32.totalorder %s11, 0
    %p94 = por %p92, %p93
    %p95 = scmp.ne.s32.totalorder %s87, %s89
    %p96 = scmp.eq.s32.totalorder %s16, 3
    %p97 = por %p95, %p96
    %p98 = scmp.ne.s32.totalorder %s89, %s90
    %p99 = scmp.eq.s32.totalorder %s16, 0
    %p100 = por %p98, %p99
    %p101 = scmp.ne.s32.totalorder %s89, %s90
    %p102 = scmp.eq.s32.totalorder %s17, 3
    %p103 = por %p101, %p102
    %p105 = scmp.ne.s32.totalorder %s90, %s104
    %p106 = scmp.eq.s32.totalorder %s17, 0
    %p107 = por %p105, %p106
    %s109 = sadd.s32 %s108, 1
    %p112 = scmp.eq.s32.totalorder %s11, 3
    %p113 = scmp.ne.s32.totalorder %s108, %s110
    %p114 = scmp.eq.s32.totalorder %s11, 0
    %p115 = por %p113, %p114
    %p116 = scmp.ne.s32.totalorder %s108, %s110
    %p117 = scmp.eq.s32.totalorder %s16, 3
    %p118 = por %p116, %p117
    %p119 = scmp.ne.s32.totalorder %s110, %s111
    %p120 = scmp.eq.s32.totalorder %s16, 0
    %p121 = por %p119, %p120
    %p122 = scmp.ne.s32.totalorder %s110, %s111
    %p123 = scmp.eq.s32.totalorder %s17, 3
    %p124 = por %p122, %p123
    %p126 = scmp.ne.s32.totalorder %s111, %s125
    %p127 = scmp.eq.s32.totalorder %s17, 0
    %p128 = por %p126, %p127
    %s129 = ssub.s32 %s11, %s18
    %p130 = scmp.eq.s32.totalorder %s129, 0
    %s132 = sadd.s32 %s131, 1
    %s133 = scalar_select %p130, %s131, %s132
    %p136 = pneg %p130
    %p137 = scmp.eq.s32.totalorder %s11, 3
    %p138 = por %p136, %p137
    %p139 = scmp.ne.s32.totalorder %s131, %s134
    %p140 = scmp.eq.s32.totalorder %s11, 0
    %p141 = por %p139, %p140
    %p142 = scmp.ne.s32.totalorder %s131, %s134
    %p143 = scmp.eq.s32.totalorder %s16, 3
    %p144 = por %p142, %p143
    %p145 = scmp.ne.s32.totalorder %s134, %s135
    %p146 = scmp.eq.s32.totalorder %s16, 0
    %p147 = por %p145, %p146
    %p148 = scmp.ne.s32.totalorder %s134, %s135
    %p149 = scmp.eq.s32.totalorder %s17, 3
    %p150 = por %p148, %p149
    %p152 = scmp.ne.s32.totalorder %s135, %s151
    %p153 = scmp.eq.s32.totalorder %s17, 0
    %p154 = por %p152, %p153
    %p155 = scmp.le.s32.totalorder 1, %s11
    %p156 = scmp.lt.s32.totalorder %s11, 5
    %p157 = pnand %p155, %p156
    %p158 = pneg %p157
    // Predicated region
    $region9: #{siamese_forward.6} parent=5 // pred_check
      _
    $region10: #{siamese_forward.6} parent=5 // pred_check_branch
      %160 = sbr.rel (%p157) target = $region12
    $region11: #{siamese_forward.6} parent=5 // pred_region
      %s161 = ssub.s32 %s11, 1
      // Predicated region
      $region13: #{siamese_forward.6} parent=11 // pred_check
        %p162 = pneg %p58
      $region14: #{siamese_forward.6} parent=11 // pred_check_branch
        %164 = sbr.rel (%p162) target = $region16
      $region15: #{siamese_forward.6} parent=11 // pred_region
        _
      $region16: #{siamese_forward.6} parent=11 // pred_fallthru
        _
      // Predicated region
      $region17: #{siamese_forward.6} parent=11 // pred_check
        %p165 = pneg %p79
      $region18: #{siamese_forward.6} parent=11 // pred_check_branch
        %167 = sbr.rel (%p165) target = $region20
      $region19: #{siamese_forward.6} parent=11 // pred_region
        _
      $region20: #{siamese_forward.6} parent=11 // pred_fallthru
        _
      // Predicated region
      $region21: #{siamese_forward.6} parent=11 // pred_check
        %p168 = pneg %p100
      $region22: #{siamese_forward.6} parent=11 // pred_check_branch
        %170 = sbr.rel (%p168) target = $region24
      $region23: #{siamese_forward.6} parent=11 // pred_region
        _
      $region24: #{siamese_forward.6} parent=11 // pred_fallthru
        _
      // Predicated region
      $region25: #{siamese_forward.6} parent=11 // pred_check
        %p171 = pneg %p121
      $region26: #{siamese_forward.6} parent=11 // pred_check_branch
        %173 = sbr.rel (%p171) target = $region28
      $region27: #{siamese_forward.6} parent=11 // pred_region
        _
      $region28: #{siamese_forward.6} parent=11 // pred_fallthru
        _
    $region12: #{siamese_forward.6} parent=5 // pred_fallthru
      _
    %p174 = scmp.lt.s32.totalorder %s11, 4
    // Predicated region
    $region29: #{siamese_forward.6} parent=5 // pred_check
      %p175 = pneg %p174
    $region30: #{siamese_forward.6} parent=5 // pred_check_branch
      %177 = sbr.rel (%p175) target = $region32
    $region31: #{siamese_forward.6} parent=5 // pred_region
      // Predicated region
      $region33: #{siamese_forward.6} parent=31 // pred_check
        %p178 = pneg %p31
      $region34: #{siamese_forward.6} parent=31 // pred_check_branch
        %180 = sbr.rel (%p178) target = $region36
      $region35: #{siamese_forward.6} parent=31 // pred_region
        %p181 = scmp.lt.s32.totalorder %s11, 3
        %s182 = scalar_select %p181, %s11, 3
        %s183 = smul.addr %s182, 36
        %s184 = smul.addr %s183, 4
        %s185 = scalar_lea.vmem %s0, %s184
      $region36: #{siamese_forward.6} parent=31 // pred_fallthru
        _
    $region32: #{siamese_forward.6} parent=5 // pred_fallthru
      _
    %p186 = scmp.le.s32.totalorder 1, %s11
    %p187 = scmp.lt.s32.totalorder %s11, 5
    %p188 = pnand %p186, %p187
    %p189 = pneg %p188
    // Predicated region
    $region37: #{siamese_forward.6} parent=5 // pred_check
      _
    $region38: #{siamese_forward.6} parent=5 // pred_check_branch
      %191 = sbr.rel (%p188) target = $region40
    $region39: #{siamese_forward.6} parent=5 // pred_region
      %s192 = ssub.s32 %s11, 1
      %p193 = scmp.lt.s32.totalorder %s16, 3
      %s194 = scalar_select %p193, %s16, 3
      %s195 = smul.addr %s194, 36
      %s196 = smul.addr %s195, 4
      %s197 = scalar_lea.vmem %s0, %s196
      %p198 = pneg %p37
      %p199 = pneg %p34
      %p200 = pneg %p58
      %p201 = pneg %p55
      %p202 = pneg %p79
      %p203 = pneg %p76
      %p204 = pneg %p100
      %p205 = pneg %p97
      %p206 = pneg %p121
      %p207 = pneg %p118
      %p208 = pneg %p147
      %p209 = pneg %p144
      %p210 = scmp.lt.s32.totalorder %s16, 3
      %s211 = scalar_select %p210, %s16, 3
      %s212 = smul.addr %s211, 4
      %s213 = smul.addr %s212, 4
      %s214 = scalar_lea.vmem %s5, %s213
      %p215 = scmp.lt.s32.totalorder %s16, 3
      %s216 = scalar_select %p215, %s16, 3
      %s217 = smul.addr %s216, 36
      %s218 = smul.addr %s217, 4
      %s219 = scalar_lea.vmem %s0, %s218
      %p220 = scmp.lt.s32.totalorder %s16, 3
      %s221 = scalar_select %p220, %s16, 3
      %s222 = smul.addr %s221, 4
      %s223 = smul.addr %s222, 4
      %s224 = scalar_lea.vmem %s5, %s223
      %v226 = vld [vmem:[%s1] sm:$0xff]
      %v227 = vld [vmem:[%s1 + $0x8] sm:$0xff]
      %v228 = vld [vmem:[%s219] sm:$0xff]
      %v229 = vld [vmem:[%s219 + $0x8] sm:$0xff]
      %v230 = vld [vmem:[%s219 + $0x10] sm:$0xff]
      %v231 = vld [vmem:[%s219 + $0x18] sm:$0xff]
      %v232 = vld [vmem:[%s219 + $0x20] sm:$0xff]
      %v233 = vld [vmem:[%s219 + $0x28] sm:$0xff]
      %v234 = vld [vmem:[%s219 + $0x30] sm:$0xff]
      %v235 = vld [vmem:[%s219 + $0x38] sm:$0xff]
      %v236 = vld [vmem:[%s219 + $0x40] sm:$0xff]
      %v237 = vld [vmem:[%s219 + $0x48] sm:$0xff]
      %v238 = vld [vmem:[%s219 + $0x50] sm:$0xff]
      %v239 = vld [vmem:[%s219 + $0x58] sm:$0xff]
      %v240 = vld [vmem:[%s219 + $0x60] sm:$0xff]
      %v241 = vld [vmem:[%s219 + $0x68] sm:$0xff]
      %v242 = vld [vmem:[%s219 + $0x70] sm:$0xff]
      %v243 = vld [vmem:[%s219 + $0x78] sm:$0xff]
      %v244 = vld [vmem:[%s219 + $0x80] sm:$0xff]
      %v245 = vld [vmem:[%s219 + $0x88] sm:$0xff]
      %v246 = vld [vmem:[%s2] sm:$0xff]
      %v247 = vld [vmem:[%s2 + $0x8] sm:$0xff]
      %249 = vset.pattern.permute.xlu0 0
      %250 = vperm.xlu0 %249, %v246
      %v251 = vpop.permute.xlu0 %250
      %254 = vset.pattern.permute.xlu0 0
      %255 = vperm.xlu0 %254, %v247
      %v256 = vpop.permute.xlu0 %255
      %v260 = vunpack.c.l.b16 %v226
      %v261 = vunpack.c.h.b16 %v226
      %v262 = vunpack.c.l.b16 %v227
      %v263 = vunpack.c.h.b16 %v227
      %v264 = vpack.c.b16 %v262, %v260
      %v265 = vpack.c.b16 %v263, %v261
      %v285 = vunpack.c.l.b16 %v228
      %v286 = vunpack.c.h.b16 %v228
      %v287 = vunpack.c.l.b16 %v229
      %v288 = vunpack.c.h.b16 %v229
      %v289 = vunpack.c.l.b16 %v230
      %v290 = vunpack.c.h.b16 %v230
      %v291 = vunpack.c.l.b16 %v231
      %v292 = vunpack.c.h.b16 %v231
      %v293 = vunpack.c.l.b16 %v232
      %v294 = vunpack.c.h.b16 %v232
      %v295 = vunpack.c.l.b16 %v233
      %v296 = vunpack.c.h.b16 %v233
      %v297 = vunpack.c.l.b16 %v234
      %v298 = vunpack.c.h.b16 %v234
      %v299 = vunpack.c.l.b16 %v235
      %v300 = vunpack.c.h.b16 %v235
      %v301 = vunpack.c.l.b16 %v236
      %v302 = vunpack.c.h.b16 %v236
      %v303 = vunpack.c.l.b16 %v237
      %v304 = vunpack.c.h.b16 %v237
      %v305 = vunpack.c.l.b16 %v238
      %v306 = vunpack.c.h.b16 %v238
      %v307 = vunpack.c.l.b16 %v239
      %v308 = vunpack.c.h.b16 %v239
      %v309 = vunpack.c.l.b16 %v240
      %v310 = vunpack.c.h.b16 %v240
      %v311 = vunpack.c.l.b16 %v241
      %v312 = vunpack.c.h.b16 %v241
      %v313 = vunpack.c.l.b16 %v242
      %v314 = vunpack.c.h.b16 %v242
      %v315 = vunpack.c.l.b16 %v243
      %v316 = vunpack.c.h.b16 %v243
      %v317 = vunpack.c.l.b16 %v244
      %v318 = vunpack.c.h.b16 %v244
      %v319 = vunpack.c.l.b16 %v245
      %v320 = vunpack.c.h.b16 %v245
      %v321 = vpack.c.b16 %v287, %v285
      %v322 = vpack.c.b16 %v288, %v286
      %v323 = vpack.c.b16 %v291, %v289
      %v324 = vpack.c.b16 %v292, %v290
      %v325 = vpack.c.b16 %v295, %v293
      %v326 = vpack.c.b16 %v296, %v294
      %v327 = vpack.c.b16 %v299, %v297
      %v328 = vpack.c.b16 %v300, %v298
      %v329 = vpack.c.b16 %v303, %v301
      %v330 = vpack.c.b16 %v304, %v302
      %v331 = vpack.c.b16 %v307, %v305
      %v332 = vpack.c.b16 %v308, %v306
      %v333 = vpack.c.b16 %v311, %v309
      %v334 = vpack.c.b16 %v312, %v310
      %v335 = vpack.c.b16 %v315, %v313
      %v336 = vpack.c.b16 %v316, %v314
      %v337 = vpack.c.b16 %v319, %v317
      %v338 = vpack.c.b16 %v320, %v318
      %vm357 = vcmask 130048
      %v359 = vsel %vm357, %v265, 0
      %361 = vmatprep.subr.bf16.mxu0 %v322
      %362 = vmatpush1.bf16.msra.mxu0 %v321
      %363 = vmatprep.subr.bf16.mxu0 %v324
      %364 = vmatpush1.bf16.msra.mxu0 %v323
      %365 = vmatprep.subr.bf16.mxu0 %v326
      %366 = vmatpush1.bf16.msra.mxu0 %v325
      %367 = vmatprep.subr.bf16.mxu0 %v328
      %368 = vmatpush1.bf16.msra.mxu0 %v327
      %369 = vmatprep.subr.bf16.mxu0 %v330
      %370 = vmatpush1.bf16.msra.mxu0 %v329
      %371 = vmatprep.subr.bf16.mxu0 %v332
      %372 = vmatpush1.bf16.msra.mxu0 %v331
      %373 = vmatprep.subr.bf16.mxu0 %v334
      %374 = vmatpush1.bf16.msra.mxu0 %v333
      %375 = vmatprep.subr.bf16.mxu0 %v336
      %376 = vmatpush1.bf16.msra.mxu0 %v335
      %377 = vmatprep.subr.bf16.mxu0 %v338
      %378 = vmatpush1.bf16.msra.mxu0 %v337
      %379 = vmatprep.subr.bf16.mxu0 0
      %380 = vmatpush1.bf16.msra.mxu0 0
      %381 = vmatprep.subr.bf16.mxu0 0
      %382 = vmatpush1.bf16.msra.mxu0 0
      %383 = vmatprep.subr.bf16.mxu0 0
      %384 = vmatpush1.bf16.msra.mxu0 0
      %385 = vmatprep.subr.bf16.mxu0 0
      %386 = vmatpush1.bf16.msra.mxu0 0
      %387 = vmatprep.subr.bf16.mxu0 0
      %388 = vmatpush1.bf16.msra.mxu0 0
      %389 = vmatprep.subr.bf16.mxu0 0
      %390 = vmatpush1.bf16.msra.mxu0 0
      %391 = vmatprep.subr.bf16.mxu0 0
      %392 = vmatpush1.bf16.msra.mxu0 0
      %393 = vmatprep.mubr.bf16.mxu0 %v359
      %394 = vmatmul.mubr.bf16.gmra.mrb[0].mxu0 %v264
      %v395 = vpop.f32.mrb[0].mxu0
      %v396 = vadd.f32 %v251, %v395
      %v397 = vpop.f32.mrb[0].mxu0
      %v398 = vadd.f32 %v251, %v397
      %v399 = vpop.f32.mrb[0].mxu0
      %v400 = vadd.f32 %v256, %v399
      %v401 = vpop.f32.mrb[0].mxu0
      %v402 = vadd.f32 %v256, %v401
      %403 = vdwg.mxu0
      %v404 = vmax.f32 %v396, 0.0
      %v405 = vmax.f32 %v398, 0.0
      %v406 = vmax.f32 %v400, 0.0
      %v407 = vmax.f32 %v402, 0.0
      %v408 = vld [vmem:[%s3] sm:$0xff]
      %v409 = vld [vmem:[%s3 + $0x8] sm:$0xff]
      %411 = vset.pattern.permute.xlu0 0
      %412 = vperm.xlu0 %411, %v408
      %v413 = vpop.permute.xlu0 %412
      %416 = vset.pattern.permute.xlu0 0
      %417 = vperm.xlu0 %416, %v409
      %v418 = vpop.permute.xlu0 %417
      %v420 = vmul.f32 %v404, %v413
      %v421 = vmul.f32 %v405, %v413
      %v422 = vmul.f32 %v406, %v418
      %v423 = vmul.f32 %v407, %v418
      %v424 = vld [vmem:[%s4] sm:$0xff]
      %v425 = vld [vmem:[%s4 + $0x8] sm:$0xff]
      %427 = vset.pattern.permute.xlu0 0
      %428 = vperm.xlu0 %427, %v424
      %v429 = vpop.permute.xlu0 %428
      %432 = vset.pattern.permute.xlu0 0
      %433 = vperm.xlu0 %432, %v425
      %v434 = vpop.permute.xlu0 %433
      %v436 = vadd.f32 %v420, %v429
      %v437 = vadd.f32 %v421, %v429
      %v438 = vadd.f32 %v422, %v434
      %v439 = vadd.f32 %v423, %v434
      %v440 = vpack.c.bf16 %v438, %v436
      %v441 = vpack.c.bf16 %v439, %v437
      %v444 = vunpack.c.l.b16 %v440
      %v445 = vunpack.c.l.b16 %v441
      %v446 = vunpack.c.h.b16 %v440
      %v447 = vunpack.c.h.b16 %v441
      %v448 = vpack.c.b16 %v445, %v444
      %v449 = vpack.c.b16 %v447, %v446
      %452 = vst [vmem:[%s224] sm:$0xff] %v448
      %453 = vst [vmem:[%s224 + $0x8] sm:$0xff] %v449
      %p454 = scmp.lt.s32.totalorder %s16, 3
      %s455 = scalar_select %p454, %s16, 3
      %s456 = smul.addr %s455, 4
      %s457 = smul.addr %s456, 4
      %s458 = scalar_lea.vmem %s5, %s457
      // Predicated region
      $region41: #{siamese_forward.6} parent=39 // pred_check
        %p459 = pneg %p144
      $region42: #{siamese_forward.6} parent=39 // pred_check_branch
        %461 = sbr.rel (%p459) target = $region44
      $region43: #{siamese_forward.6} parent=39 // pred_region
        _
      $region44: #{siamese_forward.6} parent=39 // pred_fallthru
        _
    $region40: #{siamese_forward.6} parent=5 // pred_fallthru
      _
    %p462 = scmp.le.s32.totalorder 2, %s11
    // Predicated region
    $region45: #{siamese_forward.6} parent=5 // pred_check
      %p463 = pneg %p462
    $region46: #{siamese_forward.6} parent=5 // pred_check_branch
      %465 = sbr.rel (%p463) target = $region48
    $region47: #{siamese_forward.6} parent=5 // pred_region
      %s466 = ssub.s32 %s11, 2
      // Predicated region
      $region49: #{siamese_forward.6} parent=47 // pred_check
        %p467 = pneg %p150
      $region50: #{siamese_forward.6} parent=47 // pred_check_branch
        %469 = sbr.rel (%p467) target = $region52
      $region51: #{siamese_forward.6} parent=47 // pred_region
        %p470 = scmp.lt.s32.totalorder %s17, 3
        %s471 = scalar_select %p470, %s17, 3
        %s472 = smul.addr %s471, 4
        %s473 = smul.addr %s472, 4
        %s474 = scalar_lea.vmem %s5, %s473
      $region52: #{siamese_forward.6} parent=47 // pred_fallthru
        _
    $region48: #{siamese_forward.6} parent=5 // pred_fallthru
      _
  $region6: #{siamese_forward.6} parent=0 // loop_footer
    %s15 = sadd.s32 1, %s11
  $region7: #{siamese_forward.6} parent=0 // loop_footer_branch
    %10 = sbr.rel target = $region3
  $region8: #{siamese_forward.6} parent=0 // loop_exit
    _

// kernel: siamese_forward.7
$region0: #{siamese_forward.7}
  #allocation0 [shape = 'u32[]', space=smem, size = 0x4, offset = 0x4, fixed_abs, tag = 'smem constant byte address 0x4 - core index']
  #allocation1 [shape = 'u32[144,128]{1,0:T(1,128)}', space=vmem, size = 0x12000, scoped, tag = 'internal scratch']
  %s0 = inlined_call_operand.vmem [shape: bf16[4,4096], index: 0, kind: input, shape index: {}]
  %s1 = inlined_call_operand.vmem [shape: bf16[4096,512], index: 1, kind: input, shape index: {}]
  %s2 = inlined_call_operand.vmem [shape: f32[1,512], index: 2, kind: input, shape index: {}]
  %s3 = inlined_call_operand.vmem [shape: bf16[512,512], index: 3, kind: input, shape index: {}]
  %s4 = inlined_call_operand.vmem [shape: f32[1,512], index: 4, kind: input, shape index: {}]
  %s5 = inlined_call_operand.vmem [shape: bf16[512,128], index: 5, kind: input, shape index: {}]
  %s6 = inlined_call_operand.vmem [shape: f32[1,128], index: 6, kind: input, shape index: {}]
  %s7 = inlined_call_operand.vmem [shape: f32[4,128], index: 7, kind: output, shape index: {}]
  %s8 = sld [smem:[#allocation0]]
  $region38: #{siamese_forward.7} parent=0
    _
  %s10 = ssub.s32 1, %s8
  %s11 = scalar_select 0, %s10, %s8
  // Predicated region
  $region2: #{siamese_forward.7} parent=0 // pred_check
    _
  $region3: #{siamese_forward.7} parent=0 // pred_check_branch
    %13 = sbr.rel (0) target = $region5
  $region4: #{siamese_forward.7} parent=0 // pred_region
    _
  $region5: #{siamese_forward.7} parent=0 // pred_fallthru
    _
  // Predicated region
  $region6: #{siamese_forward.7} parent=0 // pred_check
    _
  $region7: #{siamese_forward.7} parent=0 // pred_check_branch
    %15 = sbr.rel (0) target = $region9
  $region8: #{siamese_forward.7} parent=0 // pred_region
    _
  $region9: #{siamese_forward.7} parent=0 // pred_fallthru
    _
  // Predicated region
  $region10: #{siamese_forward.7} parent=0 // pred_check
    _
  $region11: #{siamese_forward.7} parent=0 // pred_check_branch
    %17 = sbr.rel (0) target = $region13
  $region12: #{siamese_forward.7} parent=0 // pred_region
    _
  $region13: #{siamese_forward.7} parent=0 // pred_fallthru
    _
  // Predicated region
  $region14: #{siamese_forward.7} parent=0 // pred_check
    _
  $region15: #{siamese_forward.7} parent=0 // pred_check_branch
    %19 = sbr.rel (0) target = $region17
  $region16: #{siamese_forward.7} parent=0 // pred_region
    _
  $region17: #{siamese_forward.7} parent=0 // pred_fallthru
    _
  // Predicated region
  $region18: #{siamese_forward.7} parent=0 // pred_check
    _
  $region19: #{siamese_forward.7} parent=0 // pred_check_branch
    %21 = sbr.rel (0) target = $region21
  $region20: #{siamese_forward.7} parent=0 // pred_region
    _
  $region21: #{siamese_forward.7} parent=0 // pred_fallthru
    _
  // Predicated region
  $region22: #{siamese_forward.7} parent=0 // pred_check
    _
  $region23: #{siamese_forward.7} parent=0 // pred_check_branch
    %23 = sbr.rel (0) target = $region25
  $region24: #{siamese_forward.7} parent=0 // pred_region
    _
  $region25: #{siamese_forward.7} parent=0 // pred_fallthru
    _
  // Predicated region
  $region26: #{siamese_forward.7} parent=0 // pred_check
    _
  $region27: #{siamese_forward.7} parent=0 // pred_check_branch
    %25 = sbr.rel (0) target = $region29
  $region28: #{siamese_forward.7} parent=0 // pred_region
    _
  $region29: #{siamese_forward.7} parent=0 // pred_fallthru
    _
  %v27 = vld [vmem:[%s0] sm:$0xff]
  %v28 = vld [vmem:[%s0 + $0x8] sm:$0xff]
  %v29 = vld [vmem:[%s0 + $0x10] sm:$0xff]
  %v30 = vld [vmem:[%s0 + $0x18] sm:$0xff]
  %v31 = vld [vmem:[%s0 + $0x20] sm:$0xff]
  %v32 = vld [vmem:[%s0 + $0x28] sm:$0xff]
  %v33 = vld [vmem:[%s0 + $0x30] sm:$0xff]
  %v34 = vld [vmem:[%s0 + $0x38] sm:$0xff]
  %v35 = vld [vmem:[%s1] sm:$0xff]
  %v36 = vld [vmem:[%s1 + $0x8] sm:$0xff]
  %v37 = vld [vmem:[%s1 + $0x10] sm:$0xff]
  %v38 = vld [vmem:[%s1 + $0x18] sm:$0xff]
  %v39 = vld [vmem:[%s1 + $0x20] sm:$0xff]
  %v40 = vld [vmem:[%s1 + $0x28] sm:$0xff]
  %v41 = vld [vmem:[%s1 + $0x30] sm:$0xff]
  %v42 = vld [vmem:[%s1 + $0x38] sm:$0xff]
  %v43 = vld [vmem:[%s1 + $0x40] sm:$0xff]
  %v44 = vld [vmem:[%s1 + $0x48] sm:$0xff]
  %v45 = vld [vmem:[%s1 + $0x50] sm:$0xff]
  %v46 = vld [vmem:[%s1 + $0x58] sm:$0xff]
  %v47 = vld [vmem:[%s1 + $0x60] sm:$0xff]
  %v48 = vld [vmem:[%s1 + $0x68] sm:$0xff]
  %v49 = vld [vmem:[%s1 + $0x70] sm:$0xff]
  %v50 = vld [vmem:[%s1 + $0x78] sm:$0xff]
  %v51 = vld [vmem:[%s1 + $0x80] sm:$0xff]
  %v52 = vld [vmem:[%s1 + $0x88] sm:$0xff]
  %v53 = vld [vmem:[%s1 + $0x90] sm:$0xff]
  %v54 = vld [vmem:[%s1 + $0x98] sm:$0xff]
  %v55 = vld [vmem:[%s1 + $0xa0] sm:$0xff]
  %v56 = vld [vmem:[%s1 + $0xa8] sm:$0xff]
  %v57 = vld [vmem:[%s1 + $0xb0] sm:$0xff]
  %v58 = vld [vmem:[%s1 + $0xb8] sm:$0xff]
  %v59 = vld [vmem:[%s1 + $0xc0] sm:$0xff]
  %v60 = vld [vmem:[%s1 + $0xc8] sm:$0xff]
  %v61 = vld [vmem:[%s1 + $0xd0] sm:$0xff]
  %v62 = vld [vmem:[%s1 + $0xd8] sm:$0xff]
  %v63 = vld [vmem:[%s1 + $0xe0] sm:$0xff]
  %v64 = vld [vmem:[%s1 + $0xe8] sm:$0xff]
  %v65 = vld [vmem:[%s1 + $0xf0] sm:$0xff]
  %v66 = vld [vmem:[%s1 + $0xf8] sm:$0xff]
  %v67 = vld [vmem:[%s1 + $0x100] sm:$0xff]
  %v68 = vld [vmem:[%s1 + $0x108] sm:$0xff]
  %v69 = vld [vmem:[%s1 + $0x110] sm:$0xff]
  %v70 = vld [vmem:[%s1 + $0x118] sm:$0xff]
  %v71 = vld [vmem:[%s1 + $0x120] sm:$0xff]
  %v72 = vld [vmem:[%s1 + $0x128] sm:$0xff]
  %v73 = vld [vmem:[%s1 + $0x130] sm:$0xff]
  %v74 = vld [vmem:[%s1 + $0x138] sm:$0xff]
  %v75 = vld [vmem:[%s1 + $0x140] sm:$0xff]
  %v76 = vld [vmem:[%s1 + $0x148] sm:$0xff]
  %v77 = vld [vmem:[%s1 + $0x150] sm:$0xff]
  %v78 = vld [vmem:[%s1 + $0x158] sm:$0xff]
  %v79 = vld [vmem:[%s1 + $0x160] sm:$0xff]
  %v80 = vld [vmem:[%s1 + $0x168] sm:$0xff]
  %v81 = vld [vmem:[%s1 + $0x170] sm:$0xff]
  %v82 = vld [vmem:[%s1 + $0x178] sm:$0xff]
  %v83 = vld [vmem:[%s1 + $0x180] sm:$0xff]
  %v84 = vld [vmem:[%s1 + $0x188] sm:$0xff]
  %v85 = vld [vmem:[%s1 + $0x190] sm:$0xff]
  %v86 = vld [vmem:[%s1 + $0x198] sm:$0xff]
  %v87 = vld [vmem:[%s1 + $0x1a0] sm:$0xff]
  %v88 = vld [vmem:[%s1 + $0x1a8] sm:$0xff]
  %v89 = vld [vmem:[%s1 + $0x1b0] sm:$0xff]
  %v90 = vld [vmem:[%s1 + $0x1b8] sm:$0xff]
  %v91 = vld [vmem:[%s1 + $0x1c0] sm:$0xff]
  %v92 = vld [vmem:[%s1 + $0x1c8] sm:$0xff]
  %v93 = vld [vmem:[%s1 + $0x1d0] sm:$0xff]
  %v94 = vld [vmem:[%s1 + $0x1d8] sm:$0xff]
  %v95 = vld [vmem:[%s1 + $0x1e0] sm:$0xff]
  %v96 = vld [vmem:[%s1 + $0x1e8] sm:$0xff]
  %v97 = vld [vmem:[%s1 + $0x1f0] sm:$0xff]
  %v98 = vld [vmem:[%s1 + $0x1f8] sm:$0xff]
  %v99 = vld [vmem:[%s1 + $0x200] sm:$0xff]
  %v100 = vld [vmem:[%s1 + $0x208] sm:$0xff]
  %v101 = vld [vmem:[%s1 + $0x210] sm:$0xff]
  %v102 = vld [vmem:[%s1 + $0x218] sm:$0xff]
  %v103 = vld [vmem:[%s1 + $0x220] sm:$0xff]
  %v104 = vld [vmem:[%s1 + $0x228] sm:$0xff]
  %v105 = vld [vmem:[%s1 + $0x230] sm:$0xff]
  %v106 = vld [vmem:[%s1 + $0x238] sm:$0xff]
  %v107 = vld [vmem:[%s1 + $0x240] sm:$0xff]
  %v108 = vld [vmem:[%s1 + $0x248] sm:$0xff]
  %v109 = vld [vmem:[%s1 + $0x250] sm:$0xff]
  %v110 = vld [vmem:[%s1 + $0x258] sm:$0xff]
  %v111 = vld [vmem:[%s1 + $0x260] sm:$0xff]
  %v112 = vld [vmem:[%s1 + $0x268] sm:$0xff]
  %v113 = vld [vmem:[%s1 + $0x270] sm:$0xff]
  %v114 = vld [vmem:[%s1 + $0x278] sm:$0xff]
  %v115 = vld [vmem:[%s1 + $0x280] sm:$0xff]
  %v116 = vld [vmem:[%s1 + $0x288] sm:$0xff]
  %v117 = vld [vmem:[%s1 + $0x290] sm:$0xff]
  %v118 = vld [vmem:[%s1 + $0x298] sm:$0xff]
  %v119 = vld [vmem:[%s1 + $0x2a0] sm:$0xff]
  %v120 = vld [vmem:[%s1 + $0x2a8] sm:$0xff]
  %v121 = vld [vmem:[%s1 + $0x2b0] sm:$0xff]
  %v122 = vld [vmem:[%s1 + $0x2b8] sm:$0xff]
  %v123 = vld [vmem:[%s1 + $0x2c0] sm:$0xff]
  %v124 = vld [vmem:[%s1 + $0x2c8] sm:$0xff]
  %v125 = vld [vmem:[%s1 + $0x2d0] sm:$0xff]
  %v126 = vld [vmem:[%s1 + $0x2d8] sm:$0xff]
  %v127 = vld [vmem:[%s1 + $0x2e0] sm:$0xff]
  %v128 = vld [vmem:[%s1 + $0x2e8] sm:$0xff]
  %v129 = vld [vmem:[%s1 + $0x2f0] sm:$0xff]
  %v130 = vld [vmem:[%s1 + $0x2f8] sm:$0xff]
  %v131 = vld [vmem:[%s1 + $0x300] sm:$0xff]
  %v132 = vld [vmem:[%s1 + $0x308] sm:$0xff]
  %v133 = vld [vmem:[%s1 + $0x310] sm:$0xff]
  %v134 = vld [vmem:[%s1 + $0x318] sm:$0xff]
  %v135 = vld [vmem:[%s1 + $0x320] sm:$0xff]
  %v136 = vld [vmem:[%s1 + $0x328] sm:$0xff]
  %v137 = vld [vmem:[%s1 + $0x330] sm:$0xff]
  %v138 = vld [vmem:[%s1 + $0x338] sm:$0xff]
  %v139 = vld [vmem:[%s1 + $0x340] sm:$0xff]
  %v140 = vld [vmem:[%s1 + $0x348] sm:$0xff]
  %v141 = vld [vmem:[%s1 + $0x350] sm:$0xff]
  %v142 = vld [vmem:[%s1 + $0x358] sm:$0xff]
  %v143 = vld [vmem:[%s1 + $0x360] sm:$0xff]
  %v144 = vld [vmem:[%s1 + $0x368] sm:$0xff]
  %v145 = vld [vmem:[%s1 + $0x370] sm:$0xff]
  %v146 = vld [vmem:[%s1 + $0x378] sm:$0xff]
  %v147 = vld [vmem:[%s1 + $0x380] sm:$0xff]
  %v148 = vld [vmem:[%s1 + $0x388] sm:$0xff]
  %v149 = vld [vmem:[%s1 + $0x390] sm:$0xff]
  %v150 = vld [vmem:[%s1 + $0x398] sm:$0xff]
  %v151 = vld [vmem:[%s1 + $0x3a0] sm:$0xff]
  %v152 = vld [vmem:[%s1 + $0x3a8] sm:$0xff]
  %v153 = vld [vmem:[%s1 + $0x3b0] sm:$0xff]
  %v154 = vld [vmem:[%s1 + $0x3b8] sm:$0xff]
  %v155 = vld [vmem:[%s1 + $0x3c0] sm:$0xff]
  %v156 = vld [vmem:[%s1 + $0x3c8] sm:$0xff]
  %v157 = vld [vmem:[%s1 + $0x3d0] sm:$0xff]
  %v158 = vld [vmem:[%s1 + $0x3d8] sm:$0xff]
  %v159 = vld [vmem:[%s1 + $0x3e0] sm:$0xff]
  %v160 = vld [vmem:[%s1 + $0x3e8] sm:$0xff]
  %v161 = vld [vmem:[%s1 + $0x3f0] sm:$0xff]
  %v162 = vld [vmem:[%s1 + $0x3f8] sm:$0xff]
  %v163 = vld [vmem:[%s1 + $0x400] sm:$0xff]
  %v164 = vld [vmem:[%s1 + $0x408] sm:$0xff]
  %v165 = vld [vmem:[%s1 + $0x410] sm:$0xff]
  %v166 = vld [vmem:[%s1 + $0x418] sm:$0xff]
  %v167 = vld [vmem:[%s1 + $0x420] sm:$0xff]
  %v168 = vld [vmem:[%s1 + $0x428] sm:$0xff]
  %v169 = vld [vmem:[%s1 + $0x430] sm:$0xff]
  %v170 = vld [vmem:[%s1 + $0x438] sm:$0xff]
  %v171 = vld [vmem:[%s1 + $0x440] sm:$0xff]
  %v172 = vld [vmem:[%s1 + $0x448] sm:$0xff]
  %v173 = vld [vmem:[%s1 + $0x450] sm:$0xff]
  %v174 = vld [vmem:[%s1 + $0x458] sm:$0xff]
  %v175 = vld [vmem:[%s1 + $0x460] sm:$0xff]
  %v176 = vld [vmem:[%s1 + $0x468] sm:$0xff]
  %v177 = vld [vmem:[%s1 + $0x470] sm:$0xff]
  %v178 = vld [vmem:[%s1 + $0x478] sm:$0xff]
  %v179 = vld [vmem:[%s1 + $0x480] sm:$0xff]
  %v180 = vld [vmem:[%s1 + $0x488] sm:$0xff]
  %v181 = vld [vmem:[%s1 + $0x490] sm:$0xff]
  %v182 = vld [vmem:[%s1 + $0x498] sm:$0xff]
  %v183 = vld [vmem:[%s1 + $0x4a0] sm:$0xff]
  %v184 = vld [vmem:[%s1 + $0x4a8] sm:$0xff]
  %v185 = vld [vmem:[%s1 + $0x4b0] sm:$0xff]
  %v186 = vld [vmem:[%s1 + $0x4b8] sm:$0xff]
  %v187 = vld [vmem:[%s1 + $0x4c0] sm:$0xff]
  %v188 = vld [vmem:[%s1 + $0x4c8] sm:$0xff]
  %v189 = vld [vmem:[%s1 + $0x4d0] sm:$0xff]
  %v190 = vld [vmem:[%s1 + $0x4d8] sm:$0xff]
  %v191 = vld [vmem:[%s1 + $0x4e0] sm:$0xff]
  %v192 = vld [vmem:[%s1 + $0x4e8] sm:$0xff]
  %v193 = vld [vmem:[%s1 + $0x4f0] sm:$0xff]
  %v194 = vld [vmem:[%s1 + $0x4f8] sm:$0xff]
  %v195 = vld [vmem:[%s1 + $0x500] sm:$0xff]
  %v196 = vld [vmem:[%s1 + $0x508] sm:$0xff]
  %v197 = vld [vmem:[%s1 + $0x510] sm:$0xff]
  %v198 = vld [vmem:[%s1 + $0x518] sm:$0xff]
  %v199 = vld [vmem:[%s1 + $0x520] sm:$0xff]
  %v200 = vld [vmem:[%s1 + $0x528] sm:$0xff]
  %v201 = vld [vmem:[%s1 + $0x530] sm:$0xff]
  %v202 = vld [vmem:[%s1 + $0x538] sm:$0xff]
  %v203 = vld [vmem:[%s1 + $0x540] sm:$0xff]
  %v204 = vld [vmem:[%s1 + $0x548] sm:$0xff]
  %v205 = vld [vmem:[%s1 + $0x550] sm:$0xff]
  %v206 = vld [vmem:[%s1 + $0x558] sm:$0xff]
  %v207 = vld [vmem:[%s1 + $0x560] sm:$0xff]
  %v208 = vld [vmem:[%s1 + $0x568] sm:$0xff]
  %v209 = vld [vmem:[%s1 + $0x570] sm:$0xff]
  %v210 = vld [vmem:[%s1 + $0x578] sm:$0xff]
  %v211 = vld [vmem:[%s1 + $0x580] sm:$0xff]
  %v212 = vld [vmem:[%s1 + $0x588] sm:$0xff]
  %v213 = vld [vmem:[%s1 + $0x590] sm:$0xff]
  %v214 = vld [vmem:[%s1 + $0x598] sm:$0xff]
  %v215 = vld [vmem:[%s1 + $0x5a0] sm:$0xff]
  %v216 = vld [vmem:[%s1 + $0x5a8] sm:$0xff]
  %v217 = vld [vmem:[%s1 + $0x5b0] sm:$0xff]
  %v218 = vld [vmem:[%s1 + $0x5b8] sm:$0xff]
  %v219 = vld [vmem:[%s1 + $0x5c0] sm:$0xff]
  %v220 = vld [vmem:[%s1 + $0x5c8] sm:$0xff]
  %v221 = vld [vmem:[%s1 + $0x5d0] sm:$0xff]
  %v222 = vld [vmem:[%s1 + $0x5d8] sm:$0xff]
  %v223 = vld [vmem:[%s1 + $0x5e0] sm:$0xff]
  %v224 = vld [vmem:[%s1 + $0x5e8] sm:$0xff]
  %v225 = vld [vmem:[%s1 + $0x5f0] sm:$0xff]
  %v226 = vld [vmem:[%s1 + $0x5f8] sm:$0xff]
  %v227 = vld [vmem:[%s1 + $0x600] sm:$0xff]
  %v228 = vld [vmem:[%s1 + $0x608] sm:$0xff]
  %v229 = vld [vmem:[%s1 + $0x610] sm:$0xff]
  %v230 = vld [vmem:[%s1 + $0x618] sm:$0xff]
  %v231 = vld [vmem:[%s1 + $0x620] sm:$0xff]
  %v232 = vld [vmem:[%s1 + $0x628] sm:$0xff]
  %v233 = vld [vmem:[%s1 + $0x630] sm:$0xff]
  %v234 = vld [vmem:[%s1 + $0x638] sm:$0xff]
  %v235 = vld [vmem:[%s1 + $0x640] sm:$0xff]
  %v236 = vld [vmem:[%s1 + $0x648] sm:$0xff]
  %v237 = vld [vmem:[%s1 + $0x650] sm:$0xff]
  %v238 = vld [vmem:[%s1 + $0x658] sm:$0xff]
  %v239 = vld [vmem:[%s1 + $0x660] sm:$0xff]
  %v240 = vld [vmem:[%s1 + $0x668] sm:$0xff]
  %v241 = vld [vmem:[%s1 + $0x670] sm:$0xff]
  %v242 = vld [vmem:[%s1 + $0x678] sm:$0xff]
  %v243 = vld [vmem:[%s1 + $0x680] sm:$0xff]
  %v244 = vld [vmem:[%s1 + $0x688] sm:$0xff]
  %v245 = vld [vmem:[%s1 + $0x690] sm:$0xff]
  %v246 = vld [vmem:[%s1 + $0x698] sm:$0xff]
  %v247 = vld [vmem:[%s1 + $0x6a0] sm:$0xff]
  %v248 = vld [vmem:[%s1 + $0x6a8] sm:$0xff]
  %v249 = vld [vmem:[%s1 + $0x6b0] sm:$0xff]
  %v250 = vld [vmem:[%s1 + $0x6b8] sm:$0xff]
  %v251 = vld [vmem:[%s1 + $0x6c0] sm:$0xff]
  %v252 = vld [vmem:[%s1 + $0x6c8] sm:$0xff]
  %v253 = vld [vmem:[%s1 + $0x6d0] sm:$0xff]
  %v254 = vld [vmem:[%s1 + $0x6d8] sm:$0xff]
  %v255 = vld [vmem:[%s1 + $0x6e0] sm:$0xff]
  %v256 = vld [vmem:[%s1 + $0x6e8] sm:$0xff]
  %v257 = vld [vmem:[%s1 + $0x6f0] sm:$0xff]
  %v258 = vld [vmem:[%s1 + $0x6f8] sm:$0xff]
  %v259 = vld [vmem:[%s1 + $0x700] sm:$0xff]
  %v260 = vld [vmem:[%s1 + $0x708] sm:$0xff]
  %v261 = vld [vmem:[%s1 + $0x710] sm:$0xff]
  %v262 = vld [vmem:[%s1 + $0x718] sm:$0xff]
  %v263 = vld [vmem:[%s1 + $0x720] sm:$0xff]
  %v264 = vld [vmem:[%s1 + $0x728] sm:$0xff]
  %v265 = vld [vmem:[%s1 + $0x730] sm:$0xff]
  %v266 = vld [vmem:[%s1 + $0x738] sm:$0xff]
  %v267 = vld [vmem:[%s1 + $0x740] sm:$0xff]
  %v268 = vld [vmem:[%s1 + $0x748] sm:$0xff]
  %v269 = vld [vmem:[%s1 + $0x750] sm:$0xff]
  %v270 = vld [vmem:[%s1 + $0x758] sm:$0xff]
  %v271 = vld [vmem:[%s1 + $0x760] sm:$0xff]
  %v272 = vld [vmem:[%s1 + $0x768] sm:$0xff]
  %v273 = vld [vmem:[%s1 + $0x770] sm:$0xff]
  %v274 = vld [vmem:[%s1 + $0x778] sm:$0xff]
  %v275 = vld [vmem:[%s1 + $0x780] sm:$0xff]
  %v276 = vld [vmem:[%s1 + $0x788] sm:$0xff]
  %v277 = vld [vmem:[%s1 + $0x790] sm:$0xff]
  %v278 = vld [vmem:[%s1 + $0x798] sm:$0xff]
  %v279 = vld [vmem:[%s1 + $0x7a0] sm:$0xff]
  %v280 = vld [vmem:[%s1 + $0x7a8] sm:$0xff]
  %v281 = vld [vmem:[%s1 + $0x7b0] sm:$0xff]
  %v282 = vld [vmem:[%s1 + $0x7b8] sm:$0xff]
  %v283 = vld [vmem:[%s1 + $0x7c0] sm:$0xff]
  %v284 = vld [vmem:[%s1 + $0x7c8] sm:$0xff]
  %v285 = vld [vmem:[%s1 + $0x7d0] sm:$0xff]
  %v286 = vld [vmem:[%s1 + $0x7d8] sm:$0xff]
  %v287 = vld [vmem:[%s1 + $0x7e0] sm:$0xff]
  %v288 = vld [vmem:[%s1 + $0x7e8] sm:$0xff]
  %v289 = vld [vmem:[%s1 + $0x7f0] sm:$0xff]
  %v290 = vld [vmem:[%s1 + $0x7f8] sm:$0xff]
  %v291 = vld [vmem:[%s1 + $0x800] sm:$0xff]
  %v292 = vld [vmem:[%s1 + $0x808] sm:$0xff]
  %v293 = vld [vmem:[%s1 + $0x810] sm:$0xff]
  %v294 = vld [vmem:[%s1 + $0x818] sm:$0xff]
  %v295 = vld [vmem:[%s1 + $0x820] sm:$0xff]
  %v296 = vld [vmem:[%s1 + $0x828] sm:$0xff]
  %v297 = vld [vmem:[%s1 + $0x830] sm:$0xff]
  %v298 = vld [vmem:[%s1 + $0x838] sm:$0xff]
  %v299 = vld [vmem:[%s1 + $0x840] sm:$0xff]
  %v300 = vld [vmem:[%s1 + $0x848] sm:$0xff]
  %v301 = vld [vmem:[%s1 + $0x850] sm:$0xff]
  %v302 = vld [vmem:[%s1 + $0x858] sm:$0xff]
  %v303 = vld [vmem:[%s1 + $0x860] sm:$0xff]
  %v304 = vld [vmem:[%s1 + $0x868] sm:$0xff]
  %v305 = vld [vmem:[%s1 + $0x870] sm:$0xff]
  %v306 = vld [vmem:[%s1 + $0x878] sm:$0xff]
  %v307 = vld [vmem:[%s1 + $0x880] sm:$0xff]
  %v308 = vld [vmem:[%s1 + $0x888] sm:$0xff]
  %v309 = vld [vmem:[%s1 + $0x890] sm:$0xff]
  %v310 = vld [vmem:[%s1 + $0x898] sm:$0xff]
  %v311 = vld [vmem:[%s1 + $0x8a0] sm:$0xff]
  %v312 = vld [vmem:[%s1 + $0x8a8] sm:$0xff]
  %v313 = vld [vmem:[%s1 + $0x8b0] sm:$0xff]
  %v314 = vld [vmem:[%s1 + $0x8b8] sm:$0xff]
  %v315 = vld [vmem:[%s1 + $0x8c0] sm:$0xff]
  %v316 = vld [vmem:[%s1 + $0x8c8] sm:$0xff]
  %v317 = vld [vmem:[%s1 + $0x8d0] sm:$0xff]
  %v318 = vld [vmem:[%s1 + $0x8d8] sm:$0xff]
  %v319 = vld [vmem:[%s1 + $0x8e0] sm:$0xff]
  %v320 = vld [vmem:[%s1 + $0x8e8] sm:$0xff]
  %v321 = vld [vmem:[%s1 + $0x8f0] sm:$0xff]
  %v322 = vld [vmem:[%s1 + $0x8f8] sm:$0xff]
  %v323 = vld [vmem:[%s1 + $0x900] sm:$0xff]
  %v324 = vld [vmem:[%s1 + $0x908] sm:$0xff]
  %v325 = vld [vmem:[%s1 + $0x910] sm:$0xff]
  %v326 = vld [vmem:[%s1 + $0x918] sm:$0xff]
  %v327 = vld [vmem:[%s1 + $0x920] sm:$0xff]
  %v328 = vld [vmem:[%s1 + $0x928] sm:$0xff]
  %v329 = vld [vmem:[%s1 + $0x930] sm:$0xff]
  %v330 = vld [vmem:[%s1 + $0x938] sm:$0xff]
  %v331 = vld [vmem:[%s1 + $0x940] sm:$0xff]
  %v332 = vld [vmem:[%s1 + $0x948] sm:$0xff]
  %v333 = vld [vmem:[%s1 + $0x950] sm:$0xff]
  %v334 = vld [vmem:[%s1 + $0x958] sm:$0xff]
  %v335 = vld [vmem:[%s1 + $0x960] sm:$0xff]
  %v336 = vld [vmem:[%s1 + $0x968] sm:$0xff]
  %v337 = vld [vmem:[%s1 + $0x970] sm:$0xff]
  %v338 = vld [vmem:[%s1 + $0x978] sm:$0xff]
  %v339 = vld [vmem:[%s1 + $0x980] sm:$0xff]
  %v340 = vld [vmem:[%s1 + $0x988] sm:$0xff]
  %v341 = vld [vmem:[%s1 + $0x990] sm:$0xff]
  %v342 = vld [vmem:[%s1 + $0x998] sm:$0xff]
  %v343 = vld [vmem:[%s1 + $0x9a0] sm:$0xff]
  %v344 = vld [vmem:[%s1 + $0x9a8] sm:$0xff]
  %v345 = vld [vmem:[%s1 + $0x9b0] sm:$0xff]
  %v346 = vld [vmem:[%s1 + $0x9b8] sm:$0xff]
  %v347 = vld [vmem:[%s1 + $0x9c0] sm:$0xff]
  %v348 = vld [vmem:[%s1 + $0x9c8] sm:$0xff]
  %v349 = vld [vmem:[%s1 + $0x9d0] sm:$0xff]
  %v350 = vld [vmem:[%s1 + $0x9d8] sm:$0xff]
  %v351 = vld [vmem:[%s1 + $0x9e0] sm:$0xff]
  %v352 = vld [vmem:[%s1 + $0x9e8] sm:$0xff]
  %v353 = vld [vmem:[%s1 + $0x9f0] sm:$0xff]
  %v354 = vld [vmem:[%s1 + $0x9f8] sm:$0xff]
  %v355 = vld [vmem:[%s1 + $0xa00] sm:$0xff]
  %v356 = vld [vmem:[%s1 + $0xa08] sm:$0xff]
  %v357 = vld [vmem:[%s1 + $0xa10] sm:$0xff]
  %v358 = vld [vmem:[%s1 + $0xa18] sm:$0xff]
  %v359 = vld [vmem:[%s1 + $0xa20] sm:$0xff]
  %v360 = vld [vmem:[%s1 + $0xa28] sm:$0xff]
  %v361 = vld [vmem:[%s1 + $0xa30] sm:$0xff]
  %v362 = vld [vmem:[%s1 + $0xa38] sm:$0xff]
  %v363 = vld [vmem:[%s1 + $0xa40] sm:$0xff]
  %v364 = vld [vmem:[%s1 + $0xa48] sm:$0xff]
  %v365 = vld [vmem:[%s1 + $0xa50] sm:$0xff]
  %v366 = vld [vmem:[%s1 + $0xa58] sm:$0xff]
  %v367 = vld [vmem:[%s1 + $0xa60] sm:$0xff]
  %v368 = vld [vmem:[%s1 + $0xa68] sm:$0xff]
  %v369 = vld [vmem:[%s1 + $0xa70] sm:$0xff]
  %v370 = vld [vmem:[%s1 + $0xa78] sm:$0xff]
  %v371 = vld [vmem:[%s1 + $0xa80] sm:$0xff]
  %v372 = vld [vmem:[%s1 + $0xa88] sm:$0xff]
  %v373 = vld [vmem:[%s1 + $0xa90] sm:$0xff]
  %v374 = vld [vmem:[%s1 + $0xa98] sm:$0xff]
  %v375 = vld [vmem:[%s1 + $0xaa0] sm:$0xff]
  %v376 = vld [vmem:[%s1 + $0xaa8] sm:$0xff]
  %v377 = vld [vmem:[%s1 + $0xab0] sm:$0xff]
  %v378 = vld [vmem:[%s1 + $0xab8] sm:$0xff]
  %v379 = vld [vmem:[%s1 + $0xac0] sm:$0xff]
  %v380 = vld [vmem:[%s1 + $0xac8] sm:$0xff]
  %v381 = vld [vmem:[%s1 + $0xad0] sm:$0xff]
  %v382 = vld [vmem:[%s1 + $0xad8] sm:$0xff]
  %v383 = vld [vmem:[%s1 + $0xae0] sm:$0xff]
  %v384 = vld [vmem:[%s1 + $0xae8] sm:$0xff]
  %v385 = vld [vmem:[%s1 + $0xaf0] sm:$0xff]
  %v386 = vld [vmem:[%s1 + $0xaf8] sm:$0xff]
  %v387 = vld [vmem:[%s1 + $0xb00] sm:$0xff]
  %v388 = vld [vmem:[%s1 + $0xb08] sm:$0xff]
  %v389 = vld [vmem:[%s1 + $0xb10] sm:$0xff]
  %v390 = vld [vmem:[%s1 + $0xb18] sm:$0xff]
  %v391 = vld [vmem:[%s1 + $0xb20] sm:$0xff]
  %v392 = vld [vmem:[%s1 + $0xb28] sm:$0xff]
  %v393 = vld [vmem:[%s1 + $0xb30] sm:$0xff]
  %v394 = vld [vmem:[%s1 + $0xb38] sm:$0xff]
  %v395 = vld [vmem:[%s1 + $0xb40] sm:$0xff]
  %v396 = vld [vmem:[%s1 + $0xb48] sm:$0xff]
  %v397 = vld [vmem:[%s1 + $0xb50] sm:$0xff]
  %v398 = vld [vmem:[%s1 + $0xb58] sm:$0xff]
  %v399 = vld [vmem:[%s1 + $0xb60] sm:$0xff]
  %v400 = vld [vmem:[%s1 + $0xb68] sm:$0xff]
  %v401 = vld [vmem:[%s1 + $0xb70] sm:$0xff]
  %v402 = vld [vmem:[%s1 + $0xb78] sm:$0xff]
  %v403 = vld [vmem:[%s1 + $0xb80] sm:$0xff]
  %v404 = vld [vmem:[%s1 + $0xb88] sm:$0xff]
  %v405 = vld [vmem:[%s1 + $0xb90] sm:$0xff]
  %v406 = vld [vmem:[%s1 + $0xb98] sm:$0xff]
  %v407 = vld [vmem:[%s1 + $0xba0] sm:$0xff]
  %v408 = vld [vmem:[%s1 + $0xba8] sm:$0xff]
  %v409 = vld [vmem:[%s1 + $0xbb0] sm:$0xff]
  %v410 = vld [vmem:[%s1 + $0xbb8] sm:$0xff]
  %v411 = vld [vmem:[%s1 + $0xbc0] sm:$0xff]
  %v412 = vld [vmem:[%s1 + $0xbc8] sm:$0xff]
  %v413 = vld [vmem:[%s1 + $0xbd0] sm:$0xff]
  %v414 = vld [vmem:[%s1 + $0xbd8] sm:$0xff]
  %v415 = vld [vmem:[%s1 + $0xbe0] sm:$0xff]
  %v416 = vld [vmem:[%s1 + $0xbe8] sm:$0xff]
  %v417 = vld [vmem:[%s1 + $0xbf0] sm:$0xff]
  %v418 = vld [vmem:[%s1 + $0xbf8] sm:$0xff]
  %v419 = vld [vmem:[%s1 + $0xc00] sm:$0xff]
  %v420 = vld [vmem:[%s1 + $0xc08] sm:$0xff]
  %v421 = vld [vmem:[%s1 + $0xc10] sm:$0xff]
  %v422 = vld [vmem:[%s1 + $0xc18] sm:$0xff]
  %v423 = vld [vmem:[%s1 + $0xc20] sm:$0xff]
  %v424 = vld [vmem:[%s1 + $0xc28] sm:$0xff]
  %v425 = vld [vmem:[%s1 + $0xc30] sm:$0xff]
  %v426 = vld [vmem:[%s1 + $0xc38] sm:$0xff]
  %v427 = vld [vmem:[%s1 + $0xc40] sm:$0xff]
  %v428 = vld [vmem:[%s1 + $0xc48] sm:$0xff]
  %v429 = vld [vmem:[%s1 + $0xc50] sm:$0xff]
  %v430 = vld [vmem:[%s1 + $0xc58] sm:$0xff]
  %v431 = vld [vmem:[%s1 + $0xc60] sm:$0xff]
  %v432 = vld [vmem:[%s1 + $0xc68] sm:$0xff]
  %v433 = vld [vmem:[%s1 + $0xc70] sm:$0xff]
  %v434 = vld [vmem:[%s1 + $0xc78] sm:$0xff]
  %v435 = vld [vmem:[%s1 + $0xc80] sm:$0xff]
  %v436 = vld [vmem:[%s1 + $0xc88] sm:$0xff]
  %v437 = vld [vmem:[%s1 + $0xc90] sm:$0xff]
  %v438 = vld [vmem:[%s1 + $0xc98] sm:$0xff]
  %v439 = vld [vmem:[%s1 + $0xca0] sm:$0xff]
  %v440 = vld [vmem:[%s1 + $0xca8] sm:$0xff]
  %v441 = vld [vmem:[%s1 + $0xcb0] sm:$0xff]
  %v442 = vld [vmem:[%s1 + $0xcb8] sm:$0xff]
  %v443 = vld [vmem:[%s1 + $0xcc0] sm:$0xff]
  %v444 = vld [vmem:[%s1 + $0xcc8] sm:$0xff]
  %v445 = vld [vmem:[%s1 + $0xcd0] sm:$0xff]
  %v446 = vld [vmem:[%s1 + $0xcd8] sm:$0xff]
  %v447 = vld [vmem:[%s1 + $0xce0] sm:$0xff]
  %v448 = vld [vmem:[%s1 + $0xce8] sm:$0xff]
  %v449 = vld [vmem:[%s1 + $0xcf0] sm:$0xff]
  %v450 = vld [vmem:[%s1 + $0xcf8] sm:$0xff]
  %v451 = vld [vmem:[%s1 + $0xd00] sm:$0xff]
  %v452 = vld [vmem:[%s1 + $0xd08] sm:$0xff]
  %v453 = vld [vmem:[%s1 + $0xd10] sm:$0xff]
  %v454 = vld [vmem:[%s1 + $0xd18] sm:$0xff]
  %v455 = vld [vmem:[%s1 + $0xd20] sm:$0xff]
  %v456 = vld [vmem:[%s1 + $0xd28] sm:$0xff]
  %v457 = vld [vmem:[%s1 + $0xd30] sm:$0xff]
  %v458 = vld [vmem:[%s1 + $0xd38] sm:$0xff]
  %v459 = vld [vmem:[%s1 + $0xd40] sm:$0xff]
  %v460 = vld [vmem:[%s1 + $0xd48] sm:$0xff]
  %v461 = vld [vmem:[%s1 + $0xd50] sm:$0xff]
  %v462 = vld [vmem:[%s1 + $0xd58] sm:$0xff]
  %v463 = vld [vmem:[%s1 + $0xd60] sm:$0xff]
  %v464 = vld [vmem:[%s1 + $0xd68] sm:$0xff]
  %v465 = vld [vmem:[%s1 + $0xd70] sm:$0xff]
  %v466 = vld [vmem:[%s1 + $0xd78] sm:$0xff]
  %v467 = vld [vmem:[%s1 + $0xd80] sm:$0xff]
  %v468 = vld [vmem:[%s1 + $0xd88] sm:$0xff]
  %v469 = vld [vmem:[%s1 + $0xd90] sm:$0xff]
  %v470 = vld [vmem:[%s1 + $0xd98] sm:$0xff]
  %v471 = vld [vmem:[%s1 + $0xda0] sm:$0xff]
  %v472 = vld [vmem:[%s1 + $0xda8] sm:$0xff]
  %v473 = vld [vmem:[%s1 + $0xdb0] sm:$0xff]
  %v474 = vld [vmem:[%s1 + $0xdb8] sm:$0xff]
  %v475 = vld [vmem:[%s1 + $0xdc0] sm:$0xff]
  %v476 = vld [vmem:[%s1 + $0xdc8] sm:$0xff]
  %v477 = vld [vmem:[%s1 + $0xdd0] sm:$0xff]
  %v478 = vld [vmem:[%s1 + $0xdd8] sm:$0xff]
  %v479 = vld [vmem:[%s1 + $0xde0] sm:$0xff]
  %v480 = vld [vmem:[%s1 + $0xde8] sm:$0xff]
  %v481 = vld [vmem:[%s1 + $0xdf0] sm:$0xff]
  %v482 = vld [vmem:[%s1 + $0xdf8] sm:$0xff]
  %v483 = vld [vmem:[%s1 + $0xe00] sm:$0xff]
  %v484 = vld [vmem:[%s1 + $0xe08] sm:$0xff]
  %v485 = vld [vmem:[%s1 + $0xe10] sm:$0xff]
  %v486 = vld [vmem:[%s1 + $0xe18] sm:$0xff]
  %v487 = vld [vmem:[%s1 + $0xe20] sm:$0xff]
  %v488 = vld [vmem:[%s1 + $0xe28] sm:$0xff]
  %v489 = vld [vmem:[%s1 + $0xe30] sm:$0xff]
  %v490 = vld [vmem:[%s1 + $0xe38] sm:$0xff]
  %v491 = vld [vmem:[%s1 + $0xe40] sm:$0xff]
  %v492 = vld [vmem:[%s1 + $0xe48] sm:$0xff]
  %v493 = vld [vmem:[%s1 + $0xe50] sm:$0xff]
  %v494 = vld [vmem:[%s1 + $0xe58] sm:$0xff]
  %v495 = vld [vmem:[%s1 + $0xe60] sm:$0xff]
  %v496 = vld [vmem:[%s1 + $0xe68] sm:$0xff]
  %v497 = vld [vmem:[%s1 + $0xe70] sm:$0xff]
  %v498 = vld [vmem:[%s1 + $0xe78] sm:$0xff]
  %v499 = vld [vmem:[%s1 + $0xe80] sm:$0xff]
  %v500 = vld [vmem:[%s1 + $0xe88] sm:$0xff]
  %v501 = vld [vmem:[%s1 + $0xe90] sm:$0xff]
  %v502 = vld [vmem:[%s1 + $0xe98] sm:$0xff]
  %v503 = vld [vmem:[%s1 + $0xea0] sm:$0xff]
  %v504 = vld [vmem:[%s1 + $0xea8] sm:$0xff]
  %v505 = vld [vmem:[%s1 + $0xeb0] sm:$0xff]
  %v506 = vld [vmem:[%s1 + $0xeb8] sm:$0xff]
  %v507 = vld [vmem:[%s1 + $0xec0] sm:$0xff]
  %v508 = vld [vmem:[%s1 + $0xec8] sm:$0xff]
  %v509 = vld [vmem:[%s1 + $0xed0] sm:$0xff]
  %v510 = vld [vmem:[%s1 + $0xed8] sm:$0xff]
  %v511 = vld [vmem:[%s1 + $0xee0] sm:$0xff]
  %v512 = vld [vmem:[%s1 + $0xee8] sm:$0xff]
  %v513 = vld [vmem:[%s1 + $0xef0] sm:$0xff]
  %v514 = vld [vmem:[%s1 + $0xef8] sm:$0xff]
  %v515 = vld [vmem:[%s1 + $0xf00] sm:$0xff]
  %v516 = vld [vmem:[%s1 + $0xf08] sm:$0xff]
  %v517 = vld [vmem:[%s1 + $0xf10] sm:$0xff]
  %v518 = vld [vmem:[%s1 + $0xf18] sm:$0xff]
  %v519 = vld [vmem:[%s1 + $0xf20] sm:$0xff]
  %v520 = vld [vmem:[%s1 + $0xf28] sm:$0xff]
  %v521 = vld [vmem:[%s1 + $0xf30] sm:$0xff]
  %v522 = vld [vmem:[%s1 + $0xf38] sm:$0xff]
  %v523 = vld [vmem:[%s1 + $0xf40] sm:$0xff]
  %v524 = vld [vmem:[%s1 + $0xf48] sm:$0xff]
  %v525 = vld [vmem:[%s1 + $0xf50] sm:$0xff]
  %v526 = vld [vmem:[%s1 + $0xf58] sm:$0xff]
  %v527 = vld [vmem:[%s1 + $0xf60] sm:$0xff]
  %v528 = vld [vmem:[%s1 + $0xf68] sm:$0xff]
  %v529 = vld [vmem:[%s1 + $0xf70] sm:$0xff]
  %v530 = vld [vmem:[%s1 + $0xf78] sm:$0xff]
  %v531 = vld [vmem:[%s1 + $0xf80] sm:$0xff]
  %v532 = vld [vmem:[%s1 + $0xf88] sm:$0xff]
  %v533 = vld [vmem:[%s1 + $0xf90] sm:$0xff]
  %v534 = vld [vmem:[%s1 + $0xf98] sm:$0xff]
  %v535 = vld [vmem:[%s1 + $0xfa0] sm:$0xff]
  %v536 = vld [vmem:[%s1 + $0xfa8] sm:$0xff]
  %v537 = vld [vmem:[%s1 + $0xfb0] sm:$0xff]
  %v538 = vld [vmem:[%s1 + $0xfb8] sm:$0xff]
  %v539 = vld [vmem:[%s1 + $0xfc0] sm:$0xff]
  %v540 = vld [vmem:[%s1 + $0xfc8] sm:$0xff]
  %v541 = vld [vmem:[%s1 + $0xfd0] sm:$0xff]
  %v542 = vld [vmem:[%s1 + $0xfd8] sm:$0xff]
  %v543 = vld [vmem:[%s1 + $0xfe0] sm:$0xff]
  %v544 = vld [vmem:[%s1 + $0xfe8] sm:$0xff]
  %v545 = vld [vmem:[%s1 + $0xff0] sm:$0xff]
  %v546 = vld [vmem:[%s1 + $0xff8] sm:$0xff]
  %v547 = vld [vmem:[%s1 + $0x1000] sm:$0xff]
  %v548 = vld [vmem:[%s1 + $0x1008] sm:$0xff]
  %v549 = vld [vmem:[%s1 + $0x1010] sm:$0xff]
  %v550 = vld [vmem:[%s1 + $0x1018] sm:$0xff]
  %v551 = vld [vmem:[%s1 + $0x1020] sm:$0xff]
  %v552 = vld [vmem:[%s1 + $0x1028] sm:$0xff]
  %v553 = vld [vmem:[%s1 + $0x1030] sm:$0xff]
  %v554 = vld [vmem:[%s1 + $0x1038] sm:$0xff]
  %v555 = vld [vmem:[%s1 + $0x1040] sm:$0xff]
  %v556 = vld [vmem:[%s1 + $0x1048] sm:$0xff]
  %v557 = vld [vmem:[%s1 + $0x1050] sm:$0xff]
  %v558 = vld [vmem:[%s1 + $0x1058] sm:$0xff]
  %v559 = vld [vmem:[%s1 + $0x1060] sm:$0xff]
  %v560 = vld [vmem:[%s1 + $0x1068] sm:$0xff]
  %v561 = vld [vmem:[%s1 + $0x1070] sm:$0xff]
  %v562 = vld [vmem:[%s1 + $0x1078] sm:$0xff]
  %v563 = vld [vmem:[%s1 + $0x1080] sm:$0xff]
  %v564 = vld [vmem:[%s1 + $0x1088] sm:$0xff]
  %v565 = vld [vmem:[%s1 + $0x1090] sm:$0xff]
  %v566 = vld [vmem:[%s1 + $0x1098] sm:$0xff]
  %v567 = vld [vmem:[%s1 + $0x10a0] sm:$0xff]
  %v568 = vld [vmem:[%s1 + $0x10a8] sm:$0xff]
  %v569 = vld [vmem:[%s1 + $0x10b0] sm:$0xff]
  %v570 = vld [vmem:[%s1 + $0x10b8] sm:$0xff]
  %v571 = vld [vmem:[%s1 + $0x10c0] sm:$0xff]
  %v572 = vld [vmem:[%s1 + $0x10c8] sm:$0xff]
  %v573 = vld [vmem:[%s1 + $0x10d0] sm:$0xff]
  %v574 = vld [vmem:[%s1 + $0x10d8] sm:$0xff]
  %v575 = vld [vmem:[%s1 + $0x10e0] sm:$0xff]
  %v576 = vld [vmem:[%s1 + $0x10e8] sm:$0xff]
  %v577 = vld [vmem:[%s1 + $0x10f0] sm:$0xff]
  %v578 = vld [vmem:[%s1 + $0x10f8] sm:$0xff]
  %v579 = vld [vmem:[%s1 + $0x1100] sm:$0xff]
  %v580 = vld [vmem:[%s1 + $0x1108] sm:$0xff]
  %v581 = vld [vmem:[%s1 + $0x1110] sm:$0xff]
  %v582 = vld [vmem:[%s1 + $0x1118] sm:$0xff]
  %v583 = vld [vmem:[%s1 + $0x1120] sm:$0xff]
  %v584 = vld [vmem:[%s1 + $0x1128] sm:$0xff]
  %v585 = vld [vmem:[%s1 + $0x1130] sm:$0xff]
  %v586 = vld [vmem:[%s1 + $0x1138] sm:$0xff]
  %v587 = vld [vmem:[%s1 + $0x1140] sm:$0xff]
  %v588 = vld [vmem:[%s1 + $0x1148] sm:$0xff]
  %v589 = vld [vmem:[%s1 + $0x1150] sm:$0xff]
  %v590 = vld [vmem:[%s1 + $0x1158] sm:$0xff]
  %v591 = vld [vmem:[%s1 + $0x1160] sm:$0xff]
  %v592 = vld [vmem:[%s1 + $0x1168] sm:$0xff]
  %v593 = vld [vmem:[%s1 + $0x1170] sm:$0xff]
  %v594 = vld [vmem:[%s1 + $0x1178] sm:$0xff]
  %v595 = vld [vmem:[%s1 + $0x1180] sm:$0xff]
  %v596 = vld [vmem:[%s1 + $0x1188] sm:$0xff]
  %v597 = vld [vmem:[%s1 + $0x1190] sm:$0xff]
  %v598 = vld [vmem:[%s1 + $0x1198] sm:$0xff]
  %v599 = vld [vmem:[%s1 + $0x11a0] sm:$0xff]
  %v600 = vld [vmem:[%s1 + $0x11a8] sm:$0xff]
  %v601 = vld [vmem:[%s1 + $0x11b0] sm:$0xff]
  %v602 = vld [vmem:[%s1 + $0x11b8] sm:$0xff]
  %v603 = vld [vmem:[%s1 + $0x11c0] sm:$0xff]
  %v604 = vld [vmem:[%s1 + $0x11c8] sm:$0xff]
  %v605 = vld [vmem:[%s1 + $0x11d0] sm:$0xff]
  %v606 = vld [vmem:[%s1 + $0x11d8] sm:$0xff]
  %v607 = vld [vmem:[%s1 + $0x11e0] sm:$0xff]
  %v608 = vld [vmem:[%s1 + $0x11e8] sm:$0xff]
  %v609 = vld [vmem:[%s1 + $0x11f0] sm:$0xff]
  %v610 = vld [vmem:[%s1 + $0x11f8] sm:$0xff]
  %v611 = vld [vmem:[%s1 + $0x1200] sm:$0xff]
  %v612 = vld [vmem:[%s1 + $0x1208] sm:$0xff]
  %v613 = vld [vmem:[%s1 + $0x1210] sm:$0xff]
  %v614 = vld [vmem:[%s1 + $0x1218] sm:$0xff]
  %v615 = vld [vmem:[%s1 + $0x1220] sm:$0xff]
  %v616 = vld [vmem:[%s1 + $0x1228] sm:$0xff]
  %v617 = vld [vmem:[%s1 + $0x1230] sm:$0xff]
  %v618 = vld [vmem:[%s1 + $0x1238] sm:$0xff]
  %v619 = vld [vmem:[%s1 + $0x1240] sm:$0xff]
  %v620 = vld [vmem:[%s1 + $0x1248] sm:$0xff]
  %v621 = vld [vmem:[%s1 + $0x1250] sm:$0xff]
  %v622 = vld [vmem:[%s1 + $0x1258] sm:$0xff]
  %v623 = vld [vmem:[%s1 + $0x1260] sm:$0xff]
  %v624 = vld [vmem:[%s1 + $0x1268] sm:$0xff]
  %v625 = vld [vmem:[%s1 + $0x1270] sm:$0xff]
  %v626 = vld [vmem:[%s1 + $0x1278] sm:$0xff]
  %v627 = vld [vmem:[%s1 + $0x1280] sm:$0xff]
  %v628 = vld [vmem:[%s1 + $0x1288] sm:$0xff]
  %v629 = vld [vmem:[%s1 + $0x1290] sm:$0xff]
  %v630 = vld [vmem:[%s1 + $0x1298] sm:$0xff]
  %v631 = vld [vmem:[%s1 + $0x12a0] sm:$0xff]
  %v632 = vld [vmem:[%s1 + $0x12a8] sm:$0xff]
  %v633 = vld [vmem:[%s1 + $0x12b0] sm:$0xff]
  %v634 = vld [vmem:[%s1 + $0x12b8] sm:$0xff]
  %v635 = vld [vmem:[%s1 + $0x12c0] sm:$0xff]
  %v636 = vld [vmem:[%s1 + $0x12c8] sm:$0xff]
  %v637 = vld [vmem:[%s1 + $0x12d0] sm:$0xff]
  %v638 = vld [vmem:[%s1 + $0x12d8] sm:$0xff]
  %v639 = vld [vmem:[%s1 + $0x12e0] sm:$0xff]
  %v640 = vld [vmem:[%s1 + $0x12e8] sm:$0xff]
  %v641 = vld [vmem:[%s1 + $0x12f0] sm:$0xff]
  %v642 = vld [vmem:[%s1 + $0x12f8] sm:$0xff]
  %v643 = vld [vmem:[%s1 + $0x1300] sm:$0xff]
  %v644 = vld [vmem:[%s1 + $0x1308] sm:$0xff]
  %v645 = vld [vmem:[%s1 + $0x1310] sm:$0xff]
  %v646 = vld [vmem:[%s1 + $0x1318] sm:$0xff]
  %v647 = vld [vmem:[%s1 + $0x1320] sm:$0xff]
  %v648 = vld [vmem:[%s1 + $0x1328] sm:$0xff]
  %v649 = vld [vmem:[%s1 + $0x1330] sm:$0xff]
  %v650 = vld [vmem:[%s1 + $0x1338] sm:$0xff]
  %v651 = vld [vmem:[%s1 + $0x1340] sm:$0xff]
  %v652 = vld [vmem:[%s1 + $0x1348] sm:$0xff]
  %v653 = vld [vmem:[%s1 + $0x1350] sm:$0xff]
  %v654 = vld [vmem:[%s1 + $0x1358] sm:$0xff]
  %v655 = vld [vmem:[%s1 + $0x1360] sm:$0xff]
  %v656 = vld [vmem:[%s1 + $0x1368] sm:$0xff]
  %v657 = vld [vmem:[%s1 + $0x1370] sm:$0xff]
  %v658 = vld [vmem:[%s1 + $0x1378] sm:$0xff]
  %v659 = vld [vmem:[%s1 + $0x1380] sm:$0xff]
  %v660 = vld [vmem:[%s1 + $0x1388] sm:$0xff]
  %v661 = vld [vmem:[%s1 + $0x1390] sm:$0xff]
  %v662 = vld [vmem:[%s1 + $0x1398] sm:$0xff]
  %v663 = vld [vmem:[%s1 + $0x13a0] sm:$0xff]
  %v664 = vld [vmem:[%s1 + $0x13a8] sm:$0xff]
  %v665 = vld [vmem:[%s1 + $0x13b0] sm:$0xff]
  %v666 = vld [vmem:[%s1 + $0x13b8] sm:$0xff]
  %v667 = vld [vmem:[%s1 + $0x13c0] sm:$0xff]
  %v668 = vld [vmem:[%s1 + $0x13c8] sm:$0xff]
  %v669 = vld [vmem:[%s1 + $0x13d0] sm:$0xff]
  %v670 = vld [vmem:[%s1 + $0x13d8] sm:$0xff]
  %v671 = vld [vmem:[%s1 + $0x13e0] sm:$0xff]
  %v672 = vld [vmem:[%s1 + $0x13e8] sm:$0xff]
  %v673 = vld [vmem:[%s1 + $0x13f0] sm:$0xff]
  %v674 = vld [vmem:[%s1 + $0x13f8] sm:$0xff]
  %v675 = vld [vmem:[%s1 + $0x1400] sm:$0xff]
  %v676 = vld [vmem:[%s1 + $0x1408] sm:$0xff]
  %v677 = vld [vmem:[%s1 + $0x1410] sm:$0xff]
  %v678 = vld [vmem:[%s1 + $0x1418] sm:$0xff]
  %v679 = vld [vmem:[%s1 + $0x1420] sm:$0xff]
  %v680 = vld [vmem:[%s1 + $0x1428] sm:$0xff]
  %v681 = vld [vmem:[%s1 + $0x1430] sm:$0xff]
  %v682 = vld [vmem:[%s1 + $0x1438] sm:$0xff]
  %v683 = vld [vmem:[%s1 + $0x1440] sm:$0xff]
  %v684 = vld [vmem:[%s1 + $0x1448] sm:$0xff]
  %v685 = vld [vmem:[%s1 + $0x1450] sm:$0xff]
  %v686 = vld [vmem:[%s1 + $0x1458] sm:$0xff]
  %v687 = vld [vmem:[%s1 + $0x1460] sm:$0xff]
  %v688 = vld [vmem:[%s1 + $0x1468] sm:$0xff]
  %v689 = vld [vmem:[%s1 + $0x1470] sm:$0xff]
  %v690 = vld [vmem:[%s1 + $0x1478] sm:$0xff]
  %v691 = vld [vmem:[%s1 + $0x1480] sm:$0xff]
  %v692 = vld [vmem:[%s1 + $0x1488] sm:$0xff]
  %v693 = vld [vmem:[%s1 + $0x1490] sm:$0xff]
  %v694 = vld [vmem:[%s1 + $0x1498] sm:$0xff]
  %v695 = vld [vmem:[%s1 + $0x14a0] sm:$0xff]
  %v696 = vld [vmem:[%s1 + $0x14a8] sm:$0xff]
  %v697 = vld [vmem:[%s1 + $0x14b0] sm:$0xff]
  %v698 = vld [vmem:[%s1 + $0x14b8] sm:$0xff]
  %v699 = vld [vmem:[%s1 + $0x14c0] sm:$0xff]
  %v700 = vld [vmem:[%s1 + $0x14c8] sm:$0xff]
  %v701 = vld [vmem:[%s1 + $0x14d0] sm:$0xff]
  %v702 = vld [vmem:[%s1 + $0x14d8] sm:$0xff]
  %v703 = vld [vmem:[%s1 + $0x14e0] sm:$0xff]
  %v704 = vld [vmem:[%s1 + $0x14e8] sm:$0xff]
  %v705 = vld [vmem:[%s1 + $0x14f0] sm:$0xff]
  %v706 = vld [vmem:[%s1 + $0x14f8] sm:$0xff]
  %v707 = vld [vmem:[%s1 + $0x1500] sm:$0xff]
  %v708 = vld [vmem:[%s1 + $0x1508] sm:$0xff]
  %v709 = vld [vmem:[%s1 + $0x1510] sm:$0xff]
  %v710 = vld [vmem:[%s1 + $0x1518] sm:$0xff]
  %v711 = vld [vmem:[%s1 + $0x1520] sm:$0xff]
  %v712 = vld [vmem:[%s1 + $0x1528] sm:$0xff]
  %v713 = vld [vmem:[%s1 + $0x1530] sm:$0xff]
  %v714 = vld [vmem:[%s1 + $0x1538] sm:$0xff]
  %v715 = vld [vmem:[%s1 + $0x1540] sm:$0xff]
  %v716 = vld [vmem:[%s1 + $0x1548] sm:$0xff]
  %v717 = vld [vmem:[%s1 + $0x1550] sm:$0xff]
  %v718 = vld [vmem:[%s1 + $0x1558] sm:$0xff]
  %v719 = vld [vmem:[%s1 + $0x1560] sm:$0xff]
  %v720 = vld [vmem:[%s1 + $0x1568] sm:$0xff]
  %v721 = vld [vmem:[%s1 + $0x1570] sm:$0xff]
  %v722 = vld [vmem:[%s1 + $0x1578] sm:$0xff]
  %v723 = vld [vmem:[%s1 + $0x1580] sm:$0xff]
  %v724 = vld [vmem:[%s1 + $0x1588] sm:$0xff]
  %v725 = vld [vmem:[%s1 + $0x1590] sm:$0xff]
  %v726 = vld [vmem:[%s1 + $0x1598] sm:$0xff]
  %v727 = vld [vmem:[%s1 + $0x15a0] sm:$0xff]
  %v728 = vld [vmem:[%s1 + $0x15a8] sm:$0xff]
  %v729 = vld [vmem:[%s1 + $0x15b0] sm:$0xff]
  %v730 = vld [vmem:[%s1 + $0x15b8] sm:$0xff]
  %v731 = vld [vmem:[%s1 + $0x15c0] sm:$0xff]
  %v732 = vld [vmem:[%s1 + $0x15c8] sm:$0xff]
  %v733 = vld [vmem:[%s1 + $0x15d0] sm:$0xff]
  %v734 = vld [vmem:[%s1 + $0x15d8] sm:$0xff]
  %v735 = vld [vmem:[%s1 + $0x15e0] sm:$0xff]
  %v736 = vld [vmem:[%s1 + $0x15e8] sm:$0xff]
  %v737 = vld [vmem:[%s1 + $0x15f0] sm:$0xff]
  %v738 = vld [vmem:[%s1 + $0x15f8] sm:$0xff]
  %v739 = vld [vmem:[%s1 + $0x1600] sm:$0xff]
  %v740 = vld [vmem:[%s1 + $0x1608] sm:$0xff]
  %v741 = vld [vmem:[%s1 + $0x1610] sm:$0xff]
  %v742 = vld [vmem:[%s1 + $0x1618] sm:$0xff]
  %v743 = vld [vmem:[%s1 + $0x1620] sm:$0xff]
  %v744 = vld [vmem:[%s1 + $0x1628] sm:$0xff]
  %v745 = vld [vmem:[%s1 + $0x1630] sm:$0xff]
  %v746 = vld [vmem:[%s1 + $0x1638] sm:$0xff]
  %v747 = vld [vmem:[%s1 + $0x1640] sm:$0xff]
  %v748 = vld [vmem:[%s1 + $0x1648] sm:$0xff]
  %v749 = vld [vmem:[%s1 + $0x1650] sm:$0xff]
  %v750 = vld [vmem:[%s1 + $0x1658] sm:$0xff]
  %v751 = vld [vmem:[%s1 + $0x1660] sm:$0xff]
  %v752 = vld [vmem:[%s1 + $0x1668] sm:$0xff]
  %v753 = vld [vmem:[%s1 + $0x1670] sm:$0xff]
  %v754 = vld [vmem:[%s1 + $0x1678] sm:$0xff]
  %v755 = vld [vmem:[%s1 + $0x1680] sm:$0xff]
  %v756 = vld [vmem:[%s1 + $0x1688] sm:$0xff]
  %v757 = vld [vmem:[%s1 + $0x1690] sm:$0xff]
  %v758 = vld [vmem:[%s1 + $0x1698] sm:$0xff]
  %v759 = vld [vmem:[%s1 + $0x16a0] sm:$0xff]
  %v760 = vld [vmem:[%s1 + $0x16a8] sm:$0xff]
  %v761 = vld [vmem:[%s1 + $0x16b0] sm:$0xff]
  %v762 = vld [vmem:[%s1 + $0x16b8] sm:$0xff]
  %v763 = vld [vmem:[%s1 + $0x16c0] sm:$0xff]
  %v764 = vld [vmem:[%s1 + $0x16c8] sm:$0xff]
  %v765 = vld [vmem:[%s1 + $0x16d0] sm:$0xff]
  %v766 = vld [vmem:[%s1 + $0x16d8] sm:$0xff]
  %v767 = vld [vmem:[%s1 + $0x16e0] sm:$0xff]
  %v768 = vld [vmem:[%s1 + $0x16e8] sm:$0xff]
  %v769 = vld [vmem:[%s1 + $0x16f0] sm:$0xff]
  %v770 = vld [vmem:[%s1 + $0x16f8] sm:$0xff]
  %v771 = vld [vmem:[%s1 + $0x1700] sm:$0xff]
  %v772 = vld [vmem:[%s1 + $0x1708] sm:$0xff]
  %v773 = vld [vmem:[%s1 + $0x1710] sm:$0xff]
  %v774 = vld [vmem:[%s1 + $0x1718] sm:$0xff]
  %v775 = vld [vmem:[%s1 + $0x1720] sm:$0xff]
  %v776 = vld [vmem:[%s1 + $0x1728] sm:$0xff]
  %v777 = vld [vmem:[%s1 + $0x1730] sm:$0xff]
  %v778 = vld [vmem:[%s1 + $0x1738] sm:$0xff]
  %v779 = vld [vmem:[%s1 + $0x1740] sm:$0xff]
  %v780 = vld [vmem:[%s1 + $0x1748] sm:$0xff]
  %v781 = vld [vmem:[%s1 + $0x1750] sm:$0xff]
  %v782 = vld [vmem:[%s1 + $0x1758] sm:$0xff]
  %v783 = vld [vmem:[%s1 + $0x1760] sm:$0xff]
  %v784 = vld [vmem:[%s1 + $0x1768] sm:$0xff]
  %v785 = vld [vmem:[%s1 + $0x1770] sm:$0xff]
  %v786 = vld [vmem:[%s1 + $0x1778] sm:$0xff]
  %v787 = vld [vmem:[%s1 + $0x1780] sm:$0xff]
  %v788 = vld [vmem:[%s1 + $0x1788] sm:$0xff]
  %v789 = vld [vmem:[%s1 + $0x1790] sm:$0xff]
  %v790 = vld [vmem:[%s1 + $0x1798] sm:$0xff]
  %v791 = vld [vmem:[%s1 + $0x17a0] sm:$0xff]
  %v792 = vld [vmem:[%s1 + $0x17a8] sm:$0xff]
  %v793 = vld [vmem:[%s1 + $0x17b0] sm:$0xff]
  %v794 = vld [vmem:[%s1 + $0x17b8] sm:$0xff]
  %v795 = vld [vmem:[%s1 + $0x17c0] sm:$0xff]
  %v796 = vld [vmem:[%s1 + $0x17c8] sm:$0xff]
  %v797 = vld [vmem:[%s1 + $0x17d0] sm:$0xff]
  %v798 = vld [vmem:[%s1 + $0x17d8] sm:$0xff]
  %v799 = vld [vmem:[%s1 + $0x17e0] sm:$0xff]
  %v800 = vld [vmem:[%s1 + $0x17e8] sm:$0xff]
  %v801 = vld [vmem:[%s1 + $0x17f0] sm:$0xff]
  %v802 = vld [vmem:[%s1 + $0x17f8] sm:$0xff]
  %v803 = vld [vmem:[%s1 + $0x1800] sm:$0xff]
  %v804 = vld [vmem:[%s1 + $0x1808] sm:$0xff]
  %v805 = vld [vmem:[%s1 + $0x1810] sm:$0xff]
  %v806 = vld [vmem:[%s1 + $0x1818] sm:$0xff]
  %v807 = vld [vmem:[%s1 + $0x1820] sm:$0xff]
  %v808 = vld [vmem:[%s1 + $0x1828] sm:$0xff]
  %v809 = vld [vmem:[%s1 + $0x1830] sm:$0xff]
  %v810 = vld [vmem:[%s1 + $0x1838] sm:$0xff]
  %v811 = vld [vmem:[%s1 + $0x1840] sm:$0xff]
  %v812 = vld [vmem:[%s1 + $0x1848] sm:$0xff]
  %v813 = vld [vmem:[%s1 + $0x1850] sm:$0xff]
  %v814 = vld [vmem:[%s1 + $0x1858] sm:$0xff]
  %v815 = vld [vmem:[%s1 + $0x1860] sm:$0xff]
  %v816 = vld [vmem:[%s1 + $0x1868] sm:$0xff]
  %v817 = vld [vmem:[%s1 + $0x1870] sm:$0xff]
  %v818 = vld [vmem:[%s1 + $0x1878] sm:$0xff]
  %v819 = vld [vmem:[%s1 + $0x1880] sm:$0xff]
  %v820 = vld [vmem:[%s1 + $0x1888] sm:$0xff]
  %v821 = vld [vmem:[%s1 + $0x1890] sm:$0xff]
  %v822 = vld [vmem:[%s1 + $0x1898] sm:$0xff]
  %v823 = vld [vmem:[%s1 + $0x18a0] sm:$0xff]
  %v824 = vld [vmem:[%s1 + $0x18a8] sm:$0xff]
  %v825 = vld [vmem:[%s1 + $0x18b0] sm:$0xff]
  %v826 = vld [vmem:[%s1 + $0x18b8] sm:$0xff]
  %v827 = vld [vmem:[%s1 + $0x18c0] sm:$0xff]
  %v828 = vld [vmem:[%s1 + $0x18c8] sm:$0xff]
  %v829 = vld [vmem:[%s1 + $0x18d0] sm:$0xff]
  %v830 = vld [vmem:[%s1 + $0x18d8] sm:$0xff]
  %v831 = vld [vmem:[%s1 + $0x18e0] sm:$0xff]
  %v832 = vld [vmem:[%s1 + $0x18e8] sm:$0xff]
  %v833 = vld [vmem:[%s1 + $0x18f0] sm:$0xff]
  %v834 = vld [vmem:[%s1 + $0x18f8] sm:$0xff]
  %v835 = vld [vmem:[%s1 + $0x1900] sm:$0xff]
  %v836 = vld [vmem:[%s1 + $0x1908] sm:$0xff]
  %v837 = vld [vmem:[%s1 + $0x1910] sm:$0xff]
  %v838 = vld [vmem:[%s1 + $0x1918] sm:$0xff]
  %v839 = vld [vmem:[%s1 + $0x1920] sm:$0xff]
  %v840 = vld [vmem:[%s1 + $0x1928] sm:$0xff]
  %v841 = vld [vmem:[%s1 + $0x1930] sm:$0xff]
  %v842 = vld [vmem:[%s1 + $0x1938] sm:$0xff]
  %v843 = vld [vmem:[%s1 + $0x1940] sm:$0xff]
  %v844 = vld [vmem:[%s1 + $0x1948] sm:$0xff]
  %v845 = vld [vmem:[%s1 + $0x1950] sm:$0xff]
  %v846 = vld [vmem:[%s1 + $0x1958] sm:$0xff]
  %v847 = vld [vmem:[%s1 + $0x1960] sm:$0xff]
  %v848 = vld [vmem:[%s1 + $0x1968] sm:$0xff]
  %v849 = vld [vmem:[%s1 + $0x1970] sm:$0xff]
  %v850 = vld [vmem:[%s1 + $0x1978] sm:$0xff]
  %v851 = vld [vmem:[%s1 + $0x1980] sm:$0xff]
  %v852 = vld [vmem:[%s1 + $0x1988] sm:$0xff]
  %v853 = vld [vmem:[%s1 + $0x1990] sm:$0xff]
  %v854 = vld [vmem:[%s1 + $0x1998] sm:$0xff]
  %v855 = vld [vmem:[%s1 + $0x19a0] sm:$0xff]
  %v856 = vld [vmem:[%s1 + $0x19a8] sm:$0xff]
  %v857 = vld [vmem:[%s1 + $0x19b0] sm:$0xff]
  %v858 = vld [vmem:[%s1 + $0x19b8] sm:$0xff]
  %v859 = vld [vmem:[%s1 + $0x19c0] sm:$0xff]
  %v860 = vld [vmem:[%s1 + $0x19c8] sm:$0xff]
  %v861 = vld [vmem:[%s1 + $0x19d0] sm:$0xff]
  %v862 = vld [vmem:[%s1 + $0x19d8] sm:$0xff]
  %v863 = vld [vmem:[%s1 + $0x19e0] sm:$0xff]
  %v864 = vld [vmem:[%s1 + $0x19e8] sm:$0xff]
  %v865 = vld [vmem:[%s1 + $0x19f0] sm:$0xff]
  %v866 = vld [vmem:[%s1 + $0x19f8] sm:$0xff]
  %v867 = vld [vmem:[%s1 + $0x1a00] sm:$0xff]
  %v868 = vld [vmem:[%s1 + $0x1a08] sm:$0xff]
  %v869 = vld [vmem:[%s1 + $0x1a10] sm:$0xff]
  %v870 = vld [vmem:[%s1 + $0x1a18] sm:$0xff]
  %v871 = vld [vmem:[%s1 + $0x1a20] sm:$0xff]
  %v872 = vld [vmem:[%s1 + $0x1a28] sm:$0xff]
  %v873 = vld [vmem:[%s1 + $0x1a30] sm:$0xff]
  %v874 = vld [vmem:[%s1 + $0x1a38] sm:$0xff]
  %v875 = vld [vmem:[%s1 + $0x1a40] sm:$0xff]
  %v876 = vld [vmem:[%s1 + $0x1a48] sm:$0xff]
  %v877 = vld [vmem:[%s1 + $0x1a50] sm:$0xff]
  %v878 = vld [vmem:[%s1 + $0x1a58] sm:$0xff]
  %v879 = vld [vmem:[%s1 + $0x1a60] sm:$0xff]
  %v880 = vld [vmem:[%s1 + $0x1a68] sm:$0xff]
  %v881 = vld [vmem:[%s1 + $0x1a70] sm:$0xff]
  %v882 = vld [vmem:[%s1 + $0x1a78] sm:$0xff]
  %v883 = vld [vmem:[%s1 + $0x1a80] sm:$0xff]
  %v884 = vld [vmem:[%s1 + $0x1a88] sm:$0xff]
  %v885 = vld [vmem:[%s1 + $0x1a90] sm:$0xff]
  %v886 = vld [vmem:[%s1 + $0x1a98] sm:$0xff]
  %v887 = vld [vmem:[%s1 + $0x1aa0] sm:$0xff]
  %v888 = vld [vmem:[%s1 + $0x1aa8] sm:$0xff]
  %v889 = vld [vmem:[%s1 + $0x1ab0] sm:$0xff]
  %v890 = vld [vmem:[%s1 + $0x1ab8] sm:$0xff]
  %v891 = vld [vmem:[%s1 + $0x1ac0] sm:$0xff]
  %v892 = vld [vmem:[%s1 + $0x1ac8] sm:$0xff]
  %v893 = vld [vmem:[%s1 + $0x1ad0] sm:$0xff]
  %v894 = vld [vmem:[%s1 + $0x1ad8] sm:$0xff]
  %v895 = vld [vmem:[%s1 + $0x1ae0] sm:$0xff]
  %v896 = vld [vmem:[%s1 + $0x1ae8] sm:$0xff]
  %v897 = vld [vmem:[%s1 + $0x1af0] sm:$0xff]
  %v898 = vld [vmem:[%s1 + $0x1af8] sm:$0xff]
  %v899 = vld [vmem:[%s1 + $0x1b00] sm:$0xff]
  %v900 = vld [vmem:[%s1 + $0x1b08] sm:$0xff]
  %v901 = vld [vmem:[%s1 + $0x1b10] sm:$0xff]
  %v902 = vld [vmem:[%s1 + $0x1b18] sm:$0xff]
  %v903 = vld [vmem:[%s1 + $0x1b20] sm:$0xff]
  %v904 = vld [vmem:[%s1 + $0x1b28] sm:$0xff]
  %v905 = vld [vmem:[%s1 + $0x1b30] sm:$0xff]
  %v906 = vld [vmem:[%s1 + $0x1b38] sm:$0xff]
  %v907 = vld [vmem:[%s1 + $0x1b40] sm:$0xff]
  %v908 = vld [vmem:[%s1 + $0x1b48] sm:$0xff]
  %v909 = vld [vmem:[%s1 + $0x1b50] sm:$0xff]
  %v910 = vld [vmem:[%s1 + $0x1b58] sm:$0xff]
  %v911 = vld [vmem:[%s1 + $0x1b60] sm:$0xff]
  %v912 = vld [vmem:[%s1 + $0x1b68] sm:$0xff]
  %v913 = vld [vmem:[%s1 + $0x1b70] sm:$0xff]
  %v914 = vld [vmem:[%s1 + $0x1b78] sm:$0xff]
  %v915 = vld [vmem:[%s1 + $0x1b80] sm:$0xff]
  %v916 = vld [vmem:[%s1 + $0x1b88] sm:$0xff]
  %v917 = vld [vmem:[%s1 + $0x1b90] sm:$0xff]
  %v918 = vld [vmem:[%s1 + $0x1b98] sm:$0xff]
  %v919 = vld [vmem:[%s1 + $0x1ba0] sm:$0xff]
  %v920 = vld [vmem:[%s1 + $0x1ba8] sm:$0xff]
  %v921 = vld [vmem:[%s1 + $0x1bb0] sm:$0xff]
  %v922 = vld [vmem:[%s1 + $0x1bb8] sm:$0xff]
  %v923 = vld [vmem:[%s1 + $0x1bc0] sm:$0xff]
  %v924 = vld [vmem:[%s1 + $0x1bc8] sm:$0xff]
  %v925 = vld [vmem:[%s1 + $0x1bd0] sm:$0xff]
  %v926 = vld [vmem:[%s1 + $0x1bd8] sm:$0xff]
  %v927 = vld [vmem:[%s1 + $0x1be0] sm:$0xff]
  %v928 = vld [vmem:[%s1 + $0x1be8] sm:$0xff]
  %v929 = vld [vmem:[%s1 + $0x1bf0] sm:$0xff]
  %v930 = vld [vmem:[%s1 + $0x1bf8] sm:$0xff]
  %v931 = vld [vmem:[%s1 + $0x1c00] sm:$0xff]
  %v932 = vld [vmem:[%s1 + $0x1c08] sm:$0xff]
  %v933 = vld [vmem:[%s1 + $0x1c10] sm:$0xff]
  %v934 = vld [vmem:[%s1 + $0x1c18] sm:$0xff]
  %v935 = vld [vmem:[%s1 + $0x1c20] sm:$0xff]
  %v936 = vld [vmem:[%s1 + $0x1c28] sm:$0xff]
  %v937 = vld [vmem:[%s1 + $0x1c30] sm:$0xff]
  %v938 = vld [vmem:[%s1 + $0x1c38] sm:$0xff]
  %v939 = vld [vmem:[%s1 + $0x1c40] sm:$0xff]
  %v940 = vld [vmem:[%s1 + $0x1c48] sm:$0xff]
  %v941 = vld [vmem:[%s1 + $0x1c50] sm:$0xff]
  %v942 = vld [vmem:[%s1 + $0x1c58] sm:$0xff]
  %v943 = vld [vmem:[%s1 + $0x1c60] sm:$0xff]
  %v944 = vld [vmem:[%s1 + $0x1c68] sm:$0xff]
  %v945 = vld [vmem:[%s1 + $0x1c70] sm:$0xff]
  %v946 = vld [vmem:[%s1 + $0x1c78] sm:$0xff]
  %v947 = vld [vmem:[%s1 + $0x1c80] sm:$0xff]
  %v948 = vld [vmem:[%s1 + $0x1c88] sm:$0xff]
  %v949 = vld [vmem:[%s1 + $0x1c90] sm:$0xff]
  %v950 = vld [vmem:[%s1 + $0x1c98] sm:$0xff]
  %v951 = vld [vmem:[%s1 + $0x1ca0] sm:$0xff]
  %v952 = vld [vmem:[%s1 + $0x1ca8] sm:$0xff]
  %v953 = vld [vmem:[%s1 + $0x1cb0] sm:$0xff]
  %v954 = vld [vmem:[%s1 + $0x1cb8] sm:$0xff]
  %v955 = vld [vmem:[%s1 + $0x1cc0] sm:$0xff]
  %v956 = vld [vmem:[%s1 + $0x1cc8] sm:$0xff]
  %v957 = vld [vmem:[%s1 + $0x1cd0] sm:$0xff]
  %v958 = vld [vmem:[%s1 + $0x1cd8] sm:$0xff]
  %v959 = vld [vmem:[%s1 + $0x1ce0] sm:$0xff]
  %v960 = vld [vmem:[%s1 + $0x1ce8] sm:$0xff]
  %v961 = vld [vmem:[%s1 + $0x1cf0] sm:$0xff]
  %v962 = vld [vmem:[%s1 + $0x1cf8] sm:$0xff]
  %v963 = vld [vmem:[%s1 + $0x1d00] sm:$0xff]
  %v964 = vld [vmem:[%s1 + $0x1d08] sm:$0xff]
  %v965 = vld [vmem:[%s1 + $0x1d10] sm:$0xff]
  %v966 = vld [vmem:[%s1 + $0x1d18] sm:$0xff]
  %v967 = vld [vmem:[%s1 + $0x1d20] sm:$0xff]
  %v968 = vld [vmem:[%s1 + $0x1d28] sm:$0xff]
  %v969 = vld [vmem:[%s1 + $0x1d30] sm:$0xff]
  %v970 = vld [vmem:[%s1 + $0x1d38] sm:$0xff]
  %v971 = vld [vmem:[%s1 + $0x1d40] sm:$0xff]
  %v972 = vld [vmem:[%s1 + $0x1d48] sm:$0xff]
  %v973 = vld [vmem:[%s1 + $0x1d50] sm:$0xff]
  %v974 = vld [vmem:[%s1 + $0x1d58] sm:$0xff]
  %v975 = vld [vmem:[%s1 + $0x1d60] sm:$0xff]
  %v976 = vld [vmem:[%s1 + $0x1d68] sm:$0xff]
  %v977 = vld [vmem:[%s1 + $0x1d70] sm:$0xff]
  %v978 = vld [vmem:[%s1 + $0x1d78] sm:$0xff]
  %v979 = vld [vmem:[%s1 + $0x1d80] sm:$0xff]
  %v980 = vld [vmem:[%s1 + $0x1d88] sm:$0xff]
  %v981 = vld [vmem:[%s1 + $0x1d90] sm:$0xff]
  %v982 = vld [vmem:[%s1 + $0x1d98] sm:$0xff]
  %v983 = vld [vmem:[%s1 + $0x1da0] sm:$0xff]
  %v984 = vld [vmem:[%s1 + $0x1da8] sm:$0xff]
  %v985 = vld [vmem:[%s1 + $0x1db0] sm:$0xff]
  %v986 = vld [vmem:[%s1 + $0x1db8] sm:$0xff]
  %v987 = vld [vmem:[%s1 + $0x1dc0] sm:$0xff]
  %v988 = vld [vmem:[%s1 + $0x1dc8] sm:$0xff]
  %v989 = vld [vmem:[%s1 + $0x1dd0] sm:$0xff]
  %v990 = vld [vmem:[%s1 + $0x1dd8] sm:$0xff]
  %v991 = vld [vmem:[%s1 + $0x1de0] sm:$0xff]
  %v992 = vld [vmem:[%s1 + $0x1de8] sm:$0xff]
  %v993 = vld [vmem:[%s1 + $0x1df0] sm:$0xff]
  %v994 = vld [vmem:[%s1 + $0x1df8] sm:$0xff]
  %v995 = vld [vmem:[%s1 + $0x1e00] sm:$0xff]
  %v996 = vld [vmem:[%s1 + $0x1e08] sm:$0xff]
  %v997 = vld [vmem:[%s1 + $0x1e10] sm:$0xff]
  %v998 = vld [vmem:[%s1 + $0x1e18] sm:$0xff]
  %v999 = vld [vmem:[%s1 + $0x1e20] sm:$0xff]
  %v1000 = vld [vmem:[%s1 + $0x1e28] sm:$0xff]
  %v1001 = vld [vmem:[%s1 + $0x1e30] sm:$0xff]
  %v1002 = vld [vmem:[%s1 + $0x1e38] sm:$0xff]
  %v1003 = vld [vmem:[%s1 + $0x1e40] sm:$0xff]
  %v1004 = vld [vmem:[%s1 + $0x1e48] sm:$0xff]
  %v1005 = vld [vmem:[%s1 + $0x1e50] sm:$0xff]
  %v1006 = vld [vmem:[%s1 + $0x1e58] sm:$0xff]
  %v1007 = vld [vmem:[%s1 + $0x1e60] sm:$0xff]
  %v1008 = vld [vmem:[%s1 + $0x1e68] sm:$0xff]
  %v1009 = vld [vmem:[%s1 + $0x1e70] sm:$0xff]
  %v1010 = vld [vmem:[%s1 + $0x1e78] sm:$0xff]
  %v1011 = vld [vmem:[%s1 + $0x1e80] sm:$0xff]
  %v1012 = vld [vmem:[%s1 + $0x1e88] sm:$0xff]
  %v1013 = vld [vmem:[%s1 + $0x1e90] sm:$0xff]
  %v1014 = vld [vmem:[%s1 + $0x1e98] sm:$0xff]
  %v1015 = vld [vmem:[%s1 + $0x1ea0] sm:$0xff]
  %v1016 = vld [vmem:[%s1 + $0x1ea8] sm:$0xff]
  %v1017 = vld [vmem:[%s1 + $0x1eb0] sm:$0xff]
  %v1018 = vld [vmem:[%s1 + $0x1eb8] sm:$0xff]
  %v1019 = vld [vmem:[%s1 + $0x1ec0] sm:$0xff]
  %v1020 = vld [vmem:[%s1 + $0x1ec8] sm:$0xff]
  %v1021 = vld [vmem:[%s1 + $0x1ed0] sm:$0xff]
  %v1022 = vld [vmem:[%s1 + $0x1ed8] sm:$0xff]
  %v1023 = vld [vmem:[%s1 + $0x1ee0] sm:$0xff]
  %v1024 = vld [vmem:[%s1 + $0x1ee8] sm:$0xff]
  %v1025 = vld [vmem:[%s1 + $0x1ef0] sm:$0xff]
  %v1026 = vld [vmem:[%s1 + $0x1ef8] sm:$0xff]
  %v1027 = vld [vmem:[%s1 + $0x1f00] sm:$0xff]
  %v1028 = vld [vmem:[%s1 + $0x1f08] sm:$0xff]
  %v1029 = vld [vmem:[%s1 + $0x1f10] sm:$0xff]
  %v1030 = vld [vmem:[%s1 + $0x1f18] sm:$0xff]
  %v1031 = vld [vmem:[%s1 + $0x1f20] sm:$0xff]
  %v1032 = vld [vmem:[%s1 + $0x1f28] sm:$0xff]
  %v1033 = vld [vmem:[%s1 + $0x1f30] sm:$0xff]
  %v1034 = vld [vmem:[%s1 + $0x1f38] sm:$0xff]
  %v1035 = vld [vmem:[%s1 + $0x1f40] sm:$0xff]
  %v1036 = vld [vmem:[%s1 + $0x1f48] sm:$0xff]
  %v1037 = vld [vmem:[%s1 + $0x1f50] sm:$0xff]
  %v1038 = vld [vmem:[%s1 + $0x1f58] sm:$0xff]
  %v1039 = vld [vmem:[%s1 + $0x1f60] sm:$0xff]
  %v1040 = vld [vmem:[%s1 + $0x1f68] sm:$0xff]
  %v1041 = vld [vmem:[%s1 + $0x1f70] sm:$0xff]
  %v1042 = vld [vmem:[%s1 + $0x1f78] sm:$0xff]
  %v1043 = vld [vmem:[%s1 + $0x1f80] sm:$0xff]
  %v1044 = vld [vmem:[%s1 + $0x1f88] sm:$0xff]
  %v1045 = vld [vmem:[%s1 + $0x1f90] sm:$0xff]
  %v1046 = vld [vmem:[%s1 + $0x1f98] sm:$0xff]
  %v1047 = vld [vmem:[%s1 + $0x1fa0] sm:$0xff]
  %v1048 = vld [vmem:[%s1 + $0x1fa8] sm:$0xff]
  %v1049 = vld [vmem:[%s1 + $0x1fb0] sm:$0xff]
  %v1050 = vld [vmem:[%s1 + $0x1fb8] sm:$0xff]
  %v1051 = vld [vmem:[%s1 + $0x1fc0] sm:$0xff]
  %v1052 = vld [vmem:[%s1 + $0x1fc8] sm:$0xff]
  %v1053 = vld [vmem:[%s1 + $0x1fd0] sm:$0xff]
  %v1054 = vld [vmem:[%s1 + $0x1fd8] sm:$0xff]
  %v1055 = vld [vmem:[%s1 + $0x1fe0] sm:$0xff]
  %v1056 = vld [vmem:[%s1 + $0x1fe8] sm:$0xff]
  %v1057 = vld [vmem:[%s1 + $0x1ff0] sm:$0xff]
  %v1058 = vld [vmem:[%s1 + $0x1ff8] sm:$0xff]
  %v1059 = vld [vmem:[%s2] sm:$0xf]
  %v1061 = vlaneseq
  %v1062 = vshrl.u32 %v1061, 7
  %v1063 = vsub.s32 0, %v1062
  %v1064 = vrot.slane %v1059, %v1063
  %v1065 = vlaneseq
  %v1066 = vshrl.u32 %v1065, 7
  %v1067 = vsub.s32 1, %v1066
  %v1068 = vrot.slane %v1059, %v1067
  %v1069 = vlaneseq
  %v1070 = vshrl.u32 %v1069, 7
  %v1071 = vsub.s32 2, %v1070
  %v1072 = vrot.slane %v1059, %v1071
  %v1073 = vlaneseq
  %v1074 = vshrl.u32 %v1073, 7
  %v1075 = vsub.s32 3, %v1074
  %v1076 = vrot.slane %v1059, %v1075
  %v1089 = vcombine.high %v27, %v27
  %v1091 = vunpack.c.l.s4 1983009808
  %v1092 = vunpack.c.0.s8 %v1091
  %v1093 = vlaneseq
  %v1094 = vshrl.u32 %v1093, 7
  %v1095 = vsub.s32 %v1092, %v1094
  %v1096 = vrot.slane %v27, %v1095
  %v1098 = vunpack.c.l.s4 1983009808
  %v1099 = vunpack.c.0.s8 %v1098
  %v1100 = vlaneseq
  %v1101 = vshrl.u32 %v1100, 7
  %v1102 = vsub.s32 %v1099, %v1101
  %v1103 = vrot.slane %v1089, %v1102
  %v1104 = vcombine.high %v1096, %v1096
  %v1105 = vcombine.high %v1103, %v1103
  %v1106 = vcombine.high %v28, %v28
  %v1108 = vunpack.c.l.s4 1983009808
  %v1109 = vunpack.c.0.s8 %v1108
  %v1110 = vlaneseq
  %v1111 = vshrl.u32 %v1110, 7
  %v1112 = vsub.s32 %v1109, %v1111
  %v1113 = vrot.slane %v28, %v1112
  %v1115 = vunpack.c.l.s4 1983009808
  %v1116 = vunpack.c.0.s8 %v1115
  %v1117 = vlaneseq
  %v1118 = vshrl.u32 %v1117, 7
  %v1119 = vsub.s32 %v1116, %v1118
  %v1120 = vrot.slane %v1106, %v1119
  %v1121 = vcombine.high %v1113, %v1113
  %v1122 = vcombine.high %v1120, %v1120
  %v1123 = vcombine.high %v29, %v29
  %v1125 = vunpack.c.l.s4 1983009808
  %v1126 = vunpack.c.0.s8 %v1125
  %v1127 = vlaneseq
  %v1128 = vshrl.u32 %v1127, 7
  %v1129 = vsub.s32 %v1126, %v1128
  %v1130 = vrot.slane %v29, %v1129
  %v1132 = vunpack.c.l.s4 1983009808
  %v1133 = vunpack.c.0.s8 %v1132
  %v1134 = vlaneseq
  %v1135 = vshrl.u32 %v1134, 7
  %v1136 = vsub.s32 %v1133, %v1135
  %v1137 = vrot.slane %v1123, %v1136
  %v1138 = vcombine.high %v1130, %v1130
  %v1139 = vcombine.high %v1137, %v1137
  %v1140 = vcombine.high %v30, %v30
  %v1142 = vunpack.c.l.s4 1983009808
  %v1143 = vunpack.c.0.s8 %v1142
  %v1144 = vlaneseq
  %v1145 = vshrl.u32 %v1144, 7
  %v1146 = vsub.s32 %v1143, %v1145
  %v1147 = vrot.slane %v30, %v1146
  %v1149 = vunpack.c.l.s4 1983009808
  %v1150 = vunpack.c.0.s8 %v1149
  %v1151 = vlaneseq
  %v1152 = vshrl.u32 %v1151, 7
  %v1153 = vsub.s32 %v1150, %v1152
  %v1154 = vrot.slane %v1140, %v1153
  %v1155 = vcombine.high %v1147, %v1147
  %v1156 = vcombine.high %v1154, %v1154
  %v1157 = vcombine.high %v31, %v31
  %v1159 = vunpack.c.l.s4 1983009808
  %v1160 = vunpack.c.0.s8 %v1159
  %v1161 = vlaneseq
  %v1162 = vshrl.u32 %v1161, 7
  %v1163 = vsub.s32 %v1160, %v1162
  %v1164 = vrot.slane %v31, %v1163
  %v1166 = vunpack.c.l.s4 1983009808
  %v1167 = vunpack.c.0.s8 %v1166
  %v1168 = vlaneseq
  %v1169 = vshrl.u32 %v1168, 7
  %v1170 = vsub.s32 %v1167, %v1169
  %v1171 = vrot.slane %v1157, %v1170
  %v1172 = vcombine.high %v1164, %v1164
  %v1173 = vcombine.high %v1171, %v1171
  %v1174 = vcombine.high %v32, %v32
  %v1176 = vunpack.c.l.s4 1983009808
  %v1177 = vunpack.c.0.s8 %v1176
  %v1178 = vlaneseq
  %v1179 = vshrl.u32 %v1178, 7
  %v1180 = vsub.s32 %v1177, %v1179
  %v1181 = vrot.slane %v32, %v1180
  %v1183 = vunpack.c.l.s4 1983009808
  %v1184 = vunpack.c.0.s8 %v1183
  %v1185 = vlaneseq
  %v1186 = vshrl.u32 %v1185, 7
  %v1187 = vsub.s32 %v1184, %v1186
  %v1188 = vrot.slane %v1174, %v1187
  %v1189 = vcombine.high %v1181, %v1181
  %v1190 = vcombine.high %v1188, %v1188
  %v1191 = vcombine.high %v33, %v33
  %v1193 = vunpack.c.l.s4 1983009808
  %v1194 = vunpack.c.0.s8 %v1193
  %v1195 = vlaneseq
  %v1196 = vshrl.u32 %v1195, 7
  %v1197 = vsub.s32 %v1194, %v1196
  %v1198 = vrot.slane %v33, %v1197
  %v1200 = vunpack.c.l.s4 1983009808
  %v1201 = vunpack.c.0.s8 %v1200
  %v1202 = vlaneseq
  %v1203 = vshrl.u32 %v1202, 7
  %v1204 = vsub.s32 %v1201, %v1203
  %v1205 = vrot.slane %v1191, %v1204
  %v1206 = vcombine.high %v1198, %v1198
  %v1207 = vcombine.high %v1205, %v1205
  %v1208 = vcombine.high %v34, %v34
  %v1210 = vunpack.c.l.s4 1983009808
  %v1211 = vunpack.c.0.s8 %v1210
  %v1212 = vlaneseq
  %v1213 = vshrl.u32 %v1212, 7
  %v1214 = vsub.s32 %v1211, %v1213
  %v1215 = vrot.slane %v34, %v1214
  %v1217 = vunpack.c.l.s4 1983009808
  %v1218 = vunpack.c.0.s8 %v1217
  %v1219 = vlaneseq
  %v1220 = vshrl.u32 %v1219, 7
  %v1221 = vsub.s32 %v1218, %v1220
  %v1222 = vrot.slane %v1208, %v1221
  %v1223 = vcombine.high %v1215, %v1215
  %v1224 = vcombine.high %v1222, %v1222
  %v2281 = vunpack.c.l.b16 %v35
  %v2282 = vunpack.c.h.b16 %v35
  %v2283 = vunpack.c.l.b16 %v36
  %v2284 = vunpack.c.h.b16 %v36
  %v2285 = vunpack.c.l.b16 %v37
  %v2286 = vunpack.c.h.b16 %v37
  %v2287 = vunpack.c.l.b16 %v38
  %v2288 = vunpack.c.h.b16 %v38
  %v2289 = vunpack.c.l.b16 %v39
  %v2290 = vunpack.c.h.b16 %v39
  %v2291 = vunpack.c.l.b16 %v40
  %v2292 = vunpack.c.h.b16 %v40
  %v2293 = vunpack.c.l.b16 %v41
  %v2294 = vunpack.c.h.b16 %v41
  %v2295 = vunpack.c.l.b16 %v42
  %v2296 = vunpack.c.h.b16 %v42
  %v2297 = vunpack.c.l.b16 %v43
  %v2298 = vunpack.c.h.b16 %v43
  %v2299 = vunpack.c.l.b16 %v44
  %v2300 = vunpack.c.h.b16 %v44
  %v2301 = vunpack.c.l.b16 %v45
  %v2302 = vunpack.c.h.b16 %v45
  %v2303 = vunpack.c.l.b16 %v46
  %v2304 = vunpack.c.h.b16 %v46
  %v2305 = vunpack.c.l.b16 %v47
  %v2306 = vunpack.c.h.b16 %v47
  %v2307 = vunpack.c.l.b16 %v48
  %v2308 = vunpack.c.h.b16 %v48
  %v2309 = vunpack.c.l.b16 %v49
  %v2310 = vunpack.c.h.b16 %v49
  %v2311 = vunpack.c.l.b16 %v50
  %v2312 = vunpack.c.h.b16 %v50
  %v2313 = vunpack.c.l.b16 %v51
  %v2314 = vunpack.c.h.b16 %v51
  %v2315 = vunpack.c.l.b16 %v52
  %v2316 = vunpack.c.h.b16 %v52
  %v2317 = vunpack.c.l.b16 %v53
  %v2318 = vunpack.c.h.b16 %v53
  %v2319 = vunpack.c.l.b16 %v54
  %v2320 = vunpack.c.h.b16 %v54
  %v2321 = vunpack.c.l.b16 %v55
  %v2322 = vunpack.c.h.b16 %v55
  %v2323 = vunpack.c.l.b16 %v56
  %v2324 = vunpack.c.h.b16 %v56
  %v2325 = vunpack.c.l.b16 %v57
  %v2326 = vunpack.c.h.b16 %v57
  %v2327 = vunpack.c.l.b16 %v58
  %v2328 = vunpack.c.h.b16 %v58
  %v2329 = vunpack.c.l.b16 %v59
  %v2330 = vunpack.c.h.b16 %v59
  %v2331 = vunpack.c.l.b16 %v60
  %v2332 = vunpack.c.h.b16 %v60
  %v2333 = vunpack.c.l.b16 %v61
  %v2334 = vunpack.c.h.b16 %v61
  %v2335 = vunpack.c.l.b16 %v62
  %v2336 = vunpack.c.h.b16 %v62
  %v2337 = vunpack.c.l.b16 %v63
  %v2338 = vunpack.c.h.b16 %v63
  %v2339 = vunpack.c.l.b16 %v64
  %v2340 = vunpack.c.h.b16 %v64
  %v2341 = vunpack.c.l.b16 %v65
  %v2342 = vunpack.c.h.b16 %v65
  %v2343 = vunpack.c.l.b16 %v66
  %v2344 = vunpack.c.h.b16 %v66
  %v2345 = vunpack.c.l.b16 %v67
  %v2346 = vunpack.c.h.b16 %v67
  %v2347 = vunpack.c.l.b16 %v68
  %v2348 = vunpack.c.h.b16 %v68
  %v2349 = vunpack.c.l.b16 %v69
  %v2350 = vunpack.c.h.b16 %v69
  %v2351 = vunpack.c.l.b16 %v70
  %v2352 = vunpack.c.h.b16 %v70
  %v2353 = vunpack.c.l.b16 %v71
  %v2354 = vunpack.c.h.b16 %v71
  %v2355 = vunpack.c.l.b16 %v72
  %v2356 = vunpack.c.h.b16 %v72
  %v2357 = vunpack.c.l.b16 %v73
  %v2358 = vunpack.c.h.b16 %v73
  %v2359 = vunpack.c.l.b16 %v74
  %v2360 = vunpack.c.h.b16 %v74
  %v2361 = vunpack.c.l.b16 %v75
  %v2362 = vunpack.c.h.b16 %v75
  %v2363 = vunpack.c.l.b16 %v76
  %v2364 = vunpack.c.h.b16 %v76
  %v2365 = vunpack.c.l.b16 %v77
  %v2366 = vunpack.c.h.b16 %v77
  %v2367 = vunpack.c.l.b16 %v78
  %v2368 = vunpack.c.h.b16 %v78
  %v2369 = vunpack.c.l.b16 %v79
  %v2370 = vunpack.c.h.b16 %v79
  %v2371 = vunpack.c.l.b16 %v80
  %v2372 = vunpack.c.h.b16 %v80
  %v2373 = vunpack.c.l.b16 %v81
  %v2374 = vunpack.c.h.b16 %v81
  %v2375 = vunpack.c.l.b16 %v82
  %v2376 = vunpack.c.h.b16 %v82
  %v2377 = vunpack.c.l.b16 %v83
  %v2378 = vunpack.c.h.b16 %v83
  %v2379 = vunpack.c.l.b16 %v84
  %v2380 = vunpack.c.h.b16 %v84
  %v2381 = vunpack.c.l.b16 %v85
  %v2382 = vunpack.c.h.b16 %v85
  %v2383 = vunpack.c.l.b16 %v86
  %v2384 = vunpack.c.h.b16 %v86
  %v2385 = vunpack.c.l.b16 %v87
  %v2386 = vunpack.c.h.b16 %v87
  %v2387 = vunpack.c.l.b16 %v88
  %v2388 = vunpack.c.h.b16 %v88
  %v2389 = vunpack.c.l.b16 %v89
  %v2390 = vunpack.c.h.b16 %v89
  %v2391 = vunpack.c.l.b16 %v90
  %v2392 = vunpack.c.h.b16 %v90
  %v2393 = vunpack.c.l.b16 %v91
  %v2394 = vunpack.c.h.b16 %v91
  %v2395 = vunpack.c.l.b16 %v92
  %v2396 = vunpack.c.h.b16 %v92
  %v2397 = vunpack.c.l.b16 %v93
  %v2398 = vunpack.c.h.b16 %v93
  %v2399 = vunpack.c.l.b16 %v94
  %v2400 = vunpack.c.h.b16 %v94
  %v2401 = vunpack.c.l.b16 %v95
  %v2402 = vunpack.c.h.b16 %v95
  %v2403 = vunpack.c.l.b16 %v96
  %v2404 = vunpack.c.h.b16 %v96
  %v2405 = vunpack.c.l.b16 %v97
  %v2406 = vunpack.c.h.b16 %v97
  %v2407 = vunpack.c.l.b16 %v98
  %v2408 = vunpack.c.h.b16 %v98
  %v2409 = vunpack.c.l.b16 %v99
  %v2410 = vunpack.c.h.b16 %v99
  %v2411 = vunpack.c.l.b16 %v100
  %v2412 = vunpack.c.h.b16 %v100
  %v2413 = vunpack.c.l.b16 %v101
  %v2414 = vunpack.c.h.b16 %v101
  %v2415 = vunpack.c.l.b16 %v102
  %v2416 = vunpack.c.h.b16 %v102
  %v2417 = vunpack.c.l.b16 %v103
  %v2418 = vunpack.c.h.b16 %v103
  %v2419 = vunpack.c.l.b16 %v104
  %v2420 = vunpack.c.h.b16 %v104
  %v2421 = vunpack.c.l.b16 %v105
  %v2422 = vunpack.c.h.b16 %v105
  %v2423 = vunpack.c.l.b16 %v106
  %v2424 = vunpack.c.h.b16 %v106
  %v2425 = vunpack.c.l.b16 %v107
  %v2426 = vunpack.c.h.b16 %v107
  %v2427 = vunpack.c.l.b16 %v108
  %v2428 = vunpack.c.h.b16 %v108
  %v2429 = vunpack.c.l.b16 %v109
  %v2430 = vunpack.c.h.b16 %v109
  %v2431 = vunpack.c.l.b16 %v110
  %v2432 = vunpack.c.h.b16 %v110
  %v2433 = vunpack.c.l.b16 %v111
  %v2434 = vunpack.c.h.b16 %v111
  %v2435 = vunpack.c.l.b16 %v112
  %v2436 = vunpack.c.h.b16 %v112
  %v2437 = vunpack.c.l.b16 %v113
  %v2438 = vunpack.c.h.b16 %v113
  %v2439 = vunpack.c.l.b16 %v114
  %v2440 = vunpack.c.h.b16 %v114
  %v2441 = vunpack.c.l.b16 %v115
  %v2442 = vunpack.c.h.b16 %v115
  %v2443 = vunpack.c.l.b16 %v116
  %v2444 = vunpack.c.h.b16 %v116
  %v2445 = vunpack.c.l.b16 %v117
  %v2446 = vunpack.c.h.b16 %v117
  %v2447 = vunpack.c.l.b16 %v118
  %v2448 = vunpack.c.h.b16 %v118
  %v2449 = vunpack.c.l.b16 %v119
  %v2450 = vunpack.c.h.b16 %v119
  %v2451 = vunpack.c.l.b16 %v120
  %v2452 = vunpack.c.h.b16 %v120
  %v2453 = vunpack.c.l.b16 %v121
  %v2454 = vunpack.c.h.b16 %v121
  %v2455 = vunpack.c.l.b16 %v122
  %v2456 = vunpack.c.h.b16 %v122
  %v2457 = vunpack.c.l.b16 %v123
  %v2458 = vunpack.c.h.b16 %v123
  %v2459 = vunpack.c.l.b16 %v124
  %v2460 = vunpack.c.h.b16 %v124
  %v2461 = vunpack.c.l.b16 %v125
  %v2462 = vunpack.c.h.b16 %v125
  %v2463 = vunpack.c.l.b16 %v126
  %v2464 = vunpack.c.h.b16 %v126
  %v2465 = vunpack.c.l.b16 %v127
  %v2466 = vunpack.c.h.b16 %v127
  %v2467 = vunpack.c.l.b16 %v128
  %v2468 = vunpack.c.h.b16 %v128
  %v2469 = vunpack.c.l.b16 %v129
  %v2470 = vunpack.c.h.b16 %v129
  %v2471 = vunpack.c.l.b16 %v130
  %v2472 = vunpack.c.h.b16 %v130
  %v2473 = vunpack.c.l.b16 %v131
  %v2474 = vunpack.c.h.b16 %v131
  %v2475 = vunpack.c.l.b16 %v132
  %v2476 = vunpack.c.h.b16 %v132
  %v2477 = vunpack.c.l.b16 %v133
  %v2478 = vunpack.c.h.b16 %v133
  %v2479 = vunpack.c.l.b16 %v134
  %v2480 = vunpack.c.h.b16 %v134
  %v2481 = vunpack.c.l.b16 %v135
  %v2482 = vunpack.c.h.b16 %v135
  %v2483 = vunpack.c.l.b16 %v136
  %v2484 = vunpack.c.h.b16 %v136
  %v2485 = vunpack.c.l.b16 %v137
  %v2486 = vunpack.c.h.b16 %v137
  %v2487 = vunpack.c.l.b16 %v138
  %v2488 = vunpack.c.h.b16 %v138
  %v2489 = vunpack.c.l.b16 %v139
  %v2490 = vunpack.c.h.b16 %v139
  %v2491 = vunpack.c.l.b16 %v140
  %v2492 = vunpack.c.h.b16 %v140
  %v2493 = vunpack.c.l.b16 %v141
  %v2494 = vunpack.c.h.b16 %v141
  %v2495 = vunpack.c.l.b16 %v142
  %v2496 = vunpack.c.h.b16 %v142
  %v2497 = vunpack.c.l.b16 %v143
  %v2498 = vunpack.c.h.b16 %v143
  %v2499 = vunpack.c.l.b16 %v144
  %v2500 = vunpack.c.h.b16 %v144
  %v2501 = vunpack.c.l.b16 %v145
  %v2502 = vunpack.c.h.b16 %v145
  %v2503 = vunpack.c.l.b16 %v146
  %v2504 = vunpack.c.h.b16 %v146
  %v2505 = vunpack.c.l.b16 %v147
  %v2506 = vunpack.c.h.b16 %v147
  %v2507 = vunpack.c.l.b16 %v148
  %v2508 = vunpack.c.h.b16 %v148
  %v2509 = vunpack.c.l.b16 %v149
  %v2510 = vunpack.c.h.b16 %v149
  %v2511 = vunpack.c.l.b16 %v150
  %v2512 = vunpack.c.h.b16 %v150
  %v2513 = vunpack.c.l.b16 %v151
  %v2514 = vunpack.c.h.b16 %v151
  %v2515 = vunpack.c.l.b16 %v152
  %v2516 = vunpack.c.h.b16 %v152
  %v2517 = vunpack.c.l.b16 %v153
  %v2518 = vunpack.c.h.b16 %v153
  %v2519 = vunpack.c.l.b16 %v154
  %v2520 = vunpack.c.h.b16 %v154
  %v2521 = vunpack.c.l.b16 %v155
  %v2522 = vunpack.c.h.b16 %v155
  %v2523 = vunpack.c.l.b16 %v156
  %v2524 = vunpack.c.h.b16 %v156
  %v2525 = vunpack.c.l.b16 %v157
  %v2526 = vunpack.c.h.b16 %v157
  %v2527 = vunpack.c.l.b16 %v158
  %v2528 = vunpack.c.h.b16 %v158
  %v2529 = vunpack.c.l.b16 %v159
  %v2530 = vunpack.c.h.b16 %v159
  %v2531 = vunpack.c.l.b16 %v160
  %v2532 = vunpack.c.h.b16 %v160
  %v2533 = vunpack.c.l.b16 %v161
  %v2534 = vunpack.c.h.b16 %v161
  %v2535 = vunpack.c.l.b16 %v162
  %v2536 = vunpack.c.h.b16 %v162
  %v2537 = vunpack.c.l.b16 %v163
  %v2538 = vunpack.c.h.b16 %v163
  %v2539 = vunpack.c.l.b16 %v164
  %v2540 = vunpack.c.h.b16 %v164
  %v2541 = vunpack.c.l.b16 %v165
  %v2542 = vunpack.c.h.b16 %v165
  %v2543 = vunpack.c.l.b16 %v166
  %v2544 = vunpack.c.h.b16 %v166
  %v2545 = vunpack.c.l.b16 %v167
  %v2546 = vunpack.c.h.b16 %v167
  %v2547 = vunpack.c.l.b16 %v168
  %v2548 = vunpack.c.h.b16 %v168
  %v2549 = vunpack.c.l.b16 %v169
  %v2550 = vunpack.c.h.b16 %v169
  %v2551 = vunpack.c.l.b16 %v170
  %v2552 = vunpack.c.h.b16 %v170
  %v2553 = vunpack.c.l.b16 %v171
  %v2554 = vunpack.c.h.b16 %v171
  %v2555 = vunpack.c.l.b16 %v172
  %v2556 = vunpack.c.h.b16 %v172
  %v2557 = vunpack.c.l.b16 %v173
  %v2558 = vunpack.c.h.b16 %v173
  %v2559 = vunpack.c.l.b16 %v174
  %v2560 = vunpack.c.h.b16 %v174
  %v2561 = vunpack.c.l.b16 %v175
  %v2562 = vunpack.c.h.b16 %v175
  %v2563 = vunpack.c.l.b16 %v176
  %v2564 = vunpack.c.h.b16 %v176
  %v2565 = vunpack.c.l.b16 %v177
  %v2566 = vunpack.c.h.b16 %v177
  %v2567 = vunpack.c.l.b16 %v178
  %v2568 = vunpack.c.h.b16 %v178
  %v2569 = vunpack.c.l.b16 %v179
  %v2570 = vunpack.c.h.b16 %v179
  %v2571 = vunpack.c.l.b16 %v180
  %v2572 = vunpack.c.h.b16 %v180
  %v2573 = vunpack.c.l.b16 %v181
  %v2574 = vunpack.c.h.b16 %v181
  %v2575 = vunpack.c.l.b16 %v182
  %v2576 = vunpack.c.h.b16 %v182
  %v2577 = vunpack.c.l.b16 %v183
  %v2578 = vunpack.c.h.b16 %v183
  %v2579 = vunpack.c.l.b16 %v184
  %v2580 = vunpack.c.h.b16 %v184
  %v2581 = vunpack.c.l.b16 %v185
  %v2582 = vunpack.c.h.b16 %v185
  %v2583 = vunpack.c.l.b16 %v186
  %v2584 = vunpack.c.h.b16 %v186
  %v2585 = vunpack.c.l.b16 %v187
  %v2586 = vunpack.c.h.b16 %v187
  %v2587 = vunpack.c.l.b16 %v188
  %v2588 = vunpack.c.h.b16 %v188
  %v2589 = vunpack.c.l.b16 %v189
  %v2590 = vunpack.c.h.b16 %v189
  %v2591 = vunpack.c.l.b16 %v190
  %v2592 = vunpack.c.h.b16 %v190
  %v2593 = vunpack.c.l.b16 %v191
  %v2594 = vunpack.c.h.b16 %v191
  %v2595 = vunpack.c.l.b16 %v192
  %v2596 = vunpack.c.h.b16 %v192
  %v2597 = vunpack.c.l.b16 %v193
  %v2598 = vunpack.c.h.b16 %v193
  %v2599 = vunpack.c.l.b16 %v194
  %v2600 = vunpack.c.h.b16 %v194
  %v2601 = vunpack.c.l.b16 %v195
  %v2602 = vunpack.c.h.b16 %v195
  %v2603 = vunpack.c.l.b16 %v196
  %v2604 = vunpack.c.h.b16 %v196
  %v2605 = vunpack.c.l.b16 %v197
  %v2606 = vunpack.c.h.b16 %v197
  %v2607 = vunpack.c.l.b16 %v198
  %v2608 = vunpack.c.h.b16 %v198
  %v2609 = vunpack.c.l.b16 %v199
  %v2610 = vunpack.c.h.b16 %v199
  %v2611 = vunpack.c.l.b16 %v200
  %v2612 = vunpack.c.h.b16 %v200
  %v2613 = vunpack.c.l.b16 %v201
  %v2614 = vunpack.c.h.b16 %v201
  %v2615 = vunpack.c.l.b16 %v202
  %v2616 = vunpack.c.h.b16 %v202
  %v2617 = vunpack.c.l.b16 %v203
  %v2618 = vunpack.c.h.b16 %v203
  %v2619 = vunpack.c.l.b16 %v204
  %v2620 = vunpack.c.h.b16 %v204
  %v2621 = vunpack.c.l.b16 %v205
  %v2622 = vunpack.c.h.b16 %v205
  %v2623 = vunpack.c.l.b16 %v206
  %v2624 = vunpack.c.h.b16 %v206
  %v2625 = vunpack.c.l.b16 %v207
  %v2626 = vunpack.c.h.b16 %v207
  %v2627 = vunpack.c.l.b16 %v208
  %v2628 = vunpack.c.h.b16 %v208
  %v2629 = vunpack.c.l.b16 %v209
  %v2630 = vunpack.c.h.b16 %v209
  %v2631 = vunpack.c.l.b16 %v210
  %v2632 = vunpack.c.h.b16 %v210
  %v2633 = vunpack.c.l.b16 %v211
  %v2634 = vunpack.c.h.b16 %v211
  %v2635 = vunpack.c.l.b16 %v212
  %v2636 = vunpack.c.h.b16 %v212
  %v2637 = vunpack.c.l.b16 %v213
  %v2638 = vunpack.c.h.b16 %v213
  %v2639 = vunpack.c.l.b16 %v214
  %v2640 = vunpack.c.h.b16 %v214
  %v2641 = vunpack.c.l.b16 %v215
  %v2642 = vunpack.c.h.b16 %v215
  %v2643 = vunpack.c.l.b16 %v216
  %v2644 = vunpack.c.h.b16 %v216
  %v2645 = vunpack.c.l.b16 %v217
  %v2646 = vunpack.c.h.b16 %v217
  %v2647 = vunpack.c.l.b16 %v218
  %v2648 = vunpack.c.h.b16 %v218
  %v2649 = vunpack.c.l.b16 %v219
  %v2650 = vunpack.c.h.b16 %v219
  %v2651 = vunpack.c.l.b16 %v220
  %v2652 = vunpack.c.h.b16 %v220
  %v2653 = vunpack.c.l.b16 %v221
  %v2654 = vunpack.c.h.b16 %v221
  %v2655 = vunpack.c.l.b16 %v222
  %v2656 = vunpack.c.h.b16 %v222
  %v2657 = vunpack.c.l.b16 %v223
  %v2658 = vunpack.c.h.b16 %v223
  %v2659 = vunpack.c.l.b16 %v224
  %v2660 = vunpack.c.h.b16 %v224
  %v2661 = vunpack.c.l.b16 %v225
  %v2662 = vunpack.c.h.b16 %v225
  %v2663 = vunpack.c.l.b16 %v226
  %v2664 = vunpack.c.h.b16 %v226
  %v2665 = vunpack.c.l.b16 %v227
  %v2666 = vunpack.c.h.b16 %v227
  %v2667 = vunpack.c.l.b16 %v228
  %v2668 = vunpack.c.h.b16 %v228
  %v2669 = vunpack.c.l.b16 %v229
  %v2670 = vunpack.c.h.b16 %v229
  %v2671 = vunpack.c.l.b16 %v230
  %v2672 = vunpack.c.h.b16 %v230
  %v2673 = vunpack.c.l.b16 %v231
  %v2674 = vunpack.c.h.b16 %v231
  %v2675 = vunpack.c.l.b16 %v232
  %v2676 = vunpack.c.h.b16 %v232
  %v2677 = vunpack.c.l.b16 %v233
  %v2678 = vunpack.c.h.b16 %v233
  %v2679 = vunpack.c.l.b16 %v234
  %v2680 = vunpack.c.h.b16 %v234
  %v2681 = vunpack.c.l.b16 %v235
  %v2682 = vunpack.c.h.b16 %v235
  %v2683 = vunpack.c.l.b16 %v236
  %v2684 = vunpack.c.h.b16 %v236
  %v2685 = vunpack.c.l.b16 %v237
  %v2686 = vunpack.c.h.b16 %v237
  %v2687 = vunpack.c.l.b16 %v238
  %v2688 = vunpack.c.h.b16 %v238
  %v2689 = vunpack.c.l.b16 %v239
  %v2690 = vunpack.c.h.b16 %v239
  %v2691 = vunpack.c.l.b16 %v240
  %v2692 = vunpack.c.h.b16 %v240
  %v2693 = vunpack.c.l.b16 %v241
  %v2694 = vunpack.c.h.b16 %v241
  %v2695 = vunpack.c.l.b16 %v242
  %v2696 = vunpack.c.h.b16 %v242
  %v2697 = vunpack.c.l.b16 %v243
  %v2698 = vunpack.c.h.b16 %v243
  %v2699 = vunpack.c.l.b16 %v244
  %v2700 = vunpack.c.h.b16 %v244
  %v2701 = vunpack.c.l.b16 %v245
  %v2702 = vunpack.c.h.b16 %v245
  %v2703 = vunpack.c.l.b16 %v246
  %v2704 = vunpack.c.h.b16 %v246
  %v2705 = vunpack.c.l.b16 %v247
  %v2706 = vunpack.c.h.b16 %v247
  %v2707 = vunpack.c.l.b16 %v248
  %v2708 = vunpack.c.h.b16 %v248
  %v2709 = vunpack.c.l.b16 %v249
  %v2710 = vunpack.c.h.b16 %v249
  %v2711 = vunpack.c.l.b16 %v250
  %v2712 = vunpack.c.h.b16 %v250
  %v2713 = vunpack.c.l.b16 %v251
  %v2714 = vunpack.c.h.b16 %v251
  %v2715 = vunpack.c.l.b16 %v252
  %v2716 = vunpack.c.h.b16 %v252
  %v2717 = vunpack.c.l.b16 %v253
  %v2718 = vunpack.c.h.b16 %v253
  %v2719 = vunpack.c.l.b16 %v254
  %v2720 = vunpack.c.h.b16 %v254
  %v2721 = vunpack.c.l.b16 %v255
  %v2722 = vunpack.c.h.b16 %v255
  %v2723 = vunpack.c.l.b16 %v256
  %v2724 = vunpack.c.h.b16 %v256
  %v2725 = vunpack.c.l.b16 %v257
  %v2726 = vunpack.c.h.b16 %v257
  %v2727 = vunpack.c.l.b16 %v258
  %v2728 = vunpack.c.h.b16 %v258
  %v2729 = vunpack.c.l.b16 %v259
  %v2730 = vunpack.c.h.b16 %v259
  %v2731 = vunpack.c.l.b16 %v260
  %v2732 = vunpack.c.h.b16 %v260
  %v2733 = vunpack.c.l.b16 %v261
  %v2734 = vunpack.c.h.b16 %v261
  %v2735 = vunpack.c.l.b16 %v262
  %v2736 = vunpack.c.h.b16 %v262
  %v2737 = vunpack.c.l.b16 %v263
  %v2738 = vunpack.c.h.b16 %v263
  %v2739 = vunpack.c.l.b16 %v264
  %v2740 = vunpack.c.h.b16 %v264
  %v2741 = vunpack.c.l.b16 %v265
  %v2742 = vunpack.c.h.b16 %v265
  %v2743 = vunpack.c.l.b16 %v266
  %v2744 = vunpack.c.h.b16 %v266
  %v2745 = vunpack.c.l.b16 %v267
  %v2746 = vunpack.c.h.b16 %v267
  %v2747 = vunpack.c.l.b16 %v268
  %v2748 = vunpack.c.h.b16 %v268
  %v2749 = vunpack.c.l.b16 %v269
  %v2750 = vunpack.c.h.b16 %v269
  %v2751 = vunpack.c.l.b16 %v270
  %v2752 = vunpack.c.h.b16 %v270
  %v2753 = vunpack.c.l.b16 %v271
  %v2754 = vunpack.c.h.b16 %v271
  %v2755 = vunpack.c.l.b16 %v272
  %v2756 = vunpack.c.h.b16 %v272
  %v2757 = vunpack.c.l.b16 %v273
  %v2758 = vunpack.c.h.b16 %v273
  %v2759 = vunpack.c.l.b16 %v274
  %v2760 = vunpack.c.h.b16 %v274
  %v2761 = vunpack.c.l.b16 %v275
  %v2762 = vunpack.c.h.b16 %v275
  %v2763 = vunpack.c.l.b16 %v276
  %v2764 = vunpack.c.h.b16 %v276
  %v2765 = vunpack.c.l.b16 %v277
  %v2766 = vunpack.c.h.b16 %v277
  %v2767 = vunpack.c.l.b16 %v278
  %v2768 = vunpack.c.h.b16 %v278
  %v2769 = vunpack.c.l.b16 %v279
  %v2770 = vunpack.c.h.b16 %v279
  %v2771 = vunpack.c.l.b16 %v280
  %v2772 = vunpack.c.h.b16 %v280
  %v2773 = vunpack.c.l.b16 %v281
  %v2774 = vunpack.c.h.b16 %v281
  %v2775 = vunpack.c.l.b16 %v282
  %v2776 = vunpack.c.h.b16 %v282
  %v2777 = vunpack.c.l.b16 %v283
  %v2778 = vunpack.c.h.b16 %v283
  %v2779 = vunpack.c.l.b16 %v284
  %v2780 = vunpack.c.h.b16 %v284
  %v2781 = vunpack.c.l.b16 %v285
  %v2782 = vunpack.c.h.b16 %v285
  %v2783 = vunpack.c.l.b16 %v286
  %v2784 = vunpack.c.h.b16 %v286
  %v2785 = vunpack.c.l.b16 %v287
  %v2786 = vunpack.c.h.b16 %v287
  %v2787 = vunpack.c.l.b16 %v288
  %v2788 = vunpack.c.h.b16 %v288
  %v2789 = vunpack.c.l.b16 %v289
  %v2790 = vunpack.c.h.b16 %v289
  %v2791 = vunpack.c.l.b16 %v290
  %v2792 = vunpack.c.h.b16 %v290
  %v2793 = vunpack.c.l.b16 %v291
  %v2794 = vunpack.c.h.b16 %v291
  %v2795 = vunpack.c.l.b16 %v292
  %v2796 = vunpack.c.h.b16 %v292
  %v2797 = vunpack.c.l.b16 %v293
  %v2798 = vunpack.c.h.b16 %v293
  %v2799 = vunpack.c.l.b16 %v294
  %v2800 = vunpack.c.h.b16 %v294
  %v2801 = vunpack.c.l.b16 %v295
  %v2802 = vunpack.c.h.b16 %v295
  %v2803 = vunpack.c.l.b16 %v296
  %v2804 = vunpack.c.h.b16 %v296
  %v2805 = vunpack.c.l.b16 %v297
  %v2806 = vunpack.c.h.b16 %v297
  %v2807 = vunpack.c.l.b16 %v298
  %v2808 = vunpack.c.h.b16 %v298
  %v2809 = vunpack.c.l.b16 %v299
  %v2810 = vunpack.c.h.b16 %v299
  %v2811 = vunpack.c.l.b16 %v300
  %v2812 = vunpack.c.h.b16 %v300
  %v2813 = vunpack.c.l.b16 %v301
  %v2814 = vunpack.c.h.b16 %v301
  %v2815 = vunpack.c.l.b16 %v302
  %v2816 = vunpack.c.h.b16 %v302
  %v2817 = vunpack.c.l.b16 %v303
  %v2818 = vunpack.c.h.b16 %v303
  %v2819 = vunpack.c.l.b16 %v304
  %v2820 = vunpack.c.h.b16 %v304
  %v2821 = vunpack.c.l.b16 %v305
  %v2822 = vunpack.c.h.b16 %v305
  %v2823 = vunpack.c.l.b16 %v306
  %v2824 = vunpack.c.h.b16 %v306
  %v2825 = vunpack.c.l.b16 %v307
  %v2826 = vunpack.c.h.b16 %v307
  %v2827 = vunpack.c.l.b16 %v308
  %v2828 = vunpack.c.h.b16 %v308
  %v2829 = vunpack.c.l.b16 %v309
  %v2830 = vunpack.c.h.b16 %v309
  %v2831 = vunpack.c.l.b16 %v310
  %v2832 = vunpack.c.h.b16 %v310
  %v2833 = vunpack.c.l.b16 %v311
  %v2834 = vunpack.c.h.b16 %v311
  %v2835 = vunpack.c.l.b16 %v312
  %v2836 = vunpack.c.h.b16 %v312
  %v2837 = vunpack.c.l.b16 %v313
  %v2838 = vunpack.c.h.b16 %v313
  %v2839 = vunpack.c.l.b16 %v314
  %v2840 = vunpack.c.h.b16 %v314
  %v2841 = vunpack.c.l.b16 %v315
  %v2842 = vunpack.c.h.b16 %v315
  %v2843 = vunpack.c.l.b16 %v316
  %v2844 = vunpack.c.h.b16 %v316
  %v2845 = vunpack.c.l.b16 %v317
  %v2846 = vunpack.c.h.b16 %v317
  %v2847 = vunpack.c.l.b16 %v318
  %v2848 = vunpack.c.h.b16 %v318
  %v2849 = vunpack.c.l.b16 %v319
  %v2850 = vunpack.c.h.b16 %v319
  %v2851 = vunpack.c.l.b16 %v320
  %v2852 = vunpack.c.h.b16 %v320
  %v2853 = vunpack.c.l.b16 %v321
  %v2854 = vunpack.c.h.b16 %v321
  %v2855 = vunpack.c.l.b16 %v322
  %v2856 = vunpack.c.h.b16 %v322
  %v2857 = vunpack.c.l.b16 %v323
  %v2858 = vunpack.c.h.b16 %v323
  %v2859 = vunpack.c.l.b16 %v324
  %v2860 = vunpack.c.h.b16 %v324
  %v2861 = vunpack.c.l.b16 %v325
  %v2862 = vunpack.c.h.b16 %v325
  %v2863 = vunpack.c.l.b16 %v326
  %v2864 = vunpack.c.h.b16 %v326
  %v2865 = vunpack.c.l.b16 %v327
  %v2866 = vunpack.c.h.b16 %v327
  %v2867 = vunpack.c.l.b16 %v328
  %v2868 = vunpack.c.h.b16 %v328
  %v2869 = vunpack.c.l.b16 %v329
  %v2870 = vunpack.c.h.b16 %v329
  %v2871 = vunpack.c.l.b16 %v330
  %v2872 = vunpack.c.h.b16 %v330
  %v2873 = vunpack.c.l.b16 %v331
  %v2874 = vunpack.c.h.b16 %v331
  %v2875 = vunpack.c.l.b16 %v332
  %v2876 = vunpack.c.h.b16 %v332
  %v2877 = vunpack.c.l.b16 %v333
  %v2878 = vunpack.c.h.b16 %v333
  %v2879 = vunpack.c.l.b16 %v334
  %v2880 = vunpack.c.h.b16 %v334
  %v2881 = vunpack.c.l.b16 %v335
  %v2882 = vunpack.c.h.b16 %v335
  %v2883 = vunpack.c.l.b16 %v336
  %v2884 = vunpack.c.h.b16 %v336
  %v2885 = vunpack.c.l.b16 %v337
  %v2886 = vunpack.c.h.b16 %v337
  %v2887 = vunpack.c.l.b16 %v338
  %v2888 = vunpack.c.h.b16 %v338
  %v2889 = vunpack.c.l.b16 %v339
  %v2890 = vunpack.c.h.b16 %v339
  %v2891 = vunpack.c.l.b16 %v340
  %v2892 = vunpack.c.h.b16 %v340
  %v2893 = vunpack.c.l.b16 %v341
  %v2894 = vunpack.c.h.b16 %v341
  %v2895 = vunpack.c.l.b16 %v342
  %v2896 = vunpack.c.h.b16 %v342
  %v2897 = vunpack.c.l.b16 %v343
  %v2898 = vunpack.c.h.b16 %v343
  %v2899 = vunpack.c.l.b16 %v344
  %v2900 = vunpack.c.h.b16 %v344
  %v2901 = vunpack.c.l.b16 %v345
  %v2902 = vunpack.c.h.b16 %v345
  %v2903 = vunpack.c.l.b16 %v346
  %v2904 = vunpack.c.h.b16 %v346
  %v2905 = vunpack.c.l.b16 %v347
  %v2906 = vunpack.c.h.b16 %v347
  %v2907 = vunpack.c.l.b16 %v348
  %v2908 = vunpack.c.h.b16 %v348
  %v2909 = vunpack.c.l.b16 %v349
  %v2910 = vunpack.c.h.b16 %v349
  %v2911 = vunpack.c.l.b16 %v350
  %v2912 = vunpack.c.h.b16 %v350
  %v2913 = vunpack.c.l.b16 %v351
  %v2914 = vunpack.c.h.b16 %v351
  %v2915 = vunpack.c.l.b16 %v352
  %v2916 = vunpack.c.h.b16 %v352
  %v2917 = vunpack.c.l.b16 %v353
  %v2918 = vunpack.c.h.b16 %v353
  %v2919 = vunpack.c.l.b16 %v354
  %v2920 = vunpack.c.h.b16 %v354
  %v2921 = vunpack.c.l.b16 %v355
  %v2922 = vunpack.c.h.b16 %v355
  %v2923 = vunpack.c.l.b16 %v356
  %v2924 = vunpack.c.h.b16 %v356
  %v2925 = vunpack.c.l.b16 %v357
  %v2926 = vunpack.c.h.b16 %v357
  %v2927 = vunpack.c.l.b16 %v358
  %v2928 = vunpack.c.h.b16 %v358
  %v2929 = vunpack.c.l.b16 %v359
  %v2930 = vunpack.c.h.b16 %v359
  %v2931 = vunpack.c.l.b16 %v360
  %v2932 = vunpack.c.h.b16 %v360
  %v2933 = vunpack.c.l.b16 %v361
  %v2934 = vunpack.c.h.b16 %v361
  %v2935 = vunpack.c.l.b16 %v362
  %v2936 = vunpack.c.h.b16 %v362
  %v2937 = vunpack.c.l.b16 %v363
  %v2938 = vunpack.c.h.b16 %v363
  %v2939 = vunpack.c.l.b16 %v364
  %v2940 = vunpack.c.h.b16 %v364
  %v2941 = vunpack.c.l.b16 %v365
  %v2942 = vunpack.c.h.b16 %v365
  %v2943 = vunpack.c.l.b16 %v366
  %v2944 = vunpack.c.h.b16 %v366
  %v2945 = vunpack.c.l.b16 %v367
  %v2946 = vunpack.c.h.b16 %v367
  %v2947 = vunpack.c.l.b16 %v368
  %v2948 = vunpack.c.h.b16 %v368
  %v2949 = vunpack.c.l.b16 %v369
  %v2950 = vunpack.c.h.b16 %v369
  %v2951 = vunpack.c.l.b16 %v370
  %v2952 = vunpack.c.h.b16 %v370
  %v2953 = vunpack.c.l.b16 %v371
  %v2954 = vunpack.c.h.b16 %v371
  %v2955 = vunpack.c.l.b16 %v372
  %v2956 = vunpack.c.h.b16 %v372
  %v2957 = vunpack.c.l.b16 %v373
  %v2958 = vunpack.c.h.b16 %v373
  %v2959 = vunpack.c.l.b16 %v374
  %v2960 = vunpack.c.h.b16 %v374
  %v2961 = vunpack.c.l.b16 %v375
  %v2962 = vunpack.c.h.b16 %v375
  %v2963 = vunpack.c.l.b16 %v376
  %v2964 = vunpack.c.h.b16 %v376
  %v2965 = vunpack.c.l.b16 %v377
  %v2966 = vunpack.c.h.b16 %v377
  %v2967 = vunpack.c.l.b16 %v378
  %v2968 = vunpack.c.h.b16 %v378
  %v2969 = vunpack.c.l.b16 %v379
  %v2970 = vunpack.c.h.b16 %v379
  %v2971 = vunpack.c.l.b16 %v380
  %v2972 = vunpack.c.h.b16 %v380
  %v2973 = vunpack.c.l.b16 %v381
  %v2974 = vunpack.c.h.b16 %v381
  %v2975 = vunpack.c.l.b16 %v382
  %v2976 = vunpack.c.h.b16 %v382
  %v2977 = vunpack.c.l.b16 %v383
  %v2978 = vunpack.c.h.b16 %v383
  %v2979 = vunpack.c.l.b16 %v384
  %v2980 = vunpack.c.h.b16 %v384
  %v2981 = vunpack.c.l.b16 %v385
  %v2982 = vunpack.c.h.b16 %v385
  %v2983 = vunpack.c.l.b16 %v386
  %v2984 = vunpack.c.h.b16 %v386
  %v2985 = vunpack.c.l.b16 %v387
  %v2986 = vunpack.c.h.b16 %v387
  %v2987 = vunpack.c.l.b16 %v388
  %v2988 = vunpack.c.h.b16 %v388
  %v2989 = vunpack.c.l.b16 %v389
  %v2990 = vunpack.c.h.b16 %v389
  %v2991 = vunpack.c.l.b16 %v390
  %v2992 = vunpack.c.h.b16 %v390
  %v2993 = vunpack.c.l.b16 %v391
  %v2994 = vunpack.c.h.b16 %v391
  %v2995 = vunpack.c.l.b16 %v392
  %v2996 = vunpack.c.h.b16 %v392
  %v2997 = vunpack.c.l.b16 %v393
  %v2998 = vunpack.c.h.b16 %v393
  %v2999 = vunpack.c.l.b16 %v394
  %v3000 = vunpack.c.h.b16 %v394
  %v3001 = vunpack.c.l.b16 %v395
  %v3002 = vunpack.c.h.b16 %v395
  %v3003 = vunpack.c.l.b16 %v396
  %v3004 = vunpack.c.h.b16 %v396
  %v3005 = vunpack.c.l.b16 %v397
  %v3006 = vunpack.c.h.b16 %v397
  %v3007 = vunpack.c.l.b16 %v398
  %v3008 = vunpack.c.h.b16 %v398
  %v3009 = vunpack.c.l.b16 %v399
  %v3010 = vunpack.c.h.b16 %v399
  %v3011 = vunpack.c.l.b16 %v400
  %v3012 = vunpack.c.h.b16 %v400
  %v3013 = vunpack.c.l.b16 %v401
  %v3014 = vunpack.c.h.b16 %v401
  %v3015 = vunpack.c.l.b16 %v402
  %v3016 = vunpack.c.h.b16 %v402
  %v3017 = vunpack.c.l.b16 %v403
  %v3018 = vunpack.c.h.b16 %v403
  %v3019 = vunpack.c.l.b16 %v404
  %v3020 = vunpack.c.h.b16 %v404
  %v3021 = vunpack.c.l.b16 %v405
  %v3022 = vunpack.c.h.b16 %v405
  %v3023 = vunpack.c.l.b16 %v406
  %v3024 = vunpack.c.h.b16 %v406
  %v3025 = vunpack.c.l.b16 %v407
  %v3026 = vunpack.c.h.b16 %v407
  %v3027 = vunpack.c.l.b16 %v408
  %v3028 = vunpack.c.h.b16 %v408
  %v3029 = vunpack.c.l.b16 %v409
  %v3030 = vunpack.c.h.b16 %v409
  %v3031 = vunpack.c.l.b16 %v410
  %v3032 = vunpack.c.h.b16 %v410
  %v3033 = vunpack.c.l.b16 %v411
  %v3034 = vunpack.c.h.b16 %v411
  %v3035 = vunpack.c.l.b16 %v412
  %v3036 = vunpack.c.h.b16 %v412
  %v3037 = vunpack.c.l.b16 %v413
  %v3038 = vunpack.c.h.b16 %v413
  %v3039 = vunpack.c.l.b16 %v414
  %v3040 = vunpack.c.h.b16 %v414
  %v3041 = vunpack.c.l.b16 %v415
  %v3042 = vunpack.c.h.b16 %v415
  %v3043 = vunpack.c.l.b16 %v416
  %v3044 = vunpack.c.h.b16 %v416
  %v3045 = vunpack.c.l.b16 %v417
  %v3046 = vunpack.c.h.b16 %v417
  %v3047 = vunpack.c.l.b16 %v418
  %v3048 = vunpack.c.h.b16 %v418
  %v3049 = vunpack.c.l.b16 %v419
  %v3050 = vunpack.c.h.b16 %v419
  %v3051 = vunpack.c.l.b16 %v420
  %v3052 = vunpack.c.h.b16 %v420
  %v3053 = vunpack.c.l.b16 %v421
  %v3054 = vunpack.c.h.b16 %v421
  %v3055 = vunpack.c.l.b16 %v422
  %v3056 = vunpack.c.h.b16 %v422
  %v3057 = vunpack.c.l.b16 %v423
  %v3058 = vunpack.c.h.b16 %v423
  %v3059 = vunpack.c.l.b16 %v424
  %v3060 = vunpack.c.h.b16 %v424
  %v3061 = vunpack.c.l.b16 %v425
  %v3062 = vunpack.c.h.b16 %v425
  %v3063 = vunpack.c.l.b16 %v426
  %v3064 = vunpack.c.h.b16 %v426
  %v3065 = vunpack.c.l.b16 %v427
  %v3066 = vunpack.c.h.b16 %v427
  %v3067 = vunpack.c.l.b16 %v428
  %v3068 = vunpack.c.h.b16 %v428
  %v3069 = vunpack.c.l.b16 %v429
  %v3070 = vunpack.c.h.b16 %v429
  %v3071 = vunpack.c.l.b16 %v430
  %v3072 = vunpack.c.h.b16 %v430
  %v3073 = vunpack.c.l.b16 %v431
  %v3074 = vunpack.c.h.b16 %v431
  %v3075 = vunpack.c.l.b16 %v432
  %v3076 = vunpack.c.h.b16 %v432
  %v3077 = vunpack.c.l.b16 %v433
  %v3078 = vunpack.c.h.b16 %v433
  %v3079 = vunpack.c.l.b16 %v434
  %v3080 = vunpack.c.h.b16 %v434
  %v3081 = vunpack.c.l.b16 %v435
  %v3082 = vunpack.c.h.b16 %v435
  %v3083 = vunpack.c.l.b16 %v436
  %v3084 = vunpack.c.h.b16 %v436
  %v3085 = vunpack.c.l.b16 %v437
  %v3086 = vunpack.c.h.b16 %v437
  %v3087 = vunpack.c.l.b16 %v438
  %v3088 = vunpack.c.h.b16 %v438
  %v3089 = vunpack.c.l.b16 %v439
  %v3090 = vunpack.c.h.b16 %v439
  %v3091 = vunpack.c.l.b16 %v440
  %v3092 = vunpack.c.h.b16 %v440
  %v3093 = vunpack.c.l.b16 %v441
  %v3094 = vunpack.c.h.b16 %v441
  %v3095 = vunpack.c.l.b16 %v442
  %v3096 = vunpack.c.h.b16 %v442
  %v3097 = vunpack.c.l.b16 %v443
  %v3098 = vunpack.c.h.b16 %v443
  %v3099 = vunpack.c.l.b16 %v444
  %v3100 = vunpack.c.h.b16 %v444
  %v3101 = vunpack.c.l.b16 %v445
  %v3102 = vunpack.c.h.b16 %v445
  %v3103 = vunpack.c.l.b16 %v446
  %v3104 = vunpack.c.h.b16 %v446
  %v3105 = vunpack.c.l.b16 %v447
  %v3106 = vunpack.c.h.b16 %v447
  %v3107 = vunpack.c.l.b16 %v448
  %v3108 = vunpack.c.h.b16 %v448
  %v3109 = vunpack.c.l.b16 %v449
  %v3110 = vunpack.c.h.b16 %v449
  %v3111 = vunpack.c.l.b16 %v450
  %v3112 = vunpack.c.h.b16 %v450
  %v3113 = vunpack.c.l.b16 %v451
  %v3114 = vunpack.c.h.b16 %v451
  %v3115 = vunpack.c.l.b16 %v452
  %v3116 = vunpack.c.h.b16 %v452
  %v3117 = vunpack.c.l.b16 %v453
  %v3118 = vunpack.c.h.b16 %v453
  %v3119 = vunpack.c.l.b16 %v454
  %v3120 = vunpack.c.h.b16 %v454
  %v3121 = vunpack.c.l.b16 %v455
  %v3122 = vunpack.c.h.b16 %v455
  %v3123 = vunpack.c.l.b16 %v456
  %v3124 = vunpack.c.h.b16 %v456
  %v3125 = vunpack.c.l.b16 %v457
  %v3126 = vunpack.c.h.b16 %v457
  %v3127 = vunpack.c.l.b16 %v458
  %v3128 = vunpack.c.h.b16 %v458
  %v3129 = vunpack.c.l.b16 %v459
  %v3130 = vunpack.c.h.b16 %v459
  %v3131 = vunpack.c.l.b16 %v460
  %v3132 = vunpack.c.h.b16 %v460
  %v3133 = vunpack.c.l.b16 %v461
  %v3134 = vunpack.c.h.b16 %v461
  %v3135 = vunpack.c.l.b16 %v462
  %v3136 = vunpack.c.h.b16 %v462
  %v3137 = vunpack.c.l.b16 %v463
  %v3138 = vunpack.c.h.b16 %v463
  %v3139 = vunpack.c.l.b16 %v464
  %v3140 = vunpack.c.h.b16 %v464
  %v3141 = vunpack.c.l.b16 %v465
  %v3142 = vunpack.c.h.b16 %v465
  %v3143 = vunpack.c.l.b16 %v466
  %v3144 = vunpack.c.h.b16 %v466
  %v3145 = vunpack.c.l.b16 %v467
  %v3146 = vunpack.c.h.b16 %v467
  %v3147 = vunpack.c.l.b16 %v468
  %v3148 = vunpack.c.h.b16 %v468
  %v3149 = vunpack.c.l.b16 %v469
  %v3150 = vunpack.c.h.b16 %v469
  %v3151 = vunpack.c.l.b16 %v470
  %v3152 = vunpack.c.h.b16 %v470
  %v3153 = vunpack.c.l.b16 %v471
  %v3154 = vunpack.c.h.b16 %v471
  %v3155 = vunpack.c.l.b16 %v472
  %v3156 = vunpack.c.h.b16 %v472
  %v3157 = vunpack.c.l.b16 %v473
  %v3158 = vunpack.c.h.b16 %v473
  %v3159 = vunpack.c.l.b16 %v474
  %v3160 = vunpack.c.h.b16 %v474
  %v3161 = vunpack.c.l.b16 %v475
  %v3162 = vunpack.c.h.b16 %v475
  %v3163 = vunpack.c.l.b16 %v476
  %v3164 = vunpack.c.h.b16 %v476
  %v3165 = vunpack.c.l.b16 %v477
  %v3166 = vunpack.c.h.b16 %v477
  %v3167 = vunpack.c.l.b16 %v478
  %v3168 = vunpack.c.h.b16 %v478
  %v3169 = vunpack.c.l.b16 %v479
  %v3170 = vunpack.c.h.b16 %v479
  %v3171 = vunpack.c.l.b16 %v480
  %v3172 = vunpack.c.h.b16 %v480
  %v3173 = vunpack.c.l.b16 %v481
  %v3174 = vunpack.c.h.b16 %v481
  %v3175 = vunpack.c.l.b16 %v482
  %v3176 = vunpack.c.h.b16 %v482
  %v3177 = vunpack.c.l.b16 %v483
  %v3178 = vunpack.c.h.b16 %v483
  %v3179 = vunpack.c.l.b16 %v484
  %v3180 = vunpack.c.h.b16 %v484
  %v3181 = vunpack.c.l.b16 %v485
  %v3182 = vunpack.c.h.b16 %v485
  %v3183 = vunpack.c.l.b16 %v486
  %v3184 = vunpack.c.h.b16 %v486
  %v3185 = vunpack.c.l.b16 %v487
  %v3186 = vunpack.c.h.b16 %v487
  %v3187 = vunpack.c.l.b16 %v488
  %v3188 = vunpack.c.h.b16 %v488
  %v3189 = vunpack.c.l.b16 %v489
  %v3190 = vunpack.c.h.b16 %v489
  %v3191 = vunpack.c.l.b16 %v490
  %v3192 = vunpack.c.h.b16 %v490
  %v3193 = vunpack.c.l.b16 %v491
  %v3194 = vunpack.c.h.b16 %v491
  %v3195 = vunpack.c.l.b16 %v492
  %v3196 = vunpack.c.h.b16 %v492
  %v3197 = vunpack.c.l.b16 %v493
  %v3198 = vunpack.c.h.b16 %v493
  %v3199 = vunpack.c.l.b16 %v494
  %v3200 = vunpack.c.h.b16 %v494
  %v3201 = vunpack.c.l.b16 %v495
  %v3202 = vunpack.c.h.b16 %v495
  %v3203 = vunpack.c.l.b16 %v496
  %v3204 = vunpack.c.h.b16 %v496
  %v3205 = vunpack.c.l.b16 %v497
  %v3206 = vunpack.c.h.b16 %v497
  %v3207 = vunpack.c.l.b16 %v498
  %v3208 = vunpack.c.h.b16 %v498
  %v3209 = vunpack.c.l.b16 %v499
  %v3210 = vunpack.c.h.b16 %v499
  %v3211 = vunpack.c.l.b16 %v500
  %v3212 = vunpack.c.h.b16 %v500
  %v3213 = vunpack.c.l.b16 %v501
  %v3214 = vunpack.c.h.b16 %v501
  %v3215 = vunpack.c.l.b16 %v502
  %v3216 = vunpack.c.h.b16 %v502
  %v3217 = vunpack.c.l.b16 %v503
  %v3218 = vunpack.c.h.b16 %v503
  %v3219 = vunpack.c.l.b16 %v504
  %v3220 = vunpack.c.h.b16 %v504
  %v3221 = vunpack.c.l.b16 %v505
  %v3222 = vunpack.c.h.b16 %v505
  %v3223 = vunpack.c.l.b16 %v506
  %v3224 = vunpack.c.h.b16 %v506
  %v3225 = vunpack.c.l.b16 %v507
  %v3226 = vunpack.c.h.b16 %v507
  %v3227 = vunpack.c.l.b16 %v508
  %v3228 = vunpack.c.h.b16 %v508
  %v3229 = vunpack.c.l.b16 %v509
  %v3230 = vunpack.c.h.b16 %v509
  %v3231 = vunpack.c.l.b16 %v510
  %v3232 = vunpack.c.h.b16 %v510
  %v3233 = vunpack.c.l.b16 %v511
  %v3234 = vunpack.c.h.b16 %v511
  %v3235 = vunpack.c.l.b16 %v512
  %v3236 = vunpack.c.h.b16 %v512
  %v3237 = vunpack.c.l.b16 %v513
  %v3238 = vunpack.c.h.b16 %v513
  %v3239 = vunpack.c.l.b16 %v514
  %v3240 = vunpack.c.h.b16 %v514
  %v3241 = vunpack.c.l.b16 %v515
  %v3242 = vunpack.c.h.b16 %v515
  %v3243 = vunpack.c.l.b16 %v516
  %v3244 = vunpack.c.h.b16 %v516
  %v3245 = vunpack.c.l.b16 %v517
  %v3246 = vunpack.c.h.b16 %v517
  %v3247 = vunpack.c.l.b16 %v518
  %v3248 = vunpack.c.h.b16 %v518
  %v3249 = vunpack.c.l.b16 %v519
  %v3250 = vunpack.c.h.b16 %v519
  %v3251 = vunpack.c.l.b16 %v520
  %v3252 = vunpack.c.h.b16 %v520
  %v3253 = vunpack.c.l.b16 %v521
  %v3254 = vunpack.c.h.b16 %v521
  %v3255 = vunpack.c.l.b16 %v522
  %v3256 = vunpack.c.h.b16 %v522
  %v3257 = vunpack.c.l.b16 %v523
  %v3258 = vunpack.c.h.b16 %v523
  %v3259 = vunpack.c.l.b16 %v524
  %v3260 = vunpack.c.h.b16 %v524
  %v3261 = vunpack.c.l.b16 %v525
  %v3262 = vunpack.c.h.b16 %v525
  %v3263 = vunpack.c.l.b16 %v526
  %v3264 = vunpack.c.h.b16 %v526
  %v3265 = vunpack.c.l.b16 %v527
  %v3266 = vunpack.c.h.b16 %v527
  %v3267 = vunpack.c.l.b16 %v528
  %v3268 = vunpack.c.h.b16 %v528
  %v3269 = vunpack.c.l.b16 %v529
  %v3270 = vunpack.c.h.b16 %v529
  %v3271 = vunpack.c.l.b16 %v530
  %v3272 = vunpack.c.h.b16 %v530
  %v3273 = vunpack.c.l.b16 %v531
  %v3274 = vunpack.c.h.b16 %v531
  %v3275 = vunpack.c.l.b16 %v532
  %v3276 = vunpack.c.h.b16 %v532
  %v3277 = vunpack.c.l.b16 %v533
  %v3278 = vunpack.c.h.b16 %v533
  %v3279 = vunpack.c.l.b16 %v534
  %v3280 = vunpack.c.h.b16 %v534
  %v3281 = vunpack.c.l.b16 %v535
  %v3282 = vunpack.c.h.b16 %v535
  %v3283 = vunpack.c.l.b16 %v536
  %v3284 = vunpack.c.h.b16 %v536
  %v3285 = vunpack.c.l.b16 %v537
  %v3286 = vunpack.c.h.b16 %v537
  %v3287 = vunpack.c.l.b16 %v538
  %v3288 = vunpack.c.h.b16 %v538
  %v3289 = vunpack.c.l.b16 %v539
  %v3290 = vunpack.c.h.b16 %v539
  %v3291 = vunpack.c.l.b16 %v540
  %v3292 = vunpack.c.h.b16 %v540
  %v3293 = vunpack.c.l.b16 %v541
  %v3294 = vunpack.c.h.b16 %v541
  %v3295 = vunpack.c.l.b16 %v542
  %v3296 = vunpack.c.h.b16 %v542
  %v3297 = vunpack.c.l.b16 %v543
  %v3298 = vunpack.c.h.b16 %v543
  %v3299 = vunpack.c.l.b16 %v544
  %v3300 = vunpack.c.h.b16 %v544
  %v3301 = vunpack.c.l.b16 %v545
  %v3302 = vunpack.c.h.b16 %v545
  %v3303 = vunpack.c.l.b16 %v546
  %v3304 = vunpack.c.h.b16 %v546
  %v3305 = vunpack.c.l.b16 %v547
  %v3306 = vunpack.c.h.b16 %v547
  %v3307 = vunpack.c.l.b16 %v548
  %v3308 = vunpack.c.h.b16 %v548
  %v3309 = vunpack.c.l.b16 %v549
  %v3310 = vunpack.c.h.b16 %v549
  %v3311 = vunpack.c.l.b16 %v550
  %v3312 = vunpack.c.h.b16 %v550
  %v3313 = vunpack.c.l.b16 %v551
  %v3314 = vunpack.c.h.b16 %v551
  %v3315 = vunpack.c.l.b16 %v552
  %v3316 = vunpack.c.h.b16 %v552
  %v3317 = vunpack.c.l.b16 %v553
  %v3318 = vunpack.c.h.b16 %v553
  %v3319 = vunpack.c.l.b16 %v554
  %v3320 = vunpack.c.h.b16 %v554
  %v3321 = vunpack.c.l.b16 %v555
  %v3322 = vunpack.c.h.b16 %v555
  %v3323 = vunpack.c.l.b16 %v556
  %v3324 = vunpack.c.h.b16 %v556
  %v3325 = vunpack.c.l.b16 %v557
  %v3326 = vunpack.c.h.b16 %v557
  %v3327 = vunpack.c.l.b16 %v558
  %v3328 = vunpack.c.h.b16 %v558
  %v3329 = vunpack.c.l.b16 %v559
  %v3330 = vunpack.c.h.b16 %v559
  %v3331 = vunpack.c.l.b16 %v560
  %v3332 = vunpack.c.h.b16 %v560
  %v3333 = vunpack.c.l.b16 %v561
  %v3334 = vunpack.c.h.b16 %v561
  %v3335 = vunpack.c.l.b16 %v562
  %v3336 = vunpack.c.h.b16 %v562
  %v3337 = vunpack.c.l.b16 %v563
  %v3338 = vunpack.c.h.b16 %v563
  %v3339 = vunpack.c.l.b16 %v564
  %v3340 = vunpack.c.h.b16 %v564
  %v3341 = vunpack.c.l.b16 %v565
  %v3342 = vunpack.c.h.b16 %v565
  %v3343 = vunpack.c.l.b16 %v566
  %v3344 = vunpack.c.h.b16 %v566
  %v3345 = vunpack.c.l.b16 %v567
  %v3346 = vunpack.c.h.b16 %v567
  %v3347 = vunpack.c.l.b16 %v568
  %v3348 = vunpack.c.h.b16 %v568
  %v3349 = vunpack.c.l.b16 %v569
  %v3350 = vunpack.c.h.b16 %v569
  %v3351 = vunpack.c.l.b16 %v570
  %v3352 = vunpack.c.h.b16 %v570
  %v3353 = vunpack.c.l.b16 %v571
  %v3354 = vunpack.c.h.b16 %v571
  %v3355 = vunpack.c.l.b16 %v572
  %v3356 = vunpack.c.h.b16 %v572
  %v3357 = vunpack.c.l.b16 %v573
  %v3358 = vunpack.c.h.b16 %v573
  %v3359 = vunpack.c.l.b16 %v574
  %v3360 = vunpack.c.h.b16 %v574
  %v3361 = vunpack.c.l.b16 %v575
  %v3362 = vunpack.c.h.b16 %v575
  %v3363 = vunpack.c.l.b16 %v576
  %v3364 = vunpack.c.h.b16 %v576
  %v3365 = vunpack.c.l.b16 %v577
  %v3366 = vunpack.c.h.b16 %v577
  %v3367 = vunpack.c.l.b16 %v578
  %v3368 = vunpack.c.h.b16 %v578
  %v3369 = vunpack.c.l.b16 %v579
  %v3370 = vunpack.c.h.b16 %v579
  %v3371 = vunpack.c.l.b16 %v580
  %v3372 = vunpack.c.h.b16 %v580
  %v3373 = vunpack.c.l.b16 %v581
  %v3374 = vunpack.c.h.b16 %v581
  %v3375 = vunpack.c.l.b16 %v582
  %v3376 = vunpack.c.h.b16 %v582
  %v3377 = vunpack.c.l.b16 %v583
  %v3378 = vunpack.c.h.b16 %v583
  %v3379 = vunpack.c.l.b16 %v584
  %v3380 = vunpack.c.h.b16 %v584
  %v3381 = vunpack.c.l.b16 %v585
  %v3382 = vunpack.c.h.b16 %v585
  %v3383 = vunpack.c.l.b16 %v586
  %v3384 = vunpack.c.h.b16 %v586
  %v3385 = vunpack.c.l.b16 %v587
  %v3386 = vunpack.c.h.b16 %v587
  %v3387 = vunpack.c.l.b16 %v588
  %v3388 = vunpack.c.h.b16 %v588
  %v3389 = vunpack.c.l.b16 %v589
  %v3390 = vunpack.c.h.b16 %v589
  %v3391 = vunpack.c.l.b16 %v590
  %v3392 = vunpack.c.h.b16 %v590
  %v3393 = vunpack.c.l.b16 %v591
  %v3394 = vunpack.c.h.b16 %v591
  %v3395 = vunpack.c.l.b16 %v592
  %v3396 = vunpack.c.h.b16 %v592
  %v3397 = vunpack.c.l.b16 %v593
  %v3398 = vunpack.c.h.b16 %v593
  %v3399 = vunpack.c.l.b16 %v594
  %v3400 = vunpack.c.h.b16 %v594
  %v3401 = vunpack.c.l.b16 %v595
  %v3402 = vunpack.c.h.b16 %v595
  %v3403 = vunpack.c.l.b16 %v596
  %v3404 = vunpack.c.h.b16 %v596
  %v3405 = vunpack.c.l.b16 %v597
  %v3406 = vunpack.c.h.b16 %v597
  %v3407 = vunpack.c.l.b16 %v598
  %v3408 = vunpack.c.h.b16 %v598
  %v3409 = vunpack.c.l.b16 %v599
  %v3410 = vunpack.c.h.b16 %v599
  %v3411 = vunpack.c.l.b16 %v600
  %v3412 = vunpack.c.h.b16 %v600
  %v3413 = vunpack.c.l.b16 %v601
  %v3414 = vunpack.c.h.b16 %v601
  %v3415 = vunpack.c.l.b16 %v602
  %v3416 = vunpack.c.h.b16 %v602
  %v3417 = vunpack.c.l.b16 %v603
  %v3418 = vunpack.c.h.b16 %v603
  %v3419 = vunpack.c.l.b16 %v604
  %v3420 = vunpack.c.h.b16 %v604
  %v3421 = vunpack.c.l.b16 %v605
  %v3422 = vunpack.c.h.b16 %v605
  %v3423 = vunpack.c.l.b16 %v606
  %v3424 = vunpack.c.h.b16 %v606
  %v3425 = vunpack.c.l.b16 %v607
  %v3426 = vunpack.c.h.b16 %v607
  %v3427 = vunpack.c.l.b16 %v608
  %v3428 = vunpack.c.h.b16 %v608
  %v3429 = vunpack.c.l.b16 %v609
  %v3430 = vunpack.c.h.b16 %v609
  %v3431 = vunpack.c.l.b16 %v610
  %v3432 = vunpack.c.h.b16 %v610
  %v3433 = vunpack.c.l.b16 %v611
  %v3434 = vunpack.c.h.b16 %v611
  %v3435 = vunpack.c.l.b16 %v612
  %v3436 = vunpack.c.h.b16 %v612
  %v3437 = vunpack.c.l.b16 %v613
  %v3438 = vunpack.c.h.b16 %v613
  %v3439 = vunpack.c.l.b16 %v614
  %v3440 = vunpack.c.h.b16 %v614
  %v3441 = vunpack.c.l.b16 %v615
  %v3442 = vunpack.c.h.b16 %v615
  %v3443 = vunpack.c.l.b16 %v616
  %v3444 = vunpack.c.h.b16 %v616
  %v3445 = vunpack.c.l.b16 %v617
  %v3446 = vunpack.c.h.b16 %v617
  %v3447 = vunpack.c.l.b16 %v618
  %v3448 = vunpack.c.h.b16 %v618
  %v3449 = vunpack.c.l.b16 %v619
  %v3450 = vunpack.c.h.b16 %v619
  %v3451 = vunpack.c.l.b16 %v620
  %v3452 = vunpack.c.h.b16 %v620
  %v3453 = vunpack.c.l.b16 %v621
  %v3454 = vunpack.c.h.b16 %v621
  %v3455 = vunpack.c.l.b16 %v622
  %v3456 = vunpack.c.h.b16 %v622
  %v3457 = vunpack.c.l.b16 %v623
  %v3458 = vunpack.c.h.b16 %v623
  %v3459 = vunpack.c.l.b16 %v624
  %v3460 = vunpack.c.h.b16 %v624
  %v3461 = vunpack.c.l.b16 %v625
  %v3462 = vunpack.c.h.b16 %v625
  %v3463 = vunpack.c.l.b16 %v626
  %v3464 = vunpack.c.h.b16 %v626
  %v3465 = vunpack.c.l.b16 %v627
  %v3466 = vunpack.c.h.b16 %v627
  %v3467 = vunpack.c.l.b16 %v628
  %v3468 = vunpack.c.h.b16 %v628
  %v3469 = vunpack.c.l.b16 %v629
  %v3470 = vunpack.c.h.b16 %v629
  %v3471 = vunpack.c.l.b16 %v630
  %v3472 = vunpack.c.h.b16 %v630
  %v3473 = vunpack.c.l.b16 %v631
  %v3474 = vunpack.c.h.b16 %v631
  %v3475 = vunpack.c.l.b16 %v632
  %v3476 = vunpack.c.h.b16 %v632
  %v3477 = vunpack.c.l.b16 %v633
  %v3478 = vunpack.c.h.b16 %v633
  %v3479 = vunpack.c.l.b16 %v634
  %v3480 = vunpack.c.h.b16 %v634
  %v3481 = vunpack.c.l.b16 %v635
  %v3482 = vunpack.c.h.b16 %v635
  %v3483 = vunpack.c.l.b16 %v636
  %v3484 = vunpack.c.h.b16 %v636
  %v3485 = vunpack.c.l.b16 %v637
  %v3486 = vunpack.c.h.b16 %v637
  %v3487 = vunpack.c.l.b16 %v638
  %v3488 = vunpack.c.h.b16 %v638
  %v3489 = vunpack.c.l.b16 %v639
  %v3490 = vunpack.c.h.b16 %v639
  %v3491 = vunpack.c.l.b16 %v640
  %v3492 = vunpack.c.h.b16 %v640
  %v3493 = vunpack.c.l.b16 %v641
  %v3494 = vunpack.c.h.b16 %v641
  %v3495 = vunpack.c.l.b16 %v642
  %v3496 = vunpack.c.h.b16 %v642
  %v3497 = vunpack.c.l.b16 %v643
  %v3498 = vunpack.c.h.b16 %v643
  %v3499 = vunpack.c.l.b16 %v644
  %v3500 = vunpack.c.h.b16 %v644
  %v3501 = vunpack.c.l.b16 %v645
  %v3502 = vunpack.c.h.b16 %v645
  %v3503 = vunpack.c.l.b16 %v646
  %v3504 = vunpack.c.h.b16 %v646
  %v3505 = vunpack.c.l.b16 %v647
  %v3506 = vunpack.c.h.b16 %v647
  %v3507 = vunpack.c.l.b16 %v648
  %v3508 = vunpack.c.h.b16 %v648
  %v3509 = vunpack.c.l.b16 %v649
  %v3510 = vunpack.c.h.b16 %v649
  %v3511 = vunpack.c.l.b16 %v650
  %v3512 = vunpack.c.h.b16 %v650
  %v3513 = vunpack.c.l.b16 %v651
  %v3514 = vunpack.c.h.b16 %v651
  %v3515 = vunpack.c.l.b16 %v652
  %v3516 = vunpack.c.h.b16 %v652
  %v3517 = vunpack.c.l.b16 %v653
  %v3518 = vunpack.c.h.b16 %v653
  %v3519 = vunpack.c.l.b16 %v654
  %v3520 = vunpack.c.h.b16 %v654
  %v3521 = vunpack.c.l.b16 %v655
  %v3522 = vunpack.c.h.b16 %v655
  %v3523 = vunpack.c.l.b16 %v656
  %v3524 = vunpack.c.h.b16 %v656
  %v3525 = vunpack.c.l.b16 %v657
  %v3526 = vunpack.c.h.b16 %v657
  %v3527 = vunpack.c.l.b16 %v658
  %v3528 = vunpack.c.h.b16 %v658
  %v3529 = vunpack.c.l.b16 %v659
  %v3530 = vunpack.c.h.b16 %v659
  %v3531 = vunpack.c.l.b16 %v660
  %v3532 = vunpack.c.h.b16 %v660
  %v3533 = vunpack.c.l.b16 %v661
  %v3534 = vunpack.c.h.b16 %v661
  %v3535 = vunpack.c.l.b16 %v662
  %v3536 = vunpack.c.h.b16 %v662
  %v3537 = vunpack.c.l.b16 %v663
  %v3538 = vunpack.c.h.b16 %v663
  %v3539 = vunpack.c.l.b16 %v664
  %v3540 = vunpack.c.h.b16 %v664
  %v3541 = vunpack.c.l.b16 %v665
  %v3542 = vunpack.c.h.b16 %v665
  %v3543 = vunpack.c.l.b16 %v666
  %v3544 = vunpack.c.h.b16 %v666
  %v3545 = vunpack.c.l.b16 %v667
  %v3546 = vunpack.c.h.b16 %v667
  %v3547 = vunpack.c.l.b16 %v668
  %v3548 = vunpack.c.h.b16 %v668
  %v3549 = vunpack.c.l.b16 %v669
  %v3550 = vunpack.c.h.b16 %v669
  %v3551 = vunpack.c.l.b16 %v670
  %v3552 = vunpack.c.h.b16 %v670
  %v3553 = vunpack.c.l.b16 %v671
  %v3554 = vunpack.c.h.b16 %v671
  %v3555 = vunpack.c.l.b16 %v672
  %v3556 = vunpack.c.h.b16 %v672
  %v3557 = vunpack.c.l.b16 %v673
  %v3558 = vunpack.c.h.b16 %v673
  %v3559 = vunpack.c.l.b16 %v674
  %v3560 = vunpack.c.h.b16 %v674
  %v3561 = vunpack.c.l.b16 %v675
  %v3562 = vunpack.c.h.b16 %v675
  %v3563 = vunpack.c.l.b16 %v676
  %v3564 = vunpack.c.h.b16 %v676
  %v3565 = vunpack.c.l.b16 %v677
  %v3566 = vunpack.c.h.b16 %v677
  %v3567 = vunpack.c.l.b16 %v678
  %v3568 = vunpack.c.h.b16 %v678
  %v3569 = vunpack.c.l.b16 %v679
  %v3570 = vunpack.c.h.b16 %v679
  %v3571 = vunpack.c.l.b16 %v680
  %v3572 = vunpack.c.h.b16 %v680
  %v3573 = vunpack.c.l.b16 %v681
  %v3574 = vunpack.c.h.b16 %v681
  %v3575 = vunpack.c.l.b16 %v682
  %v3576 = vunpack.c.h.b16 %v682
  %v3577 = vunpack.c.l.b16 %v683
  %v3578 = vunpack.c.h.b16 %v683
  %v3579 = vunpack.c.l.b16 %v684
  %v3580 = vunpack.c.h.b16 %v684
  %v3581 = vunpack.c.l.b16 %v685
  %v3582 = vunpack.c.h.b16 %v685
  %v3583 = vunpack.c.l.b16 %v686
  %v3584 = vunpack.c.h.b16 %v686
  %v3585 = vunpack.c.l.b16 %v687
  %v3586 = vunpack.c.h.b16 %v687
  %v3587 = vunpack.c.l.b16 %v688
  %v3588 = vunpack.c.h.b16 %v688
  %v3589 = vunpack.c.l.b16 %v689
  %v3590 = vunpack.c.h.b16 %v689
  %v3591 = vunpack.c.l.b16 %v690
  %v3592 = vunpack.c.h.b16 %v690
  %v3593 = vunpack.c.l.b16 %v691
  %v3594 = vunpack.c.h.b16 %v691
  %v3595 = vunpack.c.l.b16 %v692
  %v3596 = vunpack.c.h.b16 %v692
  %v3597 = vunpack.c.l.b16 %v693
  %v3598 = vunpack.c.h.b16 %v693
  %v3599 = vunpack.c.l.b16 %v694
  %v3600 = vunpack.c.h.b16 %v694
  %v3601 = vunpack.c.l.b16 %v695
  %v3602 = vunpack.c.h.b16 %v695
  %v3603 = vunpack.c.l.b16 %v696
  %v3604 = vunpack.c.h.b16 %v696
  %v3605 = vunpack.c.l.b16 %v697
  %v3606 = vunpack.c.h.b16 %v697
  %v3607 = vunpack.c.l.b16 %v698
  %v3608 = vunpack.c.h.b16 %v698
  %v3609 = vunpack.c.l.b16 %v699
  %v3610 = vunpack.c.h.b16 %v699
  %v3611 = vunpack.c.l.b16 %v700
  %v3612 = vunpack.c.h.b16 %v700
  %v3613 = vunpack.c.l.b16 %v701
  %v3614 = vunpack.c.h.b16 %v701
  %v3615 = vunpack.c.l.b16 %v702
  %v3616 = vunpack.c.h.b16 %v702
  %v3617 = vunpack.c.l.b16 %v703
  %v3618 = vunpack.c.h.b16 %v703
  %v3619 = vunpack.c.l.b16 %v704
  %v3620 = vunpack.c.h.b16 %v704
  %v3621 = vunpack.c.l.b16 %v705
  %v3622 = vunpack.c.h.b16 %v705
  %v3623 = vunpack.c.l.b16 %v706
  %v3624 = vunpack.c.h.b16 %v706
  %v3625 = vunpack.c.l.b16 %v707
  %v3626 = vunpack.c.h.b16 %v707
  %v3627 = vunpack.c.l.b16 %v708
  %v3628 = vunpack.c.h.b16 %v708
  %v3629 = vunpack.c.l.b16 %v709
  %v3630 = vunpack.c.h.b16 %v709
  %v3631 = vunpack.c.l.b16 %v710
  %v3632 = vunpack.c.h.b16 %v710
  %v3633 = vunpack.c.l.b16 %v711
  %v3634 = vunpack.c.h.b16 %v711
  %v3635 = vunpack.c.l.b16 %v712
  %v3636 = vunpack.c.h.b16 %v712
  %v3637 = vunpack.c.l.b16 %v713
  %v3638 = vunpack.c.h.b16 %v713
  %v3639 = vunpack.c.l.b16 %v714
  %v3640 = vunpack.c.h.b16 %v714
  %v3641 = vunpack.c.l.b16 %v715
  %v3642 = vunpack.c.h.b16 %v715
  %v3643 = vunpack.c.l.b16 %v716
  %v3644 = vunpack.c.h.b16 %v716
  %v3645 = vunpack.c.l.b16 %v717
  %v3646 = vunpack.c.h.b16 %v717
  %v3647 = vunpack.c.l.b16 %v718
  %v3648 = vunpack.c.h.b16 %v718
  %v3649 = vunpack.c.l.b16 %v719
  %v3650 = vunpack.c.h.b16 %v719
  %v3651 = vunpack.c.l.b16 %v720
  %v3652 = vunpack.c.h.b16 %v720
  %v3653 = vunpack.c.l.b16 %v721
  %v3654 = vunpack.c.h.b16 %v721
  %v3655 = vunpack.c.l.b16 %v722
  %v3656 = vunpack.c.h.b16 %v722
  %v3657 = vunpack.c.l.b16 %v723
  %v3658 = vunpack.c.h.b16 %v723
  %v3659 = vunpack.c.l.b16 %v724
  %v3660 = vunpack.c.h.b16 %v724
  %v3661 = vunpack.c.l.b16 %v725
  %v3662 = vunpack.c.h.b16 %v725
  %v3663 = vunpack.c.l.b16 %v726
  %v3664 = vunpack.c.h.b16 %v726
  %v3665 = vunpack.c.l.b16 %v727
  %v3666 = vunpack.c.h.b16 %v727
  %v3667 = vunpack.c.l.b16 %v728
  %v3668 = vunpack.c.h.b16 %v728
  %v3669 = vunpack.c.l.b16 %v729
  %v3670 = vunpack.c.h.b16 %v729
  %v3671 = vunpack.c.l.b16 %v730
  %v3672 = vunpack.c.h.b16 %v730
  %v3673 = vunpack.c.l.b16 %v731
  %v3674 = vunpack.c.h.b16 %v731
  %v3675 = vunpack.c.l.b16 %v732
  %v3676 = vunpack.c.h.b16 %v732
  %v3677 = vunpack.c.l.b16 %v733
  %v3678 = vunpack.c.h.b16 %v733
  %v3679 = vunpack.c.l.b16 %v734
  %v3680 = vunpack.c.h.b16 %v734
  %v3681 = vunpack.c.l.b16 %v735
  %v3682 = vunpack.c.h.b16 %v735
  %v3683 = vunpack.c.l.b16 %v736
  %v3684 = vunpack.c.h.b16 %v736
  %v3685 = vunpack.c.l.b16 %v737
  %v3686 = vunpack.c.h.b16 %v737
  %v3687 = vunpack.c.l.b16 %v738
  %v3688 = vunpack.c.h.b16 %v738
  %v3689 = vunpack.c.l.b16 %v739
  %v3690 = vunpack.c.h.b16 %v739
  %v3691 = vunpack.c.l.b16 %v740
  %v3692 = vunpack.c.h.b16 %v740
  %v3693 = vunpack.c.l.b16 %v741
  %v3694 = vunpack.c.h.b16 %v741
  %v3695 = vunpack.c.l.b16 %v742
  %v3696 = vunpack.c.h.b16 %v742
  %v3697 = vunpack.c.l.b16 %v743
  %v3698 = vunpack.c.h.b16 %v743
  %v3699 = vunpack.c.l.b16 %v744
  %v3700 = vunpack.c.h.b16 %v744
  %v3701 = vunpack.c.l.b16 %v745
  %v3702 = vunpack.c.h.b16 %v745
  %v3703 = vunpack.c.l.b16 %v746
  %v3704 = vunpack.c.h.b16 %v746
  %v3705 = vunpack.c.l.b16 %v747
  %v3706 = vunpack.c.h.b16 %v747
  %v3707 = vunpack.c.l.b16 %v748
  %v3708 = vunpack.c.h.b16 %v748
  %v3709 = vunpack.c.l.b16 %v749
  %v3710 = vunpack.c.h.b16 %v749
  %v3711 = vunpack.c.l.b16 %v750
  %v3712 = vunpack.c.h.b16 %v750
  %v3713 = vunpack.c.l.b16 %v751
  %v3714 = vunpack.c.h.b16 %v751
  %v3715 = vunpack.c.l.b16 %v752
  %v3716 = vunpack.c.h.b16 %v752
  %v3717 = vunpack.c.l.b16 %v753
  %v3718 = vunpack.c.h.b16 %v753
  %v3719 = vunpack.c.l.b16 %v754
  %v3720 = vunpack.c.h.b16 %v754
  %v3721 = vunpack.c.l.b16 %v755
  %v3722 = vunpack.c.h.b16 %v755
  %v3723 = vunpack.c.l.b16 %v756
  %v3724 = vunpack.c.h.b16 %v756
  %v3725 = vunpack.c.l.b16 %v757
  %v3726 = vunpack.c.h.b16 %v757
  %v3727 = vunpack.c.l.b16 %v758
  %v3728 = vunpack.c.h.b16 %v758
  %v3729 = vunpack.c.l.b16 %v759
  %v3730 = vunpack.c.h.b16 %v759
  %v3731 = vunpack.c.l.b16 %v760
  %v3732 = vunpack.c.h.b16 %v760
  %v3733 = vunpack.c.l.b16 %v761
  %v3734 = vunpack.c.h.b16 %v761
  %v3735 = vunpack.c.l.b16 %v762
  %v3736 = vunpack.c.h.b16 %v762
  %v3737 = vunpack.c.l.b16 %v763
  %v3738 = vunpack.c.h.b16 %v763
  %v3739 = vunpack.c.l.b16 %v764
  %v3740 = vunpack.c.h.b16 %v764
  %v3741 = vunpack.c.l.b16 %v765
  %v3742 = vunpack.c.h.b16 %v765
  %v3743 = vunpack.c.l.b16 %v766
  %v3744 = vunpack.c.h.b16 %v766
  %v3745 = vunpack.c.l.b16 %v767
  %v3746 = vunpack.c.h.b16 %v767
  %v3747 = vunpack.c.l.b16 %v768
  %v3748 = vunpack.c.h.b16 %v768
  %v3749 = vunpack.c.l.b16 %v769
  %v3750 = vunpack.c.h.b16 %v769
  %v3751 = vunpack.c.l.b16 %v770
  %v3752 = vunpack.c.h.b16 %v770
  %v3753 = vunpack.c.l.b16 %v771
  %v3754 = vunpack.c.h.b16 %v771
  %v3755 = vunpack.c.l.b16 %v772
  %v3756 = vunpack.c.h.b16 %v772
  %v3757 = vunpack.c.l.b16 %v773
  %v3758 = vunpack.c.h.b16 %v773
  %v3759 = vunpack.c.l.b16 %v774
  %v3760 = vunpack.c.h.b16 %v774
  %v3761 = vunpack.c.l.b16 %v775
  %v3762 = vunpack.c.h.b16 %v775
  %v3763 = vunpack.c.l.b16 %v776
  %v3764 = vunpack.c.h.b16 %v776
  %v3765 = vunpack.c.l.b16 %v777
  %v3766 = vunpack.c.h.b16 %v777
  %v3767 = vunpack.c.l.b16 %v778
  %v3768 = vunpack.c.h.b16 %v778
  %v3769 = vunpack.c.l.b16 %v779
  %v3770 = vunpack.c.h.b16 %v779
  %v3771 = vunpack.c.l.b16 %v780
  %v3772 = vunpack.c.h.b16 %v780
  %v3773 = vunpack.c.l.b16 %v781
  %v3774 = vunpack.c.h.b16 %v781
  %v3775 = vunpack.c.l.b16 %v782
  %v3776 = vunpack.c.h.b16 %v782
  %v3777 = vunpack.c.l.b16 %v783
  %v3778 = vunpack.c.h.b16 %v783
  %v3779 = vunpack.c.l.b16 %v784
  %v3780 = vunpack.c.h.b16 %v784
  %v3781 = vunpack.c.l.b16 %v785
  %v3782 = vunpack.c.h.b16 %v785
  %v3783 = vunpack.c.l.b16 %v786
  %v3784 = vunpack.c.h.b16 %v786
  %v3785 = vunpack.c.l.b16 %v787
  %v3786 = vunpack.c.h.b16 %v787
  %v3787 = vunpack.c.l.b16 %v788
  %v3788 = vunpack.c.h.b16 %v788
  %v3789 = vunpack.c.l.b16 %v789
  %v3790 = vunpack.c.h.b16 %v789
  %v3791 = vunpack.c.l.b16 %v790
  %v3792 = vunpack.c.h.b16 %v790
  %v3793 = vunpack.c.l.b16 %v791
  %v3794 = vunpack.c.h.b16 %v791
  %v3795 = vunpack.c.l.b16 %v792
  %v3796 = vunpack.c.h.b16 %v792
  %v3797 = vunpack.c.l.b16 %v793
  %v3798 = vunpack.c.h.b16 %v793
  %v3799 = vunpack.c.l.b16 %v794
  %v3800 = vunpack.c.h.b16 %v794
  %v3801 = vunpack.c.l.b16 %v795
  %v3802 = vunpack.c.h.b16 %v795
  %v3803 = vunpack.c.l.b16 %v796
  %v3804 = vunpack.c.h.b16 %v796
  %v3805 = vunpack.c.l.b16 %v797
  %v3806 = vunpack.c.h.b16 %v797
  %v3807 = vunpack.c.l.b16 %v798
  %v3808 = vunpack.c.h.b16 %v798
  %v3809 = vunpack.c.l.b16 %v799
  %v3810 = vunpack.c.h.b16 %v799
  %v3811 = vunpack.c.l.b16 %v800
  %v3812 = vunpack.c.h.b16 %v800
  %v3813 = vunpack.c.l.b16 %v801
  %v3814 = vunpack.c.h.b16 %v801
  %v3815 = vunpack.c.l.b16 %v802
  %v3816 = vunpack.c.h.b16 %v802
  %v3817 = vunpack.c.l.b16 %v803
  %v3818 = vunpack.c.h.b16 %v803
  %v3819 = vunpack.c.l.b16 %v804
  %v3820 = vunpack.c.h.b16 %v804
  %v3821 = vunpack.c.l.b16 %v805
  %v3822 = vunpack.c.h.b16 %v805
  %v3823 = vunpack.c.l.b16 %v806
  %v3824 = vunpack.c.h.b16 %v806
  %v3825 = vunpack.c.l.b16 %v807
  %v3826 = vunpack.c.h.b16 %v807
  %v3827 = vunpack.c.l.b16 %v808
  %v3828 = vunpack.c.h.b16 %v808
  %v3829 = vunpack.c.l.b16 %v809
  %v3830 = vunpack.c.h.b16 %v809
  %v3831 = vunpack.c.l.b16 %v810
  %v3832 = vunpack.c.h.b16 %v810
  %v3833 = vunpack.c.l.b16 %v811
  %v3834 = vunpack.c.h.b16 %v811
  %v3835 = vunpack.c.l.b16 %v812
  %v3836 = vunpack.c.h.b16 %v812
  %v3837 = vunpack.c.l.b16 %v813
  %v3838 = vunpack.c.h.b16 %v813
  %v3839 = vunpack.c.l.b16 %v814
  %v3840 = vunpack.c.h.b16 %v814
  %v3841 = vunpack.c.l.b16 %v815
  %v3842 = vunpack.c.h.b16 %v815
  %v3843 = vunpack.c.l.b16 %v816
  %v3844 = vunpack.c.h.b16 %v816
  %v3845 = vunpack.c.l.b16 %v817
  %v3846 = vunpack.c.h.b16 %v817
  %v3847 = vunpack.c.l.b16 %v818
  %v3848 = vunpack.c.h.b16 %v818
  %v3849 = vunpack.c.l.b16 %v819
  %v3850 = vunpack.c.h.b16 %v819
  %v3851 = vunpack.c.l.b16 %v820
  %v3852 = vunpack.c.h.b16 %v820
  %v3853 = vunpack.c.l.b16 %v821
  %v3854 = vunpack.c.h.b16 %v821
  %v3855 = vunpack.c.l.b16 %v822
  %v3856 = vunpack.c.h.b16 %v822
  %v3857 = vunpack.c.l.b16 %v823
  %v3858 = vunpack.c.h.b16 %v823
  %v3859 = vunpack.c.l.b16 %v824
  %v3860 = vunpack.c.h.b16 %v824
  %v3861 = vunpack.c.l.b16 %v825
  %v3862 = vunpack.c.h.b16 %v825
  %v3863 = vunpack.c.l.b16 %v826
  %v3864 = vunpack.c.h.b16 %v826
  %v3865 = vunpack.c.l.b16 %v827
  %v3866 = vunpack.c.h.b16 %v827
  %v3867 = vunpack.c.l.b16 %v828
  %v3868 = vunpack.c.h.b16 %v828
  %v3869 = vunpack.c.l.b16 %v829
  %v3870 = vunpack.c.h.b16 %v829
  %v3871 = vunpack.c.l.b16 %v830
  %v3872 = vunpack.c.h.b16 %v830
  %v3873 = vunpack.c.l.b16 %v831
  %v3874 = vunpack.c.h.b16 %v831
  %v3875 = vunpack.c.l.b16 %v832
  %v3876 = vunpack.c.h.b16 %v832
  %v3877 = vunpack.c.l.b16 %v833
  %v3878 = vunpack.c.h.b16 %v833
  %v3879 = vunpack.c.l.b16 %v834
  %v3880 = vunpack.c.h.b16 %v834
  %v3881 = vunpack.c.l.b16 %v835
  %v3882 = vunpack.c.h.b16 %v835
  %v3883 = vunpack.c.l.b16 %v836
  %v3884 = vunpack.c.h.b16 %v836
  %v3885 = vunpack.c.l.b16 %v837
  %v3886 = vunpack.c.h.b16 %v837
  %v3887 = vunpack.c.l.b16 %v838
  %v3888 = vunpack.c.h.b16 %v838
  %v3889 = vunpack.c.l.b16 %v839
  %v3890 = vunpack.c.h.b16 %v839
  %v3891 = vunpack.c.l.b16 %v840
  %v3892 = vunpack.c.h.b16 %v840
  %v3893 = vunpack.c.l.b16 %v841
  %v3894 = vunpack.c.h.b16 %v841
  %v3895 = vunpack.c.l.b16 %v842
  %v3896 = vunpack.c.h.b16 %v842
  %v3897 = vunpack.c.l.b16 %v843
  %v3898 = vunpack.c.h.b16 %v843
  %v3899 = vunpack.c.l.b16 %v844
  %v3900 = vunpack.c.h.b16 %v844
  %v3901 = vunpack.c.l.b16 %v845
  %v3902 = vunpack.c.h.b16 %v845
  %v3903 = vunpack.c.l.b16 %v846
  %v3904 = vunpack.c.h.b16 %v846
  %v3905 = vunpack.c.l.b16 %v847
  %v3906 = vunpack.c.h.b16 %v847
  %v3907 = vunpack.c.l.b16 %v848
  %v3908 = vunpack.c.h.b16 %v848
  %v3909 = vunpack.c.l.b16 %v849
  %v3910 = vunpack.c.h.b16 %v849
  %v3911 = vunpack.c.l.b16 %v850
  %v3912 = vunpack.c.h.b16 %v850
  %v3913 = vunpack.c.l.b16 %v851
  %v3914 = vunpack.c.h.b16 %v851
  %v3915 = vunpack.c.l.b16 %v852
  %v3916 = vunpack.c.h.b16 %v852
  %v3917 = vunpack.c.l.b16 %v853
  %v3918 = vunpack.c.h.b16 %v853
  %v3919 = vunpack.c.l.b16 %v854
  %v3920 = vunpack.c.h.b16 %v854
  %v3921 = vunpack.c.l.b16 %v855
  %v3922 = vunpack.c.h.b16 %v855
  %v3923 = vunpack.c.l.b16 %v856
  %v3924 = vunpack.c.h.b16 %v856
  %v3925 = vunpack.c.l.b16 %v857
  %v3926 = vunpack.c.h.b16 %v857
  %v3927 = vunpack.c.l.b16 %v858
  %v3928 = vunpack.c.h.b16 %v858
  %v3929 = vunpack.c.l.b16 %v859
  %v3930 = vunpack.c.h.b16 %v859
  %v3931 = vunpack.c.l.b16 %v860
  %v3932 = vunpack.c.h.b16 %v860
  %v3933 = vunpack.c.l.b16 %v861
  %v3934 = vunpack.c.h.b16 %v861
  %v3935 = vunpack.c.l.b16 %v862
  %v3936 = vunpack.c.h.b16 %v862
  %v3937 = vunpack.c.l.b16 %v863
  %v3938 = vunpack.c.h.b16 %v863
  %v3939 = vunpack.c.l.b16 %v864
  %v3940 = vunpack.c.h.b16 %v864
  %v3941 = vunpack.c.l.b16 %v865
  %v3942 = vunpack.c.h.b16 %v865
  %v3943 = vunpack.c.l.b16 %v866
  %v3944 = vunpack.c.h.b16 %v866
  %v3945 = vunpack.c.l.b16 %v867
  %v3946 = vunpack.c.h.b16 %v867
  %v3947 = vunpack.c.l.b16 %v868
  %v3948 = vunpack.c.h.b16 %v868
  %v3949 = vunpack.c.l.b16 %v869
  %v3950 = vunpack.c.h.b16 %v869
  %v3951 = vunpack.c.l.b16 %v870
  %v3952 = vunpack.c.h.b16 %v870
  %v3953 = vunpack.c.l.b16 %v871
  %v3954 = vunpack.c.h.b16 %v871
  %v3955 = vunpack.c.l.b16 %v872
  %v3956 = vunpack.c.h.b16 %v872
  %v3957 = vunpack.c.l.b16 %v873
  %v3958 = vunpack.c.h.b16 %v873
  %v3959 = vunpack.c.l.b16 %v874
  %v3960 = vunpack.c.h.b16 %v874
  %v3961 = vunpack.c.l.b16 %v875
  %v3962 = vunpack.c.h.b16 %v875
  %v3963 = vunpack.c.l.b16 %v876
  %v3964 = vunpack.c.h.b16 %v876
  %v3965 = vunpack.c.l.b16 %v877
  %v3966 = vunpack.c.h.b16 %v877
  %v3967 = vunpack.c.l.b16 %v878
  %v3968 = vunpack.c.h.b16 %v878
  %v3969 = vunpack.c.l.b16 %v879
  %v3970 = vunpack.c.h.b16 %v879
  %v3971 = vunpack.c.l.b16 %v880
  %v3972 = vunpack.c.h.b16 %v880
  %v3973 = vunpack.c.l.b16 %v881
  %v3974 = vunpack.c.h.b16 %v881
  %v3975 = vunpack.c.l.b16 %v882
  %v3976 = vunpack.c.h.b16 %v882
  %v3977 = vunpack.c.l.b16 %v883
  %v3978 = vunpack.c.h.b16 %v883
  %v3979 = vunpack.c.l.b16 %v884
  %v3980 = vunpack.c.h.b16 %v884
  %v3981 = vunpack.c.l.b16 %v885
  %v3982 = vunpack.c.h.b16 %v885
  %v3983 = vunpack.c.l.b16 %v886
  %v3984 = vunpack.c.h.b16 %v886
  %v3985 = vunpack.c.l.b16 %v887
  %v3986 = vunpack.c.h.b16 %v887
  %v3987 = vunpack.c.l.b16 %v888
  %v3988 = vunpack.c.h.b16 %v888
  %v3989 = vunpack.c.l.b16 %v889
  %v3990 = vunpack.c.h.b16 %v889
  %v3991 = vunpack.c.l.b16 %v890
  %v3992 = vunpack.c.h.b16 %v890
  %v3993 = vunpack.c.l.b16 %v891
  %v3994 = vunpack.c.h.b16 %v891
  %v3995 = vunpack.c.l.b16 %v892
  %v3996 = vunpack.c.h.b16 %v892
  %v3997 = vunpack.c.l.b16 %v893
  %v3998 = vunpack.c.h.b16 %v893
  %v3999 = vunpack.c.l.b16 %v894
  %v4000 = vunpack.c.h.b16 %v894
  %v4001 = vunpack.c.l.b16 %v895
  %v4002 = vunpack.c.h.b16 %v895
  %v4003 = vunpack.c.l.b16 %v896
  %v4004 = vunpack.c.h.b16 %v896
  %v4005 = vunpack.c.l.b16 %v897
  %v4006 = vunpack.c.h.b16 %v897
  %v4007 = vunpack.c.l.b16 %v898
  %v4008 = vunpack.c.h.b16 %v898
  %v4009 = vunpack.c.l.b16 %v899
  %v4010 = vunpack.c.h.b16 %v899
  %v4011 = vunpack.c.l.b16 %v900
  %v4012 = vunpack.c.h.b16 %v900
  %v4013 = vunpack.c.l.b16 %v901
  %v4014 = vunpack.c.h.b16 %v901
  %v4015 = vunpack.c.l.b16 %v902
  %v4016 = vunpack.c.h.b16 %v902
  %v4017 = vunpack.c.l.b16 %v903
  %v4018 = vunpack.c.h.b16 %v903
  %v4019 = vunpack.c.l.b16 %v904
  %v4020 = vunpack.c.h.b16 %v904
  %v4021 = vunpack.c.l.b16 %v905
  %v4022 = vunpack.c.h.b16 %v905
  %v4023 = vunpack.c.l.b16 %v906
  %v4024 = vunpack.c.h.b16 %v906
  %v4025 = vunpack.c.l.b16 %v907
  %v4026 = vunpack.c.h.b16 %v907
  %v4027 = vunpack.c.l.b16 %v908
  %v4028 = vunpack.c.h.b16 %v908
  %v4029 = vunpack.c.l.b16 %v909
  %v4030 = vunpack.c.h.b16 %v909
  %v4031 = vunpack.c.l.b16 %v910
  %v4032 = vunpack.c.h.b16 %v910
  %v4033 = vunpack.c.l.b16 %v911
  %v4034 = vunpack.c.h.b16 %v911
  %v4035 = vunpack.c.l.b16 %v912
  %v4036 = vunpack.c.h.b16 %v912
  %v4037 = vunpack.c.l.b16 %v913
  %v4038 = vunpack.c.h.b16 %v913
  %v4039 = vunpack.c.l.b16 %v914
  %v4040 = vunpack.c.h.b16 %v914
  %v4041 = vunpack.c.l.b16 %v915
  %v4042 = vunpack.c.h.b16 %v915
  %v4043 = vunpack.c.l.b16 %v916
  %v4044 = vunpack.c.h.b16 %v916
  %v4045 = vunpack.c.l.b16 %v917
  %v4046 = vunpack.c.h.b16 %v917
  %v4047 = vunpack.c.l.b16 %v918
  %v4048 = vunpack.c.h.b16 %v918
  %v4049 = vunpack.c.l.b16 %v919
  %v4050 = vunpack.c.h.b16 %v919
  %v4051 = vunpack.c.l.b16 %v920
  %v4052 = vunpack.c.h.b16 %v920
  %v4053 = vunpack.c.l.b16 %v921
  %v4054 = vunpack.c.h.b16 %v921
  %v4055 = vunpack.c.l.b16 %v922
  %v4056 = vunpack.c.h.b16 %v922
  %v4057 = vunpack.c.l.b16 %v923
  %v4058 = vunpack.c.h.b16 %v923
  %v4059 = vunpack.c.l.b16 %v924
  %v4060 = vunpack.c.h.b16 %v924
  %v4061 = vunpack.c.l.b16 %v925
  %v4062 = vunpack.c.h.b16 %v925
  %v4063 = vunpack.c.l.b16 %v926
  %v4064 = vunpack.c.h.b16 %v926
  %v4065 = vunpack.c.l.b16 %v927
  %v4066 = vunpack.c.h.b16 %v927
  %v4067 = vunpack.c.l.b16 %v928
  %v4068 = vunpack.c.h.b16 %v928
  %v4069 = vunpack.c.l.b16 %v929
  %v4070 = vunpack.c.h.b16 %v929
  %v4071 = vunpack.c.l.b16 %v930
  %v4072 = vunpack.c.h.b16 %v930
  %v4073 = vunpack.c.l.b16 %v931
  %v4074 = vunpack.c.h.b16 %v931
  %v4075 = vunpack.c.l.b16 %v932
  %v4076 = vunpack.c.h.b16 %v932
  %v4077 = vunpack.c.l.b16 %v933
  %v4078 = vunpack.c.h.b16 %v933
  %v4079 = vunpack.c.l.b16 %v934
  %v4080 = vunpack.c.h.b16 %v934
  %v4081 = vunpack.c.l.b16 %v935
  %v4082 = vunpack.c.h.b16 %v935
  %v4083 = vunpack.c.l.b16 %v936
  %v4084 = vunpack.c.h.b16 %v936
  %v4085 = vunpack.c.l.b16 %v937
  %v4086 = vunpack.c.h.b16 %v937
  %v4087 = vunpack.c.l.b16 %v938
  %v4088 = vunpack.c.h.b16 %v938
  %v4089 = vunpack.c.l.b16 %v939
  %v4090 = vunpack.c.h.b16 %v939
  %v4091 = vunpack.c.l.b16 %v940
  %v4092 = vunpack.c.h.b16 %v940
  %v4093 = vunpack.c.l.b16 %v941
  %v4094 = vunpack.c.h.b16 %v941
  %v4095 = vunpack.c.l.b16 %v942
  %v4096 = vunpack.c.h.b16 %v942
  %v4097 = vunpack.c.l.b16 %v943
  %v4098 = vunpack.c.h.b16 %v943
  %v4099 = vunpack.c.l.b16 %v944
  %v4100 = vunpack.c.h.b16 %v944
  %v4101 = vunpack.c.l.b16 %v945
  %v4102 = vunpack.c.h.b16 %v945
  %v4103 = vunpack.c.l.b16 %v946
  %v4104 = vunpack.c.h.b16 %v946
  %v4105 = vunpack.c.l.b16 %v947
  %v4106 = vunpack.c.h.b16 %v947
  %v4107 = vunpack.c.l.b16 %v948
  %v4108 = vunpack.c.h.b16 %v948
  %v4109 = vunpack.c.l.b16 %v949
  %v4110 = vunpack.c.h.b16 %v949
  %v4111 = vunpack.c.l.b16 %v950
  %v4112 = vunpack.c.h.b16 %v950
  %v4113 = vunpack.c.l.b16 %v951
  %v4114 = vunpack.c.h.b16 %v951
  %v4115 = vunpack.c.l.b16 %v952
  %v4116 = vunpack.c.h.b16 %v952
  %v4117 = vunpack.c.l.b16 %v953
  %v4118 = vunpack.c.h.b16 %v953
  %v4119 = vunpack.c.l.b16 %v954
  %v4120 = vunpack.c.h.b16 %v954
  %v4121 = vunpack.c.l.b16 %v955
  %v4122 = vunpack.c.h.b16 %v955
  %v4123 = vunpack.c.l.b16 %v956
  %v4124 = vunpack.c.h.b16 %v956
  %v4125 = vunpack.c.l.b16 %v957
  %v4126 = vunpack.c.h.b16 %v957
  %v4127 = vunpack.c.l.b16 %v958
  %v4128 = vunpack.c.h.b16 %v958
  %v4129 = vunpack.c.l.b16 %v959
  %v4130 = vunpack.c.h.b16 %v959
  %v4131 = vunpack.c.l.b16 %v960
  %v4132 = vunpack.c.h.b16 %v960
  %v4133 = vunpack.c.l.b16 %v961
  %v4134 = vunpack.c.h.b16 %v961
  %v4135 = vunpack.c.l.b16 %v962
  %v4136 = vunpack.c.h.b16 %v962
  %v4137 = vunpack.c.l.b16 %v963
  %v4138 = vunpack.c.h.b16 %v963
  %v4139 = vunpack.c.l.b16 %v964
  %v4140 = vunpack.c.h.b16 %v964
  %v4141 = vunpack.c.l.b16 %v965
  %v4142 = vunpack.c.h.b16 %v965
  %v4143 = vunpack.c.l.b16 %v966
  %v4144 = vunpack.c.h.b16 %v966
  %v4145 = vunpack.c.l.b16 %v967
  %v4146 = vunpack.c.h.b16 %v967
  %v4147 = vunpack.c.l.b16 %v968
  %v4148 = vunpack.c.h.b16 %v968
  %v4149 = vunpack.c.l.b16 %v969
  %v4150 = vunpack.c.h.b16 %v969
  %v4151 = vunpack.c.l.b16 %v970
  %v4152 = vunpack.c.h.b16 %v970
  %v4153 = vunpack.c.l.b16 %v971
  %v4154 = vunpack.c.h.b16 %v971
  %v4155 = vunpack.c.l.b16 %v972
  %v4156 = vunpack.c.h.b16 %v972
  %v4157 = vunpack.c.l.b16 %v973
  %v4158 = vunpack.c.h.b16 %v973
  %v4159 = vunpack.c.l.b16 %v974
  %v4160 = vunpack.c.h.b16 %v974
  %v4161 = vunpack.c.l.b16 %v975
  %v4162 = vunpack.c.h.b16 %v975
  %v4163 = vunpack.c.l.b16 %v976
  %v4164 = vunpack.c.h.b16 %v976
  %v4165 = vunpack.c.l.b16 %v977
  %v4166 = vunpack.c.h.b16 %v977
  %v4167 = vunpack.c.l.b16 %v978
  %v4168 = vunpack.c.h.b16 %v978
  %v4169 = vunpack.c.l.b16 %v979
  %v4170 = vunpack.c.h.b16 %v979
  %v4171 = vunpack.c.l.b16 %v980
  %v4172 = vunpack.c.h.b16 %v980
  %v4173 = vunpack.c.l.b16 %v981
  %v4174 = vunpack.c.h.b16 %v981
  %v4175 = vunpack.c.l.b16 %v982
  %v4176 = vunpack.c.h.b16 %v982
  %v4177 = vunpack.c.l.b16 %v983
  %v4178 = vunpack.c.h.b16 %v983
  %v4179 = vunpack.c.l.b16 %v984
  %v4180 = vunpack.c.h.b16 %v984
  %v4181 = vunpack.c.l.b16 %v985
  %v4182 = vunpack.c.h.b16 %v985
  %v4183 = vunpack.c.l.b16 %v986
  %v4184 = vunpack.c.h.b16 %v986
  %v4185 = vunpack.c.l.b16 %v987
  %v4186 = vunpack.c.h.b16 %v987
  %v4187 = vunpack.c.l.b16 %v988
  %v4188 = vunpack.c.h.b16 %v988
  %v4189 = vunpack.c.l.b16 %v989
  %v4190 = vunpack.c.h.b16 %v989
  %v4191 = vunpack.c.l.b16 %v990
  %v4192 = vunpack.c.h.b16 %v990
  %v4193 = vunpack.c.l.b16 %v991
  %v4194 = vunpack.c.h.b16 %v991
  %v4195 = vunpack.c.l.b16 %v992
  %v4196 = vunpack.c.h.b16 %v992
  %v4197 = vunpack.c.l.b16 %v993
  %v4198 = vunpack.c.h.b16 %v993
  %v4199 = vunpack.c.l.b16 %v994
  %v4200 = vunpack.c.h.b16 %v994
  %v4201 = vunpack.c.l.b16 %v995
  %v4202 = vunpack.c.h.b16 %v995
  %v4203 = vunpack.c.l.b16 %v996
  %v4204 = vunpack.c.h.b16 %v996
  %v4205 = vunpack.c.l.b16 %v997
  %v4206 = vunpack.c.h.b16 %v997
  %v4207 = vunpack.c.l.b16 %v998
  %v4208 = vunpack.c.h.b16 %v998
  %v4209 = vunpack.c.l.b16 %v999
  %v4210 = vunpack.c.h.b16 %v999
  %v4211 = vunpack.c.l.b16 %v1000
  %v4212 = vunpack.c.h.b16 %v1000
  %v4213 = vunpack.c.l.b16 %v1001
  %v4214 = vunpack.c.h.b16 %v1001
  %v4215 = vunpack.c.l.b16 %v1002
  %v4216 = vunpack.c.h.b16 %v1002
  %v4217 = vunpack.c.l.b16 %v1003
  %v4218 = vunpack.c.h.b16 %v1003
  %v4219 = vunpack.c.l.b16 %v1004
  %v4220 = vunpack.c.h.b16 %v1004
  %v4221 = vunpack.c.l.b16 %v1005
  %v4222 = vunpack.c.h.b16 %v1005
  %v4223 = vunpack.c.l.b16 %v1006
  %v4224 = vunpack.c.h.b16 %v1006
  %v4225 = vunpack.c.l.b16 %v1007
  %v4226 = vunpack.c.h.b16 %v1007
  %v4227 = vunpack.c.l.b16 %v1008
  %v4228 = vunpack.c.h.b16 %v1008
  %v4229 = vunpack.c.l.b16 %v1009
  %v4230 = vunpack.c.h.b16 %v1009
  %v4231 = vunpack.c.l.b16 %v1010
  %v4232 = vunpack.c.h.b16 %v1010
  %v4233 = vunpack.c.l.b16 %v1011
  %v4234 = vunpack.c.h.b16 %v1011
  %v4235 = vunpack.c.l.b16 %v1012
  %v4236 = vunpack.c.h.b16 %v1012
  %v4237 = vunpack.c.l.b16 %v1013
  %v4238 = vunpack.c.h.b16 %v1013
  %v4239 = vunpack.c.l.b16 %v1014
  %v4240 = vunpack.c.h.b16 %v1014
  %v4241 = vunpack.c.l.b16 %v1015
  %v4242 = vunpack.c.h.b16 %v1015
  %v4243 = vunpack.c.l.b16 %v1016
  %v4244 = vunpack.c.h.b16 %v1016
  %v4245 = vunpack.c.l.b16 %v1017
  %v4246 = vunpack.c.h.b16 %v1017
  %v4247 = vunpack.c.l.b16 %v1018
  %v4248 = vunpack.c.h.b16 %v1018
  %v4249 = vunpack.c.l.b16 %v1019
  %v4250 = vunpack.c.h.b16 %v1019
  %v4251 = vunpack.c.l.b16 %v1020
  %v4252 = vunpack.c.h.b16 %v1020
  %v4253 = vunpack.c.l.b16 %v1021
  %v4254 = vunpack.c.h.b16 %v1021
  %v4255 = vunpack.c.l.b16 %v1022
  %v4256 = vunpack.c.h.b16 %v1022
  %v4257 = vunpack.c.l.b16 %v1023
  %v4258 = vunpack.c.h.b16 %v1023
  %v4259 = vunpack.c.l.b16 %v1024
  %v4260 = vunpack.c.h.b16 %v1024
  %v4261 = vunpack.c.l.b16 %v1025
  %v4262 = vunpack.c.h.b16 %v1025
  %v4263 = vunpack.c.l.b16 %v1026
  %v4264 = vunpack.c.h.b16 %v1026
  %v4265 = vunpack.c.l.b16 %v1027
  %v4266 = vunpack.c.h.b16 %v1027
  %v4267 = vunpack.c.l.b16 %v1028
  %v4268 = vunpack.c.h.b16 %v1028
  %v4269 = vunpack.c.l.b16 %v1029
  %v4270 = vunpack.c.h.b16 %v1029
  %v4271 = vunpack.c.l.b16 %v1030
  %v4272 = vunpack.c.h.b16 %v1030
  %v4273 = vunpack.c.l.b16 %v1031
  %v4274 = vunpack.c.h.b16 %v1031
  %v4275 = vunpack.c.l.b16 %v1032
  %v4276 = vunpack.c.h.b16 %v1032
  %v4277 = vunpack.c.l.b16 %v1033
  %v4278 = vunpack.c.h.b16 %v1033
  %v4279 = vunpack.c.l.b16 %v1034
  %v4280 = vunpack.c.h.b16 %v1034
  %v4281 = vunpack.c.l.b16 %v1035
  %v4282 = vunpack.c.h.b16 %v1035
  %v4283 = vunpack.c.l.b16 %v1036
  %v4284 = vunpack.c.h.b16 %v1036
  %v4285 = vunpack.c.l.b16 %v1037
  %v4286 = vunpack.c.h.b16 %v1037
  %v4287 = vunpack.c.l.b16 %v1038
  %v4288 = vunpack.c.h.b16 %v1038
  %v4289 = vunpack.c.l.b16 %v1039
  %v4290 = vunpack.c.h.b16 %v1039
  %v4291 = vunpack.c.l.b16 %v1040
  %v4292 = vunpack.c.h.b16 %v1040
  %v4293 = vunpack.c.l.b16 %v1041
  %v4294 = vunpack.c.h.b16 %v1041
  %v4295 = vunpack.c.l.b16 %v1042
  %v4296 = vunpack.c.h.b16 %v1042
  %v4297 = vunpack.c.l.b16 %v1043
  %v4298 = vunpack.c.h.b16 %v1043
  %v4299 = vunpack.c.l.b16 %v1044
  %v4300 = vunpack.c.h.b16 %v1044
  %v4301 = vunpack.c.l.b16 %v1045
  %v4302 = vunpack.c.h.b16 %v1045
  %v4303 = vunpack.c.l.b16 %v1046
  %v4304 = vunpack.c.h.b16 %v1046
  %v4305 = vunpack.c.l.b16 %v1047
  %v4306 = vunpack.c.h.b16 %v1047
  %v4307 = vunpack.c.l.b16 %v1048
  %v4308 = vunpack.c.h.b16 %v1048
  %v4309 = vunpack.c.l.b16 %v1049
  %v4310 = vunpack.c.h.b16 %v1049
  %v4311 = vunpack.c.l.b16 %v1050
  %v4312 = vunpack.c.h.b16 %v1050
  %v4313 = vunpack.c.l.b16 %v1051
  %v4314 = vunpack.c.h.b16 %v1051
  %v4315 = vunpack.c.l.b16 %v1052
  %v4316 = vunpack.c.h.b16 %v1052
  %v4317 = vunpack.c.l.b16 %v1053
  %v4318 = vunpack.c.h.b16 %v1053
  %v4319 = vunpack.c.l.b16 %v1054
  %v4320 = vunpack.c.h.b16 %v1054
  %v4321 = vunpack.c.l.b16 %v1055
  %v4322 = vunpack.c.h.b16 %v1055
  %v4323 = vunpack.c.l.b16 %v1056
  %v4324 = vunpack.c.h.b16 %v1056
  %v4325 = vunpack.c.l.b16 %v1057
  %v4326 = vunpack.c.h.b16 %v1057
  %v4327 = vunpack.c.l.b16 %v1058
  %v4328 = vunpack.c.h.b16 %v1058
  %v4329 = vpack.c.b16 %v2285, %v2281
  %v4330 = vpack.c.b16 %v2286, %v2282
  %v4331 = vpack.c.b16 %v2287, %v2283
  %v4332 = vpack.c.b16 %v2288, %v2284
  %v4333 = vpack.c.b16 %v2293, %v2289
  %v4334 = vpack.c.b16 %v2294, %v2290
  %v4335 = vpack.c.b16 %v2295, %v2291
  %v4336 = vpack.c.b16 %v2296, %v2292
  %v4337 = vpack.c.b16 %v2301, %v2297
  %v4338 = vpack.c.b16 %v2302, %v2298
  %v4339 = vpack.c.b16 %v2303, %v2299
  %v4340 = vpack.c.b16 %v2304, %v2300
  %v4341 = vpack.c.b16 %v2309, %v2305
  %v4342 = vpack.c.b16 %v2310, %v2306
  %v4343 = vpack.c.b16 %v2311, %v2307
  %v4344 = vpack.c.b16 %v2312, %v2308
  %v4345 = vpack.c.b16 %v2317, %v2313
  %v4346 = vpack.c.b16 %v2318, %v2314
  %v4347 = vpack.c.b16 %v2319, %v2315
  %v4348 = vpack.c.b16 %v2320, %v2316
  %v4349 = vpack.c.b16 %v2325, %v2321
  %v4350 = vpack.c.b16 %v2326, %v2322
  %v4351 = vpack.c.b16 %v2327, %v2323
  %v4352 = vpack.c.b16 %v2328, %v2324
  %v4353 = vpack.c.b16 %v2333, %v2329
  %v4354 = vpack.c.b16 %v2334, %v2330
  %v4355 = vpack.c.b16 %v2335, %v2331
  %v4356 = vpack.c.b16 %v2336, %v2332
  %v4357 = vpack.c.b16 %v2341, %v2337
  %v4358 = vpack.c.b16 %v2342, %v2338
  %v4359 = vpack.c.b16 %v2343, %v2339
  %v4360 = vpack.c.b16 %v2344, %v2340
  %v4361 = vpack.c.b16 %v2349, %v2345
  %v4362 = vpack.c.b16 %v2350, %v2346
  %v4363 = vpack.c.b16 %v2351, %v2347
  %v4364 = vpack.c.b16 %v2352, %v2348
  %v4365 = vpack.c.b16 %v2357, %v2353
  %v4366 = vpack.c.b16 %v2358, %v2354
  %v4367 = vpack.c.b16 %v2359, %v2355
  %v4368 = vpack.c.b16 %v2360, %v2356
  %v4369 = vpack.c.b16 %v2365, %v2361
  %v4370 = vpack.c.b16 %v2366, %v2362
  %v4371 = vpack.c.b16 %v2367, %v2363
  %v4372 = vpack.c.b16 %v2368, %v2364
  %v4373 = vpack.c.b16 %v2373, %v2369
  %v4374 = vpack.c.b16 %v2374, %v2370
  %v4375 = vpack.c.b16 %v2375, %v2371
  %v4376 = vpack.c.b16 %v2376, %v2372
  %v4377 = vpack.c.b16 %v2381, %v2377
  %v4378 = vpack.c.b16 %v2382, %v2378
  %v4379 = vpack.c.b16 %v2383, %v2379
  %v4380 = vpack.c.b16 %v2384, %v2380
  %v4381 = vpack.c.b16 %v2389, %v2385
  %v4382 = vpack.c.b16 %v2390, %v2386
  %v4383 = vpack.c.b16 %v2391, %v2387
  %v4384 = vpack.c.b16 %v2392, %v2388
  %v4385 = vpack.c.b16 %v2397, %v2393
  %v4386 = vpack.c.b16 %v2398, %v2394
  %v4387 = vpack.c.b16 %v2399, %v2395
  %v4388 = vpack.c.b16 %v2400, %v2396
  %v4389 = vpack.c.b16 %v2405, %v2401
  %v4390 = vpack.c.b16 %v2406, %v2402
  %v4391 = vpack.c.b16 %v2407, %v2403
  %v4392 = vpack.c.b16 %v2408, %v2404
  %v4393 = vpack.c.b16 %v2413, %v2409
  %v4394 = vpack.c.b16 %v2414, %v2410
  %v4395 = vpack.c.b16 %v2415, %v2411
  %v4396 = vpack.c.b16 %v2416, %v2412
  %v4397 = vpack.c.b16 %v2421, %v2417
  %v4398 = vpack.c.b16 %v2422, %v2418
  %v4399 = vpack.c.b16 %v2423, %v2419
  %v4400 = vpack.c.b16 %v2424, %v2420
  %v4401 = vpack.c.b16 %v2429, %v2425
  %v4402 = vpack.c.b16 %v2430, %v2426
  %v4403 = vpack.c.b16 %v2431, %v2427
  %v4404 = vpack.c.b16 %v2432, %v2428
  %v4405 = vpack.c.b16 %v2437, %v2433
  %v4406 = vpack.c.b16 %v2438, %v2434
  %v4407 = vpack.c.b16 %v2439, %v2435
  %v4408 = vpack.c.b16 %v2440, %v2436
  %v4409 = vpack.c.b16 %v2445, %v2441
  %v4410 = vpack.c.b16 %v2446, %v2442
  %v4411 = vpack.c.b16 %v2447, %v2443
  %v4412 = vpack.c.b16 %v2448, %v2444
  %v4413 = vpack.c.b16 %v2453, %v2449
  %v4414 = vpack.c.b16 %v2454, %v2450
  %v4415 = vpack.c.b16 %v2455, %v2451
  %v4416 = vpack.c.b16 %v2456, %v2452
  %v4417 = vpack.c.b16 %v2461, %v2457
  %v4418 = vpack.c.b16 %v2462, %v2458
  %v4419 = vpack.c.b16 %v2463, %v2459
  %v4420 = vpack.c.b16 %v2464, %v2460
  %v4421 = vpack.c.b16 %v2469, %v2465
  %v4422 = vpack.c.b16 %v2470, %v2466
  %v4423 = vpack.c.b16 %v2471, %v2467
  %v4424 = vpack.c.b16 %v2472, %v2468
  %v4425 = vpack.c.b16 %v2477, %v2473
  %v4426 = vpack.c.b16 %v2478, %v2474
  %v4427 = vpack.c.b16 %v2479, %v2475
  %v4428 = vpack.c.b16 %v2480, %v2476
  %v4429 = vpack.c.b16 %v2485, %v2481
  %v4430 = vpack.c.b16 %v2486, %v2482
  %v4431 = vpack.c.b16 %v2487, %v2483
  %v4432 = vpack.c.b16 %v2488, %v2484
  %v4433 = vpack.c.b16 %v2493, %v2489
  %v4434 = vpack.c.b16 %v2494, %v2490
  %v4435 = vpack.c.b16 %v2495, %v2491
  %v4436 = vpack.c.b16 %v2496, %v2492
  %v4437 = vpack.c.b16 %v2501, %v2497
  %v4438 = vpack.c.b16 %v2502, %v2498
  %v4439 = vpack.c.b16 %v2503, %v2499
  %v4440 = vpack.c.b16 %v2504, %v2500
  %v4441 = vpack.c.b16 %v2509, %v2505
  %v4442 = vpack.c.b16 %v2510, %v2506
  %v4443 = vpack.c.b16 %v2511, %v2507
  %v4444 = vpack.c.b16 %v2512, %v2508
  %v4445 = vpack.c.b16 %v2517, %v2513
  %v4446 = vpack.c.b16 %v2518, %v2514
  %v4447 = vpack.c.b16 %v2519, %v2515
  %v4448 = vpack.c.b16 %v2520, %v2516
  %v4449 = vpack.c.b16 %v2525, %v2521
  %v4450 = vpack.c.b16 %v2526, %v2522
  %v4451 = vpack.c.b16 %v2527, %v2523
  %v4452 = vpack.c.b16 %v2528, %v2524
  %v4453 = vpack.c.b16 %v2533, %v2529
  %v4454 = vpack.c.b16 %v2534, %v2530
  %v4455 = vpack.c.b16 %v2535, %v2531
  %v4456 = vpack.c.b16 %v2536, %v2532
  %v4457 = vpack.c.b16 %v2541, %v2537
  %v4458 = vpack.c.b16 %v2542, %v2538
  %v4459 = vpack.c.b16 %v2543, %v2539
  %v4460 = vpack.c.b16 %v2544, %v2540
  %v4461 = vpack.c.b16 %v2549, %v2545
  %v4462 = vpack.c.b16 %v2550, %v2546
  %v4463 = vpack.c.b16 %v2551, %v2547
  %v4464 = vpack.c.b16 %v2552, %v2548
  %v4465 = vpack.c.b16 %v2557, %v2553
  %v4466 = vpack.c.b16 %v2558, %v2554
  %v4467 = vpack.c.b16 %v2559, %v2555
  %v4468 = vpack.c.b16 %v2560, %v2556
  %v4469 = vpack.c.b16 %v2565, %v2561
  %v4470 = vpack.c.b16 %v2566, %v2562
  %v4471 = vpack.c.b16 %v2567, %v2563
  %v4472 = vpack.c.b16 %v2568, %v2564
  %v4473 = vpack.c.b16 %v2573, %v2569
  %v4474 = vpack.c.b16 %v2574, %v2570
  %v4475 = vpack.c.b16 %v2575, %v2571
  %v4476 = vpack.c.b16 %v2576, %v2572
  %v4477 = vpack.c.b16 %v2581, %v2577
  %v4478 = vpack.c.b16 %v2582, %v2578
  %v4479 = vpack.c.b16 %v2583, %v2579
  %v4480 = vpack.c.b16 %v2584, %v2580
  %v4481 = vpack.c.b16 %v2589, %v2585
  %v4482 = vpack.c.b16 %v2590, %v2586
  %v4483 = vpack.c.b16 %v2591, %v2587
  %v4484 = vpack.c.b16 %v2592, %v2588
  %v4485 = vpack.c.b16 %v2597, %v2593
  %v4486 = vpack.c.b16 %v2598, %v2594
  %v4487 = vpack.c.b16 %v2599, %v2595
  %v4488 = vpack.c.b16 %v2600, %v2596
  %v4489 = vpack.c.b16 %v2605, %v2601
  %v4490 = vpack.c.b16 %v2606, %v2602
  %v4491 = vpack.c.b16 %v2607, %v2603
  %v4492 = vpack.c.b16 %v2608, %v2604
  %v4493 = vpack.c.b16 %v2613, %v2609
  %v4494 = vpack.c.b16 %v2614, %v2610
  %v4495 = vpack.c.b16 %v2615, %v2611
  %v4496 = vpack.c.b16 %v2616, %v2612
  %v4497 = vpack.c.b16 %v2621, %v2617
  %v4498 = vpack.c.b16 %v2622, %v2618
  %v4499 = vpack.c.b16 %v2623, %v2619
  %v4500 = vpack.c.b16 %v2624, %v2620
  %v4501 = vpack.c.b16 %v2629, %v2625
  %v4502 = vpack.c.b16 %v2630, %v2626
  %v4503 = vpack.c.b16 %v2631, %v2627
  %v4504 = vpack.c.b16 %v2632, %v2628
  %v4505 = vpack.c.b16 %v2637, %v2633
  %v4506 = vpack.c.b16 %v2638, %v2634
  %v4507 = vpack.c.b16 %v2639, %v2635
  %v4508 = vpack.c.b16 %v2640, %v2636
  %v4509 = vpack.c.b16 %v2645, %v2641
  %v4510 = vpack.c.b16 %v2646, %v2642
  %v4511 = vpack.c.b16 %v2647, %v2643
  %v4512 = vpack.c.b16 %v2648, %v2644
  %v4513 = vpack.c.b16 %v2653, %v2649
  %v4514 = vpack.c.b16 %v2654, %v2650
  %v4515 = vpack.c.b16 %v2655, %v2651
  %v4516 = vpack.c.b16 %v2656, %v2652
  %v4517 = vpack.c.b16 %v2661, %v2657
  %v4518 = vpack.c.b16 %v2662, %v2658
  %v4519 = vpack.c.b16 %v2663, %v2659
  %v4520 = vpack.c.b16 %v2664, %v2660
  %v4521 = vpack.c.b16 %v2669, %v2665
  %v4522 = vpack.c.b16 %v2670, %v2666
  %v4523 = vpack.c.b16 %v2671, %v2667
  %v4524 = vpack.c.b16 %v2672, %v2668
  %v4525 = vpack.c.b16 %v2677, %v2673
  %v4526 = vpack.c.b16 %v2678, %v2674
  %v4527 = vpack.c.b16 %v2679, %v2675
  %v4528 = vpack.c.b16 %v2680, %v2676
  %v4529 = vpack.c.b16 %v2685, %v2681
  %v4530 = vpack.c.b16 %v2686, %v2682
  %v4531 = vpack.c.b16 %v2687, %v2683
  %v4532 = vpack.c.b16 %v2688, %v2684
  %v4533 = vpack.c.b16 %v2693, %v2689
  %v4534 = vpack.c.b16 %v2694, %v2690
  %v4535 = vpack.c.b16 %v2695, %v2691
  %v4536 = vpack.c.b16 %v2696, %v2692
  %v4537 = vpack.c.b16 %v2701, %v2697
  %v4538 = vpack.c.b16 %v2702, %v2698
  %v4539 = vpack.c.b16 %v2703, %v2699
  %v4540 = vpack.c.b16 %v2704, %v2700
  %v4541 = vpack.c.b16 %v2709, %v2705
  %v4542 = vpack.c.b16 %v2710, %v2706
  %v4543 = vpack.c.b16 %v2711, %v2707
  %v4544 = vpack.c.b16 %v2712, %v2708
  %v4545 = vpack.c.b16 %v2717, %v2713
  %v4546 = vpack.c.b16 %v2718, %v2714
  %v4547 = vpack.c.b16 %v2719, %v2715
  %v4548 = vpack.c.b16 %v2720, %v2716
  %v4549 = vpack.c.b16 %v2725, %v2721
  %v4550 = vpack.c.b16 %v2726, %v2722
  %v4551 = vpack.c.b16 %v2727, %v2723
  %v4552 = vpack.c.b16 %v2728, %v2724
  %v4553 = vpack.c.b16 %v2733, %v2729
  %v4554 = vpack.c.b16 %v2734, %v2730
  %v4555 = vpack.c.b16 %v2735, %v2731
  %v4556 = vpack.c.b16 %v2736, %v2732
  %v4557 = vpack.c.b16 %v2741, %v2737
  %v4558 = vpack.c.b16 %v2742, %v2738
  %v4559 = vpack.c.b16 %v2743, %v2739
  %v4560 = vpack.c.b16 %v2744, %v2740
  %v4561 = vpack.c.b16 %v2749, %v2745
  %v4562 = vpack.c.b16 %v2750, %v2746
  %v4563 = vpack.c.b16 %v2751, %v2747
  %v4564 = vpack.c.b16 %v2752, %v2748
  %v4565 = vpack.c.b16 %v2757, %v2753
  %v4566 = vpack.c.b16 %v2758, %v2754
  %v4567 = vpack.c.b16 %v2759, %v2755
  %v4568 = vpack.c.b16 %v2760, %v2756
  %v4569 = vpack.c.b16 %v2765, %v2761
  %v4570 = vpack.c.b16 %v2766, %v2762
  %v4571 = vpack.c.b16 %v2767, %v2763
  %v4572 = vpack.c.b16 %v2768, %v2764
  %v4573 = vpack.c.b16 %v2773, %v2769
  %v4574 = vpack.c.b16 %v2774, %v2770
  %v4575 = vpack.c.b16 %v2775, %v2771
  %v4576 = vpack.c.b16 %v2776, %v2772
  %v4577 = vpack.c.b16 %v2781, %v2777
  %v4578 = vpack.c.b16 %v2782, %v2778
  %v4579 = vpack.c.b16 %v2783, %v2779
  %v4580 = vpack.c.b16 %v2784, %v2780
  %v4581 = vpack.c.b16 %v2789, %v2785
  %v4582 = vpack.c.b16 %v2790, %v2786
  %v4583 = vpack.c.b16 %v2791, %v2787
  %v4584 = vpack.c.b16 %v2792, %v2788
  %v4585 = vpack.c.b16 %v2797, %v2793
  %v4586 = vpack.c.b16 %v2798, %v2794
  %v4587 = vpack.c.b16 %v2799, %v2795
  %v4588 = vpack.c.b16 %v2800, %v2796
  %v4589 = vpack.c.b16 %v2805, %v2801
  %v4590 = vpack.c.b16 %v2806, %v2802
  %v4591 = vpack.c.b16 %v2807, %v2803
  %v4592 = vpack.c.b16 %v2808, %v2804
  %v4593 = vpack.c.b16 %v2813, %v2809
  %v4594 = vpack.c.b16 %v2814, %v2810
  %v4595 = vpack.c.b16 %v2815, %v2811
  %v4596 = vpack.c.b16 %v2816, %v2812
  %v4597 = vpack.c.b16 %v2821, %v2817
  %v4598 = vpack.c.b16 %v2822, %v2818
  %v4599 = vpack.c.b16 %v2823, %v2819
  %v4600 = vpack.c.b16 %v2824, %v2820
  %v4601 = vpack.c.b16 %v2829, %v2825
  %v4602 = vpack.c.b16 %v2830, %v2826
  %v4603 = vpack.c.b16 %v2831, %v2827
  %v4604 = vpack.c.b16 %v2832, %v2828
  %v4605 = vpack.c.b16 %v2837, %v2833
  %v4606 = vpack.c.b16 %v2838, %v2834
  %v4607 = vpack.c.b16 %v2839, %v2835
  %v4608 = vpack.c.b16 %v2840, %v2836
  %v4609 = vpack.c.b16 %v2845, %v2841
  %v4610 = vpack.c.b16 %v2846, %v2842
  %v4611 = vpack.c.b16 %v2847, %v2843
  %v4612 = vpack.c.b16 %v2848, %v2844
  %v4613 = vpack.c.b16 %v2853, %v2849
  %v4614 = vpack.c.b16 %v2854, %v2850
  %v4615 = vpack.c.b16 %v2855, %v2851
  %v4616 = vpack.c.b16 %v2856, %v2852
  %v4617 = vpack.c.b16 %v2861, %v2857
  %v4618 = vpack.c.b16 %v2862, %v2858
  %v4619 = vpack.c.b16 %v2863, %v2859
  %v4620 = vpack.c.b16 %v2864, %v2860
  %v4621 = vpack.c.b16 %v2869, %v2865
  %v4622 = vpack.c.b16 %v2870, %v2866
  %v4623 = vpack.c.b16 %v2871, %v2867
  %v4624 = vpack.c.b16 %v2872, %v2868
  %v4625 = vpack.c.b16 %v2877, %v2873
  %v4626 = vpack.c.b16 %v2878, %v2874
  %v4627 = vpack.c.b16 %v2879, %v2875
  %v4628 = vpack.c.b16 %v2880, %v2876
  %v4629 = vpack.c.b16 %v2885, %v2881
  %v4630 = vpack.c.b16 %v2886, %v2882
  %v4631 = vpack.c.b16 %v2887, %v2883
  %v4632 = vpack.c.b16 %v2888, %v2884
  %v4633 = vpack.c.b16 %v2893, %v2889
  %v4634 = vpack.c.b16 %v2894, %v2890
  %v4635 = vpack.c.b16 %v2895, %v2891
  %v4636 = vpack.c.b16 %v2896, %v2892
  %v4637 = vpack.c.b16 %v2901, %v2897
  %v4638 = vpack.c.b16 %v2902, %v2898
  %v4639 = vpack.c.b16 %v2903, %v2899
  %v4640 = vpack.c.b16 %v2904, %v2900
  %v4641 = vpack.c.b16 %v2909, %v2905
  %v4642 = vpack.c.b16 %v2910, %v2906
  %v4643 = vpack.c.b16 %v2911, %v2907
  %v4644 = vpack.c.b16 %v2912, %v2908
  %v4645 = vpack.c.b16 %v2917, %v2913
  %v4646 = vpack.c.b16 %v2918, %v2914
  %v4647 = vpack.c.b16 %v2919, %v2915
  %v4648 = vpack.c.b16 %v2920, %v2916
  %v4649 = vpack.c.b16 %v2925, %v2921
  %v4650 = vpack.c.b16 %v2926, %v2922
  %v4651 = vpack.c.b16 %v2927, %v2923
  %v4652 = vpack.c.b16 %v2928, %v2924
  %v4653 = vpack.c.b16 %v2933, %v2929
  %v4654 = vpack.c.b16 %v2934, %v2930
  %v4655 = vpack.c.b16 %v2935, %v2931
  %v4656 = vpack.c.b16 %v2936, %v2932
  %v4657 = vpack.c.b16 %v2941, %v2937
  %v4658 = vpack.c.b16 %v2942, %v2938
  %v4659 = vpack.c.b16 %v2943, %v2939
  %v4660 = vpack.c.b16 %v2944, %v2940
  %v4661 = vpack.c.b16 %v2949, %v2945
  %v4662 = vpack.c.b16 %v2950, %v2946
  %v4663 = vpack.c.b16 %v2951, %v2947
  %v4664 = vpack.c.b16 %v2952, %v2948
  %v4665 = vpack.c.b16 %v2957, %v2953
  %v4666 = vpack.c.b16 %v2958, %v2954
  %v4667 = vpack.c.b16 %v2959, %v2955
  %v4668 = vpack.c.b16 %v2960, %v2956
  %v4669 = vpack.c.b16 %v2965, %v2961
  %v4670 = vpack.c.b16 %v2966, %v2962
  %v4671 = vpack.c.b16 %v2967, %v2963
  %v4672 = vpack.c.b16 %v2968, %v2964
  %v4673 = vpack.c.b16 %v2973, %v2969
  %v4674 = vpack.c.b16 %v2974, %v2970
  %v4675 = vpack.c.b16 %v2975, %v2971
  %v4676 = vpack.c.b16 %v2976, %v2972
  %v4677 = vpack.c.b16 %v2981, %v2977
  %v4678 = vpack.c.b16 %v2982, %v2978
  %v4679 = vpack.c.b16 %v2983, %v2979
  %v4680 = vpack.c.b16 %v2984, %v2980
  %v4681 = vpack.c.b16 %v2989, %v2985
  %v4682 = vpack.c.b16 %v2990, %v2986
  %v4683 = vpack.c.b16 %v2991, %v2987
  %v4684 = vpack.c.b16 %v2992, %v2988
  %v4685 = vpack.c.b16 %v2997, %v2993
  %v4686 = vpack.c.b16 %v2998, %v2994
  %v4687 = vpack.c.b16 %v2999, %v2995
  %v4688 = vpack.c.b16 %v3000, %v2996
  %v4689 = vpack.c.b16 %v3005, %v3001
  %v4690 = vpack.c.b16 %v3006, %v3002
  %v4691 = vpack.c.b16 %v3007, %v3003
  %v4692 = vpack.c.b16 %v3008, %v3004
  %v4693 = vpack.c.b16 %v3013, %v3009
  %v4694 = vpack.c.b16 %v3014, %v3010
  %v4695 = vpack.c.b16 %v3015, %v3011
  %v4696 = vpack.c.b16 %v3016, %v3012
  %v4697 = vpack.c.b16 %v3021, %v3017
  %v4698 = vpack.c.b16 %v3022, %v3018
  %v4699 = vpack.c.b16 %v3023, %v3019
  %v4700 = vpack.c.b16 %v3024, %v3020
  %v4701 = vpack.c.b16 %v3029, %v3025
  %v4702 = vpack.c.b16 %v3030, %v3026
  %v4703 = vpack.c.b16 %v3031, %v3027
  %v4704 = vpack.c.b16 %v3032, %v3028
  %v4705 = vpack.c.b16 %v3037, %v3033
  %v4706 = vpack.c.b16 %v3038, %v3034
  %v4707 = vpack.c.b16 %v3039, %v3035
  %v4708 = vpack.c.b16 %v3040, %v3036
  %v4709 = vpack.c.b16 %v3045, %v3041
  %v4710 = vpack.c.b16 %v3046, %v3042
  %v4711 = vpack.c.b16 %v3047, %v3043
  %v4712 = vpack.c.b16 %v3048, %v3044
  %v4713 = vpack.c.b16 %v3053, %v3049
  %v4714 = vpack.c.b16 %v3054, %v3050
  %v4715 = vpack.c.b16 %v3055, %v3051
  %v4716 = vpack.c.b16 %v3056, %v3052
  %v4717 = vpack.c.b16 %v3061, %v3057
  %v4718 = vpack.c.b16 %v3062, %v3058
  %v4719 = vpack.c.b16 %v3063, %v3059
  %v4720 = vpack.c.b16 %v3064, %v3060
  %v4721 = vpack.c.b16 %v3069, %v3065
  %v4722 = vpack.c.b16 %v3070, %v3066
  %v4723 = vpack.c.b16 %v3071, %v3067
  %v4724 = vpack.c.b16 %v3072, %v3068
  %v4725 = vpack.c.b16 %v3077, %v3073
  %v4726 = vpack.c.b16 %v3078, %v3074
  %v4727 = vpack.c.b16 %v3079, %v3075
  %v4728 = vpack.c.b16 %v3080, %v3076
  %v4729 = vpack.c.b16 %v3085, %v3081
  %v4730 = vpack.c.b16 %v3086, %v3082
  %v4731 = vpack.c.b16 %v3087, %v3083
  %v4732 = vpack.c.b16 %v3088, %v3084
  %v4733 = vpack.c.b16 %v3093, %v3089
  %v4734 = vpack.c.b16 %v3094, %v3090
  %v4735 = vpack.c.b16 %v3095, %v3091
  %v4736 = vpack.c.b16 %v3096, %v3092
  %v4737 = vpack.c.b16 %v3101, %v3097
  %v4738 = vpack.c.b16 %v3102, %v3098
  %v4739 = vpack.c.b16 %v3103, %v3099
  %v4740 = vpack.c.b16 %v3104, %v3100
  %v4741 = vpack.c.b16 %v3109, %v3105
  %v4742 = vpack.c.b16 %v3110, %v3106
  %v4743 = vpack.c.b16 %v3111, %v3107
  %v4744 = vpack.c.b16 %v3112, %v3108
  %v4745 = vpack.c.b16 %v3117, %v3113
  %v4746 = vpack.c.b16 %v3118, %v3114
  %v4747 = vpack.c.b16 %v3119, %v3115
  %v4748 = vpack.c.b16 %v3120, %v3116
  %v4749 = vpack.c.b16 %v3125, %v3121
  %v4750 = vpack.c.b16 %v3126, %v3122
  %v4751 = vpack.c.b16 %v3127, %v3123
  %v4752 = vpack.c.b16 %v3128, %v3124
  %v4753 = vpack.c.b16 %v3133, %v3129
  %v4754 = vpack.c.b16 %v3134, %v3130
  %v4755 = vpack.c.b16 %v3135, %v3131
  %v4756 = vpack.c.b16 %v3136, %v3132
  %v4757 = vpack.c.b16 %v3141, %v3137
  %v4758 = vpack.c.b16 %v3142, %v3138
  %v4759 = vpack.c.b16 %v3143, %v3139
  %v4760 = vpack.c.b16 %v3144, %v3140
  %v4761 = vpack.c.b16 %v3149, %v3145
  %v4762 = vpack.c.b16 %v3150, %v3146
  %v4763 = vpack.c.b16 %v3151, %v3147
  %v4764 = vpack.c.b16 %v3152, %v3148
  %v4765 = vpack.c.b16 %v3157, %v3153
  %v4766 = vpack.c.b16 %v3158, %v3154
  %v4767 = vpack.c.b16 %v3159, %v3155
  %v4768 = vpack.c.b16 %v3160, %v3156
  %v4769 = vpack.c.b16 %v3165, %v3161
  %v4770 = vpack.c.b16 %v3166, %v3162
  %v4771 = vpack.c.b16 %v3167, %v3163
  %v4772 = vpack.c.b16 %v3168, %v3164
  %v4773 = vpack.c.b16 %v3173, %v3169
  %v4774 = vpack.c.b16 %v3174, %v3170
  %v4775 = vpack.c.b16 %v3175, %v3171
  %v4776 = vpack.c.b16 %v3176, %v3172
  %v4777 = vpack.c.b16 %v3181, %v3177
  %v4778 = vpack.c.b16 %v3182, %v3178
  %v4779 = vpack.c.b16 %v3183, %v3179
  %v4780 = vpack.c.b16 %v3184, %v3180
  %v4781 = vpack.c.b16 %v3189, %v3185
  %v4782 = vpack.c.b16 %v3190, %v3186
  %v4783 = vpack.c.b16 %v3191, %v3187
  %v4784 = vpack.c.b16 %v3192, %v3188
  %v4785 = vpack.c.b16 %v3197, %v3193
  %v4786 = vpack.c.b16 %v3198, %v3194
  %v4787 = vpack.c.b16 %v3199, %v3195
  %v4788 = vpack.c.b16 %v3200, %v3196
  %v4789 = vpack.c.b16 %v3205, %v3201
  %v4790 = vpack.c.b16 %v3206, %v3202
  %v4791 = vpack.c.b16 %v3207, %v3203
  %v4792 = vpack.c.b16 %v3208, %v3204
  %v4793 = vpack.c.b16 %v3213, %v3209
  %v4794 = vpack.c.b16 %v3214, %v3210
  %v4795 = vpack.c.b16 %v3215, %v3211
  %v4796 = vpack.c.b16 %v3216, %v3212
  %v4797 = vpack.c.b16 %v3221, %v3217
  %v4798 = vpack.c.b16 %v3222, %v3218
  %v4799 = vpack.c.b16 %v3223, %v3219
  %v4800 = vpack.c.b16 %v3224, %v3220
  %v4801 = vpack.c.b16 %v3229, %v3225
  %v4802 = vpack.c.b16 %v3230, %v3226
  %v4803 = vpack.c.b16 %v3231, %v3227
  %v4804 = vpack.c.b16 %v3232, %v3228
  %v4805 = vpack.c.b16 %v3237, %v3233
  %v4806 = vpack.c.b16 %v3238, %v3234
  %v4807 = vpack.c.b16 %v3239, %v3235
  %v4808 = vpack.c.b16 %v3240, %v3236
  %v4809 = vpack.c.b16 %v3245, %v3241
  %v4810 = vpack.c.b16 %v3246, %v3242
  %v4811 = vpack.c.b16 %v3247, %v3243
  %v4812 = vpack.c.b16 %v3248, %v3244
  %v4813 = vpack.c.b16 %v3253, %v3249
  %v4814 = vpack.c.b16 %v3254, %v3250
  %v4815 = vpack.c.b16 %v3255, %v3251
  %v4816 = vpack.c.b16 %v3256, %v3252
  %v4817 = vpack.c.b16 %v3261, %v3257
  %v4818 = vpack.c.b16 %v3262, %v3258
  %v4819 = vpack.c.b16 %v3263, %v3259
  %v4820 = vpack.c.b16 %v3264, %v3260
  %v4821 = vpack.c.b16 %v3269, %v3265
  %v4822 = vpack.c.b16 %v3270, %v3266
  %v4823 = vpack.c.b16 %v3271, %v3267
  %v4824 = vpack.c.b16 %v3272, %v3268
  %v4825 = vpack.c.b16 %v3277, %v3273
  %v4826 = vpack.c.b16 %v3278, %v3274
  %v4827 = vpack.c.b16 %v3279, %v3275
  %v4828 = vpack.c.b16 %v3280, %v3276
  %v4829 = vpack.c.b16 %v3285, %v3281
  %v4830 = vpack.c.b16 %v3286, %v3282
  %v4831 = vpack.c.b16 %v3287, %v3283
  %v4832 = vpack.c.b16 %v3288, %v3284
  %v4833 = vpack.c.b16 %v3293, %v3289
  %v4834 = vpack.c.b16 %v3294, %v3290
  %v4835 = vpack.c.b16 %v3295, %v3291
  %v4836 = vpack.c.b16 %v3296, %v3292
  %v4837 = vpack.c.b16 %v3301, %v3297
  %v4838 = vpack.c.b16 %v3302, %v3298
  %v4839 = vpack.c.b16 %v3303, %v3299
  %v4840 = vpack.c.b16 %v3304, %v3300
  %v4841 = vpack.c.b16 %v3309, %v3305
  %v4842 = vpack.c.b16 %v3310, %v3306
  %v4843 = vpack.c.b16 %v3311, %v3307
  %v4844 = vpack.c.b16 %v3312, %v3308
  %v4845 = vpack.c.b16 %v3317, %v3313
  %v4846 = vpack.c.b16 %v3318, %v3314
  %v4847 = vpack.c.b16 %v3319, %v3315
  %v4848 = vpack.c.b16 %v3320, %v3316
  %v4849 = vpack.c.b16 %v3325, %v3321
  %v4850 = vpack.c.b16 %v3326, %v3322
  %v4851 = vpack.c.b16 %v3327, %v3323
  %v4852 = vpack.c.b16 %v3328, %v3324
  %v4853 = vpack.c.b16 %v3333, %v3329
  %v4854 = vpack.c.b16 %v3334, %v3330
  %v4855 = vpack.c.b16 %v3335, %v3331
  %v4856 = vpack.c.b16 %v3336, %v3332
  %v4857 = vpack.c.b16 %v3341, %v3337
  %v4858 = vpack.c.b16 %v3342, %v3338
  %v4859 = vpack.c.b16 %v3343, %v3339
  %v4860 = vpack.c.b16 %v3344, %v3340
  %v4861 = vpack.c.b16 %v3349, %v3345
  %v4862 = vpack.c.b16 %v3350, %v3346
  %v4863 = vpack.c.b16 %v3351, %v3347
  %v4864 = vpack.c.b16 %v3352, %v3348
  %v4865 = vpack.c.b16 %v3357, %v3353
  %v4866 = vpack.c.b16 %v3358, %v3354
  %v4867 = vpack.c.b16 %v3359, %v3355
  %v4868 = vpack.c.b16 %v3360, %v3356
  %v4869 = vpack.c.b16 %v3365, %v3361
  %v4870 = vpack.c.b16 %v3366, %v3362
  %v4871 = vpack.c.b16 %v3367, %v3363
  %v4872 = vpack.c.b16 %v3368, %v3364
  %v4873 = vpack.c.b16 %v3373, %v3369
  %v4874 = vpack.c.b16 %v3374, %v3370
  %v4875 = vpack.c.b16 %v3375, %v3371
  %v4876 = vpack.c.b16 %v3376, %v3372
  %v4877 = vpack.c.b16 %v3381, %v3377
  %v4878 = vpack.c.b16 %v3382, %v3378
  %v4879 = vpack.c.b16 %v3383, %v3379
  %v4880 = vpack.c.b16 %v3384, %v3380
  %v4881 = vpack.c.b16 %v3389, %v3385
  %v4882 = vpack.c.b16 %v3390, %v3386
  %v4883 = vpack.c.b16 %v3391, %v3387
  %v4884 = vpack.c.b16 %v3392, %v3388
  %v4885 = vpack.c.b16 %v3397, %v3393
  %v4886 = vpack.c.b16 %v3398, %v3394
  %v4887 = vpack.c.b16 %v3399, %v3395
  %v4888 = vpack.c.b16 %v3400, %v3396
  %v4889 = vpack.c.b16 %v3405, %v3401
  %v4890 = vpack.c.b16 %v3406, %v3402
  %v4891 = vpack.c.b16 %v3407, %v3403
  %v4892 = vpack.c.b16 %v3408, %v3404
  %v4893 = vpack.c.b16 %v3413, %v3409
  %v4894 = vpack.c.b16 %v3414, %v3410
  %v4895 = vpack.c.b16 %v3415, %v3411
  %v4896 = vpack.c.b16 %v3416, %v3412
  %v4897 = vpack.c.b16 %v3421, %v3417
  %v4898 = vpack.c.b16 %v3422, %v3418
  %v4899 = vpack.c.b16 %v3423, %v3419
  %v4900 = vpack.c.b16 %v3424, %v3420
  %v4901 = vpack.c.b16 %v3429, %v3425
  %v4902 = vpack.c.b16 %v3430, %v3426
  %v4903 = vpack.c.b16 %v3431, %v3427
  %v4904 = vpack.c.b16 %v3432, %v3428
  %v4905 = vpack.c.b16 %v3437, %v3433
  %v4906 = vpack.c.b16 %v3438, %v3434
  %v4907 = vpack.c.b16 %v3439, %v3435
  %v4908 = vpack.c.b16 %v3440, %v3436
  %v4909 = vpack.c.b16 %v3445, %v3441
  %v4910 = vpack.c.b16 %v3446, %v3442
  %v4911 = vpack.c.b16 %v3447, %v3443
  %v4912 = vpack.c.b16 %v3448, %v3444
  %v4913 = vpack.c.b16 %v3453, %v3449
  %v4914 = vpack.c.b16 %v3454, %v3450
  %v4915 = vpack.c.b16 %v3455, %v3451
  %v4916 = vpack.c.b16 %v3456, %v3452
  %v4917 = vpack.c.b16 %v3461, %v3457
  %v4918 = vpack.c.b16 %v3462, %v3458
  %v4919 = vpack.c.b16 %v3463, %v3459
  %v4920 = vpack.c.b16 %v3464, %v3460
  %v4921 = vpack.c.b16 %v3469, %v3465
  %v4922 = vpack.c.b16 %v3470, %v3466
  %v4923 = vpack.c.b16 %v3471, %v3467
  %v4924 = vpack.c.b16 %v3472, %v3468
  %v4925 = vpack.c.b16 %v3477, %v3473
  %v4926 = vpack.c.b16 %v3478, %v3474
  %v4927 = vpack.c.b16 %v3479, %v3475
  %v4928 = vpack.c.b16 %v3480, %v3476
  %v4929 = vpack.c.b16 %v3485, %v3481
  %v4930 = vpack.c.b16 %v3486, %v3482
  %v4931 = vpack.c.b16 %v3487, %v3483
  %v4932 = vpack.c.b16 %v3488, %v3484
  %v4933 = vpack.c.b16 %v3493, %v3489
  %v4934 = vpack.c.b16 %v3494, %v3490
  %v4935 = vpack.c.b16 %v3495, %v3491
  %v4936 = vpack.c.b16 %v3496, %v3492
  %v4937 = vpack.c.b16 %v3501, %v3497
  %v4938 = vpack.c.b16 %v3502, %v3498
  %v4939 = vpack.c.b16 %v3503, %v3499
  %v4940 = vpack.c.b16 %v3504, %v3500
  %v4941 = vpack.c.b16 %v3509, %v3505
  %v4942 = vpack.c.b16 %v3510, %v3506
  %v4943 = vpack.c.b16 %v3511, %v3507
  %v4944 = vpack.c.b16 %v3512, %v3508
  %v4945 = vpack.c.b16 %v3517, %v3513
  %v4946 = vpack.c.b16 %v3518, %v3514
  %v4947 = vpack.c.b16 %v3519, %v3515
  %v4948 = vpack.c.b16 %v3520, %v3516
  %v4949 = vpack.c.b16 %v3525, %v3521
  %v4950 = vpack.c.b16 %v3526, %v3522
  %v4951 = vpack.c.b16 %v3527, %v3523
  %v4952 = vpack.c.b16 %v3528, %v3524
  %v4953 = vpack.c.b16 %v3533, %v3529
  %v4954 = vpack.c.b16 %v3534, %v3530
  %v4955 = vpack.c.b16 %v3535, %v3531
  %v4956 = vpack.c.b16 %v3536, %v3532
  %v4957 = vpack.c.b16 %v3541, %v3537
  %v4958 = vpack.c.b16 %v3542, %v3538
  %v4959 = vpack.c.b16 %v3543, %v3539
  %v4960 = vpack.c.b16 %v3544, %v3540
  %v4961 = vpack.c.b16 %v3549, %v3545
  %v4962 = vpack.c.b16 %v3550, %v3546
  %v4963 = vpack.c.b16 %v3551, %v3547
  %v4964 = vpack.c.b16 %v3552, %v3548
  %v4965 = vpack.c.b16 %v3557, %v3553
  %v4966 = vpack.c.b16 %v3558, %v3554
  %v4967 = vpack.c.b16 %v3559, %v3555
  %v4968 = vpack.c.b16 %v3560, %v3556
  %v4969 = vpack.c.b16 %v3565, %v3561
  %v4970 = vpack.c.b16 %v3566, %v3562
  %v4971 = vpack.c.b16 %v3567, %v3563
  %v4972 = vpack.c.b16 %v3568, %v3564
  %v4973 = vpack.c.b16 %v3573, %v3569
  %v4974 = vpack.c.b16 %v3574, %v3570
  %v4975 = vpack.c.b16 %v3575, %v3571
  %v4976 = vpack.c.b16 %v3576, %v3572
  %v4977 = vpack.c.b16 %v3581, %v3577
  %v4978 = vpack.c.b16 %v3582, %v3578
  %v4979 = vpack.c.b16 %v3583, %v3579
  %v4980 = vpack.c.b16 %v3584, %v3580
  %v4981 = vpack.c.b16 %v3589, %v3585
  %v4982 = vpack.c.b16 %v3590, %v3586
  %v4983 = vpack.c.b16 %v3591, %v3587
  %v4984 = vpack.c.b16 %v3592, %v3588
  %v4985 = vpack.c.b16 %v3597, %v3593
  %v4986 = vpack.c.b16 %v3598, %v3594
  %v4987 = vpack.c.b16 %v3599, %v3595
  %v4988 = vpack.c.b16 %v3600, %v3596
  %v4989 = vpack.c.b16 %v3605, %v3601
  %v4990 = vpack.c.b16 %v3606, %v3602
  %v4991 = vpack.c.b16 %v3607, %v3603
  %v4992 = vpack.c.b16 %v3608, %v3604
  %v4993 = vpack.c.b16 %v3613, %v3609
  %v4994 = vpack.c.b16 %v3614, %v3610
  %v4995 = vpack.c.b16 %v3615, %v3611
  %v4996 = vpack.c.b16 %v3616, %v3612
  %v4997 = vpack.c.b16 %v3621, %v3617
  %v4998 = vpack.c.b16 %v3622, %v3618
  %v4999 = vpack.c.b16 %v3623, %v3619
  %v5000 = vpack.c.b16 %v3624, %v3620
  %v5001 = vpack.c.b16 %v3629, %v3625
  %v5002 = vpack.c.b16 %v3630, %v3626
  %v5003 = vpack.c.b16 %v3631, %v3627
  %v5004 = vpack.c.b16 %v3632, %v3628
  %v5005 = vpack.c.b16 %v3637, %v3633
  %v5006 = vpack.c.b16 %v3638, %v3634
  %v5007 = vpack.c.b16 %v3639, %v3635
  %v5008 = vpack.c.b16 %v3640, %v3636
  %v5009 = vpack.c.b16 %v3645, %v3641
  %v5010 = vpack.c.b16 %v3646, %v3642
  %v5011 = vpack.c.b16 %v3647, %v3643
  %v5012 = vpack.c.b16 %v3648, %v3644
  %v5013 = vpack.c.b16 %v3653, %v3649
  %v5014 = vpack.c.b16 %v3654, %v3650
  %v5015 = vpack.c.b16 %v3655, %v3651
  %v5016 = vpack.c.b16 %v3656, %v3652
  %v5017 = vpack.c.b16 %v3661, %v3657
  %v5018 = vpack.c.b16 %v3662, %v3658
  %v5019 = vpack.c.b16 %v3663, %v3659
  %v5020 = vpack.c.b16 %v3664, %v3660
  %v5021 = vpack.c.b16 %v3669, %v3665
  %v5022 = vpack.c.b16 %v3670, %v3666
  %v5023 = vpack.c.b16 %v3671, %v3667
  %v5024 = vpack.c.b16 %v3672, %v3668
  %v5025 = vpack.c.b16 %v3677, %v3673
  %v5026 = vpack.c.b16 %v3678, %v3674
  %v5027 = vpack.c.b16 %v3679, %v3675
  %v5028 = vpack.c.b16 %v3680, %v3676
  %v5029 = vpack.c.b16 %v3685, %v3681
  %v5030 = vpack.c.b16 %v3686, %v3682
  %v5031 = vpack.c.b16 %v3687, %v3683
  %v5032 = vpack.c.b16 %v3688, %v3684
  %v5033 = vpack.c.b16 %v3693, %v3689
  %v5034 = vpack.c.b16 %v3694, %v3690
  %v5035 = vpack.c.b16 %v3695, %v3691
  %v5036 = vpack.c.b16 %v3696, %v3692
  %v5037 = vpack.c.b16 %v3701, %v3697
  %v5038 = vpack.c.b16 %v3702, %v3698
  %v5039 = vpack.c.b16 %v3703, %v3699
  %v5040 = vpack.c.b16 %v3704, %v3700
  %v5041 = vpack.c.b16 %v3709, %v3705
  %v5042 = vpack.c.b16 %v3710, %v3706
  %v5043 = vpack.c.b16 %v3711, %v3707
  %v5044 = vpack.c.b16 %v3712, %v3708
  %v5045 = vpack.c.b16 %v3717, %v3713
  %v5046 = vpack.c.b16 %v3718, %v3714
  %v5047 = vpack.c.b16 %v3719, %v3715
  %v5048 = vpack.c.b16 %v3720, %v3716
  %v5049 = vpack.c.b16 %v3725, %v3721
  %v5050 = vpack.c.b16 %v3726, %v3722
  %v5051 = vpack.c.b16 %v3727, %v3723
  %v5052 = vpack.c.b16 %v3728, %v3724
  %v5053 = vpack.c.b16 %v3733, %v3729
  %v5054 = vpack.c.b16 %v3734, %v3730
  %v5055 = vpack.c.b16 %v3735, %v3731
  %v5056 = vpack.c.b16 %v3736, %v3732
  %v5057 = vpack.c.b16 %v3741, %v3737
  %v5058 = vpack.c.b16 %v3742, %v3738
  %v5059 = vpack.c.b16 %v3743, %v3739
  %v5060 = vpack.c.b16 %v3744, %v3740
  %v5061 = vpack.c.b16 %v3749, %v3745
  %v5062 = vpack.c.b16 %v3750, %v3746
  %v5063 = vpack.c.b16 %v3751, %v3747
  %v5064 = vpack.c.b16 %v3752, %v3748
  %v5065 = vpack.c.b16 %v3757, %v3753
  %v5066 = vpack.c.b16 %v3758, %v3754
  %v5067 = vpack.c.b16 %v3759, %v3755
  %v5068 = vpack.c.b16 %v3760, %v3756
  %v5069 = vpack.c.b16 %v3765, %v3761
  %v5070 = vpack.c.b16 %v3766, %v3762
  %v5071 = vpack.c.b16 %v3767, %v3763
  %v5072 = vpack.c.b16 %v3768, %v3764
  %v5073 = vpack.c.b16 %v3773, %v3769
  %v5074 = vpack.c.b16 %v3774, %v3770
  %v5075 = vpack.c.b16 %v3775, %v3771
  %v5076 = vpack.c.b16 %v3776, %v3772
  %v5077 = vpack.c.b16 %v3781, %v3777
  %v5078 = vpack.c.b16 %v3782, %v3778
  %v5079 = vpack.c.b16 %v3783, %v3779
  %v5080 = vpack.c.b16 %v3784, %v3780
  %v5081 = vpack.c.b16 %v3789, %v3785
  %v5082 = vpack.c.b16 %v3790, %v3786
  %v5083 = vpack.c.b16 %v3791, %v3787
  %v5084 = vpack.c.b16 %v3792, %v3788
  %v5085 = vpack.c.b16 %v3797, %v3793
  %v5086 = vpack.c.b16 %v3798, %v3794
  %v5087 = vpack.c.b16 %v3799, %v3795
  %v5088 = vpack.c.b16 %v3800, %v3796
  %v5089 = vpack.c.b16 %v3805, %v3801
  %v5090 = vpack.c.b16 %v3806, %v3802
  %v5091 = vpack.c.b16 %v3807, %v3803
  %v5092 = vpack.c.b16 %v3808, %v3804
  %v5093 = vpack.c.b16 %v3813, %v3809
  %v5094 = vpack.c.b16 %v3814, %v3810
  %v5095 = vpack.c.b16 %v3815, %v3811
  %v5096 = vpack.c.b16 %v3816, %v3812
  %v5097 = vpack.c.b16 %v3821, %v3817
  %v5098 = vpack.c.b16 %v3822, %v3818
  %v5099 = vpack.c.b16 %v3823, %v3819
  %v5100 = vpack.c.b16 %v3824, %v3820
  %v5101 = vpack.c.b16 %v3829, %v3825
  %v5102 = vpack.c.b16 %v3830, %v3826
  %v5103 = vpack.c.b16 %v3831, %v3827
  %v5104 = vpack.c.b16 %v3832, %v3828
  %v5105 = vpack.c.b16 %v3837, %v3833
  %v5106 = vpack.c.b16 %v3838, %v3834
  %v5107 = vpack.c.b16 %v3839, %v3835
  %v5108 = vpack.c.b16 %v3840, %v3836
  %v5109 = vpack.c.b16 %v3845, %v3841
  %v5110 = vpack.c.b16 %v3846, %v3842
  %v5111 = vpack.c.b16 %v3847, %v3843
  %v5112 = vpack.c.b16 %v3848, %v3844
  %v5113 = vpack.c.b16 %v3853, %v3849
  %v5114 = vpack.c.b16 %v3854, %v3850
  %v5115 = vpack.c.b16 %v3855, %v3851
  %v5116 = vpack.c.b16 %v3856, %v3852
  %v5117 = vpack.c.b16 %v3861, %v3857
  %v5118 = vpack.c.b16 %v3862, %v3858
  %v5119 = vpack.c.b16 %v3863, %v3859
  %v5120 = vpack.c.b16 %v3864, %v3860
  %v5121 = vpack.c.b16 %v3869, %v3865
  %v5122 = vpack.c.b16 %v3870, %v3866
  %v5123 = vpack.c.b16 %v3871, %v3867
  %v5124 = vpack.c.b16 %v3872, %v3868
  %v5125 = vpack.c.b16 %v3877, %v3873
  %v5126 = vpack.c.b16 %v3878, %v3874
  %v5127 = vpack.c.b16 %v3879, %v3875
  %v5128 = vpack.c.b16 %v3880, %v3876
  %v5129 = vpack.c.b16 %v3885, %v3881
  %v5130 = vpack.c.b16 %v3886, %v3882
  %v5131 = vpack.c.b16 %v3887, %v3883
  %v5132 = vpack.c.b16 %v3888, %v3884
  %v5133 = vpack.c.b16 %v3893, %v3889
  %v5134 = vpack.c.b16 %v3894, %v3890
  %v5135 = vpack.c.b16 %v3895, %v3891
  %v5136 = vpack.c.b16 %v3896, %v3892
  %v5137 = vpack.c.b16 %v3901, %v3897
  %v5138 = vpack.c.b16 %v3902, %v3898
  %v5139 = vpack.c.b16 %v3903, %v3899
  %v5140 = vpack.c.b16 %v3904, %v3900
  %v5141 = vpack.c.b16 %v3909, %v3905
  %v5142 = vpack.c.b16 %v3910, %v3906
  %v5143 = vpack.c.b16 %v3911, %v3907
  %v5144 = vpack.c.b16 %v3912, %v3908
  %v5145 = vpack.c.b16 %v3917, %v3913
  %v5146 = vpack.c.b16 %v3918, %v3914
  %v5147 = vpack.c.b16 %v3919, %v3915
  %v5148 = vpack.c.b16 %v3920, %v3916
  %v5149 = vpack.c.b16 %v3925, %v3921
  %v5150 = vpack.c.b16 %v3926, %v3922
  %v5151 = vpack.c.b16 %v3927, %v3923
  %v5152 = vpack.c.b16 %v3928, %v3924
  %v5153 = vpack.c.b16 %v3933, %v3929
  %v5154 = vpack.c.b16 %v3934, %v3930
  %v5155 = vpack.c.b16 %v3935, %v3931
  %v5156 = vpack.c.b16 %v3936, %v3932
  %v5157 = vpack.c.b16 %v3941, %v3937
  %v5158 = vpack.c.b16 %v3942, %v3938
  %v5159 = vpack.c.b16 %v3943, %v3939
  %v5160 = vpack.c.b16 %v3944, %v3940
  %v5161 = vpack.c.b16 %v3949, %v3945
  %v5162 = vpack.c.b16 %v3950, %v3946
  %v5163 = vpack.c.b16 %v3951, %v3947
  %v5164 = vpack.c.b16 %v3952, %v3948
  %v5165 = vpack.c.b16 %v3957, %v3953
  %v5166 = vpack.c.b16 %v3958, %v3954
  %v5167 = vpack.c.b16 %v3959, %v3955
  %v5168 = vpack.c.b16 %v3960, %v3956
  %v5169 = vpack.c.b16 %v3965, %v3961
  %v5170 = vpack.c.b16 %v3966, %v3962
  %v5171 = vpack.c.b16 %v3967, %v3963
  %v5172 = vpack.c.b16 %v3968, %v3964
  %v5173 = vpack.c.b16 %v3973, %v3969
  %v5174 = vpack.c.b16 %v3974, %v3970
  %v5175 = vpack.c.b16 %v3975, %v3971
  %v5176 = vpack.c.b16 %v3976, %v3972
  %v5177 = vpack.c.b16 %v3981, %v3977
  %v5178 = vpack.c.b16 %v3982, %v3978
  %v5179 = vpack.c.b16 %v3983, %v3979
  %v5180 = vpack.c.b16 %v3984, %v3980
  %v5181 = vpack.c.b16 %v3989, %v3985
  %v5182 = vpack.c.b16 %v3990, %v3986
  %v5183 = vpack.c.b16 %v3991, %v3987
  %v5184 = vpack.c.b16 %v3992, %v3988
  %v5185 = vpack.c.b16 %v3997, %v3993
  %v5186 = vpack.c.b16 %v3998, %v3994
  %v5187 = vpack.c.b16 %v3999, %v3995
  %v5188 = vpack.c.b16 %v4000, %v3996
  %v5189 = vpack.c.b16 %v4005, %v4001
  %v5190 = vpack.c.b16 %v4006, %v4002
  %v5191 = vpack.c.b16 %v4007, %v4003
  %v5192 = vpack.c.b16 %v4008, %v4004
  %v5193 = vpack.c.b16 %v4013, %v4009
  %v5194 = vpack.c.b16 %v4014, %v4010
  %v5195 = vpack.c.b16 %v4015, %v4011
  %v5196 = vpack.c.b16 %v4016, %v4012
  %v5197 = vpack.c.b16 %v4021, %v4017
  %v5198 = vpack.c.b16 %v4022, %v4018
  %v5199 = vpack.c.b16 %v4023, %v4019
  %v5200 = vpack.c.b16 %v4024, %v4020
  %v5201 = vpack.c.b16 %v4029, %v4025
  %v5202 = vpack.c.b16 %v4030, %v4026
  %v5203 = vpack.c.b16 %v4031, %v4027
  %v5204 = vpack.c.b16 %v4032, %v4028
  %v5205 = vpack.c.b16 %v4037, %v4033
  %v5206 = vpack.c.b16 %v4038, %v4034
  %v5207 = vpack.c.b16 %v4039, %v4035
  %v5208 = vpack.c.b16 %v4040, %v4036
  %v5209 = vpack.c.b16 %v4045, %v4041
  %v5210 = vpack.c.b16 %v4046, %v4042
  %v5211 = vpack.c.b16 %v4047, %v4043
  %v5212 = vpack.c.b16 %v4048, %v4044
  %v5213 = vpack.c.b16 %v4053, %v4049
  %v5214 = vpack.c.b16 %v4054, %v4050
  %v5215 = vpack.c.b16 %v4055, %v4051
  %v5216 = vpack.c.b16 %v4056, %v4052
  %v5217 = vpack.c.b16 %v4061, %v4057
  %v5218 = vpack.c.b16 %v4062, %v4058
  %v5219 = vpack.c.b16 %v4063, %v4059
  %v5220 = vpack.c.b16 %v4064, %v4060
  %v5221 = vpack.c.b16 %v4069, %v4065
  %v5222 = vpack.c.b16 %v4070, %v4066
  %v5223 = vpack.c.b16 %v4071, %v4067
  %v5224 = vpack.c.b16 %v4072, %v4068
  %v5225 = vpack.c.b16 %v4077, %v4073
  %v5226 = vpack.c.b16 %v4078, %v4074
  %v5227 = vpack.c.b16 %v4079, %v4075
  %v5228 = vpack.c.b16 %v4080, %v4076
  %v5229 = vpack.c.b16 %v4085, %v4081
  %v5230 = vpack.c.b16 %v4086, %v4082
  %v5231 = vpack.c.b16 %v4087, %v4083
  %v5232 = vpack.c.b16 %v4088, %v4084
  %v5233 = vpack.c.b16 %v4093, %v4089
  %v5234 = vpack.c.b16 %v4094, %v4090
  %v5235 = vpack.c.b16 %v4095, %v4091
  %v5236 = vpack.c.b16 %v4096, %v4092
  %v5237 = vpack.c.b16 %v4101, %v4097
  %v5238 = vpack.c.b16 %v4102, %v4098
  %v5239 = vpack.c.b16 %v4103, %v4099
  %v5240 = vpack.c.b16 %v4104, %v4100
  %v5241 = vpack.c.b16 %v4109, %v4105
  %v5242 = vpack.c.b16 %v4110, %v4106
  %v5243 = vpack.c.b16 %v4111, %v4107
  %v5244 = vpack.c.b16 %v4112, %v4108
  %v5245 = vpack.c.b16 %v4117, %v4113
  %v5246 = vpack.c.b16 %v4118, %v4114
  %v5247 = vpack.c.b16 %v4119, %v4115
  %v5248 = vpack.c.b16 %v4120, %v4116
  %v5249 = vpack.c.b16 %v4125, %v4121
  %v5250 = vpack.c.b16 %v4126, %v4122
  %v5251 = vpack.c.b16 %v4127, %v4123
  %v5252 = vpack.c.b16 %v4128, %v4124
  %v5253 = vpack.c.b16 %v4133, %v4129
  %v5254 = vpack.c.b16 %v4134, %v4130
  %v5255 = vpack.c.b16 %v4135, %v4131
  %v5256 = vpack.c.b16 %v4136, %v4132
  %v5257 = vpack.c.b16 %v4141, %v4137
  %v5258 = vpack.c.b16 %v4142, %v4138
  %v5259 = vpack.c.b16 %v4143, %v4139
  %v5260 = vpack.c.b16 %v4144, %v4140
  %v5261 = vpack.c.b16 %v4149, %v4145
  %v5262 = vpack.c.b16 %v4150, %v4146
  %v5263 = vpack.c.b16 %v4151, %v4147
  %v5264 = vpack.c.b16 %v4152, %v4148
  %v5265 = vpack.c.b16 %v4157, %v4153
  %v5266 = vpack.c.b16 %v4158, %v4154
  %v5267 = vpack.c.b16 %v4159, %v4155
  %v5268 = vpack.c.b16 %v4160, %v4156
  %v5269 = vpack.c.b16 %v4165, %v4161
  %v5270 = vpack.c.b16 %v4166, %v4162
  %v5271 = vpack.c.b16 %v4167, %v4163
  %v5272 = vpack.c.b16 %v4168, %v4164
  %v5273 = vpack.c.b16 %v4173, %v4169
  %v5274 = vpack.c.b16 %v4174, %v4170
  %v5275 = vpack.c.b16 %v4175, %v4171
  %v5276 = vpack.c.b16 %v4176, %v4172
  %v5277 = vpack.c.b16 %v4181, %v4177
  %v5278 = vpack.c.b16 %v4182, %v4178
  %v5279 = vpack.c.b16 %v4183, %v4179
  %v5280 = vpack.c.b16 %v4184, %v4180
  %v5281 = vpack.c.b16 %v4189, %v4185
  %v5282 = vpack.c.b16 %v4190, %v4186
  %v5283 = vpack.c.b16 %v4191, %v4187
  %v5284 = vpack.c.b16 %v4192, %v4188
  %v5285 = vpack.c.b16 %v4197, %v4193
  %v5286 = vpack.c.b16 %v4198, %v4194
  %v5287 = vpack.c.b16 %v4199, %v4195
  %v5288 = vpack.c.b16 %v4200, %v4196
  %v5289 = vpack.c.b16 %v4205, %v4201
  %v5290 = vpack.c.b16 %v4206, %v4202
  %v5291 = vpack.c.b16 %v4207, %v4203
  %v5292 = vpack.c.b16 %v4208, %v4204
  %v5293 = vpack.c.b16 %v4213, %v4209
  %v5294 = vpack.c.b16 %v4214, %v4210
  %v5295 = vpack.c.b16 %v4215, %v4211
  %v5296 = vpack.c.b16 %v4216, %v4212
  %v5297 = vpack.c.b16 %v4221, %v4217
  %v5298 = vpack.c.b16 %v4222, %v4218
  %v5299 = vpack.c.b16 %v4223, %v4219
  %v5300 = vpack.c.b16 %v4224, %v4220
  %v5301 = vpack.c.b16 %v4229, %v4225
  %v5302 = vpack.c.b16 %v4230, %v4226
  %v5303 = vpack.c.b16 %v4231, %v4227
  %v5304 = vpack.c.b16 %v4232, %v4228
  %v5305 = vpack.c.b16 %v4237, %v4233
  %v5306 = vpack.c.b16 %v4238, %v4234
  %v5307 = vpack.c.b16 %v4239, %v4235
  %v5308 = vpack.c.b16 %v4240, %v4236
  %v5309 = vpack.c.b16 %v4245, %v4241
  %v5310 = vpack.c.b16 %v4246, %v4242
  %v5311 = vpack.c.b16 %v4247, %v4243
  %v5312 = vpack.c.b16 %v4248, %v4244
  %v5313 = vpack.c.b16 %v4253, %v4249
  %v5314 = vpack.c.b16 %v4254, %v4250
  %v5315 = vpack.c.b16 %v4255, %v4251
  %v5316 = vpack.c.b16 %v4256, %v4252
  %v5317 = vpack.c.b16 %v4261, %v4257
  %v5318 = vpack.c.b16 %v4262, %v4258
  %v5319 = vpack.c.b16 %v4263, %v4259
  %v5320 = vpack.c.b16 %v4264, %v4260
  %v5321 = vpack.c.b16 %v4269, %v4265
  %v5322 = vpack.c.b16 %v4270, %v4266
  %v5323 = vpack.c.b16 %v4271, %v4267
  %v5324 = vpack.c.b16 %v4272, %v4268
  %v5325 = vpack.c.b16 %v4277, %v4273
  %v5326 = vpack.c.b16 %v4278, %v4274
  %v5327 = vpack.c.b16 %v4279, %v4275
  %v5328 = vpack.c.b16 %v4280, %v4276
  %v5329 = vpack.c.b16 %v4285, %v4281
  %v5330 = vpack.c.b16 %v4286, %v4282
  %v5331 = vpack.c.b16 %v4287, %v4283
  %v5332 = vpack.c.b16 %v4288, %v4284
  %v5333 = vpack.c.b16 %v4293, %v4289
  %v5334 = vpack.c.b16 %v4294, %v4290
  %v5335 = vpack.c.b16 %v4295, %v4291
  %v5336 = vpack.c.b16 %v4296, %v4292
  %v5337 = vpack.c.b16 %v4301, %v4297
  %v5338 = vpack.c.b16 %v4302, %v4298
  %v5339 = vpack.c.b16 %v4303, %v4299
  %v5340 = vpack.c.b16 %v4304, %v4300
  %v5341 = vpack.c.b16 %v4309, %v4305
  %v5342 = vpack.c.b16 %v4310, %v4306
  %v5343 = vpack.c.b16 %v4311, %v4307
  %v5344 = vpack.c.b16 %v4312, %v4308
  %v5345 = vpack.c.b16 %v4317, %v4313
  %v5346 = vpack.c.b16 %v4318, %v4314
  %v5347 = vpack.c.b16 %v4319, %v4315
  %v5348 = vpack.c.b16 %v4320, %v4316
  %v5349 = vpack.c.b16 %v4325, %v4321
  %v5350 = vpack.c.b16 %v4326, %v4322
  %v5351 = vpack.c.b16 %v4327, %v4323
  %v5352 = vpack.c.b16 %v4328, %v4324
  %6377 = vmatprep.subr.bf16.mxu0 %v4330
  %6378 = vmatpush1.bf16.msra.mxu0 %v4329
  %6379 = vmatprep.subr.bf16.mxu0 %v4334
  %6380 = vmatpush1.bf16.msra.mxu0 %v4333
  %6381 = vmatprep.subr.bf16.mxu0 %v4338
  %6382 = vmatpush1.bf16.msra.mxu0 %v4337
  %6383 = vmatprep.subr.bf16.mxu0 %v4342
  %6384 = vmatpush1.bf16.msra.mxu0 %v4341
  %6385 = vmatprep.subr.bf16.mxu0 %v4346
  %6386 = vmatpush1.bf16.msra.mxu0 %v4345
  %6387 = vmatprep.subr.bf16.mxu0 %v4350
  %6388 = vmatpush1.bf16.msra.mxu0 %v4349
  %6389 = vmatprep.subr.bf16.mxu0 %v4354
  %6390 = vmatpush1.bf16.msra.mxu0 %v4353
  %6391 = vmatprep.subr.bf16.mxu0 %v4358
  %6392 = vmatpush1.bf16.msra.mxu0 %v4357
  %6393 = vmatprep.subr.bf16.mxu0 %v4362
  %6394 = vmatpush1.bf16.msra.mxu0 %v4361
  %6395 = vmatprep.subr.bf16.mxu0 %v4366
  %6396 = vmatpush1.bf16.msra.mxu0 %v4365
  %6397 = vmatprep.subr.bf16.mxu0 %v4370
  %6398 = vmatpush1.bf16.msra.mxu0 %v4369
  %6399 = vmatprep.subr.bf16.mxu0 %v4374
  %6400 = vmatpush1.bf16.msra.mxu0 %v4373
  %6401 = vmatprep.subr.bf16.mxu0 %v4378
  %6402 = vmatpush1.bf16.msra.mxu0 %v4377
  %6403 = vmatprep.subr.bf16.mxu0 %v4382
  %6404 = vmatpush1.bf16.msra.mxu0 %v4381
  %6405 = vmatprep.subr.bf16.mxu0 %v4386
  %6406 = vmatpush1.bf16.msra.mxu0 %v4385
  %6407 = vmatprep.subr.bf16.mxu0 %v4390
  %6408 = vmatpush1.bf16.msra.mxu0 %v4389
  %6409 = vmatprep.mubr.bf16.mxu0 %v1104
  %6410 = vmatmul.mubr.bf16.gmra.mrb[0].mxu0 %v1096
  %v6411 = vpop.f32.mrb[0].mxu0
  %v6412 = vadd.f32 %v1064, %v6411
  %v6413 = vpop.f32.mrb[0].mxu0
  %v6414 = vadd.f32 %v1068, %v6413
  %v6415 = vpop.f32.mrb[0].mxu0
  %v6416 = vpop.f32.mrb[0].mxu0
  %6417 = vdwg.mxu0
  %6418 = vmatprep.subr.bf16.mxu0 %v4394
  %6419 = vmatpush1.bf16.msra.mxu0 %v4393
  %6420 = vmatprep.subr.bf16.mxu0 %v4398
  %6421 = vmatpush1.bf16.msra.mxu0 %v4397
  %6422 = vmatprep.subr.bf16.mxu0 %v4402
  %6423 = vmatpush1.bf16.msra.mxu0 %v4401
  %6424 = vmatprep.subr.bf16.mxu0 %v4406
  %6425 = vmatpush1.bf16.msra.mxu0 %v4405
  %6426 = vmatprep.subr.bf16.mxu0 %v4410
  %6427 = vmatpush1.bf16.msra.mxu0 %v4409
  %6428 = vmatprep.subr.bf16.mxu0 %v4414
  %6429 = vmatpush1.bf16.msra.mxu0 %v4413
  %6430 = vmatprep.subr.bf16.mxu0 %v4418
  %6431 = vmatpush1.bf16.msra.mxu0 %v4417
  %6432 = vmatprep.subr.bf16.mxu0 %v4422
  %6433 = vmatpush1.bf16.msra.mxu0 %v4421
  %6434 = vmatprep.subr.bf16.mxu0 %v4426
  %6435 = vmatpush1.bf16.msra.mxu0 %v4425
  %6436 = vmatprep.subr.bf16.mxu0 %v4430
  %6437 = vmatpush1.bf16.msra.mxu0 %v4429
  %6438 = vmatprep.subr.bf16.mxu0 %v4434
  %6439 = vmatpush1.bf16.msra.mxu0 %v4433
  %6440 = vmatprep.subr.bf16.mxu0 %v4438
  %6441 = vmatpush1.bf16.msra.mxu0 %v4437
  %6442 = vmatprep.subr.bf16.mxu0 %v4442
  %6443 = vmatpush1.bf16.msra.mxu0 %v4441
  %6444 = vmatprep.subr.bf16.mxu0 %v4446
  %6445 = vmatpush1.bf16.msra.mxu0 %v4445
  %6446 = vmatprep.subr.bf16.mxu0 %v4450
  %6447 = vmatpush1.bf16.msra.mxu0 %v4449
  %6448 = vmatprep.subr.bf16.mxu0 %v4454
  %6449 = vmatpush1.bf16.msra.mxu0 %v4453
  %6450 = vmatprep.mubr.bf16.mxu0 %v1105
  %6451 = vmatmul.mubr.bf16.gmra.mrb[0].mxu0 %v1103
  %v6452 = vpop.f32.mrb[0].mxu0
  %v6453 = vadd.f32 %v6412, %v6452
  %v6454 = vpop.f32.mrb[0].mxu0
  %v6455 = vadd.f32 %v6414, %v6454
  %v6456 = vpop.f32.mrb[0].mxu0
  %v6457 = vpop.f32.mrb[0].mxu0
  %6458 = vdwg.mxu0
  %6459 = vmatprep.subr.bf16.mxu0 %v4458
  %6460 = vmatpush1.bf16.msra.mxu0 %v4457
  %6461 = vmatprep.subr.bf16.mxu0 %v4462
  %6462 = vmatpush1.bf16.msra.mxu0 %v4461
  %6463 = vmatprep.subr.bf16.mxu0 %v4466
  %6464 = vmatpush1.bf16.msra.mxu0 %v4465
  %6465 = vmatprep.subr.bf16.mxu0 %v4470
  %6466 = vmatpush1.bf16.msra.mxu0 %v4469
  %6467 = vmatprep.subr.bf16.mxu0 %v4474
  %6468 = vmatpush1.bf16.msra.mxu0 %v4473
  %6469 = vmatprep.subr.bf16.mxu0 %v4478
  %6470 = vmatpush1.bf16.msra.mxu0 %v4477
  %6471 = vmatprep.subr.bf16.mxu0 %v4482
  %6472 = vmatpush1.bf16.msra.mxu0 %v4481
  %6473 = vmatprep.subr.bf16.mxu0 %v4486
  %6474 = vmatpush1.bf16.msra.mxu0 %v4485
  %6475 = vmatprep.subr.bf16.mxu0 %v4490
  %6476 = vmatpush1.bf16.msra.mxu0 %v4489
  %6477 = vmatprep.subr.bf16.mxu0 %v4494
  %6478 = vmatpush1.bf16.msra.mxu0 %v4493
  %6479 = vmatprep.subr.bf16.mxu0 %v4498
  %6480 = vmatpush1.bf16.msra.mxu0 %v4497
  %6481 = vmatprep.subr.bf16.mxu0 %v4502
  %6482 = vmatpush1.bf16.msra.mxu0 %v4501
  %6483 = vmatprep.subr.bf16.mxu0 %v4506
  %6484 = vmatpush1.bf16.msra.mxu0 %v4505
  %6485 = vmatprep.subr.bf16.mxu0 %v4510
  %6486 = vmatpush1.bf16.msra.mxu0 %v4509
  %6487 = vmatprep.subr.bf16.mxu0 %v4514
  %6488 = vmatpush1.bf16.msra.mxu0 %v4513
  %6489 = vmatprep.subr.bf16.mxu0 %v4518
  %6490 = vmatpush1.bf16.msra.mxu0 %v4517
  %6491 = vmatprep.mubr.bf16.mxu0 %v1121
  %6492 = vmatmul.mubr.bf16.gmra.mrb[0].mxu0 %v1113
  %v6493 = vpop.f32.mrb[0].mxu0
  %v6494 = vadd.f32 %v6453, %v6493
  %v6495 = vpop.f32.mrb[0].mxu0
  %v6496 = vadd.f32 %v6455, %v6495
  %v6497 = vpop.f32.mrb[0].mxu0
  %v6498 = vpop.f32.mrb[0].mxu0
  %6499 = vdwg.mxu0
  %6500 = vmatprep.subr.bf16.mxu0 %v4522
  %6501 = vmatpush1.bf16.msra.mxu0 %v4521
  %6502 = vmatprep.subr.bf16.mxu0 %v4526
  %6503 = vmatpush1.bf16.msra.mxu0 %v4525
  %6504 = vmatprep.subr.bf16.mxu0 %v4530
  %6505 = vmatpush1.bf16.msra.mxu0 %v4529
  %6506 = vmatprep.subr.bf16.mxu0 %v4534
  %6507 = vmatpush1.bf16.msra.mxu0 %v4533
  %6508 = vmatprep.subr.bf16.mxu0 %v4538
  %6509 = vmatpush1.bf16.msra.mxu0 %v4537
  %6510 = vmatprep.subr.bf16.mxu0 %v4542
  %6511 = vmatpush1.bf16.msra.mxu0 %v4541
  %6512 = vmatprep.subr.bf16.mxu0 %v4546
  %6513 = vmatpush1.bf16.msra.mxu0 %v4545
  %6514 = vmatprep.subr.bf16.mxu0 %v4550
  %6515 = vmatpush1.bf16.msra.mxu0 %v4549
  %6516 = vmatprep.subr.bf16.mxu0 %v4554
  %6517 = vmatpush1.bf16.msra.mxu0 %v4553
  %6518 = vmatprep.subr.bf16.mxu0 %v4558
  %6519 = vmatpush1.bf16.msra.mxu0 %v4557
  %6520 = vmatprep.subr.bf16.mxu0 %v4562
  %6521 = vmatpush1.bf16.msra.mxu0 %v4561
  %6522 = vmatprep.subr.bf16.mxu0 %v4566
  %6523 = vmatpush1.bf16.msra.mxu0 %v4565
  %6524 = vmatprep.subr.bf16.mxu0 %v4570
  %6525 = vmatpush1.bf16.msra.mxu0 %v4569
  %6526 = vmatprep.subr.bf16.mxu0 %v4574
  %6527 = vmatpush1.bf16.msra.mxu0 %v4573
  %6528 = vmatprep.subr.bf16.mxu0 %v4578
  %6529 = vmatpush1.bf16.msra.mxu0 %v4577
  %6530 = vmatprep.subr.bf16.mxu0 %v4582
  %6531 = vmatpush1.bf16.msra.mxu0 %v4581
  %6532 = vmatprep.mubr.bf16.mxu0 %v1122
  %6533 = vmatmul.mubr.bf16.gmra.mrb[0].mxu0 %v1120
  %v6534 = vpop.f32.mrb[0].mxu0
  %v6535 = vadd.f32 %v6494, %v6534
  %v6536 = vpop.f32.mrb[0].mxu0
  %v6537 = vadd.f32 %v6496, %v6536
  %v6538 = vpop.f32.mrb[0].mxu0
  %v6539 = vpop.f32.mrb[0].mxu0
  %6540 = vdwg.mxu0
  %6541 = vmatprep.subr.bf16.mxu0 %v4586
  %6542 = vmatpush1.bf16.msra.mxu0 %v4585
  %6543 = vmatprep.subr.bf16.mxu0 %v4590
  %6544 = vmatpush1.bf16.msra.mxu0 %v4589
  %6545 = vmatprep.subr.bf16.mxu0 %v4594
  %6546 = vmatpush1.bf16.msra.mxu0 %v4593
  %6547 = vmatprep.subr.bf16.mxu0 %v4598
  %6548 = vmatpush1.bf16.msra.mxu0 %v4597
  %6549 = vmatprep.subr.bf16.mxu0 %v4602
  %6550 = vmatpush1.bf16.msra.mxu0 %v4601
  %6551 = vmatprep.subr.bf16.mxu0 %v4606
  %6552 = vmatpush1.bf16.msra.mxu0 %v4605
  %6553 = vmatprep.subr.bf16.mxu0 %v4610
  %6554 = vmatpush1.bf16.msra.mxu0 %v4609
  %6555 = vmatprep.subr.bf16.mxu0 %v4614
  %6556 = vmatpush1.bf16.msra.mxu0 %v4613
  %6557 = vmatprep.subr.bf16.mxu0 %v4618
  %6558 = vmatpush1.bf16.msra.mxu0 %v4617
  %6559 = vmatprep.subr.bf16.mxu0 %v4622
  %6560 = vmatpush1.bf16.msra.mxu0 %v4621
  %6561 = vmatprep.subr.bf16.mxu0 %v4626
  %6562 = vmatpush1.bf16.msra.mxu0 %v4625
  %6563 = vmatprep.subr.bf16.mxu0 %v4630
  %6564 = vmatpush1.bf16.msra.mxu0 %v4629
  %6565 = vmatprep.subr.bf16.mxu0 %v4634
  %6566 = vmatpush1.bf16.msra.mxu0 %v4633
  %6567 = vmatprep.subr.bf16.mxu0 %v4638
  %6568 = vmatpush1.bf16.msra.mxu0 %v4637
  %6569 = vmatprep.subr.bf16.mxu0 %v4642
  %6570 = vmatpush1.bf16.msra.mxu0 %v4641
  %6571 = vmatprep.subr.bf16.mxu0 %v4646
  %6572 = vmatpush1.bf16.msra.mxu0 %v4645
  %6573 = vmatprep.mubr.bf16.mxu0 %v1138
  %6574 = vmatmul.mubr.bf16.gmra.mrb[0].mxu0 %v1130
  %v6575 = vpop.f32.mrb[0].mxu0
  %v6576 = vadd.f32 %v6535, %v6575
  %v6577 = vpop.f32.mrb[0].mxu0
  %v6578 = vadd.f32 %v6537, %v6577
  %v6579 = vpop.f32.mrb[0].mxu0
  %v6580 = vpop.f32.mrb[0].mxu0
  %6581 = vdwg.mxu0
  %6582 = vmatprep.subr.bf16.mxu0 %v4650
  %6583 = vmatpush1.bf16.msra.mxu0 %v4649
  %6584 = vmatprep.subr.bf16.mxu0 %v4654
  %6585 = vmatpush1.bf16.msra.mxu0 %v4653
  %6586 = vmatprep.subr.bf16.mxu0 %v4658
  %6587 = vmatpush1.bf16.msra.mxu0 %v4657
  %6588 = vmatprep.subr.bf16.mxu0 %v4662
  %6589 = vmatpush1.bf16.msra.mxu0 %v4661
  %6590 = vmatprep.subr.bf16.mxu0 %v4666
  %6591 = vmatpush1.bf16.msra.mxu0 %v4665
  %6592 = vmatprep.subr.bf16.mxu0 %v4670
  %6593 = vmatpush1.bf16.msra.mxu0 %v4669
  %6594 = vmatprep.subr.bf16.mxu0 %v4674
  %6595 = vmatpush1.bf16.msra.mxu0 %v4673
  %6596 = vmatprep.subr.bf16.mxu0 %v4678
  %6597 = vmatpush1.bf16.msra.mxu0 %v4677
  %6598 = vmatprep.subr.bf16.mxu0 %v4682
  %6599 = vmatpush1.bf16.msra.mxu0 %v4681
  %6600 = vmatprep.subr.bf16.mxu0 %v4686
  %6601 = vmatpush1.bf16.msra.mxu0 %v4685
  %6602 = vmatprep.subr.bf16.mxu0 %v4690
  %6603 = vmatpush1.bf16.msra.mxu0 %v4689
  %6604 = vmatprep.subr.bf16.mxu0 %v4694
  %6605 = vmatpush1.bf16.msra.mxu0 %v4693
  %6606 = vmatprep.subr.bf16.mxu0 %v4698
  %6607 = vmatpush1.bf16.msra.mxu0 %v4697
  %6608 = vmatprep.subr.bf16.mxu0 %v4702
  %6609 = vmatpush1.bf16.msra.mxu0 %v4701
  %6610 = vmatprep.subr.bf16.mxu0 %v4706
  %6611 = vmatpush1.bf16.msra.mxu0 %v4705
  %6612 = vmatprep.subr.bf16.mxu0 %v4710
  %6613 = vmatpush1.bf16.msra.mxu0 %v4709
  %6614 = vmatprep.mubr.bf16.mxu0 %v1139
  %6615 = vmatmul.mubr.bf16.gmra.mrb[0].mxu0 %v1137
  %v6616 = vpop.f32.mrb[0].mxu0
  %v6617 = vadd.f32 %v6576, %v6616
  %v6618 = vpop.f32.mrb[0].mxu0
  %v6619 = vadd.f32 %v6578, %v6618
  %v6620 = vpop.f32.mrb[0].mxu0
  %v6621 = vpop.f32.mrb[0].mxu0
  %6622 = vdwg.mxu0
  %6623 = vmatprep.subr.bf16.mxu0 %v4714
  %6624 = vmatpush1.bf16.msra.mxu0 %v4713
  %6625 = vmatprep.subr.bf16.mxu0 %v4718
  %6626 = vmatpush1.bf16.msra.mxu0 %v4717
  %6627 = vmatprep.subr.bf16.mxu0 %v4722
  %6628 = vmatpush1.bf16.msra.mxu0 %v4721
  %6629 = vmatprep.subr.bf16.mxu0 %v4726
  %6630 = vmatpush1.bf16.msra.mxu0 %v4725
  %6631 = vmatprep.subr.bf16.mxu0 %v4730
  %6632 = vmatpush1.bf16.msra.mxu0 %v4729
  %6633 = vmatprep.subr.bf16.mxu0 %v4734
  %6634 = vmatpush1.bf16.msra.mxu0 %v4733
  %6635 = vmatprep.subr.bf16.mxu0 %v4738
  %6636 = vmatpush1.bf16.msra.mxu0 %v4737
  %6637 = vmatprep.subr.bf16.mxu0 %v4742
  %6638 = vmatpush1.bf16.msra.mxu0 %v4741
  %6639 = vmatprep.subr.bf16.mxu0 %v4746
  %6640 = vmatpush1.bf16.msra.mxu0 %v4745
  %6641 = vmatprep.subr.bf16.mxu0 %v4750
  %6642 = vmatpush1.bf16.msra.mxu0 %v4749
  %6643 = vmatprep.subr.bf16.mxu0 %v4754
  %6644 = vmatpush1.bf16.msra.mxu0 %v4753
  %6645 = vmatprep.subr.bf16.mxu0 %v4758
  %6646 = vmatpush1.bf16.msra.mxu0 %v4757
  %6647 = vmatprep.subr.bf16.mxu0 %v4762
  %6648 = vmatpush1.bf16.msra.mxu0 %v4761
  %6649 = vmatprep.subr.bf16.mxu0 %v4766
  %6650 = vmatpush1.bf16.msra.mxu0 %v4765
  %6651 = vmatprep.subr.bf16.mxu0 %v4770
  %6652 = vmatpush1.bf16.msra.mxu0 %v4769
  %6653 = vmatprep.subr.bf16.mxu0 %v4774
  %6654 = vmatpush1.bf16.msra.mxu0 %v4773
  %6655 = vmatprep.mubr.bf16.mxu0 %v1155
  %6656 = vmatmul.mubr.bf16.gmra.mrb[0].mxu0 %v1147
  %v6657 = vpop.f32.mrb[0].mxu0
  %v6658 = vadd.f32 %v6617, %v6657
  %v6659 = vpop.f32.mrb[0].mxu0
  %v6660 = vadd.f32 %v6619, %v6659
  %v6661 = vpop.f32.mrb[0].mxu0
  %v6662 = vpop.f32.mrb[0].mxu0
  %6663 = vdwg.mxu0
  %6664 = vmatprep.subr.bf16.mxu0 %v4778
  %6665 = vmatpush1.bf16.msra.mxu0 %v4777
  %6666 = vmatprep.subr.bf16.mxu0 %v4782
  %6667 = vmatpush1.bf16.msra.mxu0 %v4781
  %6668 = vmatprep.subr.bf16.mxu0 %v4786
  %6669 = vmatpush1.bf16.msra.mxu0 %v4785
  %6670 = vmatprep.subr.bf16.mxu0 %v4790
  %6671 = vmatpush1.bf16.msra.mxu0 %v4789
  %6672 = vmatprep.subr.bf16.mxu0 %v4794
  %6673 = vmatpush1.bf16.msra.mxu0 %v4793
  %6674 = vmatprep.subr.bf16.mxu0 %v4798
  %6675 = vmatpush1.bf16.msra.mxu0 %v4797
  %6676 = vmatprep.subr.bf16.mxu0 %v4802
  %6677 = vmatpush1.bf16.msra.mxu0 %v4801
  %6678 = vmatprep.subr.bf16.mxu0 %v4806
  %6679 = vmatpush1.bf16.msra.mxu0 %v4805
  %6680 = vmatprep.subr.bf16.mxu0 %v4810
  %6681 = vmatpush1.bf16.msra.mxu0 %v4809
  %6682 = vmatprep.subr.bf16.mxu0 %v4814
  %6683 = vmatpush1.bf16.msra.mxu0 %v4813
  %6684 = vmatprep.subr.bf16.mxu0 %v4818
  %6685 = vmatpush1.bf16.msra.mxu0 %v4817
  %6686 = vmatprep.subr.bf16.mxu0 %v4822
  %6687 = vmatpush1.bf16.msra.mxu0 %v4821
  %6688 = vmatprep.subr.bf16.mxu0 %v4826
  %6689 = vmatpush1.bf16.msra.mxu0 %v4825
  %6690 = vmatprep.subr.bf16.mxu0 %v4830
  %6691 = vmatpush1.bf16.msra.mxu0 %v4829
  %6692 = vmatprep.subr.bf16.mxu0 %v4834
  %6693 = vmatpush1.bf16.msra.mxu0 %v4833
  %6694 = vmatprep.subr.bf16.mxu0 %v4838
  %6695 = vmatpush1.bf16.msra.mxu0 %v4837
  %6696 = vmatprep.mubr.bf16.mxu0 %v1156
  %6697 = vmatmul.mubr.bf16.gmra.mrb[0].mxu0 %v1154
  %v6698 = vpop.f32.mrb[0].mxu0
  %v6699 = vadd.f32 %v6658, %v6698
  %v6700 = vpop.f32.mrb[0].mxu0
  %v6701 = vadd.f32 %v6660, %v6700
  %v6702 = vpop.f32.mrb[0].mxu0
  %v6703 = vpop.f32.mrb[0].mxu0
  %6704 = vdwg.mxu0
  %6705 = vmatprep.subr.bf16.mxu0 %v4842
  %6706 = vmatpush1.bf16.msra.mxu0 %v4841
  %6707 = vmatprep.subr.bf16.mxu0 %v4846
  %6708 = vmatpush1.bf16.msra.mxu0 %v4845
  %6709 = vmatprep.subr.bf16.mxu0 %v4850
  %6710 = vmatpush1.bf16.msra.mxu0 %v4849
  %6711 = vmatprep.subr.bf16.mxu0 %v4854
  %6712 = vmatpush1.bf16.msra.mxu0 %v4853
  %6713 = vmatprep.subr.bf16.mxu0 %v4858
  %6714 = vmatpush1.bf16.msra.mxu0 %v4857
  %6715 = vmatprep.subr.bf16.mxu0 %v4862
  %6716 = vmatpush1.bf16.msra.mxu0 %v4861
  %6717 = vmatprep.subr.bf16.mxu0 %v4866
  %6718 = vmatpush1.bf16.msra.mxu0 %v4865
  %6719 = vmatprep.subr.bf16.mxu0 %v4870
  %6720 = vmatpush1.bf16.msra.mxu0 %v4869
  %6721 = vmatprep.subr.bf16.mxu0 %v4874
  %6722 = vmatpush1.bf16.msra.mxu0 %v4873
  %6723 = vmatprep.subr.bf16.mxu0 %v4878
  %6724 = vmatpush1.bf16.msra.mxu0 %v4877
  %6725 = vmatprep.subr.bf16.mxu0 %v4882
  %6726 = vmatpush1.bf16.msra.mxu0 %v4881
  %6727 = vmatprep.subr.bf16.mxu0 %v4886
  %6728 = vmatpush1.bf16.msra.mxu0 %v4885
  %6729 = vmatprep.subr.bf16.mxu0 %v4890
  %6730 = vmatpush1.bf16.msra.mxu0 %v4889
  %6731 = vmatprep.subr.bf16.mxu0 %v4894
  %6732 = vmatpush1.bf16.msra.mxu0 %v4893
  %6733 = vmatprep.subr.bf16.mxu0 %v4898
  %6734 = vmatpush1.bf16.msra.mxu0 %v4897
  %6735 = vmatprep.subr.bf16.mxu0 %v4902
  %6736 = vmatpush1.bf16.msra.mxu0 %v4901
  %6737 = vmatprep.mubr.bf16.mxu0 %v1172
  %6738 = vmatmul.mubr.bf16.gmra.mrb[0].mxu0 %v1164
  %v6739 = vpop.f32.mrb[0].mxu0
  %v6740 = vadd.f32 %v6699, %v6739
  %v6741 = vpop.f32.mrb[0].mxu0
  %v6742 = vadd.f32 %v6701, %v6741
  %v6743 = vpop.f32.mrb[0].mxu0
  %v6744 = vpop.f32.mrb[0].mxu0
  %6745 = vdwg.mxu0
  %6746 = vmatprep.subr.bf16.mxu0 %v4906
  %6747 = vmatpush1.bf16.msra.mxu0 %v4905
  %6748 = vmatprep.subr.bf16.mxu0 %v4910
  %6749 = vmatpush1.bf16.msra.mxu0 %v4909
  %6750 = vmatprep.subr.bf16.mxu0 %v4914
  %6751 = vmatpush1.bf16.msra.mxu0 %v4913
  %6752 = vmatprep.subr.bf16.mxu0 %v4918
  %6753 = vmatpush1.bf16.msra.mxu0 %v4917
  %6754 = vmatprep.subr.bf16.mxu0 %v4922
  %6755 = vmatpush1.bf16.msra.mxu0 %v4921
  %6756 = vmatprep.subr.bf16.mxu0 %v4926
  %6757 = vmatpush1.bf16.msra.mxu0 %v4925
  %6758 = vmatprep.subr.bf16.mxu0 %v4930
  %6759 = vmatpush1.bf16.msra.mxu0 %v4929
  %6760 = vmatprep.subr.bf16.mxu0 %v4934
  %6761 = vmatpush1.bf16.msra.mxu0 %v4933
  %6762 = vmatprep.subr.bf16.mxu0 %v4938
  %6763 = vmatpush1.bf16.msra.mxu0 %v4937
  %6764 = vmatprep.subr.bf16.mxu0 %v4942
  %6765 = vmatpush1.bf16.msra.mxu0 %v4941
  %6766 = vmatprep.subr.bf16.mxu0 %v4946
  %6767 = vmatpush1.bf16.msra.mxu0 %v4945
  %6768 = vmatprep.subr.bf16.mxu0 %v4950
  %6769 = vmatpush1.bf16.msra.mxu0 %v4949
  %6770 = vmatprep.subr.bf16.mxu0 %v4954
  %6771 = vmatpush1.bf16.msra.mxu0 %v4953
  %6772 = vmatprep.subr.bf16.mxu0 %v4958
  %6773 = vmatpush1.bf16.msra.mxu0 %v4957
  %6774 = vmatprep.subr.bf16.mxu0 %v4962
  %6775 = vmatpush1.bf16.msra.mxu0 %v4961
  %6776 = vmatprep.subr.bf16.mxu0 %v4966
  %6777 = vmatpush1.bf16.msra.mxu0 %v4965
  %6778 = vmatprep.mubr.bf16.mxu0 %v1173
  %6779 = vmatmul.mubr.bf16.gmra.mrb[0].mxu0 %v1171
  %v6780 = vpop.f32.mrb[0].mxu0
  %v6781 = vadd.f32 %v6740, %v6780
  %v6782 = vpop.f32.mrb[0].mxu0
  %v6783 = vadd.f32 %v6742, %v6782
  %v6784 = vpop.f32.mrb[0].mxu0
  %v6785 = vpop.f32.mrb[0].mxu0
  %6786 = vdwg.mxu0
  %6787 = vmatprep.subr.bf16.mxu0 %v4970
  %6788 = vmatpush1.bf16.msra.mxu0 %v4969
  %6789 = vmatprep.subr.bf16.mxu0 %v4974
  %6790 = vmatpush1.bf16.msra.mxu0 %v4973
  %6791 = vmatprep.subr.bf16.mxu0 %v4978
  %6792 = vmatpush1.bf16.msra.mxu0 %v4977
  %6793 = vmatprep.subr.bf16.mxu0 %v4982
  %6794 = vmatpush1.bf16.msra.mxu0 %v4981
  %6795 = vmatprep.subr.bf16.mxu0 %v4986
  %6796 = vmatpush1.bf16.msra.mxu0 %v4985
  %6797 = vmatprep.subr.bf16.mxu0 %v4990
  %6798 = vmatpush1.bf16.msra.mxu0 %v4989
  %6799 = vmatprep.subr.bf16.mxu0 %v4994
  %6800 = vmatpush1.bf16.msra.mxu0 %v4993
  %6801 = vmatprep.subr.bf16.mxu0 %v4998
  %6802 = vmatpush1.bf16.msra.mxu0 %v4997
  %6803 = vmatprep.subr.bf16.mxu0 %v5002
  %6804 = vmatpush1.bf16.msra.mxu0 %v5001
  %6805 = vmatprep.subr.bf16.mxu0 %v5006
  %6806 = vmatpush1.bf16.msra.mxu0 %v5005
  %6807 = vmatprep.subr.bf16.mxu0 %v5010
  %6808 = vmatpush1.bf16.msra.mxu0 %v5009
  %6809 = vmatprep.subr.bf16.mxu0 %v5014
  %6810 = vmatpush1.bf16.msra.mxu0 %v5013
  %6811 = vmatprep.subr.bf16.mxu0 %v5018
  %6812 = vmatpush1.bf16.msra.mxu0 %v5017
  %6813 = vmatprep.subr.bf16.mxu0 %v5022
  %6814 = vmatpush1.bf16.msra.mxu0 %v5021
  %6815 = vmatprep.subr.bf16.mxu0 %v5026
  %6816 = vmatpush1.bf16.msra.mxu0 %v5025
  %6817 = vmatprep.subr.bf16.mxu0 %v5030
  %6818 = vmatpush1.bf16.msra.mxu0 %v5029
  %6819 = vmatprep.mubr.bf16.mxu0 %v1189
  %6820 = vmatmul.mubr.bf16.gmra.mrb[0].mxu0 %v1181
  %v6821 = vpop.f32.mrb[0].mxu0
  %v6822 = vadd.f32 %v6781, %v6821
  %v6823 = vpop.f32.mrb[0].mxu0
  %v6824 = vadd.f32 %v6783, %v6823
  %v6825 = vpop.f32.mrb[0].mxu0
  %v6826 = vpop.f32.mrb[0].mxu0
  %6827 = vdwg.mxu0
  %6828 = vmatprep.subr.bf16.mxu0 %v5034
  %6829 = vmatpush1.bf16.msra.mxu0 %v5033
  %6830 = vmatprep.subr.bf16.mxu0 %v5038
  %6831 = vmatpush1.bf16.msra.mxu0 %v5037
  %6832 = vmatprep.subr.bf16.mxu0 %v5042
  %6833 = vmatpush1.bf16.msra.mxu0 %v5041
  %6834 = vmatprep.subr.bf16.mxu0 %v5046
  %6835 = vmatpush1.bf16.msra.mxu0 %v5045
  %6836 = vmatprep.subr.bf16.mxu0 %v5050
  %6837 = vmatpush1.bf16.msra.mxu0 %v5049
  %6838 = vmatprep.subr.bf16.mxu0 %v5054
  %6839 = vmatpush1.bf16.msra.mxu0 %v5053
  %6840 = vmatprep.subr.bf16.mxu0 %v5058
  %6841 = vmatpush1.bf16.msra.mxu0 %v5057
  %6842 = vmatprep.subr.bf16.mxu0 %v5062
  %6843 = vmatpush1.bf16.msra.mxu0 %v5061
  %6844 = vmatprep.subr.bf16.mxu0 %v5066
  %6845 = vmatpush1.bf16.msra.mxu0 %v5065
  %6846 = vmatprep.subr.bf16.mxu0 %v5070
  %6847 = vmatpush1.bf16.msra.mxu0 %v5069
  %6848 = vmatprep.subr.bf16.mxu0 %v5074
  %6849 = vmatpush1.bf16.msra.mxu0 %v5073
  %6850 = vmatprep.subr.bf16.mxu0 %v5078
  %6851 = vmatpush1.bf16.msra.mxu0 %v5077
  %6852 = vmatprep.subr.bf16.mxu0 %v5082
  %6853 = vmatpush1.bf16.msra.mxu0 %v5081
  %6854 = vmatprep.subr.bf16.mxu0 %v5086
  %6855 = vmatpush1.bf16.msra.mxu0 %v5085
  %6856 = vmatprep.subr.bf16.mxu0 %v5090
  %6857 = vmatpush1.bf16.msra.mxu0 %v5089
  %6858 = vmatprep.subr.bf16.mxu0 %v5094
  %6859 = vmatpush1.bf16.msra.mxu0 %v5093
  %6860 = vmatprep.mubr.bf16.mxu0 %v1190
  %6861 = vmatmul.mubr.bf16.gmra.mrb[0].mxu0 %v1188
  %v6862 = vpop.f32.mrb[0].mxu0
  %v6863 = vadd.f32 %v6822, %v6862
  %v6864 = vpop.f32.mrb[0].mxu0
  %v6865 = vadd.f32 %v6824, %v6864
  %v6866 = vpop.f32.mrb[0].mxu0
  %v6867 = vpop.f32.mrb[0].mxu0
  %6868 = vdwg.mxu0
  %6869 = vmatprep.subr.bf16.mxu0 %v5098
  %6870 = vmatpush1.bf16.msra.mxu0 %v5097
  %6871 = vmatprep.subr.bf16.mxu0 %v5102
  %6872 = vmatpush1.bf16.msra.mxu0 %v5101
  %6873 = vmatprep.subr.bf16.mxu0 %v5106
  %6874 = vmatpush1.bf16.msra.mxu0 %v5105
  %6875 = vmatprep.subr.bf16.mxu0 %v5110
  %6876 = vmatpush1.bf16.msra.mxu0 %v5109
  %6877 = vmatprep.subr.bf16.mxu0 %v5114
  %6878 = vmatpush1.bf16.msra.mxu0 %v5113
  %6879 = vmatprep.subr.bf16.mxu0 %v5118
  %6880 = vmatpush1.bf16.msra.mxu0 %v5117
  %6881 = vmatprep.subr.bf16.mxu0 %v5122
  %6882 = vmatpush1.bf16.msra.mxu0 %v5121
  %6883 = vmatprep.subr.bf16.mxu0 %v5126
  %6884 = vmatpush1.bf16.msra.mxu0 %v5125
  %6885 = vmatprep.subr.bf16.mxu0 %v5130
  %6886 = vmatpush1.bf16.msra.mxu0 %v5129
  %6887 = vmatprep.subr.bf16.mxu0 %v5134
  %6888 = vmatpush1.bf16.msra.mxu0 %v5133
  %6889 = vmatprep.subr.bf16.mxu0 %v5138
  %6890 = vmatpush1.bf16.msra.mxu0 %v5137
  %6891 = vmatprep.subr.bf16.mxu0 %v5142
  %6892 = vmatpush1.bf16.msra.mxu0 %v5141
  %6893 = vmatprep.subr.bf16.mxu0 %v5146
  %6894 = vmatpush1.bf16.msra.mxu0 %v5145
  %6895 = vmatprep.subr.bf16.mxu0 %v5150
  %6896 = vmatpush1.bf16.msra.mxu0 %v5149
  %6897 = vmatprep.subr.bf16.mxu0 %v5154
  %6898 = vmatpush1.bf16.msra.mxu0 %v5153
  %6899 = vmatprep.subr.bf16.mxu0 %v5158
  %6900 = vmatpush1.bf16.msra.mxu0 %v5157
  %6901 = vmatprep.mubr.bf16.mxu0 %v1206
  %6902 = vmatmul.mubr.bf16.gmra.mrb[0].mxu0 %v1198
  %v6903 = vpop.f32.mrb[0].mxu0
  %v6904 = vadd.f32 %v6863, %v6903
  %v6905 = vpop.f32.mrb[0].mxu0
  %v6906 = vadd.f32 %v6865, %v6905
  %v6907 = vpop.f32.mrb[0].mxu0
  %v6908 = vpop.f32.mrb[0].mxu0
  %6909 = vdwg.mxu0
  %6910 = vmatprep.subr.bf16.mxu0 %v5162
  %6911 = vmatpush1.bf16.msra.mxu0 %v5161
  %6912 = vmatprep.subr.bf16.mxu0 %v5166
  %6913 = vmatpush1.bf16.msra.mxu0 %v5165
  %6914 = vmatprep.subr.bf16.mxu0 %v5170
  %6915 = vmatpush1.bf16.msra.mxu0 %v5169
  %6916 = vmatprep.subr.bf16.mxu0 %v5174
  %6917 = vmatpush1.bf16.msra.mxu0 %v5173
  %6918 = vmatprep.subr.bf16.mxu0 %v5178
  %6919 = vmatpush1.bf16.msra.mxu0 %v5177
  %6920 = vmatprep.subr.bf16.mxu0 %v5182
  %6921 = vmatpush1.bf16.msra.mxu0 %v5181
  %6922 = vmatprep.subr.bf16.mxu0 %v5186
  %6923 = vmatpush1.bf16.msra.mxu0 %v5185
  %6924 = vmatprep.subr.bf16.mxu0 %v5190
  %6925 = vmatpush1.bf16.msra.mxu0 %v5189
  %6926 = vmatprep.subr.bf16.mxu0 %v5194
  %6927 = vmatpush1.bf16.msra.mxu0 %v5193
  %6928 = vmatprep.subr.bf16.mxu0 %v5198
  %6929 = vmatpush1.bf16.msra.mxu0 %v5197
  %6930 = vmatprep.subr.bf16.mxu0 %v5202
  %6931 = vmatpush1.bf16.msra.mxu0 %v5201
  %6932 = vmatprep.subr.bf16.mxu0 %v5206
  %6933 = vmatpush1.bf16.msra.mxu0 %v5205
  %6934 = vmatprep.subr.bf16.mxu0 %v5210
  %6935 = vmatpush1.bf16.msra.mxu0 %v5209
  %6936 = vmatprep.subr.bf16.mxu0 %v5214
  %6937 = vmatpush1.bf16.msra.mxu0 %v5213
  %6938 = vmatprep.subr.bf16.mxu0 %v5218
  %6939 = vmatpush1.bf16.msra.mxu0 %v5217
  %6940 = vmatprep.subr.bf16.mxu0 %v5222
  %6941 = vmatpush1.bf16.msra.mxu0 %v5221
  %6942 = vmatprep.mubr.bf16.mxu0 %v1207
  %6943 = vmatmul.mubr.bf16.gmra.mrb[0].mxu0 %v1205
  %v6944 = vpop.f32.mrb[0].mxu0
  %v6945 = vadd.f32 %v6904, %v6944
  %v6946 = vpop.f32.mrb[0].mxu0
  %v6947 = vadd.f32 %v6906, %v6946
  %v6948 = vpop.f32.mrb[0].mxu0
  %v6949 = vpop.f32.mrb[0].mxu0
  %6950 = vdwg.mxu0
  %6951 = vmatprep.subr.bf16.mxu0 %v5226
  %6952 = vmatpush1.bf16.msra.mxu0 %v5225
  %6953 = vmatprep.subr.bf16.mxu0 %v5230
  %6954 = vmatpush1.bf16.msra.mxu0 %v5229
  %6955 = vmatprep.subr.bf16.mxu0 %v5234
  %6956 = vmatpush1.bf16.msra.mxu0 %v5233
  %6957 = vmatprep.subr.bf16.mxu0 %v5238
  %6958 = vmatpush1.bf16.msra.mxu0 %v5237
  %6959 = vmatprep.subr.bf16.mxu0 %v5242
  %6960 = vmatpush1.bf16.msra.mxu0 %v5241
  %6961 = vmatprep.subr.bf16.mxu0 %v5246
  %6962 = vmatpush1.bf16.msra.mxu0 %v5245
  %6963 = vmatprep.subr.bf16.mxu0 %v5250
  %6964 = vmatpush1.bf16.msra.mxu0 %v5249
  %6965 = vmatprep.subr.bf16.mxu0 %v5254
  %6966 = vmatpush1.bf16.msra.mxu0 %v5253
  %6967 = vmatprep.subr.bf16.mxu0 %v5258
  %6968 = vmatpush1.bf16.msra.mxu0 %v5257
  %6969 = vmatprep.subr.bf16.mxu0 %v5262
  %6970 = vmatpush1.bf16.msra.mxu0 %v5261
  %6971 = vmatprep.subr.bf16.mxu0 %v5266
  %6972 = vmatpush1.bf16.msra.mxu0 %v5265
  %6973 = vmatprep.subr.bf16.mxu0 %v5270
  %6974 = vmatpush1.bf16.msra.mxu0 %v5269
  %6975 = vmatprep.subr.bf16.mxu0 %v5274
  %6976 = vmatpush1.bf16.msra.mxu0 %v5273
  %6977 = vmatprep.subr.bf16.mxu0 %v5278
  %6978 = vmatpush1.bf16.msra.mxu0 %v5277
  %6979 = vmatprep.subr.bf16.mxu0 %v5282
  %6980 = vmatpush1.bf16.msra.mxu0 %v5281
  %6981 = vmatprep.subr.bf16.mxu0 %v5286
  %6982 = vmatpush1.bf16.msra.mxu0 %v5285
  %6983 = vmatprep.mubr.bf16.mxu0 %v1223
  %6984 = vmatmul.mubr.bf16.gmra.mrb[0].mxu0 %v1215
  %v6985 = vpop.f32.mrb[0].mxu0
  %v6986 = vadd.f32 %v6945, %v6985
  %v6987 = vpop.f32.mrb[0].mxu0
  %v6988 = vadd.f32 %v6947, %v6987
  %v6989 = vpop.f32.mrb[0].mxu0
  %v6990 = vpop.f32.mrb[0].mxu0
  %6991 = vdwg.mxu0
  %6992 = vmatprep.subr.bf16.mxu0 %v5290
  %6993 = vmatpush1.bf16.msra.mxu0 %v5289
  %6994 = vmatprep.subr.bf16.mxu0 %v5294
  %6995 = vmatpush1.bf16.msra.mxu0 %v5293
  %6996 = vmatprep.subr.bf16.mxu0 %v5298
  %6997 = vmatpush1.bf16.msra.mxu0 %v5297
  %6998 = vmatprep.subr.bf16.mxu0 %v5302
  %6999 = vmatpush1.bf16.msra.mxu0 %v5301
  %7000 = vmatprep.subr.bf16.mxu0 %v5306
  %7001 = vmatpush1.bf16.msra.mxu0 %v5305
  %7002 = vmatprep.subr.bf16.mxu0 %v5310
  %7003 = vmatpush1.bf16.msra.mxu0 %v5309
  %7004 = vmatprep.subr.bf16.mxu0 %v5314
  %7005 = vmatpush1.bf16.msra.mxu0 %v5313
  %7006 = vmatprep.subr.bf16.mxu0 %v5318
  %7007 = vmatpush1.bf16.msra.mxu0 %v5317
  %7008 = vmatprep.subr.bf16.mxu0 %v5322
  %7009 = vmatpush1.bf16.msra.mxu0 %v5321
  %7010 = vmatprep.subr.bf16.mxu0 %v5326
  %7011 = vmatpush1.bf16.msra.mxu0 %v5325
  %7012 = vmatprep.subr.bf16.mxu0 %v5330
  %7013 = vmatpush1.bf16.msra.mxu0 %v5329
  %7014 = vmatprep.subr.bf16.mxu0 %v5334
  %7015 = vmatpush1.bf16.msra.mxu0 %v5333
  %7016 = vmatprep.subr.bf16.mxu0 %v5338
  %7017 = vmatpush1.bf16.msra.mxu0 %v5337
  %7018 = vmatprep.subr.bf16.mxu0 %v5342
  %7019 = vmatpush1.bf16.msra.mxu0 %v5341
  %7020 = vmatprep.subr.bf16.mxu0 %v5346
  %7021 = vmatpush1.bf16.msra.mxu0 %v5345
  %7022 = vmatprep.subr.bf16.mxu0 %v5350
  %7023 = vmatpush1.bf16.msra.mxu0 %v5349
  %7024 = vmatprep.mubr.bf16.mxu0 %v1224
  %7025 = vmatmul.mubr.bf16.gmra.mrb[0].mxu0 %v1222
  %v7026 = vpop.f32.mrb[0].mxu0
  %v7027 = vadd.f32 %v6986, %v7026
  %v7028 = vpop.f32.mrb[0].mxu0
  %v7029 = vadd.f32 %v6988, %v7028
  %v7030 = vpop.f32.mrb[0].mxu0
  %v7031 = vpop.f32.mrb[0].mxu0
  %7032 = vdwg.mxu0
  %7033 = vmatprep.subr.bf16.mxu0 %v4332
  %7034 = vmatpush1.bf16.msra.mxu0 %v4331
  %7035 = vmatprep.subr.bf16.mxu0 %v4336
  %7036 = vmatpush1.bf16.msra.mxu0 %v4335
  %7037 = vmatprep.subr.bf16.mxu0 %v4340
  %7038 = vmatpush1.bf16.msra.mxu0 %v4339
  %7039 = vmatprep.subr.bf16.mxu0 %v4344
  %7040 = vmatpush1.bf16.msra.mxu0 %v4343
  %7041 = vmatprep.subr.bf16.mxu0 %v4348
  %7042 = vmatpush1.bf16.msra.mxu0 %v4347
  %7043 = vmatprep.subr.bf16.mxu0 %v4352
  %7044 = vmatpush1.bf16.msra.mxu0 %v4351
  %7045 = vmatprep.subr.bf16.mxu0 %v4356
  %7046 = vmatpush1.bf16.msra.mxu0 %v4355
  %7047 = vmatprep.subr.bf16.mxu0 %v4360
  %7048 = vmatpush1.bf16.msra.mxu0 %v4359
  %7049 = vmatprep.subr.bf16.mxu0 %v4364
  %7050 = vmatpush1.bf16.msra.mxu0 %v4363
  %7051 = vmatprep.subr.bf16.mxu0 %v4368
  %7052 = vmatpush1.bf16.msra.mxu0 %v4367
  %7053 = vmatprep.subr.bf16.mxu0 %v4372
  %7054 = vmatpush1.bf16.msra.mxu0 %v4371
  %7055 = vmatprep.subr.bf16.mxu0 %v4376
  %7056 = vmatpush1.bf16.msra.mxu0 %v4375
  %7057 = vmatprep.subr.bf16.mxu0 %v4380
  %7058 = vmatpush1.bf16.msra.mxu0 %v4379
  %7059 = vmatprep.subr.bf16.mxu0 %v4384
  %7060 = vmatpush1.bf16.msra.mxu0 %v4383
  %7061 = vmatprep.subr.bf16.mxu0 %v4388
  %7062 = vmatpush1.bf16.msra.mxu0 %v4387
  %7063 = vmatprep.subr.bf16.mxu0 %v4392
  %7064 = vmatpush1.bf16.msra.mxu0 %v4391
  %7065 = vmatprep.mubr.bf16.mxu0 %v1104
  %7066 = vmatmul.mubr.bf16.gmra.mrb[0].mxu0 %v1096
  %v7067 = vpop.f32.mrb[0].mxu0
  %v7068 = vadd.f32 %v1072, %v7067
  %v7069 = vpop.f32.mrb[0].mxu0
  %v7070 = vadd.f32 %v1076, %v7069
  %v7071 = vpop.f32.mrb[0].mxu0
  %v7072 = vpop.f32.mrb[0].mxu0
  %7073 = vdwg.mxu0
  %7074 = vmatprep.subr.bf16.mxu0 %v4396
  %7075 = vmatpush1.bf16.msra.mxu0 %v4395
  %7076 = vmatprep.subr.bf16.mxu0 %v4400
  %7077 = vmatpush1.bf16.msra.mxu0 %v4399
  %7078 = vmatprep.subr.bf16.mxu0 %v4404
  %7079 = vmatpush1.bf16.msra.mxu0 %v4403
  %7080 = vmatprep.subr.bf16.mxu0 %v4408
  %7081 = vmatpush1.bf16.msra.mxu0 %v4407
  %7082 = vmatprep.subr.bf16.mxu0 %v4412
  %7083 = vmatpush1.bf16.msra.mxu0 %v4411
  %7084 = vmatprep.subr.bf16.mxu0 %v4416
  %7085 = vmatpush1.bf16.msra.mxu0 %v4415
  %7086 = vmatprep.subr.bf16.mxu0 %v4420
  %7087 = vmatpush1.bf16.msra.mxu0 %v4419
  %7088 = vmatprep.subr.bf16.mxu0 %v4424
  %7089 = vmatpush1.bf16.msra.mxu0 %v4423
  %7090 = vmatprep.subr.bf16.mxu0 %v4428
  %7091 = vmatpush1.bf16.msra.mxu0 %v4427
  %7092 = vmatprep.subr.bf16.mxu0 %v4432
  %7093 = vmatpush1.bf16.msra.mxu0 %v4431
  %7094 = vmatprep.subr.bf16.mxu0 %v4436
  %7095 = vmatpush1.bf16.msra.mxu0 %v4435
  %7096 = vmatprep.subr.bf16.mxu0 %v4440
  %7097 = vmatpush1.bf16.msra.mxu0 %v4439
  %7098 = vmatprep.subr.bf16.mxu0 %v4444
  %7099 = vmatpush1.bf16.msra.mxu0 %v4443
  %7100 = vmatprep.subr.bf16.mxu0 %v4448
  %7101 = vmatpush1.bf16.msra.mxu0 %v4447
  %7102 = vmatprep.subr.bf16.mxu0 %v4452
  %7103 = vmatpush1.bf16.msra.mxu0 %v4451
  %7104 = vmatprep.subr.bf16.mxu0 %v4456
  %7105 = vmatpush1.bf16.msra.mxu0 %v4455
  %7106 = vmatprep.mubr.bf16.mxu0 %v1105
  %7107 = vmatmul.mubr.bf16.gmra.mrb[0].mxu0 %v1103
  %v7108 = vpop.f32.mrb[0].mxu0
  %v7109 = vadd.f32 %v7068, %v7108
  %v7110 = vpop.f32.mrb[0].mxu0
  %v7111 = vadd.f32 %v7070, %v7110
  %v7112 = vpop.f32.mrb[0].mxu0
  %v7113 = vpop.f32.mrb[0].mxu0
  %7114 = vdwg.mxu0
  %7115 = vmatprep.subr.bf16.mxu0 %v4460
  %7116 = vmatpush1.bf16.msra.mxu0 %v4459
  %7117 = vmatprep.subr.bf16.mxu0 %v4464
  %7118 = vmatpush1.bf16.msra.mxu0 %v4463
  %7119 = vmatprep.subr.bf16.mxu0 %v4468
  %7120 = vmatpush1.bf16.msra.mxu0 %v4467
  %7121 = vmatprep.subr.bf16.mxu0 %v4472
  %7122 = vmatpush1.bf16.msra.mxu0 %v4471
  %7123 = vmatprep.subr.bf16.mxu0 %v4476
  %7124 = vmatpush1.bf16.msra.mxu0 %v4475
  %7125 = vmatprep.subr.bf16.mxu0 %v4480
  %7126 = vmatpush1.bf16.msra.mxu0 %v4479
  %7127 = vmatprep.subr.bf16.mxu0 %v4484
  %7128 = vmatpush1.bf16.msra.mxu0 %v4483
  %7129 = vmatprep.subr.bf16.mxu0 %v4488
  %7130 = vmatpush1.bf16.msra.mxu0 %v4487
  %7131 = vmatprep.subr.bf16.mxu0 %v4492
  %7132 = vmatpush1.bf16.msra.mxu0 %v4491
  %7133 = vmatprep.subr.bf16.mxu0 %v4496
  %7134 = vmatpush1.bf16.msra.mxu0 %v4495
  %7135 = vmatprep.subr.bf16.mxu0 %v4500
  %7136 = vmatpush1.bf16.msra.mxu0 %v4499
  %7137 = vmatprep.subr.bf16.mxu0 %v4504
  %7138 = vmatpush1.bf16.msra.mxu0 %v4503
  %7139 = vmatprep.subr.bf16.mxu0 %v4508
  %7140 = vmatpush1.bf16.msra.mxu0 %v4507
  %7141 = vmatprep.subr.bf16.mxu0 %v4512
  %7142 = vmatpush1.bf16.msra.mxu0 %v4511
  %7143 = vmatprep.subr.bf16.mxu0 %v4516
  %7144 = vmatpush1.bf16.msra.mxu0 %v4515
  %7145 = vmatprep.subr.bf16.mxu0 %v4520
  %7146 = vmatpush1.bf16.msra.mxu0 %v4519
  %7147 = vmatprep.mubr.bf16.mxu0 %v1121
  %7148 = vmatmul.mubr.bf16.gmra.mrb[0].mxu0 %v1113
  %v7149 = vpop.f32.mrb[0].mxu0
  %v7150 = vadd.f32 %v7109, %v7149
  %v7151 = vpop.f32.mrb[0].mxu0
  %v7152 = vadd.f32 %v7111, %v7151
  %v7153 = vpop.f32.mrb[0].mxu0
  %v7154 = vpop.f32.mrb[0].mxu0
  %7155 = vdwg.mxu0
  %7156 = vmatprep.subr.bf16.mxu0 %v4524
  %7157 = vmatpush1.bf16.msra.mxu0 %v4523
  %7158 = vmatprep.subr.bf16.mxu0 %v4528
  %7159 = vmatpush1.bf16.msra.mxu0 %v4527
  %7160 = vmatprep.subr.bf16.mxu0 %v4532
  %7161 = vmatpush1.bf16.msra.mxu0 %v4531
  %7162 = vmatprep.subr.bf16.mxu0 %v4536
  %7163 = vmatpush1.bf16.msra.mxu0 %v4535
  %7164 = vmatprep.subr.bf16.mxu0 %v4540
  %7165 = vmatpush1.bf16.msra.mxu0 %v4539
  %7166 = vmatprep.subr.bf16.mxu0 %v4544
  %7167 = vmatpush1.bf16.msra.mxu0 %v4543
  %7168 = vmatprep.subr.bf16.mxu0 %v4548
  %7169 = vmatpush1.bf16.msra.mxu0 %v4547
  %7170 = vmatprep.subr.bf16.mxu0 %v4552
  %7171 = vmatpush1.bf16.msra.mxu0 %v4551
  %7172 = vmatprep.subr.bf16.mxu0 %v4556
  %7173 = vmatpush1.bf16.msra.mxu0 %v4555
  %7174 = vmatprep.subr.bf16.mxu0 %v4560
  %7175 = vmatpush1.bf16.msra.mxu0 %v4559
  %7176 = vmatprep.subr.bf16.mxu0 %v4564
  %7177 = vmatpush1.bf16.msra.mxu0 %v4563
  %7178 = vmatprep.subr.bf16.mxu0 %v4568
  %7179 = vmatpush1.bf16.msra.mxu0 %v4567
  %7180 = vmatprep.subr.bf16.mxu0 %v4572
  %7181 = vmatpush1.bf16.msra.mxu0 %v4571
  %7182 = vmatprep.subr.bf16.mxu0 %v4576
  %7183 = vmatpush1.bf16.msra.mxu0 %v4575
  %7184 = vmatprep.subr.bf16.mxu0 %v4580
  %7185 = vmatpush1.bf16.msra.mxu0 %v4579
  %7186 = vmatprep.subr.bf16.mxu0 %v4584
  %7187 = vmatpush1.bf16.msra.mxu0 %v4583
  %7188 = vmatprep.mubr.bf16.mxu0 %v1122
  %7189 = vmatmul.mubr.bf16.gmra.mrb[0].mxu0 %v1120
  %v7190 = vpop.f32.mrb[0].mxu0
  %v7191 = vadd.f32 %v7150, %v7190
  %v7192 = vpop.f32.mrb[0].mxu0
  %v7193 = vadd.f32 %v7152, %v7192
  %v7194 = vpop.f32.mrb[0].mxu0
  %v7195 = vpop.f32.mrb[0].mxu0
  %7196 = vdwg.mxu0
  %7197 = vmatprep.subr.bf16.mxu0 %v4588
  %7198 = vmatpush1.bf16.msra.mxu0 %v4587
  %7199 = vmatprep.subr.bf16.mxu0 %v4592
  %7200 = vmatpush1.bf16.msra.mxu0 %v4591
  %7201 = vmatprep.subr.bf16.mxu0 %v4596
  %7202 = vmatpush1.bf16.msra.mxu0 %v4595
  %7203 = vmatprep.subr.bf16.mxu0 %v4600
  %7204 = vmatpush1.bf16.msra.mxu0 %v4599
  %7205 = vmatprep.subr.bf16.mxu0 %v4604
  %7206 = vmatpush1.bf16.msra.mxu0 %v4603
  %7207 = vmatprep.subr.bf16.mxu0 %v4608
  %7208 = vmatpush1.bf16.msra.mxu0 %v4607
  %7209 = vmatprep.subr.bf16.mxu0 %v4612
  %7210 = vmatpush1.bf16.msra.mxu0 %v4611
  %7211 = vmatprep.subr.bf16.mxu0 %v4616
  %7212 = vmatpush1.bf16.msra.mxu0 %v4615
  %7213 = vmatprep.subr.bf16.mxu0 %v4620
  %7214 = vmatpush1.bf16.msra.mxu0 %v4619
  %7215 = vmatprep.subr.bf16.mxu0 %v4624
  %7216 = vmatpush1.bf16.msra.mxu0 %v4623
  %7217 = vmatprep.subr.bf16.mxu0 %v4628
  %7218 = vmatpush1.bf16.msra.mxu0 %v4627
  %7219 = vmatprep.subr.bf16.mxu0 %v4632
  %7220 = vmatpush1.bf16.msra.mxu0 %v4631
  %7221 = vmatprep.subr.bf16.mxu0 %v4636
  %7222 = vmatpush1.bf16.msra.mxu0 %v4635
  %7223 = vmatprep.subr.bf16.mxu0 %v4640
  %7224 = vmatpush1.bf16.msra.mxu0 %v4639
  %7225 = vmatprep.subr.bf16.mxu0 %v4644
  %7226 = vmatpush1.bf16.msra.mxu0 %v4643
  %7227 = vmatprep.subr.bf16.mxu0 %v4648
  %7228 = vmatpush1.bf16.msra.mxu0 %v4647
  %7229 = vmatprep.mubr.bf16.mxu0 %v1138
  %7230 = vmatmul.mubr.bf16.gmra.mrb[0].mxu0 %v1130
  %v7231 = vpop.f32.mrb[0].mxu0
  %v7232 = vadd.f32 %v7191, %v7231
  %v7233 = vpop.f32.mrb[0].mxu0
  %v7234 = vadd.f32 %v7193, %v7233
  %v7235 = vpop.f32.mrb[0].mxu0
  %v7236 = vpop.f32.mrb[0].mxu0
  %7237 = vdwg.mxu0
  %7238 = vmatprep.subr.bf16.mxu0 %v4652
  %7239 = vmatpush1.bf16.msra.mxu0 %v4651
  %7240 = vmatprep.subr.bf16.mxu0 %v4656
  %7241 = vmatpush1.bf16.msra.mxu0 %v4655
  %7242 = vmatprep.subr.bf16.mxu0 %v4660
  %7243 = vmatpush1.bf16.msra.mxu0 %v4659
  %7244 = vmatprep.subr.bf16.mxu0 %v4664
  %7245 = vmatpush1.bf16.msra.mxu0 %v4663
  %7246 = vmatprep.subr.bf16.mxu0 %v4668
  %7247 = vmatpush1.bf16.msra.mxu0 %v4667
  %7248 = vmatprep.subr.bf16.mxu0 %v4672
  %7249 = vmatpush1.bf16.msra.mxu0 %v4671
  %7250 = vmatprep.subr.bf16.mxu0 %v4676
  %7251 = vmatpush1.bf16.msra.mxu0 %v4675
  %7252 = vmatprep.subr.bf16.mxu0 %v4680
  %7253 = vmatpush1.bf16.msra.mxu0 %v4679
  %7254 = vmatprep.subr.bf16.mxu0 %v4684
  %7255 = vmatpush1.bf16.msra.mxu0 %v4683
  %7256 = vmatprep.subr.bf16.mxu0 %v4688
  %7257 = vmatpush1.bf16.msra.mxu0 %v4687
  %7258 = vmatprep.subr.bf16.mxu0 %v4692
  %7259 = vmatpush1.bf16.msra.mxu0 %v4691
  %7260 = vmatprep.subr.bf16.mxu0 %v4696
  %7261 = vmatpush1.bf16.msra.mxu0 %v4695
  %7262 = vmatprep.subr.bf16.mxu0 %v4700
  %7263 = vmatpush1.bf16.msra.mxu0 %v4699
  %7264 = vmatprep.subr.bf16.mxu0 %v4704
  %7265 = vmatpush1.bf16.msra.mxu0 %v4703
  %7266 = vmatprep.subr.bf16.mxu0 %v4708
  %7267 = vmatpush1.bf16.msra.mxu0 %v4707
  %7268 = vmatprep.subr.bf16.mxu0 %v4712
  %7269 = vmatpush1.bf16.msra.mxu0 %v4711
  %7270 = vmatprep.mubr.bf16.mxu0 %v1139
  %7271 = vmatmul.mubr.bf16.gmra.mrb[0].mxu0 %v1137
  %v7272 = vpop.f32.mrb[0].mxu0
  %v7273 = vadd.f32 %v7232, %v7272
  %v7274 = vpop.f32.mrb[0].mxu0
  %v7275 = vadd.f32 %v7234, %v7274
  %v7276 = vpop.f32.mrb[0].mxu0
  %v7277 = vpop.f32.mrb[0].mxu0
  %7278 = vdwg.mxu0
  %7279 = vmatprep.subr.bf16.mxu0 %v4716
  %7280 = vmatpush1.bf16.msra.mxu0 %v4715
  %7281 = vmatprep.subr.bf16.mxu0 %v4720
  %7282 = vmatpush1.bf16.msra.mxu0 %v4719
  %7283 = vmatprep.subr.bf16.mxu0 %v4724
  %7284 = vmatpush1.bf16.msra.mxu0 %v4723
  %7285 = vmatprep.subr.bf16.mxu0 %v4728
  %7286 = vmatpush1.bf16.msra.mxu0 %v4727
  %7287 = vmatprep.subr.bf16.mxu0 %v4732
  %7288 = vmatpush1.bf16.msra.mxu0 %v4731
  %7289 = vmatprep.subr.bf16.mxu0 %v4736
  %7290 = vmatpush1.bf16.msra.mxu0 %v4735
  %7291 = vmatprep.subr.bf16.mxu0 %v4740
  %7292 = vmatpush1.bf16.msra.mxu0 %v4739
  %7293 = vmatprep.subr.bf16.mxu0 %v4744
  %7294 = vmatpush1.bf16.msra.mxu0 %v4743
  %7295 = vmatprep.subr.bf16.mxu0 %v4748
  %7296 = vmatpush1.bf16.msra.mxu0 %v4747
  %7297 = vmatprep.subr.bf16.mxu0 %v4752
  %7298 = vmatpush1.bf16.msra.mxu0 %v4751
  %7299 = vmatprep.subr.bf16.mxu0 %v4756
  %7300 = vmatpush1.bf16.msra.mxu0 %v4755
  %7301 = vmatprep.subr.bf16.mxu0 %v4760
  %7302 = vmatpush1.bf16.msra.mxu0 %v4759
  %7303 = vmatprep.subr.bf16.mxu0 %v4764
  %7304 = vmatpush1.bf16.msra.mxu0 %v4763
  %7305 = vmatprep.subr.bf16.mxu0 %v4768
  %7306 = vmatpush1.bf16.msra.mxu0 %v4767
  %7307 = vmatprep.subr.bf16.mxu0 %v4772
  %7308 = vmatpush1.bf16.msra.mxu0 %v4771
  %7309 = vmatprep.subr.bf16.mxu0 %v4776
  %7310 = vmatpush1.bf16.msra.mxu0 %v4775
  %7311 = vmatprep.mubr.bf16.mxu0 %v1155
  %7312 = vmatmul.mubr.bf16.gmra.mrb[0].mxu0 %v1147
  %v7313 = vpop.f32.mrb[0].mxu0
  %v7314 = vadd.f32 %v7273, %v7313
  %v7315 = vpop.f32.mrb[0].mxu0
  %v7316 = vadd.f32 %v7275, %v7315
  %v7317 = vpop.f32.mrb[0].mxu0
  %v7318 = vpop.f32.mrb[0].mxu0
  %7319 = vdwg.mxu0
  %7320 = vmatprep.subr.bf16.mxu0 %v4780
  %7321 = vmatpush1.bf16.msra.mxu0 %v4779
  %7322 = vmatprep.subr.bf16.mxu0 %v4784
  %7323 = vmatpush1.bf16.msra.mxu0 %v4783
  %7324 = vmatprep.subr.bf16.mxu0 %v4788
  %7325 = vmatpush1.bf16.msra.mxu0 %v4787
  %7326 = vmatprep.subr.bf16.mxu0 %v4792
  %7327 = vmatpush1.bf16.msra.mxu0 %v4791
  %7328 = vmatprep.subr.bf16.mxu0 %v4796
  %7329 = vmatpush1.bf16.msra.mxu0 %v4795
  %7330 = vmatprep.subr.bf16.mxu0 %v4800
  %7331 = vmatpush1.bf16.msra.mxu0 %v4799
  %7332 = vmatprep.subr.bf16.mxu0 %v4804
  %7333 = vmatpush1.bf16.msra.mxu0 %v4803
  %7334 = vmatprep.subr.bf16.mxu0 %v4808
  %7335 = vmatpush1.bf16.msra.mxu0 %v4807
  %7336 = vmatprep.subr.bf16.mxu0 %v4812
  %7337 = vmatpush1.bf16.msra.mxu0 %v4811
  %7338 = vmatprep.subr.bf16.mxu0 %v4816
  %7339 = vmatpush1.bf16.msra.mxu0 %v4815
  %7340 = vmatprep.subr.bf16.mxu0 %v4820
  %7341 = vmatpush1.bf16.msra.mxu0 %v4819
  %7342 = vmatprep.subr.bf16.mxu0 %v4824
  %7343 = vmatpush1.bf16.msra.mxu0 %v4823
  %7344 = vmatprep.subr.bf16.mxu0 %v4828
  %7345 = vmatpush1.bf16.msra.mxu0 %v4827
  %7346 = vmatprep.subr.bf16.mxu0 %v4832
  %7347 = vmatpush1.bf16.msra.mxu0 %v4831
  %7348 = vmatprep.subr.bf16.mxu0 %v4836
  %7349 = vmatpush1.bf16.msra.mxu0 %v4835
  %7350 = vmatprep.subr.bf16.mxu0 %v4840
  %7351 = vmatpush1.bf16.msra.mxu0 %v4839
  %7352 = vmatprep.mubr.bf16.mxu0 %v1156
  %7353 = vmatmul.mubr.bf16.gmra.mrb[0].mxu0 %v1154
  %v7354 = vpop.f32.mrb[0].mxu0
  %v7355 = vadd.f32 %v7314, %v7354
  %v7356 = vpop.f32.mrb[0].mxu0
  %v7357 = vadd.f32 %v7316, %v7356
  %v7358 = vpop.f32.mrb[0].mxu0
  %v7359 = vpop.f32.mrb[0].mxu0
  %7360 = vdwg.mxu0
  %7361 = vmatprep.subr.bf16.mxu0 %v4844
  %7362 = vmatpush1.bf16.msra.mxu0 %v4843
  %7363 = vmatprep.subr.bf16.mxu0 %v4848
  %7364 = vmatpush1.bf16.msra.mxu0 %v4847
  %7365 = vmatprep.subr.bf16.mxu0 %v4852
  %7366 = vmatpush1.bf16.msra.mxu0 %v4851
  %7367 = vmatprep.subr.bf16.mxu0 %v4856
  %7368 = vmatpush1.bf16.msra.mxu0 %v4855
  %7369 = vmatprep.subr.bf16.mxu0 %v4860
  %7370 = vmatpush1.bf16.msra.mxu0 %v4859
  %7371 = vmatprep.subr.bf16.mxu0 %v4864
  %7372 = vmatpush1.bf16.msra.mxu0 %v4863
  %7373 = vmatprep.subr.bf16.mxu0 %v4868
  %7374 = vmatpush1.bf16.msra.mxu0 %v4867
  %7375 = vmatprep.subr.bf16.mxu0 %v4872
  %7376 = vmatpush1.bf16.msra.mxu0 %v4871
  %7377 = vmatprep.subr.bf16.mxu0 %v4876
  %7378 = vmatpush1.bf16.msra.mxu0 %v4875
  %7379 = vmatprep.subr.bf16.mxu0 %v4880
  %7380 = vmatpush1.bf16.msra.mxu0 %v4879
  %7381 = vmatprep.subr.bf16.mxu0 %v4884
  %7382 = vmatpush1.bf16.msra.mxu0 %v4883
  %7383 = vmatprep.subr.bf16.mxu0 %v4888
  %7384 = vmatpush1.bf16.msra.mxu0 %v4887
  %7385 = vmatprep.subr.bf16.mxu0 %v4892
  %7386 = vmatpush1.bf16.msra.mxu0 %v4891
  %7387 = vmatprep.subr.bf16.mxu0 %v4896
  %7388 = vmatpush1.bf16.msra.mxu0 %v4895
  %7389 = vmatprep.subr.bf16.mxu0 %v4900
  %7390 = vmatpush1.bf16.msra.mxu0 %v4899
  %7391 = vmatprep.subr.bf16.mxu0 %v4904
  %7392 = vmatpush1.bf16.msra.mxu0 %v4903
  %7393 = vmatprep.mubr.bf16.mxu0 %v1172
  %7394 = vmatmul.mubr.bf16.gmra.mrb[0].mxu0 %v1164
  %v7395 = vpop.f32.mrb[0].mxu0
  %v7396 = vadd.f32 %v7355, %v7395
  %v7397 = vpop.f32.mrb[0].mxu0
  %v7398 = vadd.f32 %v7357, %v7397
  %v7399 = vpop.f32.mrb[0].mxu0
  %v7400 = vpop.f32.mrb[0].mxu0
  %7401 = vdwg.mxu0
  %7402 = vmatprep.subr.bf16.mxu0 %v4908
  %7403 = vmatpush1.bf16.msra.mxu0 %v4907
  %7404 = vmatprep.subr.bf16.mxu0 %v4912
  %7405 = vmatpush1.bf16.msra.mxu0 %v4911
  %7406 = vmatprep.subr.bf16.mxu0 %v4916
  %7407 = vmatpush1.bf16.msra.mxu0 %v4915
  %7408 = vmatprep.subr.bf16.mxu0 %v4920
  %7409 = vmatpush1.bf16.msra.mxu0 %v4919
  %7410 = vmatprep.subr.bf16.mxu0 %v4924
  %7411 = vmatpush1.bf16.msra.mxu0 %v4923
  %7412 = vmatprep.subr.bf16.mxu0 %v4928
  %7413 = vmatpush1.bf16.msra.mxu0 %v4927
  %7414 = vmatprep.subr.bf16.mxu0 %v4932
  %7415 = vmatpush1.bf16.msra.mxu0 %v4931
  %7416 = vmatprep.subr.bf16.mxu0 %v4936
  %7417 = vmatpush1.bf16.msra.mxu0 %v4935
  %7418 = vmatprep.subr.bf16.mxu0 %v4940
  %7419 = vmatpush1.bf16.msra.mxu0 %v4939
  %7420 = vmatprep.subr.bf16.mxu0 %v4944
  %7421 = vmatpush1.bf16.msra.mxu0 %v4943
  %7422 = vmatprep.subr.bf16.mxu0 %v4948
  %7423 = vmatpush1.bf16.msra.mxu0 %v4947
  %7424 = vmatprep.subr.bf16.mxu0 %v4952
  %7425 = vmatpush1.bf16.msra.mxu0 %v4951
  %7426 = vmatprep.subr.bf16.mxu0 %v4956
  %7427 = vmatpush1.bf16.msra.mxu0 %v4955
  %7428 = vmatprep.subr.bf16.mxu0 %v4960
  %7429 = vmatpush1.bf16.msra.mxu0 %v4959
  %7430 = vmatprep.subr.bf16.mxu0 %v4964
  %7431 = vmatpush1.bf16.msra.mxu0 %v4963
  %7432 = vmatprep.subr.bf16.mxu0 %v4968
  %7433 = vmatpush1.bf16.msra.mxu0 %v4967
  %7434 = vmatprep.mubr.bf16.mxu0 %v1173
  %7435 = vmatmul.mubr.bf16.gmra.mrb[0].mxu0 %v1171
  %v7436 = vpop.f32.mrb[0].mxu0
  %v7437 = vadd.f32 %v7396, %v7436
  %v7438 = vpop.f32.mrb[0].mxu0
  %v7439 = vadd.f32 %v7398, %v7438
  %v7440 = vpop.f32.mrb[0].mxu0
  %v7441 = vpop.f32.mrb[0].mxu0
  %7442 = vdwg.mxu0
  %7443 = vmatprep.subr.bf16.mxu0 %v4972
  %7444 = vmatpush1.bf16.msra.mxu0 %v4971
  %7445 = vmatprep.subr.bf16.mxu0 %v4976
  %7446 = vmatpush1.bf16.msra.mxu0 %v4975
  %7447 = vmatprep.subr.bf16.mxu0 %v4980
  %7448 = vmatpush1.bf16.msra.mxu0 %v4979
  %7449 = vmatprep.subr.bf16.mxu0 %v4984
  %7450 = vmatpush1.bf16.msra.mxu0 %v4983
  %7451 = vmatprep.subr.bf16.mxu0 %v4988
  %7452 = vmatpush1.bf16.msra.mxu0 %v4987
  %7453 = vmatprep.subr.bf16.mxu0 %v4992
  %7454 = vmatpush1.bf16.msra.mxu0 %v4991
  %7455 = vmatprep.subr.bf16.mxu0 %v4996
  %7456 = vmatpush1.bf16.msra.mxu0 %v4995
  %7457 = vmatprep.subr.bf16.mxu0 %v5000
  %7458 = vmatpush1.bf16.msra.mxu0 %v4999
  %7459 = vmatprep.subr.bf16.mxu0 %v5004
  %7460 = vmatpush1.bf16.msra.mxu0 %v5003
  %7461 = vmatprep.subr.bf16.mxu0 %v5008
  %7462 = vmatpush1.bf16.msra.mxu0 %v5007
  %7463 = vmatprep.subr.bf16.mxu0 %v5012
  %7464 = vmatpush1.bf16.msra.mxu0 %v5011
  %7465 = vmatprep.subr.bf16.mxu0 %v5016
  %7466 = vmatpush1.bf16.msra.mxu0 %v5015
  %7467 = vmatprep.subr.bf16.mxu0 %v5020
  %7468 = vmatpush1.bf16.msra.mxu0 %v5019
  %7469 = vmatprep.subr.bf16.mxu0 %v5024
  %7470 = vmatpush1.bf16.msra.mxu0 %v5023
  %7471 = vmatprep.subr.bf16.mxu0 %v5028
  %7472 = vmatpush1.bf16.msra.mxu0 %v5027
  %7473 = vmatprep.subr.bf16.mxu0 %v5032
  %7474 = vmatpush1.bf16.msra.mxu0 %v5031
  %7475 = vmatprep.mubr.bf16.mxu0 %v1189
  %7476 = vmatmul.mubr.bf16.gmra.mrb[0].mxu0 %v1181
  %v7477 = vpop.f32.mrb[0].mxu0
  %v7478 = vadd.f32 %v7437, %v7477
  %v7479 = vpop.f32.mrb[0].mxu0
  %v7480 = vadd.f32 %v7439, %v7479
  %v7481 = vpop.f32.mrb[0].mxu0
  %v7482 = vpop.f32.mrb[0].mxu0
  %7483 = vdwg.mxu0
  %7484 = vmatprep.subr.bf16.mxu0 %v5036
  %7485 = vmatpush1.bf16.msra.mxu0 %v5035
  %7486 = vmatprep.subr.bf16.mxu0 %v5040
  %7487 = vmatpush1.bf16.msra.mxu0 %v5039
  %7488 = vmatprep.subr.bf16.mxu0 %v5044
  %7489 = vmatpush1.bf16.msra.mxu0 %v5043
  %7490 = vmatprep.subr.bf16.mxu0 %v5048
  %7491 = vmatpush1.bf16.msra.mxu0 %v5047
  %7492 = vmatprep.subr.bf16.mxu0 %v5052
  %7493 = vmatpush1.bf16.msra.mxu0 %v5051
  %7494 = vmatprep.subr.bf16.mxu0 %v5056
  %7495 = vmatpush1.bf16.msra.mxu0 %v5055
  %7496 = vmatprep.subr.bf16.mxu0 %v5060
  %7497 = vmatpush1.bf16.msra.mxu0 %v5059
  %7498 = vmatprep.subr.bf16.mxu0 %v5064
  %7499 = vmatpush1.bf16.msra.mxu0 %v5063
  %7500 = vmatprep.subr.bf16.mxu0 %v5068
  %7501 = vmatpush1.bf16.msra.mxu0 %v5067
  %7502 = vmatprep.subr.bf16.mxu0 %v5072
  %7503 = vmatpush1.bf16.msra.mxu0 %v5071
  %7504 = vmatprep.subr.bf16.mxu0 %v5076
  %7505 = vmatpush1.bf16.msra.mxu0 %v5075
  %7506 = vmatprep.subr.bf16.mxu0 %v5080
  %7507 = vmatpush1.bf16.msra.mxu0 %v5079
  %7508 = vmatprep.subr.bf16.mxu0 %v5084
  %7509 = vmatpush1.bf16.msra.mxu0 %v5083
  %7510 = vmatprep.subr.bf16.mxu0 %v5088
  %7511 = vmatpush1.bf16.msra.mxu0 %v5087
  %7512 = vmatprep.subr.bf16.mxu0 %v5092
  %7513 = vmatpush1.bf16.msra.mxu0 %v5091
  %7514 = vmatprep.subr.bf16.mxu0 %v5096
  %7515 = vmatpush1.bf16.msra.mxu0 %v5095
  %7516 = vmatprep.mubr.bf16.mxu0 %v1190
  %7517 = vmatmul.mubr.bf16.gmra.mrb[0].mxu0 %v1188
  %v7518 = vpop.f32.mrb[0].mxu0
  %v7519 = vadd.f32 %v7478, %v7518
  %v7520 = vpop.f32.mrb[0].mxu0
  %v7521 = vadd.f32 %v7480, %v7520
  %v7522 = vpop.f32.mrb[0].mxu0
  %v7523 = vpop.f32.mrb[0].mxu0
  %7524 = vdwg.mxu0
  %7525 = vmatprep.subr.bf16.mxu0 %v5100
  %7526 = vmatpush1.bf16.msra.mxu0 %v5099
  %7527 = vmatprep.subr.bf16.mxu0 %v5104
  %7528 = vmatpush1.bf16.msra.mxu0 %v5103
  %7529 = vmatprep.subr.bf16.mxu0 %v5108
  %7530 = vmatpush1.bf16.msra.mxu0 %v5107
  %7531 = vmatprep.subr.bf16.mxu0 %v5112
  %7532 = vmatpush1.bf16.msra.mxu0 %v5111
  %7533 = vmatprep.subr.bf16.mxu0 %v5116
  %7534 = vmatpush1.bf16.msra.mxu0 %v5115
  %7535 = vmatprep.subr.bf16.mxu0 %v5120
  %7536 = vmatpush1.bf16.msra.mxu0 %v5119
  %7537 = vmatprep.subr.bf16.mxu0 %v5124
  %7538 = vmatpush1.bf16.msra.mxu0 %v5123
  %7539 = vmatprep.subr.bf16.mxu0 %v5128
  %7540 = vmatpush1.bf16.msra.mxu0 %v5127
  %7541 = vmatprep.subr.bf16.mxu0 %v5132
  %7542 = vmatpush1.bf16.msra.mxu0 %v5131
  %7543 = vmatprep.subr.bf16.mxu0 %v5136
  %7544 = vmatpush1.bf16.msra.mxu0 %v5135
  %7545 = vmatprep.subr.bf16.mxu0 %v5140
  %7546 = vmatpush1.bf16.msra.mxu0 %v5139
  %7547 = vmatprep.subr.bf16.mxu0 %v5144
  %7548 = vmatpush1.bf16.msra.mxu0 %v5143
  %7549 = vmatprep.subr.bf16.mxu0 %v5148
  %7550 = vmatpush1.bf16.msra.mxu0 %v5147
  %7551 = vmatprep.subr.bf16.mxu0 %v5152
  %7552 = vmatpush1.bf16.msra.mxu0 %v5151
  %7553 = vmatprep.subr.bf16.mxu0 %v5156
  %7554 = vmatpush1.bf16.msra.mxu0 %v5155
  %7555 = vmatprep.subr.bf16.mxu0 %v5160
  %7556 = vmatpush1.bf16.msra.mxu0 %v5159
  %7557 = vmatprep.mubr.bf16.mxu0 %v1206
  %7558 = vmatmul.mubr.bf16.gmra.mrb[0].mxu0 %v1198
  %v7559 = vpop.f32.mrb[0].mxu0
  %v7560 = vadd.f32 %v7519, %v7559
  %v7561 = vpop.f32.mrb[0].mxu0
  %v7562 = vadd.f32 %v7521, %v7561
  %v7563 = vpop.f32.mrb[0].mxu0
  %v7564 = vpop.f32.mrb[0].mxu0
  %7565 = vdwg.mxu0
  %7566 = vmatprep.subr.bf16.mxu0 %v5164
  %7567 = vmatpush1.bf16.msra.mxu0 %v5163
  %7568 = vmatprep.subr.bf16.mxu0 %v5168
  %7569 = vmatpush1.bf16.msra.mxu0 %v5167
  %7570 = vmatprep.subr.bf16.mxu0 %v5172
  %7571 = vmatpush1.bf16.msra.mxu0 %v5171
  %7572 = vmatprep.subr.bf16.mxu0 %v5176
  %7573 = vmatpush1.bf16.msra.mxu0 %v5175
  %7574 = vmatprep.subr.bf16.mxu0 %v5180
  %7575 = vmatpush1.bf16.msra.mxu0 %v5179
  %7576 = vmatprep.subr.bf16.mxu0 %v5184
  %7577 = vmatpush1.bf16.msra.mxu0 %v5183
  %7578 = vmatprep.subr.bf16.mxu0 %v5188
  %7579 = vmatpush1.bf16.msra.mxu0 %v5187
  %7580 = vmatprep.subr.bf16.mxu0 %v5192
  %7581 = vmatpush1.bf16.msra.mxu0 %v5191
  %7582 = vmatprep.subr.bf16.mxu0 %v5196
  %7583 = vmatpush1.bf16.msra.mxu0 %v5195
  %7584 = vmatprep.subr.bf16.mxu0 %v5200
  %7585 = vmatpush1.bf16.msra.mxu0 %v5199
  %7586 = vmatprep.subr.bf16.mxu0 %v5204
  %7587 = vmatpush1.bf16.msra.mxu0 %v5203
  %7588 = vmatprep.subr.bf16.mxu0 %v5208
  %7589 = vmatpush1.bf16.msra.mxu0 %v5207
  %7590 = vmatprep.subr.bf16.mxu0 %v5212
  %7591 = vmatpush1.bf16.msra.mxu0 %v5211
  %7592 = vmatprep.subr.bf16.mxu0 %v5216
  %7593 = vmatpush1.bf16.msra.mxu0 %v5215
  %7594 = vmatprep.subr.bf16.mxu0 %v5220
  %7595 = vmatpush1.bf16.msra.mxu0 %v5219
  %7596 = vmatprep.subr.bf16.mxu0 %v5224
  %7597 = vmatpush1.bf16.msra.mxu0 %v5223
  %7598 = vmatprep.mubr.bf16.mxu0 %v1207
  %7599 = vmatmul.mubr.bf16.gmra.mrb[0].mxu0 %v1205
  %v7600 = vpop.f32.mrb[0].mxu0
  %v7601 = vadd.f32 %v7560, %v7600
  %v7602 = vpop.f32.mrb[0].mxu0
  %v7603 = vadd.f32 %v7562, %v7602
  %v7604 = vpop.f32.mrb[0].mxu0
  %v7605 = vpop.f32.mrb[0].mxu0
  %7606 = vdwg.mxu0
  %7607 = vmatprep.subr.bf16.mxu0 %v5228
  %7608 = vmatpush1.bf16.msra.mxu0 %v5227
  %7609 = vmatprep.subr.bf16.mxu0 %v5232
  %7610 = vmatpush1.bf16.msra.mxu0 %v5231
  %7611 = vmatprep.subr.bf16.mxu0 %v5236
  %7612 = vmatpush1.bf16.msra.mxu0 %v5235
  %7613 = vmatprep.subr.bf16.mxu0 %v5240
  %7614 = vmatpush1.bf16.msra.mxu0 %v5239
  %7615 = vmatprep.subr.bf16.mxu0 %v5244
  %7616 = vmatpush1.bf16.msra.mxu0 %v5243
  %7617 = vmatprep.subr.bf16.mxu0 %v5248
  %7618 = vmatpush1.bf16.msra.mxu0 %v5247
  %7619 = vmatprep.subr.bf16.mxu0 %v5252
  %7620 = vmatpush1.bf16.msra.mxu0 %v5251
  %7621 = vmatprep.subr.bf16.mxu0 %v5256
  %7622 = vmatpush1.bf16.msra.mxu0 %v5255
  %7623 = vmatprep.subr.bf16.mxu0 %v5260
  %7624 = vmatpush1.bf16.msra.mxu0 %v5259
  %7625 = vmatprep.subr.bf16.mxu0 %v5264
  %7626 = vmatpush1.bf16.msra.mxu0 %v5263
  %7627 = vmatprep.subr.bf16.mxu0 %v5268
  %7628 = vmatpush1.bf16.msra.mxu0 %v5267
  %7629 = vmatprep.subr.bf16.mxu0 %v5272
  %7630 = vmatpush1.bf16.msra.mxu0 %v5271
  %7631 = vmatprep.subr.bf16.mxu0 %v5276
  %7632 = vmatpush1.bf16.msra.mxu0 %v5275
  %7633 = vmatprep.subr.bf16.mxu0 %v5280
  %7634 = vmatpush1.bf16.msra.mxu0 %v5279
  %7635 = vmatprep.subr.bf16.mxu0 %v5284
  %7636 = vmatpush1.bf16.msra.mxu0 %v5283
  %7637 = vmatprep.subr.bf16.mxu0 %v5288
  %7638 = vmatpush1.bf16.msra.mxu0 %v5287
  %7639 = vmatprep.mubr.bf16.mxu0 %v1223
  %7640 = vmatmul.mubr.bf16.gmra.mrb[0].mxu0 %v1215
  %v7641 = vpop.f32.mrb[0].mxu0
  %v7642 = vadd.f32 %v7601, %v7641
  %v7643 = vpop.f32.mrb[0].mxu0
  %v7644 = vadd.f32 %v7603, %v7643
  %v7645 = vpop.f32.mrb[0].mxu0
  %v7646 = vpop.f32.mrb[0].mxu0
  %7647 = vdwg.mxu0
  %7648 = vmatprep.subr.bf16.mxu0 %v5292
  %7649 = vmatpush1.bf16.msra.mxu0 %v5291
  %7650 = vmatprep.subr.bf16.mxu0 %v5296
  %7651 = vmatpush1.bf16.msra.mxu0 %v5295
  %7652 = vmatprep.subr.bf16.mxu0 %v5300
  %7653 = vmatpush1.bf16.msra.mxu0 %v5299
  %7654 = vmatprep.subr.bf16.mxu0 %v5304
  %7655 = vmatpush1.bf16.msra.mxu0 %v5303
  %7656 = vmatprep.subr.bf16.mxu0 %v5308
  %7657 = vmatpush1.bf16.msra.mxu0 %v5307
  %7658 = vmatprep.subr.bf16.mxu0 %v5312
  %7659 = vmatpush1.bf16.msra.mxu0 %v5311
  %7660 = vmatprep.subr.bf16.mxu0 %v5316
  %7661 = vmatpush1.bf16.msra.mxu0 %v5315
  %7662 = vmatprep.subr.bf16.mxu0 %v5320
  %7663 = vmatpush1.bf16.msra.mxu0 %v5319
  %7664 = vmatprep.subr.bf16.mxu0 %v5324
  %7665 = vmatpush1.bf16.msra.mxu0 %v5323
  %7666 = vmatprep.subr.bf16.mxu0 %v5328
  %7667 = vmatpush1.bf16.msra.mxu0 %v5327
  %7668 = vmatprep.subr.bf16.mxu0 %v5332
  %7669 = vmatpush1.bf16.msra.mxu0 %v5331
  %7670 = vmatprep.subr.bf16.mxu0 %v5336
  %7671 = vmatpush1.bf16.msra.mxu0 %v5335
  %7672 = vmatprep.subr.bf16.mxu0 %v5340
  %7673 = vmatpush1.bf16.msra.mxu0 %v5339
  %7674 = vmatprep.subr.bf16.mxu0 %v5344
  %7675 = vmatpush1.bf16.msra.mxu0 %v5343
  %7676 = vmatprep.subr.bf16.mxu0 %v5348
  %7677 = vmatpush1.bf16.msra.mxu0 %v5347
  %7678 = vmatprep.subr.bf16.mxu0 %v5352
  %7679 = vmatpush1.bf16.msra.mxu0 %v5351
  %7680 = vmatprep.mubr.bf16.mxu0 %v1224
  %7681 = vmatmul.mubr.bf16.gmra.mrb[0].mxu0 %v1222
  %v7682 = vpop.f32.mrb[0].mxu0
  %v7683 = vadd.f32 %v7642, %v7682
  %v7684 = vpop.f32.mrb[0].mxu0
  %v7685 = vadd.f32 %v7644, %v7684
  %v7686 = vpop.f32.mrb[0].mxu0
  %v7687 = vpop.f32.mrb[0].mxu0
  %7688 = vdwg.mxu0
  %v7689 = vmax.f32 %v7027, 0.0
  %v7690 = vmax.f32 %v7029, 0.0
  %v7691 = vmax.f32 %v7683, 0.0
  %v7692 = vmax.f32 %v7685, 0.0
  %v7693 = vpack.c.bf16 %v7689, %v7689
  %v7694 = vpack.c.bf16 %v7690, %v7690
  %v7695 = vpack.c.bf16 %v7691, %v7691
  %v7696 = vpack.c.bf16 %v7692, %v7692
  %v7697 = vld [vmem:[%s3] sm:$0xff]
  %v7698 = vld [vmem:[%s3 + $0x8] sm:$0xff]
  %v7699 = vld [vmem:[%s3 + $0x10] sm:$0xff]
  %v7700 = vld [vmem:[%s3 + $0x18] sm:$0xff]
  %v7701 = vld [vmem:[%s3 + $0x20] sm:$0xff]
  %v7702 = vld [vmem:[%s3 + $0x28] sm:$0xff]
  %v7703 = vld [vmem:[%s3 + $0x30] sm:$0xff]
  %v7704 = vld [vmem:[%s3 + $0x38] sm:$0xff]
  %v7705 = vld [vmem:[%s3 + $0x40] sm:$0xff]
  %v7706 = vld [vmem:[%s3 + $0x48] sm:$0xff]
  %v7707 = vld [vmem:[%s3 + $0x50] sm:$0xff]
  %v7708 = vld [vmem:[%s3 + $0x58] sm:$0xff]
  %v7709 = vld [vmem:[%s3 + $0x60] sm:$0xff]
  %v7710 = vld [vmem:[%s3 + $0x68] sm:$0xff]
  %v7711 = vld [vmem:[%s3 + $0x70] sm:$0xff]
  %v7712 = vld [vmem:[%s3 + $0x78] sm:$0xff]
  %v7713 = vld [vmem:[%s3 + $0x80] sm:$0xff]
  %v7714 = vld [vmem:[%s3 + $0x88] sm:$0xff]
  %v7715 = vld [vmem:[%s3 + $0x90] sm:$0xff]
  %v7716 = vld [vmem:[%s3 + $0x98] sm:$0xff]
  %v7717 = vld [vmem:[%s3 + $0xa0] sm:$0xff]
  %v7718 = vld [vmem:[%s3 + $0xa8] sm:$0xff]
  %v7719 = vld [vmem:[%s3 + $0xb0] sm:$0xff]
  %v7720 = vld [vmem:[%s3 + $0xb8] sm:$0xff]
  %v7721 = vld [vmem:[%s3 + $0xc0] sm:$0xff]
  %v7722 = vld [vmem:[%s3 + $0xc8] sm:$0xff]
  %v7723 = vld [vmem:[%s3 + $0xd0] sm:$0xff]
  %v7724 = vld [vmem:[%s3 + $0xd8] sm:$0xff]
  %v7725 = vld [vmem:[%s3 + $0xe0] sm:$0xff]
  %v7726 = vld [vmem:[%s3 + $0xe8] sm:$0xff]
  %v7727 = vld [vmem:[%s3 + $0xf0] sm:$0xff]
  %v7728 = vld [vmem:[%s3 + $0xf8] sm:$0xff]
  %v7729 = vld [vmem:[%s3 + $0x100] sm:$0xff]
  %v7730 = vld [vmem:[%s3 + $0x108] sm:$0xff]
  %v7731 = vld [vmem:[%s3 + $0x110] sm:$0xff]
  %v7732 = vld [vmem:[%s3 + $0x118] sm:$0xff]
  %v7733 = vld [vmem:[%s3 + $0x120] sm:$0xff]
  %v7734 = vld [vmem:[%s3 + $0x128] sm:$0xff]
  %v7735 = vld [vmem:[%s3 + $0x130] sm:$0xff]
  %v7736 = vld [vmem:[%s3 + $0x138] sm:$0xff]
  %v7737 = vld [vmem:[%s3 + $0x140] sm:$0xff]
  %v7738 = vld [vmem:[%s3 + $0x148] sm:$0xff]
  %v7739 = vld [vmem:[%s3 + $0x150] sm:$0xff]
  %v7740 = vld [vmem:[%s3 + $0x158] sm:$0xff]
  %v7741 = vld [vmem:[%s3 + $0x160] sm:$0xff]
  %v7742 = vld [vmem:[%s3 + $0x168] sm:$0xff]
  %v7743 = vld [vmem:[%s3 + $0x170] sm:$0xff]
  %v7744 = vld [vmem:[%s3 + $0x178] sm:$0xff]
  %v7745 = vld [vmem:[%s3 + $0x180] sm:$0xff]
  %v7746 = vld [vmem:[%s3 + $0x188] sm:$0xff]
  %v7747 = vld [vmem:[%s3 + $0x190] sm:$0xff]
  %v7748 = vld [vmem:[%s3 + $0x198] sm:$0xff]
  %v7749 = vld [vmem:[%s3 + $0x1a0] sm:$0xff]
  %v7750 = vld [vmem:[%s3 + $0x1a8] sm:$0xff]
  %v7751 = vld [vmem:[%s3 + $0x1b0] sm:$0xff]
  %v7752 = vld [vmem:[%s3 + $0x1b8] sm:$0xff]
  %v7753 = vld [vmem:[%s3 + $0x1c0] sm:$0xff]
  %v7754 = vld [vmem:[%s3 + $0x1c8] sm:$0xff]
  %v7755 = vld [vmem:[%s3 + $0x1d0] sm:$0xff]
  %v7756 = vld [vmem:[%s3 + $0x1d8] sm:$0xff]
  %v7757 = vld [vmem:[%s3 + $0x1e0] sm:$0xff]
  %v7758 = vld [vmem:[%s3 + $0x1e8] sm:$0xff]
  %v7759 = vld [vmem:[%s3 + $0x1f0] sm:$0xff]
  %v7760 = vld [vmem:[%s3 + $0x1f8] sm:$0xff]
  %v7761 = vld [vmem:[%s3 + $0x200] sm:$0xff]
  %v7762 = vld [vmem:[%s3 + $0x208] sm:$0xff]
  %v7763 = vld [vmem:[%s3 + $0x210] sm:$0xff]
  %v7764 = vld [vmem:[%s3 + $0x218] sm:$0xff]
  %v7765 = vld [vmem:[%s3 + $0x220] sm:$0xff]
  %v7766 = vld [vmem:[%s3 + $0x228] sm:$0xff]
  %v7767 = vld [vmem:[%s3 + $0x230] sm:$0xff]
  %v7768 = vld [vmem:[%s3 + $0x238] sm:$0xff]
  %v7769 = vld [vmem:[%s3 + $0x240] sm:$0xff]
  %v7770 = vld [vmem:[%s3 + $0x248] sm:$0xff]
  %v7771 = vld [vmem:[%s3 + $0x250] sm:$0xff]
  %v7772 = vld [vmem:[%s3 + $0x258] sm:$0xff]
  %v7773 = vld [vmem:[%s3 + $0x260] sm:$0xff]
  %v7774 = vld [vmem:[%s3 + $0x268] sm:$0xff]
  %v7775 = vld [vmem:[%s3 + $0x270] sm:$0xff]
  %v7776 = vld [vmem:[%s3 + $0x278] sm:$0xff]
  %v7777 = vld [vmem:[%s3 + $0x280] sm:$0xff]
  %v7778 = vld [vmem:[%s3 + $0x288] sm:$0xff]
  %v7779 = vld [vmem:[%s3 + $0x290] sm:$0xff]
  %v7780 = vld [vmem:[%s3 + $0x298] sm:$0xff]
  %v7781 = vld [vmem:[%s3 + $0x2a0] sm:$0xff]
  %v7782 = vld [vmem:[%s3 + $0x2a8] sm:$0xff]
  %v7783 = vld [vmem:[%s3 + $0x2b0] sm:$0xff]
  %v7784 = vld [vmem:[%s3 + $0x2b8] sm:$0xff]
  %v7785 = vld [vmem:[%s3 + $0x2c0] sm:$0xff]
  %v7786 = vld [vmem:[%s3 + $0x2c8] sm:$0xff]
  %v7787 = vld [vmem:[%s3 + $0x2d0] sm:$0xff]
  %v7788 = vld [vmem:[%s3 + $0x2d8] sm:$0xff]
  %v7789 = vld [vmem:[%s3 + $0x2e0] sm:$0xff]
  %v7790 = vld [vmem:[%s3 + $0x2e8] sm:$0xff]
  %v7791 = vld [vmem:[%s3 + $0x2f0] sm:$0xff]
  %v7792 = vld [vmem:[%s3 + $0x2f8] sm:$0xff]
  %v7793 = vld [vmem:[%s3 + $0x300] sm:$0xff]
  %v7794 = vld [vmem:[%s3 + $0x308] sm:$0xff]
  %v7795 = vld [vmem:[%s3 + $0x310] sm:$0xff]
  %v7796 = vld [vmem:[%s3 + $0x318] sm:$0xff]
  %v7797 = vld [vmem:[%s3 + $0x320] sm:$0xff]
  %v7798 = vld [vmem:[%s3 + $0x328] sm:$0xff]
  %v7799 = vld [vmem:[%s3 + $0x330] sm:$0xff]
  %v7800 = vld [vmem:[%s3 + $0x338] sm:$0xff]
  %v7801 = vld [vmem:[%s3 + $0x340] sm:$0xff]
  %v7802 = vld [vmem:[%s3 + $0x348] sm:$0xff]
  %v7803 = vld [vmem:[%s3 + $0x350] sm:$0xff]
  %v7804 = vld [vmem:[%s3 + $0x358] sm:$0xff]
  %v7805 = vld [vmem:[%s3 + $0x360] sm:$0xff]
  %v7806 = vld [vmem:[%s3 + $0x368] sm:$0xff]
  %v7807 = vld [vmem:[%s3 + $0x370] sm:$0xff]
  %v7808 = vld [vmem:[%s3 + $0x378] sm:$0xff]
  %v7809 = vld [vmem:[%s3 + $0x380] sm:$0xff]
  %v7810 = vld [vmem:[%s3 + $0x388] sm:$0xff]
  %v7811 = vld [vmem:[%s3 + $0x390] sm:$0xff]
  %v7812 = vld [vmem:[%s3 + $0x398] sm:$0xff]
  %v7813 = vld [vmem:[%s3 + $0x3a0] sm:$0xff]
  %v7814 = vld [vmem:[%s3 + $0x3a8] sm:$0xff]
  %v7815 = vld [vmem:[%s3 + $0x3b0] sm:$0xff]
  %v7816 = vld [vmem:[%s3 + $0x3b8] sm:$0xff]
  %v7817 = vld [vmem:[%s3 + $0x3c0] sm:$0xff]
  %v7818 = vld [vmem:[%s3 + $0x3c8] sm:$0xff]
  %v7819 = vld [vmem:[%s3 + $0x3d0] sm:$0xff]
  %v7820 = vld [vmem:[%s3 + $0x3d8] sm:$0xff]
  %v7821 = vld [vmem:[%s3 + $0x3e0] sm:$0xff]
  %v7822 = vld [vmem:[%s3 + $0x3e8] sm:$0xff]
  %v7823 = vld [vmem:[%s3 + $0x3f0] sm:$0xff]
  %v7824 = vld [vmem:[%s3 + $0x3f8] sm:$0xff]
  %v7825 = vld [vmem:[%s4] sm:$0xf]
  %v7827 = vlaneseq
  %v7828 = vshrl.u32 %v7827, 7
  %v7829 = vsub.s32 0, %v7828
  %v7830 = vrot.slane %v7825, %v7829
  %v7831 = vlaneseq
  %v7832 = vshrl.u32 %v7831, 7
  %v7833 = vsub.s32 1, %v7832
  %v7834 = vrot.slane %v7825, %v7833
  %v7835 = vlaneseq
  %v7836 = vshrl.u32 %v7835, 7
  %v7837 = vsub.s32 2, %v7836
  %v7838 = vrot.slane %v7825, %v7837
  %v7839 = vlaneseq
  %v7840 = vshrl.u32 %v7839, 7
  %v7841 = vsub.s32 3, %v7840
  %v7842 = vrot.slane %v7825, %v7841
  %v7975 = vunpack.c.l.b16 %v7697
  %v7976 = vunpack.c.h.b16 %v7697
  %v7977 = vunpack.c.l.b16 %v7698
  %v7978 = vunpack.c.h.b16 %v7698
  %v7979 = vunpack.c.l.b16 %v7699
  %v7980 = vunpack.c.h.b16 %v7699
  %v7981 = vunpack.c.l.b16 %v7700
  %v7982 = vunpack.c.h.b16 %v7700
  %v7983 = vunpack.c.l.b16 %v7701
  %v7984 = vunpack.c.h.b16 %v7701
  %v7985 = vunpack.c.l.b16 %v7702
  %v7986 = vunpack.c.h.b16 %v7702
  %v7987 = vunpack.c.l.b16 %v7703
  %v7988 = vunpack.c.h.b16 %v7703
  %v7989 = vunpack.c.l.b16 %v7704
  %v7990 = vunpack.c.h.b16 %v7704
  %v7991 = vunpack.c.l.b16 %v7705
  %v7992 = vunpack.c.h.b16 %v7705
  %v7993 = vunpack.c.l.b16 %v7706
  %v7994 = vunpack.c.h.b16 %v7706
  %v7995 = vunpack.c.l.b16 %v7707
  %v7996 = vunpack.c.h.b16 %v7707
  %v7997 = vunpack.c.l.b16 %v7708
  %v7998 = vunpack.c.h.b16 %v7708
  %v7999 = vunpack.c.l.b16 %v7709
  %v8000 = vunpack.c.h.b16 %v7709
  %v8001 = vunpack.c.l.b16 %v7710
  %v8002 = vunpack.c.h.b16 %v7710
  %v8003 = vunpack.c.l.b16 %v7711
  %v8004 = vunpack.c.h.b16 %v7711
  %v8005 = vunpack.c.l.b16 %v7712
  %v8006 = vunpack.c.h.b16 %v7712
  %v8007 = vunpack.c.l.b16 %v7713
  %v8008 = vunpack.c.h.b16 %v7713
  %v8009 = vunpack.c.l.b16 %v7714
  %v8010 = vunpack.c.h.b16 %v7714
  %v8011 = vunpack.c.l.b16 %v7715
  %v8012 = vunpack.c.h.b16 %v7715
  %v8013 = vunpack.c.l.b16 %v7716
  %v8014 = vunpack.c.h.b16 %v7716
  %v8015 = vunpack.c.l.b16 %v7717
  %v8016 = vunpack.c.h.b16 %v7717
  %v8017 = vunpack.c.l.b16 %v7718
  %v8018 = vunpack.c.h.b16 %v7718
  %v8019 = vunpack.c.l.b16 %v7719
  %v8020 = vunpack.c.h.b16 %v7719
  %v8021 = vunpack.c.l.b16 %v7720
  %v8022 = vunpack.c.h.b16 %v7720
  %v8023 = vunpack.c.l.b16 %v7721
  %v8024 = vunpack.c.h.b16 %v7721
  %v8025 = vunpack.c.l.b16 %v7722
  %v8026 = vunpack.c.h.b16 %v7722
  %v8027 = vunpack.c.l.b16 %v7723
  %v8028 = vunpack.c.h.b16 %v7723
  %v8029 = vunpack.c.l.b16 %v7724
  %v8030 = vunpack.c.h.b16 %v7724
  %v8031 = vunpack.c.l.b16 %v7725
  %v8032 = vunpack.c.h.b16 %v7725
  %v8033 = vunpack.c.l.b16 %v7726
  %v8034 = vunpack.c.h.b16 %v7726
  %v8035 = vunpack.c.l.b16 %v7727
  %v8036 = vunpack.c.h.b16 %v7727
  %v8037 = vunpack.c.l.b16 %v7728
  %v8038 = vunpack.c.h.b16 %v7728
  %v8039 = vunpack.c.l.b16 %v7729
  %v8040 = vunpack.c.h.b16 %v7729
  %v8041 = vunpack.c.l.b16 %v7730
  %v8042 = vunpack.c.h.b16 %v7730
  %v8043 = vunpack.c.l.b16 %v7731
  %v8044 = vunpack.c.h.b16 %v7731
  %v8045 = vunpack.c.l.b16 %v7732
  %v8046 = vunpack.c.h.b16 %v7732
  %v8047 = vunpack.c.l.b16 %v7733
  %v8048 = vunpack.c.h.b16 %v7733
  %v8049 = vunpack.c.l.b16 %v7734
  %v8050 = vunpack.c.h.b16 %v7734
  %v8051 = vunpack.c.l.b16 %v7735
  %v8052 = vunpack.c.h.b16 %v7735
  %v8053 = vunpack.c.l.b16 %v7736
  %v8054 = vunpack.c.h.b16 %v7736
  %v8055 = vunpack.c.l.b16 %v7737
  %v8056 = vunpack.c.h.b16 %v7737
  %v8057 = vunpack.c.l.b16 %v7738
  %v8058 = vunpack.c.h.b16 %v7738
  %v8059 = vunpack.c.l.b16 %v7739
  %v8060 = vunpack.c.h.b16 %v7739
  %v8061 = vunpack.c.l.b16 %v7740
  %v8062 = vunpack.c.h.b16 %v7740
  %v8063 = vunpack.c.l.b16 %v7741
  %v8064 = vunpack.c.h.b16 %v7741
  %v8065 = vunpack.c.l.b16 %v7742
  %v8066 = vunpack.c.h.b16 %v7742
  %v8067 = vunpack.c.l.b16 %v7743
  %v8068 = vunpack.c.h.b16 %v7743
  %v8069 = vunpack.c.l.b16 %v7744
  %v8070 = vunpack.c.h.b16 %v7744
  %v8071 = vunpack.c.l.b16 %v7745
  %v8072 = vunpack.c.h.b16 %v7745
  %v8073 = vunpack.c.l.b16 %v7746
  %v8074 = vunpack.c.h.b16 %v7746
  %v8075 = vunpack.c.l.b16 %v7747
  %v8076 = vunpack.c.h.b16 %v7747
  %v8077 = vunpack.c.l.b16 %v7748
  %v8078 = vunpack.c.h.b16 %v7748
  %v8079 = vunpack.c.l.b16 %v7749
  %v8080 = vunpack.c.h.b16 %v7749
  %v8081 = vunpack.c.l.b16 %v7750
  %v8082 = vunpack.c.h.b16 %v7750
  %v8083 = vunpack.c.l.b16 %v7751
  %v8084 = vunpack.c.h.b16 %v7751
  %v8085 = vunpack.c.l.b16 %v7752
  %v8086 = vunpack.c.h.b16 %v7752
  %v8087 = vunpack.c.l.b16 %v7753
  %v8088 = vunpack.c.h.b16 %v7753
  %v8089 = vunpack.c.l.b16 %v7754
  %v8090 = vunpack.c.h.b16 %v7754
  %v8091 = vunpack.c.l.b16 %v7755
  %v8092 = vunpack.c.h.b16 %v7755
  %v8093 = vunpack.c.l.b16 %v7756
  %v8094 = vunpack.c.h.b16 %v7756
  %v8095 = vunpack.c.l.b16 %v7757
  %v8096 = vunpack.c.h.b16 %v7757
  %v8097 = vunpack.c.l.b16 %v7758
  %v8098 = vunpack.c.h.b16 %v7758
  %v8099 = vunpack.c.l.b16 %v7759
  %v8100 = vunpack.c.h.b16 %v7759
  %v8101 = vunpack.c.l.b16 %v7760
  %v8102 = vunpack.c.h.b16 %v7760
  %v8103 = vunpack.c.l.b16 %v7761
  %v8104 = vunpack.c.h.b16 %v7761
  %v8105 = vunpack.c.l.b16 %v7762
  %v8106 = vunpack.c.h.b16 %v7762
  %v8107 = vunpack.c.l.b16 %v7763
  %v8108 = vunpack.c.h.b16 %v7763
  %v8109 = vunpack.c.l.b16 %v7764
  %v8110 = vunpack.c.h.b16 %v7764
  %v8111 = vunpack.c.l.b16 %v7765
  %v8112 = vunpack.c.h.b16 %v7765
  %v8113 = vunpack.c.l.b16 %v7766
  %v8114 = vunpack.c.h.b16 %v7766
  %v8115 = vunpack.c.l.b16 %v7767
  %v8116 = vunpack.c.h.b16 %v7767
  %v8117 = vunpack.c.l.b16 %v7768
  %v8118 = vunpack.c.h.b16 %v7768
  %v8119 = vunpack.c.l.b16 %v7769
  %v8120 = vunpack.c.h.b16 %v7769
  %v8121 = vunpack.c.l.b16 %v7770
  %v8122 = vunpack.c.h.b16 %v7770
  %v8123 = vunpack.c.l.b16 %v7771
  %v8124 = vunpack.c.h.b16 %v7771
  %v8125 = vunpack.c.l.b16 %v7772
  %v8126 = vunpack.c.h.b16 %v7772
  %v8127 = vunpack.c.l.b16 %v7773
  %v8128 = vunpack.c.h.b16 %v7773
  %v8129 = vunpack.c.l.b16 %v7774
  %v8130 = vunpack.c.h.b16 %v7774
  %v8131 = vunpack.c.l.b16 %v7775
  %v8132 = vunpack.c.h.b16 %v7775
  %v8133 = vunpack.c.l.b16 %v7776
  %v8134 = vunpack.c.h.b16 %v7776
  %v8135 = vunpack.c.l.b16 %v7777
  %v8136 = vunpack.c.h.b16 %v7777
  %v8137 = vunpack.c.l.b16 %v7778
  %v8138 = vunpack.c.h.b16 %v7778
  %v8139 = vunpack.c.l.b16 %v7779
  %v8140 = vunpack.c.h.b16 %v7779
  %v8141 = vunpack.c.l.b16 %v7780
  %v8142 = vunpack.c.h.b16 %v7780
  %v8143 = vunpack.c.l.b16 %v7781
  %v8144 = vunpack.c.h.b16 %v7781
  %v8145 = vunpack.c.l.b16 %v7782
  %v8146 = vunpack.c.h.b16 %v7782
  %v8147 = vunpack.c.l.b16 %v7783
  %v8148 = vunpack.c.h.b16 %v7783
  %v8149 = vunpack.c.l.b16 %v7784
  %v8150 = vunpack.c.h.b16 %v7784
  %v8151 = vunpack.c.l.b16 %v7785
  %v8152 = vunpack.c.h.b16 %v7785
  %v8153 = vunpack.c.l.b16 %v7786
  %v8154 = vunpack.c.h.b16 %v7786
  %v8155 = vunpack.c.l.b16 %v7787
  %v8156 = vunpack.c.h.b16 %v7787
  %v8157 = vunpack.c.l.b16 %v7788
  %v8158 = vunpack.c.h.b16 %v7788
  %v8159 = vunpack.c.l.b16 %v7789
  %v8160 = vunpack.c.h.b16 %v7789
  %v8161 = vunpack.c.l.b16 %v7790
  %v8162 = vunpack.c.h.b16 %v7790
  %v8163 = vunpack.c.l.b16 %v7791
  %v8164 = vunpack.c.h.b16 %v7791
  %v8165 = vunpack.c.l.b16 %v7792
  %v8166 = vunpack.c.h.b16 %v7792
  %v8167 = vunpack.c.l.b16 %v7793
  %v8168 = vunpack.c.h.b16 %v7793
  %v8169 = vunpack.c.l.b16 %v7794
  %v8170 = vunpack.c.h.b16 %v7794
  %v8171 = vunpack.c.l.b16 %v7795
  %v8172 = vunpack.c.h.b16 %v7795
  %v8173 = vunpack.c.l.b16 %v7796
  %v8174 = vunpack.c.h.b16 %v7796
  %v8175 = vunpack.c.l.b16 %v7797
  %v8176 = vunpack.c.h.b16 %v7797
  %v8177 = vunpack.c.l.b16 %v7798
  %v8178 = vunpack.c.h.b16 %v7798
  %v8179 = vunpack.c.l.b16 %v7799
  %v8180 = vunpack.c.h.b16 %v7799
  %v8181 = vunpack.c.l.b16 %v7800
  %v8182 = vunpack.c.h.b16 %v7800
  %v8183 = vunpack.c.l.b16 %v7801
  %v8184 = vunpack.c.h.b16 %v7801
  %v8185 = vunpack.c.l.b16 %v7802
  %v8186 = vunpack.c.h.b16 %v7802
  %v8187 = vunpack.c.l.b16 %v7803
  %v8188 = vunpack.c.h.b16 %v7803
  %v8189 = vunpack.c.l.b16 %v7804
  %v8190 = vunpack.c.h.b16 %v7804
  %v8191 = vunpack.c.l.b16 %v7805
  %v8192 = vunpack.c.h.b16 %v7805
  %v8193 = vunpack.c.l.b16 %v7806
  %v8194 = vunpack.c.h.b16 %v7806
  %v8195 = vunpack.c.l.b16 %v7807
  %v8196 = vunpack.c.h.b16 %v7807
  %v8197 = vunpack.c.l.b16 %v7808
  %v8198 = vunpack.c.h.b16 %v7808
  %v8199 = vunpack.c.l.b16 %v7809
  %v8200 = vunpack.c.h.b16 %v7809
  %v8201 = vunpack.c.l.b16 %v7810
  %v8202 = vunpack.c.h.b16 %v7810
  %v8203 = vunpack.c.l.b16 %v7811
  %v8204 = vunpack.c.h.b16 %v7811
  %v8205 = vunpack.c.l.b16 %v7812
  %v8206 = vunpack.c.h.b16 %v7812
  %v8207 = vunpack.c.l.b16 %v7813
  %v8208 = vunpack.c.h.b16 %v7813
  %v8209 = vunpack.c.l.b16 %v7814
  %v8210 = vunpack.c.h.b16 %v7814
  %v8211 = vunpack.c.l.b16 %v7815
  %v8212 = vunpack.c.h.b16 %v7815
  %v8213 = vunpack.c.l.b16 %v7816
  %v8214 = vunpack.c.h.b16 %v7816
  %v8215 = vunpack.c.l.b16 %v7817
  %v8216 = vunpack.c.h.b16 %v7817
  %v8217 = vunpack.c.l.b16 %v7818
  %v8218 = vunpack.c.h.b16 %v7818
  %v8219 = vunpack.c.l.b16 %v7819
  %v8220 = vunpack.c.h.b16 %v7819
  %v8221 = vunpack.c.l.b16 %v7820
  %v8222 = vunpack.c.h.b16 %v7820
  %v8223 = vunpack.c.l.b16 %v7821
  %v8224 = vunpack.c.h.b16 %v7821
  %v8225 = vunpack.c.l.b16 %v7822
  %v8226 = vunpack.c.h.b16 %v7822
  %v8227 = vunpack.c.l.b16 %v7823
  %v8228 = vunpack.c.h.b16 %v7823
  %v8229 = vunpack.c.l.b16 %v7824
  %v8230 = vunpack.c.h.b16 %v7824
  %v8231 = vpack.c.b16 %v7979, %v7975
  %v8232 = vpack.c.b16 %v7980, %v7976
  %v8233 = vpack.c.b16 %v7981, %v7977
  %v8234 = vpack.c.b16 %v7982, %v7978
  %v8235 = vpack.c.b16 %v7987, %v7983
  %v8236 = vpack.c.b16 %v7988, %v7984
  %v8237 = vpack.c.b16 %v7989, %v7985
  %v8238 = vpack.c.b16 %v7990, %v7986
  %v8239 = vpack.c.b16 %v7995, %v7991
  %v8240 = vpack.c.b16 %v7996, %v7992
  %v8241 = vpack.c.b16 %v7997, %v7993
  %v8242 = vpack.c.b16 %v7998, %v7994
  %v8243 = vpack.c.b16 %v8003, %v7999
  %v8244 = vpack.c.b16 %v8004, %v8000
  %v8245 = vpack.c.b16 %v8005, %v8001
  %v8246 = vpack.c.b16 %v8006, %v8002
  %v8247 = vpack.c.b16 %v8011, %v8007
  %v8248 = vpack.c.b16 %v8012, %v8008
  %v8249 = vpack.c.b16 %v8013, %v8009
  %v8250 = vpack.c.b16 %v8014, %v8010
  %v8251 = vpack.c.b16 %v8019, %v8015
  %v8252 = vpack.c.b16 %v8020, %v8016
  %v8253 = vpack.c.b16 %v8021, %v8017
  %v8254 = vpack.c.b16 %v8022, %v8018
  %v8255 = vpack.c.b16 %v8027, %v8023
  %v8256 = vpack.c.b16 %v8028, %v8024
  %v8257 = vpack.c.b16 %v8029, %v8025
  %v8258 = vpack.c.b16 %v8030, %v8026
  %v8259 = vpack.c.b16 %v8035, %v8031
  %v8260 = vpack.c.b16 %v8036, %v8032
  %v8261 = vpack.c.b16 %v8037, %v8033
  %v8262 = vpack.c.b16 %v8038, %v8034
  %v8263 = vpack.c.b16 %v8043, %v8039
  %v8264 = vpack.c.b16 %v8044, %v8040
  %v8265 = vpack.c.b16 %v8045, %v8041
  %v8266 = vpack.c.b16 %v8046, %v8042
  %v8267 = vpack.c.b16 %v8051, %v8047
  %v8268 = vpack.c.b16 %v8052, %v8048
  %v8269 = vpack.c.b16 %v8053, %v8049
  %v8270 = vpack.c.b16 %v8054, %v8050
  %v8271 = vpack.c.b16 %v8059, %v8055
  %v8272 = vpack.c.b16 %v8060, %v8056
  %v8273 = vpack.c.b16 %v8061, %v8057
  %v8274 = vpack.c.b16 %v8062, %v8058
  %v8275 = vpack.c.b16 %v8067, %v8063
  %v8276 = vpack.c.b16 %v8068, %v8064
  %v8277 = vpack.c.b16 %v8069, %v8065
  %v8278 = vpack.c.b16 %v8070, %v8066
  %v8279 = vpack.c.b16 %v8075, %v8071
  %v8280 = vpack.c.b16 %v8076, %v8072
  %v8281 = vpack.c.b16 %v8077, %v8073
  %v8282 = vpack.c.b16 %v8078, %v8074
  %v8283 = vpack.c.b16 %v8083, %v8079
  %v8284 = vpack.c.b16 %v8084, %v8080
  %v8285 = vpack.c.b16 %v8085, %v8081
  %v8286 = vpack.c.b16 %v8086, %v8082
  %v8287 = vpack.c.b16 %v8091, %v8087
  %v8288 = vpack.c.b16 %v8092, %v8088
  %v8289 = vpack.c.b16 %v8093, %v8089
  %v8290 = vpack.c.b16 %v8094, %v8090
  %v8291 = vpack.c.b16 %v8099, %v8095
  %v8292 = vpack.c.b16 %v8100, %v8096
  %v8293 = vpack.c.b16 %v8101, %v8097
  %v8294 = vpack.c.b16 %v8102, %v8098
  %v8295 = vpack.c.b16 %v8107, %v8103
  %v8296 = vpack.c.b16 %v8108, %v8104
  %v8297 = vpack.c.b16 %v8109, %v8105
  %v8298 = vpack.c.b16 %v8110, %v8106
  %v8299 = vpack.c.b16 %v8115, %v8111
  %v8300 = vpack.c.b16 %v8116, %v8112
  %v8301 = vpack.c.b16 %v8117, %v8113
  %v8302 = vpack.c.b16 %v8118, %v8114
  %v8303 = vpack.c.b16 %v8123, %v8119
  %v8304 = vpack.c.b16 %v8124, %v8120
  %v8305 = vpack.c.b16 %v8125, %v8121
  %v8306 = vpack.c.b16 %v8126, %v8122
  %v8307 = vpack.c.b16 %v8131, %v8127
  %v8308 = vpack.c.b16 %v8132, %v8128
  %v8309 = vpack.c.b16 %v8133, %v8129
  %v8310 = vpack.c.b16 %v8134, %v8130
  %v8311 = vpack.c.b16 %v8139, %v8135
  %v8312 = vpack.c.b16 %v8140, %v8136
  %v8313 = vpack.c.b16 %v8141, %v8137
  %v8314 = vpack.c.b16 %v8142, %v8138
  %v8315 = vpack.c.b16 %v8147, %v8143
  %v8316 = vpack.c.b16 %v8148, %v8144
  %v8317 = vpack.c.b16 %v8149, %v8145
  %v8318 = vpack.c.b16 %v8150, %v8146
  %v8319 = vpack.c.b16 %v8155, %v8151
  %v8320 = vpack.c.b16 %v8156, %v8152
  %v8321 = vpack.c.b16 %v8157, %v8153
  %v8322 = vpack.c.b16 %v8158, %v8154
  %v8323 = vpack.c.b16 %v8163, %v8159
  %v8324 = vpack.c.b16 %v8164, %v8160
  %v8325 = vpack.c.b16 %v8165, %v8161
  %v8326 = vpack.c.b16 %v8166, %v8162
  %v8327 = vpack.c.b16 %v8171, %v8167
  %v8328 = vpack.c.b16 %v8172, %v8168
  %v8329 = vpack.c.b16 %v8173, %v8169
  %v8330 = vpack.c.b16 %v8174, %v8170
  %v8331 = vpack.c.b16 %v8179, %v8175
  %v8332 = vpack.c.b16 %v8180, %v8176
  %v8333 = vpack.c.b16 %v8181, %v8177
  %v8334 = vpack.c.b16 %v8182, %v8178
  %v8335 = vpack.c.b16 %v8187, %v8183
  %v8336 = vpack.c.b16 %v8188, %v8184
  %v8337 = vpack.c.b16 %v8189, %v8185
  %v8338 = vpack.c.b16 %v8190, %v8186
  %v8339 = vpack.c.b16 %v8195, %v8191
  %v8340 = vpack.c.b16 %v8196, %v8192
  %v8341 = vpack.c.b16 %v8197, %v8193
  %v8342 = vpack.c.b16 %v8198, %v8194
  %v8343 = vpack.c.b16 %v8203, %v8199
  %v8344 = vpack.c.b16 %v8204, %v8200
  %v8345 = vpack.c.b16 %v8205, %v8201
  %v8346 = vpack.c.b16 %v8206, %v8202
  %v8347 = vpack.c.b16 %v8211, %v8207
  %v8348 = vpack.c.b16 %v8212, %v8208
  %v8349 = vpack.c.b16 %v8213, %v8209
  %v8350 = vpack.c.b16 %v8214, %v8210
  %v8351 = vpack.c.b16 %v8219, %v8215
  %v8352 = vpack.c.b16 %v8220, %v8216
  %v8353 = vpack.c.b16 %v8221, %v8217
  %v8354 = vpack.c.b16 %v8222, %v8218
  %v8355 = vpack.c.b16 %v8227, %v8223
  %v8356 = vpack.c.b16 %v8228, %v8224
  %v8357 = vpack.c.b16 %v8229, %v8225
  %v8358 = vpack.c.b16 %v8230, %v8226
  %8487 = vmatprep.subr.bf16.mxu0 %v8232
  %8488 = vmatpush1.bf16.msra.mxu0 %v8231
  %8489 = vmatprep.subr.bf16.mxu0 %v8236
  %8490 = vmatpush1.bf16.msra.mxu0 %v8235
  %8491 = vmatprep.subr.bf16.mxu0 %v8240
  %8492 = vmatpush1.bf16.msra.mxu0 %v8239
  %8493 = vmatprep.subr.bf16.mxu0 %v8244
  %8494 = vmatpush1.bf16.msra.mxu0 %v8243
  %8495 = vmatprep.subr.bf16.mxu0 %v8248
  %8496 = vmatpush1.bf16.msra.mxu0 %v8247
  %8497 = vmatprep.subr.bf16.mxu0 %v8252
  %8498 = vmatpush1.bf16.msra.mxu0 %v8251
  %8499 = vmatprep.subr.bf16.mxu0 %v8256
  %8500 = vmatpush1.bf16.msra.mxu0 %v8255
  %8501 = vmatprep.subr.bf16.mxu0 %v8260
  %8502 = vmatpush1.bf16.msra.mxu0 %v8259
  %8503 = vmatprep.subr.bf16.mxu0 %v8264
  %8504 = vmatpush1.bf16.msra.mxu0 %v8263
  %8505 = vmatprep.subr.bf16.mxu0 %v8268
  %8506 = vmatpush1.bf16.msra.mxu0 %v8267
  %8507 = vmatprep.subr.bf16.mxu0 %v8272
  %8508 = vmatpush1.bf16.msra.mxu0 %v8271
  %8509 = vmatprep.subr.bf16.mxu0 %v8276
  %8510 = vmatpush1.bf16.msra.mxu0 %v8275
  %8511 = vmatprep.subr.bf16.mxu0 %v8280
  %8512 = vmatpush1.bf16.msra.mxu0 %v8279
  %8513 = vmatprep.subr.bf16.mxu0 %v8284
  %8514 = vmatpush1.bf16.msra.mxu0 %v8283
  %8515 = vmatprep.subr.bf16.mxu0 %v8288
  %8516 = vmatpush1.bf16.msra.mxu0 %v8287
  %8517 = vmatprep.subr.bf16.mxu0 %v8292
  %8518 = vmatpush1.bf16.msra.mxu0 %v8291
  %8519 = vmatprep.mubr.bf16.mxu0 %v7694
  %8520 = vmatmul.mubr.bf16.gmra.mrb[0].mxu0 %v7693
  %v8521 = vpop.f32.mrb[0].mxu0
  %v8522 = vadd.f32 %v7830, %v8521
  %v8523 = vpop.f32.mrb[0].mxu0
  %v8524 = vadd.f32 %v7834, %v8523
  %v8525 = vpop.f32.mrb[0].mxu0
  %v8526 = vpop.f32.mrb[0].mxu0
  %8527 = vdwg.mxu0
  %8528 = vmatprep.subr.bf16.mxu0 %v8296
  %8529 = vmatpush1.bf16.msra.mxu0 %v8295
  %8530 = vmatprep.subr.bf16.mxu0 %v8300
  %8531 = vmatpush1.bf16.msra.mxu0 %v8299
  %8532 = vmatprep.subr.bf16.mxu0 %v8304
  %8533 = vmatpush1.bf16.msra.mxu0 %v8303
  %8534 = vmatprep.subr.bf16.mxu0 %v8308
  %8535 = vmatpush1.bf16.msra.mxu0 %v8307
  %8536 = vmatprep.subr.bf16.mxu0 %v8312
  %8537 = vmatpush1.bf16.msra.mxu0 %v8311
  %8538 = vmatprep.subr.bf16.mxu0 %v8316
  %8539 = vmatpush1.bf16.msra.mxu0 %v8315
  %8540 = vmatprep.subr.bf16.mxu0 %v8320
  %8541 = vmatpush1.bf16.msra.mxu0 %v8319
  %8542 = vmatprep.subr.bf16.mxu0 %v8324
  %8543 = vmatpush1.bf16.msra.mxu0 %v8323
  %8544 = vmatprep.subr.bf16.mxu0 %v8328
  %8545 = vmatpush1.bf16.msra.mxu0 %v8327
  %8546 = vmatprep.subr.bf16.mxu0 %v8332
  %8547 = vmatpush1.bf16.msra.mxu0 %v8331
  %8548 = vmatprep.subr.bf16.mxu0 %v8336
  %8549 = vmatpush1.bf16.msra.mxu0 %v8335
  %8550 = vmatprep.subr.bf16.mxu0 %v8340
  %8551 = vmatpush1.bf16.msra.mxu0 %v8339
  %8552 = vmatprep.subr.bf16.mxu0 %v8344
  %8553 = vmatpush1.bf16.msra.mxu0 %v8343
  %8554 = vmatprep.subr.bf16.mxu0 %v8348
  %8555 = vmatpush1.bf16.msra.mxu0 %v8347
  %8556 = vmatprep.subr.bf16.mxu0 %v8352
  %8557 = vmatpush1.bf16.msra.mxu0 %v8351
  %8558 = vmatprep.subr.bf16.mxu0 %v8356
  %8559 = vmatpush1.bf16.msra.mxu0 %v8355
  %8560 = vmatprep.mubr.bf16.mxu0 %v7696
  %8561 = vmatmul.mubr.bf16.gmra.mrb[0].mxu0 %v7695
  %v8562 = vpop.f32.mrb[0].mxu0
  %v8563 = vadd.f32 %v8522, %v8562
  %v8564 = vpop.f32.mrb[0].mxu0
  %v8565 = vadd.f32 %v8524, %v8564
  %v8566 = vpop.f32.mrb[0].mxu0
  %v8567 = vpop.f32.mrb[0].mxu0
  %8568 = vdwg.mxu0
  %8569 = vmatprep.subr.bf16.mxu0 %v8234
  %8570 = vmatpush1.bf16.msra.mxu0 %v8233
  %8571 = vmatprep.subr.bf16.mxu0 %v8238
  %8572 = vmatpush1.bf16.msra.mxu0 %v8237
  %8573 = vmatprep.subr.bf16.mxu0 %v8242
  %8574 = vmatpush1.bf16.msra.mxu0 %v8241
  %8575 = vmatprep.subr.bf16.mxu0 %v8246
  %8576 = vmatpush1.bf16.msra.mxu0 %v8245
  %8577 = vmatprep.subr.bf16.mxu0 %v8250
  %8578 = vmatpush1.bf16.msra.mxu0 %v8249
  %8579 = vmatprep.subr.bf16.mxu0 %v8254
  %8580 = vmatpush1.bf16.msra.mxu0 %v8253
  %8581 = vmatprep.subr.bf16.mxu0 %v8258
  %8582 = vmatpush1.bf16.msra.mxu0 %v8257
  %8583 = vmatprep.subr.bf16.mxu0 %v8262
  %8584 = vmatpush1.bf16.msra.mxu0 %v8261
  %8585 = vmatprep.subr.bf16.mxu0 %v8266
  %8586 = vmatpush1.bf16.msra.mxu0 %v8265
  %8587 = vmatprep.subr.bf16.mxu0 %v8270
  %8588 = vmatpush1.bf16.msra.mxu0 %v8269
  %8589 = vmatprep.subr.bf16.mxu0 %v8274
  %8590 = vmatpush1.bf16.msra.mxu0 %v8273
  %8591 = vmatprep.subr.bf16.mxu0 %v8278
  %8592 = vmatpush1.bf16.msra.mxu0 %v8277
  %8593 = vmatprep.subr.bf16.mxu0 %v8282
  %8594 = vmatpush1.bf16.msra.mxu0 %v8281
  %8595 = vmatprep.subr.bf16.mxu0 %v8286
  %8596 = vmatpush1.bf16.msra.mxu0 %v8285
  %8597 = vmatprep.subr.bf16.mxu0 %v8290
  %8598 = vmatpush1.bf16.msra.mxu0 %v8289
  %8599 = vmatprep.subr.bf16.mxu0 %v8294
  %8600 = vmatpush1.bf16.msra.mxu0 %v8293
  %8601 = vmatprep.mubr.bf16.mxu0 %v7694
  %8602 = vmatmul.mubr.bf16.gmra.mrb[0].mxu0 %v7693
  %v8603 = vpop.f32.mrb[0].mxu0
  %v8604 = vadd.f32 %v7838, %v8603
  %v8605 = vpop.f32.mrb[0].mxu0
  %v8606 = vadd.f32 %v7842, %v8605
  %v8607 = vpop.f32.mrb[0].mxu0
  %v8608 = vpop.f32.mrb[0].mxu0
  %8609 = vdwg.mxu0
  %8610 = vmatprep.subr.bf16.mxu0 %v8298
  %8611 = vmatpush1.bf16.msra.mxu0 %v8297
  %8612 = vmatprep.subr.bf16.mxu0 %v8302
  %8613 = vmatpush1.bf16.msra.mxu0 %v8301
  %8614 = vmatprep.subr.bf16.mxu0 %v8306
  %8615 = vmatpush1.bf16.msra.mxu0 %v8305
  %8616 = vmatprep.subr.bf16.mxu0 %v8310
  %8617 = vmatpush1.bf16.msra.mxu0 %v8309
  %8618 = vmatprep.subr.bf16.mxu0 %v8314
  %8619 = vmatpush1.bf16.msra.mxu0 %v8313
  %8620 = vmatprep.subr.bf16.mxu0 %v8318
  %8621 = vmatpush1.bf16.msra.mxu0 %v8317
  %8622 = vmatprep.subr.bf16.mxu0 %v8322
  %8623 = vmatpush1.bf16.msra.mxu0 %v8321
  %8624 = vmatprep.subr.bf16.mxu0 %v8326
  %8625 = vmatpush1.bf16.msra.mxu0 %v8325
  %8626 = vmatprep.subr.bf16.mxu0 %v8330
  %8627 = vmatpush1.bf16.msra.mxu0 %v8329
  %8628 = vmatprep.subr.bf16.mxu0 %v8334
  %8629 = vmatpush1.bf16.msra.mxu0 %v8333
  %8630 = vmatprep.subr.bf16.mxu0 %v8338
  %8631 = vmatpush1.bf16.msra.mxu0 %v8337
  %8632 = vmatprep.subr.bf16.mxu0 %v8342
  %8633 = vmatpush1.bf16.msra.mxu0 %v8341
  %8634 = vmatprep.subr.bf16.mxu0 %v8346
  %8635 = vmatpush1.bf16.msra.mxu0 %v8345
  %8636 = vmatprep.subr.bf16.mxu0 %v8350
  %8637 = vmatpush1.bf16.msra.mxu0 %v8349
  %8638 = vmatprep.subr.bf16.mxu0 %v8354
  %8639 = vmatpush1.bf16.msra.mxu0 %v8353
  %8640 = vmatprep.subr.bf16.mxu0 %v8358
  %8641 = vmatpush1.bf16.msra.mxu0 %v8357
  %8642 = vmatprep.mubr.bf16.mxu0 %v7696
  %8643 = vmatmul.mubr.bf16.gmra.mrb[0].mxu0 %v7695
  %v8644 = vpop.f32.mrb[0].mxu0
  %v8645 = vadd.f32 %v8604, %v8644
  %v8646 = vpop.f32.mrb[0].mxu0
  %v8647 = vadd.f32 %v8606, %v8646
  %v8648 = vpop.f32.mrb[0].mxu0
  %v8649 = vpop.f32.mrb[0].mxu0
  %8650 = vdwg.mxu0
  %v8651 = vmax.f32 %v8563, 0.0
  %v8652 = vmax.f32 %v8565, 0.0
  %v8653 = vmax.f32 %v8645, 0.0
  %v8654 = vmax.f32 %v8647, 0.0
  %v8655 = vpack.c.bf16 %v8651, %v8651
  %v8656 = vpack.c.bf16 %v8652, %v8652
  %v8657 = vpack.c.bf16 %v8653, %v8653
  %v8658 = vpack.c.bf16 %v8654, %v8654
  %v8659 = vld [vmem:[%s5] sm:$0xf]
  %v8660 = vld [vmem:[%s5 + $0x4] sm:$0xf]
  %v8661 = vld [vmem:[%s5 + $0x8] sm:$0xf]
  %v8662 = vld [vmem:[%s5 + $0xc] sm:$0xf]
  %v8663 = vld [vmem:[%s5 + $0x10] sm:$0xf]
  %v8664 = vld [vmem:[%s5 + $0x14] sm:$0xf]
  %v8665 = vld [vmem:[%s5 + $0x18] sm:$0xf]
  %v8666 = vld [vmem:[%s5 + $0x1c] sm:$0xf]
  %v8667 = vld [vmem:[%s5 + $0x20] sm:$0xf]
  %v8668 = vld [vmem:[%s5 + $0x24] sm:$0xf]
  %v8669 = vld [vmem:[%s5 + $0x28] sm:$0xf]
  %v8670 = vld [vmem:[%s5 + $0x2c] sm:$0xf]
  %v8671 = vld [vmem:[%s5 + $0x30] sm:$0xf]
  %v8672 = vld [vmem:[%s5 + $0x34] sm:$0xf]
  %v8673 = vld [vmem:[%s5 + $0x38] sm:$0xf]
  %v8674 = vld [vmem:[%s5 + $0x3c] sm:$0xf]
  %v8675 = vld [vmem:[%s5 + $0x40] sm:$0xf]
  %v8676 = vld [vmem:[%s5 + $0x44] sm:$0xf]
  %v8677 = vld [vmem:[%s5 + $0x48] sm:$0xf]
  %v8678 = vld [vmem:[%s5 + $0x4c] sm:$0xf]
  %v8679 = vld [vmem:[%s5 + $0x50] sm:$0xf]
  %v8680 = vld [vmem:[%s5 + $0x54] sm:$0xf]
  %v8681 = vld [vmem:[%s5 + $0x58] sm:$0xf]
  %v8682 = vld [vmem:[%s5 + $0x5c] sm:$0xf]
  %v8683 = vld [vmem:[%s5 + $0x60] sm:$0xf]
  %v8684 = vld [vmem:[%s5 + $0x64] sm:$0xf]
  %v8685 = vld [vmem:[%s5 + $0x68] sm:$0xf]
  %v8686 = vld [vmem:[%s5 + $0x6c] sm:$0xf]
  %v8687 = vld [vmem:[%s5 + $0x70] sm:$0xf]
  %v8688 = vld [vmem:[%s5 + $0x74] sm:$0xf]
  %v8689 = vld [vmem:[%s5 + $0x78] sm:$0xf]
  %v8690 = vld [vmem:[%s5 + $0x7c] sm:$0xf]
  %v8691 = vld [vmem:[%s5 + $0x80] sm:$0xf]
  %v8692 = vld [vmem:[%s5 + $0x84] sm:$0xf]
  %v8693 = vld [vmem:[%s5 + $0x88] sm:$0xf]
  %v8694 = vld [vmem:[%s5 + $0x8c] sm:$0xf]
  %v8695 = vld [vmem:[%s5 + $0x90] sm:$0xf]
  %v8696 = vld [vmem:[%s5 + $0x94] sm:$0xf]
  %v8697 = vld [vmem:[%s5 + $0x98] sm:$0xf]
  %v8698 = vld [vmem:[%s5 + $0x9c] sm:$0xf]
  %v8699 = vld [vmem:[%s5 + $0xa0] sm:$0xf]
  %v8700 = vld [vmem:[%s5 + $0xa4] sm:$0xf]
  %v8701 = vld [vmem:[%s5 + $0xa8] sm:$0xf]
  %v8702 = vld [vmem:[%s5 + $0xac] sm:$0xf]
  %v8703 = vld [vmem:[%s5 + $0xb0] sm:$0xf]
  %v8704 = vld [vmem:[%s5 + $0xb4] sm:$0xf]
  %v8705 = vld [vmem:[%s5 + $0xb8] sm:$0xf]
  %v8706 = vld [vmem:[%s5 + $0xbc] sm:$0xf]
  %v8707 = vld [vmem:[%s5 + $0xc0] sm:$0xf]
  %v8708 = vld [vmem:[%s5 + $0xc4] sm:$0xf]
  %v8709 = vld [vmem:[%s5 + $0xc8] sm:$0xf]
  %v8710 = vld [vmem:[%s5 + $0xcc] sm:$0xf]
  %v8711 = vld [vmem:[%s5 + $0xd0] sm:$0xf]
  %v8712 = vld [vmem:[%s5 + $0xd4] sm:$0xf]
  %v8713 = vld [vmem:[%s5 + $0xd8] sm:$0xf]
  %v8714 = vld [vmem:[%s5 + $0xdc] sm:$0xf]
  %v8715 = vld [vmem:[%s5 + $0xe0] sm:$0xf]
  %v8716 = vld [vmem:[%s5 + $0xe4] sm:$0xf]
  %v8717 = vld [vmem:[%s5 + $0xe8] sm:$0xf]
  %v8718 = vld [vmem:[%s5 + $0xec] sm:$0xf]
  %v8719 = vld [vmem:[%s5 + $0xf0] sm:$0xf]
  %v8720 = vld [vmem:[%s5 + $0xf4] sm:$0xf]
  %v8721 = vld [vmem:[%s5 + $0xf8] sm:$0xf]
  %v8722 = vld [vmem:[%s5 + $0xfc] sm:$0xf]
  %v8723 = vld [vmem:[%s6] sm:$0x1]
  %v8725 = vlaneseq
  %v8726 = vshrl.u32 %v8725, 7
  %v8727 = vsub.s32 0, %v8726
  %v8728 = vrot.slane %v8723, %v8727
  %v8794 = vunpack.c.l.b16 %v8659
  %v8795 = vunpack.c.l.b16 %v8660
  %v8796 = vunpack.c.l.b16 %v8661
  %v8797 = vunpack.c.l.b16 %v8662
  %v8798 = vunpack.c.l.b16 %v8663
  %v8799 = vunpack.c.l.b16 %v8664
  %v8800 = vunpack.c.l.b16 %v8665
  %v8801 = vunpack.c.l.b16 %v8666
  %v8802 = vunpack.c.l.b16 %v8667
  %v8803 = vunpack.c.l.b16 %v8668
  %v8804 = vunpack.c.l.b16 %v8669
  %v8805 = vunpack.c.l.b16 %v8670
  %v8806 = vunpack.c.l.b16 %v8671
  %v8807 = vunpack.c.l.b16 %v8672
  %v8808 = vunpack.c.l.b16 %v8673
  %v8809 = vunpack.c.l.b16 %v8674
  %v8810 = vunpack.c.l.b16 %v8675
  %v8811 = vunpack.c.l.b16 %v8676
  %v8812 = vunpack.c.l.b16 %v8677
  %v8813 = vunpack.c.l.b16 %v8678
  %v8814 = vunpack.c.l.b16 %v8679
  %v8815 = vunpack.c.l.b16 %v8680
  %v8816 = vunpack.c.l.b16 %v8681
  %v8817 = vunpack.c.l.b16 %v8682
  %v8818 = vunpack.c.l.b16 %v8683
  %v8819 = vunpack.c.l.b16 %v8684
  %v8820 = vunpack.c.l.b16 %v8685
  %v8821 = vunpack.c.l.b16 %v8686
  %v8822 = vunpack.c.l.b16 %v8687
  %v8823 = vunpack.c.l.b16 %v8688
  %v8824 = vunpack.c.l.b16 %v8689
  %v8825 = vunpack.c.l.b16 %v8690
  %v8826 = vunpack.c.l.b16 %v8691
  %v8827 = vunpack.c.l.b16 %v8692
  %v8828 = vunpack.c.l.b16 %v8693
  %v8829 = vunpack.c.l.b16 %v8694
  %v8830 = vunpack.c.l.b16 %v8695
  %v8831 = vunpack.c.l.b16 %v8696
  %v8832 = vunpack.c.l.b16 %v8697
  %v8833 = vunpack.c.l.b16 %v8698
  %v8834 = vunpack.c.l.b16 %v8699
  %v8835 = vunpack.c.l.b16 %v8700
  %v8836 = vunpack.c.l.b16 %v8701
  %v8837 = vunpack.c.l.b16 %v8702
  %v8838 = vunpack.c.l.b16 %v8703
  %v8839 = vunpack.c.l.b16 %v8704
  %v8840 = vunpack.c.l.b16 %v8705
  %v8841 = vunpack.c.l.b16 %v8706
  %v8842 = vunpack.c.l.b16 %v8707
  %v8843 = vunpack.c.l.b16 %v8708
  %v8844 = vunpack.c.l.b16 %v8709
  %v8845 = vunpack.c.l.b16 %v8710
  %v8846 = vunpack.c.l.b16 %v8711
  %v8847 = vunpack.c.l.b16 %v8712
  %v8848 = vunpack.c.l.b16 %v8713
  %v8849 = vunpack.c.l.b16 %v8714
  %v8850 = vunpack.c.l.b16 %v8715
  %v8851 = vunpack.c.l.b16 %v8716
  %v8852 = vunpack.c.l.b16 %v8717
  %v8853 = vunpack.c.l.b16 %v8718
  %v8854 = vunpack.c.l.b16 %v8719
  %v8855 = vunpack.c.l.b16 %v8720
  %v8856 = vunpack.c.l.b16 %v8721
  %v8857 = vunpack.c.l.b16 %v8722
  %v8858 = vpack.c.b16 %v8795, %v8794
  %v8859 = vpack.c.b16 %v8797, %v8796
  %v8860 = vpack.c.b16 %v8799, %v8798
  %v8861 = vpack.c.b16 %v8801, %v8800
  %v8862 = vpack.c.b16 %v8803, %v8802
  %v8863 = vpack.c.b16 %v8805, %v8804
  %v8864 = vpack.c.b16 %v8807, %v8806
  %v8865 = vpack.c.b16 %v8809, %v8808
  %v8866 = vpack.c.b16 %v8811, %v8810
  %v8867 = vpack.c.b16 %v8813, %v8812
  %v8868 = vpack.c.b16 %v8815, %v8814
  %v8869 = vpack.c.b16 %v8817, %v8816
  %v8870 = vpack.c.b16 %v8819, %v8818
  %v8871 = vpack.c.b16 %v8821, %v8820
  %v8872 = vpack.c.b16 %v8823, %v8822
  %v8873 = vpack.c.b16 %v8825, %v8824
  %v8874 = vpack.c.b16 %v8827, %v8826
  %v8875 = vpack.c.b16 %v8829, %v8828
  %v8876 = vpack.c.b16 %v8831, %v8830
  %v8877 = vpack.c.b16 %v8833, %v8832
  %v8878 = vpack.c.b16 %v8835, %v8834
  %v8879 = vpack.c.b16 %v8837, %v8836
  %v8880 = vpack.c.b16 %v8839, %v8838
  %v8881 = vpack.c.b16 %v8841, %v8840
  %v8882 = vpack.c.b16 %v8843, %v8842
  %v8883 = vpack.c.b16 %v8845, %v8844
  %v8884 = vpack.c.b16 %v8847, %v8846
  %v8885 = vpack.c.b16 %v8849, %v8848
  %v8886 = vpack.c.b16 %v8851, %v8850
  %v8887 = vpack.c.b16 %v8853, %v8852
  %v8888 = vpack.c.b16 %v8855, %v8854
  %v8889 = vpack.c.b16 %v8857, %v8856
  %8922 = vmatprep.subr.bf16.mxu0 0
  %8923 = vmatpush1.bf16.msra.mxu0 %v8858
  %8924 = vmatprep.subr.bf16.mxu0 0
  %8925 = vmatpush1.bf16.msra.mxu0 %v8859
  %8926 = vmatprep.subr.bf16.mxu0 0
  %8927 = vmatpush1.bf16.msra.mxu0 %v8860
  %8928 = vmatprep.subr.bf16.mxu0 0
  %8929 = vmatpush1.bf16.msra.mxu0 %v8861
  %8930 = vmatprep.subr.bf16.mxu0 0
  %8931 = vmatpush1.bf16.msra.mxu0 %v8862
  %8932 = vmatprep.subr.bf16.mxu0 0
  %8933 = vmatpush1.bf16.msra.mxu0 %v8863
  %8934 = vmatprep.subr.bf16.mxu0 0
  %8935 = vmatpush1.bf16.msra.mxu0 %v8864
  %8936 = vmatprep.subr.bf16.mxu0 0
  %8937 = vmatpush1.bf16.msra.mxu0 %v8865
  %8938 = vmatprep.subr.bf16.mxu0 0
  %8939 = vmatpush1.bf16.msra.mxu0 %v8866
  %8940 = vmatprep.subr.bf16.mxu0 0
  %8941 = vmatpush1.bf16.msra.mxu0 %v8867
  %8942 = vmatprep.subr.bf16.mxu0 0
  %8943 = vmatpush1.bf16.msra.mxu0 %v8868
  %8944 = vmatprep.subr.bf16.mxu0 0
  %8945 = vmatpush1.bf16.msra.mxu0 %v8869
  %8946 = vmatprep.subr.bf16.mxu0 0
  %8947 = vmatpush1.bf16.msra.mxu0 %v8870
  %8948 = vmatprep.subr.bf16.mxu0 0
  %8949 = vmatpush1.bf16.msra.mxu0 %v8871
  %8950 = vmatprep.subr.bf16.mxu0 0
  %8951 = vmatpush1.bf16.msra.mxu0 %v8872
  %8952 = vmatprep.subr.bf16.mxu0 0
  %8953 = vmatpush1.bf16.msra.mxu0 %v8873
  %8954 = vmatprep.mubr.bf16.mxu0 %v8656
  %8955 = vmatmul.mubr.bf16.gmra.mrb[0].mxu0 %v8655
  %v8956 = vpop.f32.mrb[0].mxu0
  %v8957 = vadd.f32 %v8728, %v8956
  %v8958 = vpop.f32.mrb[0].mxu0
  %v8959 = vpop.f32.mrb[0].mxu0
  %v8960 = vpop.f32.mrb[0].mxu0
  %8961 = vdwg.mxu0
  %8962 = vmatprep.subr.bf16.mxu0 0
  %8963 = vmatpush1.bf16.msra.mxu0 %v8874
  %8964 = vmatprep.subr.bf16.mxu0 0
  %8965 = vmatpush1.bf16.msra.mxu0 %v8875
  %8966 = vmatprep.subr.bf16.mxu0 0
  %8967 = vmatpush1.bf16.msra.mxu0 %v8876
  %8968 = vmatprep.subr.bf16.mxu0 0
  %8969 = vmatpush1.bf16.msra.mxu0 %v8877
  %8970 = vmatprep.subr.bf16.mxu0 0
  %8971 = vmatpush1.bf16.msra.mxu0 %v8878
  %8972 = vmatprep.subr.bf16.mxu0 0
  %8973 = vmatpush1.bf16.msra.mxu0 %v8879
  %8974 = vmatprep.subr.bf16.mxu0 0
  %8975 = vmatpush1.bf16.msra.mxu0 %v8880
  %8976 = vmatprep.subr.bf16.mxu0 0
  %8977 = vmatpush1.bf16.msra.mxu0 %v8881
  %8978 = vmatprep.subr.bf16.mxu0 0
  %8979 = vmatpush1.bf16.msra.mxu0 %v8882
  %8980 = vmatprep.subr.bf16.mxu0 0
  %8981 = vmatpush1.bf16.msra.mxu0 %v8883
  %8982 = vmatprep.subr.bf16.mxu0 0
  %8983 = vmatpush1.bf16.msra.mxu0 %v8884
  %8984 = vmatprep.subr.bf16.mxu0 0
  %8985 = vmatpush1.bf16.msra.mxu0 %v8885
  %8986 = vmatprep.subr.bf16.mxu0 0
  %8987 = vmatpush1.bf16.msra.mxu0 %v8886
  %8988 = vmatprep.subr.bf16.mxu0 0
  %8989 = vmatpush1.bf16.msra.mxu0 %v8887
  %8990 = vmatprep.subr.bf16.mxu0 0
  %8991 = vmatpush1.bf16.msra.mxu0 %v8888
  %8992 = vmatprep.subr.bf16.mxu0 0
  %8993 = vmatpush1.bf16.msra.mxu0 %v8889
  %8994 = vmatprep.mubr.bf16.mxu0 %v8658
  %8995 = vmatmul.mubr.bf16.gmra.mrb[0].mxu0 %v8657
  %v8996 = vpop.f32.mrb[0].mxu0
  %v8997 = vadd.f32 %v8957, %v8996
  %v8998 = vpop.f32.mrb[0].mxu0
  %v8999 = vpop.f32.mrb[0].mxu0
  %v9000 = vpop.f32.mrb[0].mxu0
  %9001 = vdwg.mxu0
  %9002 = vst [vmem:[%s7] sm:$0xf] %v8997
  // Predicated region
  $region30: #{siamese_forward.7} parent=0 // pred_check
    _
  $region31: #{siamese_forward.7} parent=0 // pred_check_branch
    %9004 = sbr.rel (0) target = $region33
  $region32: #{siamese_forward.7} parent=0 // pred_region
    _
  $region33: #{siamese_forward.7} parent=0 // pred_fallthru
    _
  // Predicated region
  $region34: #{siamese_forward.7} parent=0 // pred_check
    _
  $region35: #{siamese_forward.7} parent=0 // pred_check_branch
    %9006 = sbr.rel (0) target = $region37
  $region36: #{siamese_forward.7} parent=0 // pred_region
    _
  $region37: #{siamese_forward.7} parent=0 // pred_fallthru
    _

</llo_original>
